<compile_context>
chip_gen: v7x
topology: tpu7x:2x2x1
jax: 0.10.0
libtpu: 0.0.40
codegen_flags: <defaults>
</compile_context>

<pallas_src>
import functools

import jax
import jax.numpy as jnp
from jax.experimental import pallas as pl
from jax.experimental.pallas import tpu as pltpu


def _round_up(x, m):
    return (x + m - 1) // m * m


def _vmem_limit_bytes():
    """Per-generation VMEM budget: capacity - 16 MiB, clamped to [32, 100] MiB."""
    cap = None
    try:
        info = pltpu.get_tpu_info()
        for attr in ("vmem_capacity_bytes", "vmem_size_bytes", "vmem_bytes"):
            if hasattr(info, attr):
                cap = int(getattr(info, attr))
                break
    except Exception:
        cap = None
    if not cap:
        cap = 64 * 1024 * 1024                     # conservative (v7x) fallback
    return int(min(100 * 1024 * 1024, max(32 * 1024 * 1024, cap - 16 * 1024 * 1024)))


_VMEM_LIMIT = _vmem_limit_bytes()


def _compiler_params():
    return pltpu.CompilerParams(
        dimension_semantics=("parallel",),
        vmem_limit_bytes=_VMEM_LIMIT,
    )


# ----------------------------------------------------------------------------
# Kernel 1: fused conv1 + conv2 + conv3 (both Q-nets), grid over batch tiles.
# ----------------------------------------------------------------------------
def _conv_stack_kernel(x_ref, w1_ref, b1_ref, w2_ref, b2_ref, w3_ref, b3_ref,
                       o_ref, *, samples):
    """x_ref: (S, 100, 1024) uint8 -- per sample a 10x10 grid of conv1 output
    "cells"; each cell's 1024 lanes = 4 output phases x (8*8*4) input patch.
    o_ref: (S, 49, 128) bf16 -- conv3 output, rows = 7x7 spatial, lanes = the
    twin nets' 64+64 channels (consumed flattened by the fc kernel)."""
    for s in range(samples):
        xs = x_ref[s].astype(jnp.float32).astype(jnp.bfloat16)       # (100, 1024)

        # conv1 (8x8, stride 4): one matmul per output phase, shared weights,
        # phase results lane-concatenated -> dense 256-wide result.
        h1 = jnp.concatenate(
            [jnp.dot(xs[:, k * 256:(k + 1) * 256], w1_ref[...],
                     preferred_element_type=jnp.float32) for k in range(4)],
            axis=-1) + b1_ref[...]                                    # (100, 256) f32
        h1 = jnp.maximum(h1, 0.0).astype(jnp.bfloat16)

        # conv2 (4x4, stride 2) == 2x2 stride-1 conv over the phase-packed grid.
        rows2 = []
        for oh in range(9):
            parts = []
            for i in range(2):
                for j in range(2):
                    r0 = (oh + i) * 10 + j
                    parts.append(h1[r0:r0 + 9, :])                    # (9, 256)
            rows2.append(jnp.concatenate(parts, axis=-1))             # (9, 1024)
        cols2 = jnp.concatenate(rows2, axis=0)                        # (81, 1024)
        h2 = jnp.dot(cols2, w2_ref[...], preferred_element_type=jnp.float32)
        h2 = jnp.maximum(h2 + b2_ref[...], 0.0).astype(jnp.bfloat16)  # (81, 128)

        # conv3 (3x3, stride 1) on the 9x9 grid.
        rows3 = []
        for oh in range(7):
            parts = []
            for i in range(3):
                for j in range(3):
                    r0 = (oh + i) * 9 + j
                    parts.append(h2[r0:r0 + 7, :])                    # (7, 128)
            rows3.append(jnp.concatenate(parts, axis=-1))             # (7, 1152)
        cols3 = jnp.concatenate(rows3, axis=0)                        # (49, 1152)
        h3 = jnp.dot(cols3, w3_ref[...], preferred_element_type=jnp.float32)
        h3 = jnp.maximum(h3 + b3_ref[...], 0.0)                       # (49, 128)

        o_ref[s] = h3.astype(o_ref.dtype)


def pallas_conv_stack(cols, f, *, samples_per_step):
    n_pad = cols.shape[0]
    s = samples_per_step
    assert n_pad % s == 0
    return pl.pallas_call(
        functools.partial(_conv_stack_kernel, samples=s),
        out_shape=jax.ShapeDtypeStruct((n_pad, 49, 128), jnp.bfloat16),
        grid=(n_pad // s,),
        in_specs=[
            pl.BlockSpec((s, 100, 1024), lambda i: (i, 0, 0)),   # obs patches (pipelined)
            pl.BlockSpec((256, 64), lambda i: (0, 0)),           # resident weights/biases
            pl.BlockSpec((1, 256), lambda i: (0, 0)),
            pl.BlockSpec((1024, 128), lambda i: (0, 0)),
            pl.BlockSpec((1, 128), lambda i: (0, 0)),
            pl.BlockSpec((1152, 128), lambda i: (0, 0)),
            pl.BlockSpec((1, 128), lambda i: (0, 0)),
        ],
        out_specs=pl.BlockSpec((s, 49, 128), lambda i: (i, 0, 0)),
        compiler_params=_compiler_params(),
    )(cols, f["c1_w"], f["c1_b"], f["c2_w"], f["c2_b"], f["c3_w"], f["c3_b"])


# ----------------------------------------------------------------------------
# Kernel 2: fused fc1(+ReLU)+fc2, grid over M (batch) tiles.
# ----------------------------------------------------------------------------
def _fc_fused_kernel(x_ref, w1_ref, b1_ref, w2_ref, b2_ref, o_ref):
    x = x_ref[...].astype(jnp.bfloat16)
    h = jnp.dot(x, w1_ref[...], preferred_element_type=jnp.float32)
    h = jnp.maximum(h + b1_ref[...], 0.0)
    q = jnp.dot(h.astype(jnp.bfloat16), w2_ref[...],
                preferred_element_type=jnp.float32)
    o_ref[...] = (q + b2_ref[...]).astype(o_ref.dtype)


def _pad_rows(x, tm_max):
    """Pick an M tile so padding is bounded (<= tm-1 rows) and grid >= 2 when M allows."""
    m = x.shape[0]
    if m <= 16:
        tm = 16
    else:
        steps = max(2, pl.cdiv(m, tm_max))
        tm = _round_up(pl.cdiv(m, steps), 16)
    m_pad = _round_up(m, tm)
    if m_pad != m:
        x = jnp.pad(x, ((0, m_pad - m), (0, 0)))
    return x, tm, m_pad


def pallas_fc_fused(x, w1, b1, w2, b2, *, out_dtype=jnp.float32, tm_max=None):
    m, k1 = x.shape
    n1 = w1.shape[1]
    n2 = w2.shape[1]
    if tm_max is None:
        # 128-MiB-VMEM parts (v5e/v6e) can double-buffer a bigger (tm, 6272) tile.
        tm_max = 1024 if _VMEM_LIMIT > 80 * 1024 * 1024 else 512
    xp, tm, m_pad = _pad_rows(x, tm_max)
    out = pl.pallas_call(
        _fc_fused_kernel,
        out_shape=jax.ShapeDtypeStruct((m_pad, n2), out_dtype),
        grid=(m_pad // tm,),
        in_specs=[
            pl.BlockSpec((tm, k1), lambda i: (i, 0)),
            pl.BlockSpec((k1, n1), lambda i: (0, 0)),
            pl.BlockSpec((1, n1), lambda i: (0, 0)),
            pl.BlockSpec((n1, n2), lambda i: (0, 0)),
            pl.BlockSpec((1, n2), lambda i: (0, 0)),
        ],
        out_specs=pl.BlockSpec((tm, n2), lambda i: (i, 0)),
        compiler_params=_compiler_params(),
    )(xp, w1, b1, w2, b2)
    return out[:m] if m_pad != m else out


# ----------------------------------------------------------------------------
# JAX-side conv1 patch gather (uint8) -- the only pre-kernel data movement.
# ----------------------------------------------------------------------------
def _conv1_patches_u8(obs):
    """(N, 4, 84, 84) -> (N, 100, 1024): 10x10 grid of 2x2 conv1-output-phase
    cells; lane layout = phase(p*2+q) x (kh*8+kw) x in-channel.  Kept in uint8
    so the im2col expansion costs ~100 KB/sample of HBM instead of >200 KB bf16."""
    # TODO(synk): this uint8 patch gather stays in XLA -- the 8x8/stride-4 window
    # gather is not expressible with a BlockSpec index_map and in-kernel strided
    # sublane loads were judged too lowering-risky; traffic is only ~100 KB/sample.
    n = obs.shape[0]
    x = obs if obs.dtype == jnp.uint8 else obs.astype(jnp.float32)
    x = x.transpose(0, 2, 3, 1)                                      # (N, 84, 84, 4)
    patches = [x[:, i:i + 80:4, j:j + 80:4, :]
               for i in range(8) for j in range(8)]                  # 64 x (N,20,20,4)
    cols = jnp.concatenate(patches, axis=-1)                         # (N, 20, 20, 256)
    cols = jnp.concatenate(
        [cols[:, p::2, q::2, :] for p in range(2) for q in range(2)],
        axis=-1)                                                     # (N, 10, 10, 1024)
    return cols.reshape(n, 100, 1024)


# ----------------------------------------------------------------------------
# Parameter init (PyTorch-style uniform) + one-time fused weight packing.
# ----------------------------------------------------------------------------
def _uniform(key, shape, fan_in):
    k = 1.0 / jnp.sqrt(jnp.asarray(fan_in, jnp.float32))
    return jax.random.uniform(key, shape, jnp.float32, -k, k)


def init_qnet_params(key, fc_width, action_dim):
    ks = jax.random.split(key, 10)
    p = {}
    p["c1_w"] = _uniform(ks[0], (32, 4, 8, 8), 4 * 8 * 8)
    p["c1_b"] = _uniform(ks[1], (32,), 4 * 8 * 8)
    p["c2_w"] = _uniform(ks[2], (64, 32, 4, 4), 32 * 4 * 4)
    p["c2_b"] = _uniform(ks[3], (64,), 32 * 4 * 4)
    p["c3_w"] = _uniform(ks[4], (64, 64, 3, 3), 64 * 3 * 3)
    p["c3_b"] = _uniform(ks[5], (64,), 64 * 3 * 3)
    p["fc1_w"] = _uniform(ks[6], (fc_width, 64 * 7 * 7), 64 * 7 * 7)
    p["fc1_b"] = _uniform(ks[7], (fc_width,), 64 * 7 * 7)
    p["fc2_w"] = _uniform(ks[8], (action_dim, fc_width), fc_width)
    p["fc2_b"] = _uniform(ks[9], (action_dim,), fc_width)
    return p


def prep_double_q_params(p1, p2, fc_width, action_dim):
    """One-time packing of the two Q-nets into fused bf16 weight matrices.
    NOTE: block-diagonal twin fusion keeps every layer 128 lanes wide but does
    2x FLOPs (half on structural zeros) -- acceptable while the net is
    latency/bandwidth bound; revisit if it ever becomes MXU-bound."""
    f = {}

    def conv_mat(w):            # (O, C, kh, kw) -> (kh*kw*C, O)
        o, c, kh, kw = w.shape
        return w.transpose(2, 3, 1, 0).reshape(kh * kw * c, o)

    # conv1: shared obs input -> concat along outputs; fold 1/255 into weights.
    c1 = jnp.concatenate([conv_mat(p1["c1_w"]), conv_mat(p2["c1_w"])], axis=1)
    f["c1_w"] = (c1 * (1.0 / 255.0)).astype(jnp.bfloat16)             # (256, 64)
    b1 = jnp.concatenate([p1["c1_b"], p2["c1_b"]]).astype(jnp.float32)
    f["c1_b"] = jnp.tile(b1, 4).reshape(1, 256)         # one copy per output phase

    # conv2 in its 2x2 space-to-depth form; rows ordered (i, j, p, q, c_fused).
    w2f = jnp.zeros((2, 2, 2, 2, 64, 128), jnp.float32)
    for i in range(2):
        for j in range(2):
            for p in range(2):
                for q in range(2):
                    w2f = w2f.at[i, j, p, q, :32, :64].set(
                        p1["c2_w"][:, :, 2 * i + p, 2 * j + q].T)
                    w2f = w2f.at[i, j, p, q, 32:, 64:].set(
                        p2["c2_w"][:, :, 2 * i + p, 2 * j + q].T)
    f["c2_w"] = w2f.reshape(1024, 128).astype(jnp.bfloat16)
    f["c2_b"] = jnp.concatenate([p1["c2_b"], p2["c2_b"]]
                                ).astype(jnp.float32).reshape(1, 128)

    # conv3: block-diagonal; rows ordered (kh, kw, c_fused).
    w3f = jnp.zeros((3, 3, 128, 128), jnp.float32)
    w3f = w3f.at[:, :, :64, :64].set(p1["c3_w"].transpose(2, 3, 1, 0))
    w3f = w3f.at[:, :, 64:, 64:].set(p2["c3_w"].transpose(2, 3, 1, 0))
    f["c3_w"] = w3f.reshape(1152, 128).astype(jnp.bfloat16)
    f["c3_b"] = jnp.concatenate([p1["c3_b"], p2["c3_b"]]
                                ).astype(jnp.float32).reshape(1, 128)

    # fc1: remap torch Flatten order (c, h, w) -> kernel order (h, w, c_fused).
    def fc1_block(w):
        return w.reshape(fc_width, 64, 7, 7).transpose(2, 3, 1, 0)    # (7,7,64,fc)

    w1f = jnp.zeros((7, 7, 128, 2 * fc_width), jnp.float32)
    w1f = w1f.at[:, :, :64, :fc_width].set(fc1_block(p1["fc1_w"]))
    w1f = w1f.at[:, :, 64:, fc_width:].set(fc1_block(p2["fc1_w"]))
    f["fc1_w"] = w1f.reshape(7 * 7 * 128, 2 * fc_width).astype(jnp.bfloat16)
    f["fc1_b"] = jnp.concatenate([p1["fc1_b"], p2["fc1_b"]]
                                 ).astype(jnp.float32).reshape(1, 2 * fc_width)

    # fc2: block-diagonal, output padded to a lane-dense multiple of 128.
    n_out = max(128, _round_up(2 * action_dim, 128))
    w2o = jnp.zeros((2 * fc_width, n_out), jnp.float32)
    w2o = w2o.at[:fc_width, :action_dim].set(p1["fc2_w"].T)
    w2o = w2o.at[fc_width:, action_dim:2 * action_dim].set(p2["fc2_w"].T)
    f["fc2_w"] = w2o.astype(jnp.bfloat16)
    b2o = jnp.zeros((n_out,), jnp.float32)
    b2o = b2o.at[:action_dim].set(p1["fc2_b"])
    b2o = b2o.at[action_dim:2 * action_dim].set(p2["fc2_b"])
    f["fc2_b"] = b2o.reshape(1, n_out)
    return f


# ----------------------------------------------------------------------------
# Fused Double-Q forward: 2 pallas_calls for both networks.
# ----------------------------------------------------------------------------
def double_q_net_forward(fused, obs, action_dim):
    """obs: (N, 4, 84, 84) uint8 (or float) -> (q1, q2), each (N, action_dim) f32."""
    n = obs.shape[0]
    cols = _conv1_patches_u8(obs)                                    # (N, 100, 1024) u8

    s = 1 if n < 8 else (4 if n < 64 else 8)                         # samples / grid step
    n_pad = _round_up(n, s)
    if n_pad != n:
        cols = jnp.pad(cols, ((0, n_pad - n), (0, 0), (0, 0)))

    h3 = pallas_conv_stack(cols, fused, samples_per_step=s)          # (n_pad, 49, 128)
    q = pallas_fc_fused(h3.reshape(n_pad, 49 * 128),
                        fused["fc1_w"], fused["fc1_b"],
                        fused["fc2_w"], fused["fc2_b"])              # (n_pad, 128) f32
    return q[:n, :action_dim], q[:n, action_dim:2 * action_dim]


if __name__ == "__main__":
    # Spatial must be 84x84 so the conv stack flattens to 64*7*7 per net,
    # exactly as the module requires.  Small batch / fc_width / action_dim.
    batch = 2
    fc_width = 32
    action_dim = 6

    key = jax.random.PRNGKey(0)
    k_obs, k_q1, k_q2 = jax.random.split(key, 3)

    obs = jax.random.randint(k_obs, (batch, 4, 84, 84), 0, 256,
                             dtype=jnp.int32).astype(jnp.uint8)

    params_q1 = init_qnet_params(k_q1, fc_width, action_dim)
    params_q2 = init_qnet_params(k_q2, fc_width, action_dim)
    fused = prep_double_q_params(params_q1, params_q2, fc_width, action_dim)

    fwd = jax.jit(lambda p, o: double_q_net_forward(p, o, action_dim))
    q1, q2 = fwd(fused, obs)
    jax.block_until_ready((q1, q2))

    assert q1.shape == (batch, action_dim) and q2.shape == (batch, action_dim)
    assert q1.dtype == jnp.float32 and q2.dtype == jnp.float32
    assert bool(jnp.isfinite(q1).all()) and bool(jnp.isfinite(q2).all())
    print("KERNEL_OK")
</pallas_src>

<mosaic_0001>
module attributes {stable_mosaic.version = 11 : i64} {
  func.func @_conv_stack_kernel(%arg0: i32, %arg1: memref<1x100x1024xi8, #tpu.memory_space<vmem>>, %arg2: memref<256x64xbf16, #tpu.memory_space<vmem>>, %arg3: memref<1x256xf32, #tpu.memory_space<vmem>>, %arg4: memref<1024x128xbf16, #tpu.memory_space<vmem>>, %arg5: memref<1x128xf32, #tpu.memory_space<vmem>>, %arg6: memref<1152x128xbf16, #tpu.memory_space<vmem>>, %arg7: memref<1x128xf32, #tpu.memory_space<vmem>>, %arg8: memref<1x49x128xbf16, #tpu.memory_space<vmem>>) attributes {dimension_semantics = [#tpu.dimension_semantics<parallel>], iteration_bounds = array<i64: 2>, scalar_prefetch = 0 : i64, scratch_operands = 0 : i64, tpu.core_type = #tpu.core_type<tc>, window_params = [{transform_indices = @transform_0, window_bounds = array<i64: 1, 100, 1024>}, {pipeline_mode = #tpu.pipeline_mode<synchronous>, transform_indices = @transform_1, window_bounds = array<i64: 256, 64>}, {pipeline_mode = #tpu.pipeline_mode<synchronous>, transform_indices = @transform_2, window_bounds = array<i64: 1, 256>}, {pipeline_mode = #tpu.pipeline_mode<synchronous>, transform_indices = @transform_3, window_bounds = array<i64: 1024, 128>}, {pipeline_mode = #tpu.pipeline_mode<synchronous>, transform_indices = @transform_4, window_bounds = array<i64: 1, 128>}, {pipeline_mode = #tpu.pipeline_mode<synchronous>, transform_indices = @transform_5, window_bounds = array<i64: 1152, 128>}, {pipeline_mode = #tpu.pipeline_mode<synchronous>, transform_indices = @transform_6, window_bounds = array<i64: 1, 128>}, {transform_indices = @transform_7, window_bounds = array<i64: 1, 49, 128>}]} {
    %c0 = arith.constant 0 : index
    %c0_0 = arith.constant 0 : index
    %c0_1 = arith.constant 0 : index
    %0 = vector.load %arg1[%c0, %c0_0, %c0_1] : memref<1x100x1024xi8, #tpu.memory_space<vmem>>, vector<1x100x1024xi8>
    %1 = vector.shape_cast %0 : vector<1x100x1024xi8> to vector<100x1024xi8>
    %2 = arith.uitofp %1 : vector<100x1024xi8> to vector<100x1024xf32>
    %3 = arith.truncf %2 : vector<100x1024xf32> to vector<100x1024xbf16>
    %4 = vector.extract_strided_slice %3 {offsets = [0, 0], sizes = [100, 256], strides = [1, 1]} : vector<100x1024xbf16> to vector<100x256xbf16>
    %c0_2 = arith.constant 0 : index
    %c0_3 = arith.constant 0 : index
    %5 = vector.load %arg2[%c0_2, %c0_3] : memref<256x64xbf16, #tpu.memory_space<vmem>>, vector<256x64xbf16>
    %cst = arith.constant dense<0.000000e+00> : vector<100x64xf32>
    %6 = tpu.matmul %4, %5, %cst {dimension_numbers = #tpu.dot_dimension_numbers<[1], [0], [0], [1], [0, 0, 1, 1], [], []>} : vector<100x256xbf16>, vector<256x64xbf16>, vector<100x64xf32> -> vector<100x64xf32>
    %7 = vector.extract_strided_slice %3 {offsets = [0, 256], sizes = [100, 256], strides = [1, 1]} : vector<100x1024xbf16> to vector<100x256xbf16>
    %c0_4 = arith.constant 0 : index
    %c0_5 = arith.constant 0 : index
    %8 = vector.load %arg2[%c0_4, %c0_5] : memref<256x64xbf16, #tpu.memory_space<vmem>>, vector<256x64xbf16>
    %cst_6 = arith.constant dense<0.000000e+00> : vector<100x64xf32>
    %9 = tpu.matmul %7, %8, %cst_6 {dimension_numbers = #tpu.dot_dimension_numbers<[1], [0], [0], [1], [0, 0, 1, 1], [], []>} : vector<100x256xbf16>, vector<256x64xbf16>, vector<100x64xf32> -> vector<100x64xf32>
    %10 = vector.extract_strided_slice %3 {offsets = [0, 512], sizes = [100, 256], strides = [1, 1]} : vector<100x1024xbf16> to vector<100x256xbf16>
    %c0_7 = arith.constant 0 : index
    %c0_8 = arith.constant 0 : index
    %11 = vector.load %arg2[%c0_7, %c0_8] : memref<256x64xbf16, #tpu.memory_space<vmem>>, vector<256x64xbf16>
    %cst_9 = arith.constant dense<0.000000e+00> : vector<100x64xf32>
    %12 = tpu.matmul %10, %11, %cst_9 {dimension_numbers = #tpu.dot_dimension_numbers<[1], [0], [0], [1], [0, 0, 1, 1], [], []>} : vector<100x256xbf16>, vector<256x64xbf16>, vector<100x64xf32> -> vector<100x64xf32>
    %13 = vector.extract_strided_slice %3 {offsets = [0, 768], sizes = [100, 256], strides = [1, 1]} : vector<100x1024xbf16> to vector<100x256xbf16>
    %c0_10 = arith.constant 0 : index
    %c0_11 = arith.constant 0 : index
    %14 = vector.load %arg2[%c0_10, %c0_11] : memref<256x64xbf16, #tpu.memory_space<vmem>>, vector<256x64xbf16>
    %cst_12 = arith.constant dense<0.000000e+00> : vector<100x64xf32>
    %15 = tpu.matmul %13, %14, %cst_12 {dimension_numbers = #tpu.dot_dimension_numbers<[1], [0], [0], [1], [0, 0, 1, 1], [], []>} : vector<100x256xbf16>, vector<256x64xbf16>, vector<100x64xf32> -> vector<100x64xf32>
    %16 = tpu.concatenate %6, %9, %12, %15 in 1 : vector<100x64xf32>, vector<100x64xf32>, vector<100x64xf32>, vector<100x64xf32> -> vector<100x256xf32>
    %c0_13 = arith.constant 0 : index
    %c0_14 = arith.constant 0 : index
    %17 = vector.load %arg3[%c0_13, %c0_14] : memref<1x256xf32, #tpu.memory_space<vmem>>, vector<1x256xf32>
    %18 = vector.broadcast %17 : vector<1x256xf32> to vector<100x256xf32>
    %19 = arith.addf %16, %18 : vector<100x256xf32>
    %cst_15 = arith.constant 0.000000e+00 : f32
    %20 = vector.broadcast %cst_15 : f32 to vector<100x256xf32>
    %21 = arith.maximumf %19, %20 : vector<100x256xf32>
    %22 = arith.truncf %21 : vector<100x256xf32> to vector<100x256xbf16>
    %23 = vector.extract_strided_slice %22 {offsets = [0, 0], sizes = [9, 256], strides = [1, 1]} : vector<100x256xbf16> to vector<9x256xbf16>
    %24 = vector.extract_strided_slice %22 {offsets = [1, 0], sizes = [9, 256], strides = [1, 1]} : vector<100x256xbf16> to vector<9x256xbf16>
    %25 = vector.extract_strided_slice %22 {offsets = [10, 0], sizes = [9, 256], strides = [1, 1]} : vector<100x256xbf16> to vector<9x256xbf16>
    %26 = vector.extract_strided_slice %22 {offsets = [11, 0], sizes = [9, 256], strides = [1, 1]} : vector<100x256xbf16> to vector<9x256xbf16>
    %27 = tpu.concatenate %23, %24, %25, %26 in 1 : vector<9x256xbf16>, vector<9x256xbf16>, vector<9x256xbf16>, vector<9x256xbf16> -> vector<9x1024xbf16>
    %28 = vector.extract_strided_slice %22 {offsets = [10, 0], sizes = [9, 256], strides = [1, 1]} : vector<100x256xbf16> to vector<9x256xbf16>
    %29 = vector.extract_strided_slice %22 {offsets = [11, 0], sizes = [9, 256], strides = [1, 1]} : vector<100x256xbf16> to vector<9x256xbf16>
    %30 = vector.extract_strided_slice %22 {offsets = [20, 0], sizes = [9, 256], strides = [1, 1]} : vector<100x256xbf16> to vector<9x256xbf16>
    %31 = vector.extract_strided_slice %22 {offsets = [21, 0], sizes = [9, 256], strides = [1, 1]} : vector<100x256xbf16> to vector<9x256xbf16>
    %32 = tpu.concatenate %28, %29, %30, %31 in 1 : vector<9x256xbf16>, vector<9x256xbf16>, vector<9x256xbf16>, vector<9x256xbf16> -> vector<9x1024xbf16>
    %33 = vector.extract_strided_slice %22 {offsets = [20, 0], sizes = [9, 256], strides = [1, 1]} : vector<100x256xbf16> to vector<9x256xbf16>
    %34 = vector.extract_strided_slice %22 {offsets = [21, 0], sizes = [9, 256], strides = [1, 1]} : vector<100x256xbf16> to vector<9x256xbf16>
    %35 = vector.extract_strided_slice %22 {offsets = [30, 0], sizes = [9, 256], strides = [1, 1]} : vector<100x256xbf16> to vector<9x256xbf16>
    %36 = vector.extract_strided_slice %22 {offsets = [31, 0], sizes = [9, 256], strides = [1, 1]} : vector<100x256xbf16> to vector<9x256xbf16>
    %37 = tpu.concatenate %33, %34, %35, %36 in 1 : vector<9x256xbf16>, vector<9x256xbf16>, vector<9x256xbf16>, vector<9x256xbf16> -> vector<9x1024xbf16>
    %38 = vector.extract_strided_slice %22 {offsets = [30, 0], sizes = [9, 256], strides = [1, 1]} : vector<100x256xbf16> to vector<9x256xbf16>
    %39 = vector.extract_strided_slice %22 {offsets = [31, 0], sizes = [9, 256], strides = [1, 1]} : vector<100x256xbf16> to vector<9x256xbf16>
    %40 = vector.extract_strided_slice %22 {offsets = [40, 0], sizes = [9, 256], strides = [1, 1]} : vector<100x256xbf16> to vector<9x256xbf16>
    %41 = vector.extract_strided_slice %22 {offsets = [41, 0], sizes = [9, 256], strides = [1, 1]} : vector<100x256xbf16> to vector<9x256xbf16>
    %42 = tpu.concatenate %38, %39, %40, %41 in 1 : vector<9x256xbf16>, vector<9x256xbf16>, vector<9x256xbf16>, vector<9x256xbf16> -> vector<9x1024xbf16>
    %43 = vector.extract_strided_slice %22 {offsets = [40, 0], sizes = [9, 256], strides = [1, 1]} : vector<100x256xbf16> to vector<9x256xbf16>
    %44 = vector.extract_strided_slice %22 {offsets = [41, 0], sizes = [9, 256], strides = [1, 1]} : vector<100x256xbf16> to vector<9x256xbf16>
    %45 = vector.extract_strided_slice %22 {offsets = [50, 0], sizes = [9, 256], strides = [1, 1]} : vector<100x256xbf16> to vector<9x256xbf16>
    %46 = vector.extract_strided_slice %22 {offsets = [51, 0], sizes = [9, 256], strides = [1, 1]} : vector<100x256xbf16> to vector<9x256xbf16>
    %47 = tpu.concatenate %43, %44, %45, %46 in 1 : vector<9x256xbf16>, vector<9x256xbf16>, vector<9x256xbf16>, vector<9x256xbf16> -> vector<9x1024xbf16>
    %48 = vector.extract_strided_slice %22 {offsets = [50, 0], sizes = [9, 256], strides = [1, 1]} : vector<100x256xbf16> to vector<9x256xbf16>
    %49 = vector.extract_strided_slice %22 {offsets = [51, 0], sizes = [9, 256], strides = [1, 1]} : vector<100x256xbf16> to vector<9x256xbf16>
    %50 = vector.extract_strided_slice %22 {offsets = [60, 0], sizes = [9, 256], strides = [1, 1]} : vector<100x256xbf16> to vector<9x256xbf16>
    %51 = vector.extract_strided_slice %22 {offsets = [61, 0], sizes = [9, 256], strides = [1, 1]} : vector<100x256xbf16> to vector<9x256xbf16>
    %52 = tpu.concatenate %48, %49, %50, %51 in 1 : vector<9x256xbf16>, vector<9x256xbf16>, vector<9x256xbf16>, vector<9x256xbf16> -> vector<9x1024xbf16>
    %53 = vector.extract_strided_slice %22 {offsets = [60, 0], sizes = [9, 256], strides = [1, 1]} : vector<100x256xbf16> to vector<9x256xbf16>
    %54 = vector.extract_strided_slice %22 {offsets = [61, 0], sizes = [9, 256], strides = [1, 1]} : vector<100x256xbf16> to vector<9x256xbf16>
    %55 = vector.extract_strided_slice %22 {offsets = [70, 0], sizes = [9, 256], strides = [1, 1]} : vector<100x256xbf16> to vector<9x256xbf16>
    %56 = vector.extract_strided_slice %22 {offsets = [71, 0], sizes = [9, 256], strides = [1, 1]} : vector<100x256xbf16> to vector<9x256xbf16>
    %57 = tpu.concatenate %53, %54, %55, %56 in 1 : vector<9x256xbf16>, vector<9x256xbf16>, vector<9x256xbf16>, vector<9x256xbf16> -> vector<9x1024xbf16>
    %58 = vector.extract_strided_slice %22 {offsets = [70, 0], sizes = [9, 256], strides = [1, 1]} : vector<100x256xbf16> to vector<9x256xbf16>
    %59 = vector.extract_strided_slice %22 {offsets = [71, 0], sizes = [9, 256], strides = [1, 1]} : vector<100x256xbf16> to vector<9x256xbf16>
    %60 = vector.extract_strided_slice %22 {offsets = [80, 0], sizes = [9, 256], strides = [1, 1]} : vector<100x256xbf16> to vector<9x256xbf16>
    %61 = vector.extract_strided_slice %22 {offsets = [81, 0], sizes = [9, 256], strides = [1, 1]} : vector<100x256xbf16> to vector<9x256xbf16>
    %62 = tpu.concatenate %58, %59, %60, %61 in 1 : vector<9x256xbf16>, vector<9x256xbf16>, vector<9x256xbf16>, vector<9x256xbf16> -> vector<9x1024xbf16>
    %63 = vector.extract_strided_slice %22 {offsets = [80, 0], sizes = [9, 256], strides = [1, 1]} : vector<100x256xbf16> to vector<9x256xbf16>
    %64 = vector.extract_strided_slice %22 {offsets = [81, 0], sizes = [9, 256], strides = [1, 1]} : vector<100x256xbf16> to vector<9x256xbf16>
    %65 = vector.extract_strided_slice %22 {offsets = [90, 0], sizes = [9, 256], strides = [1, 1]} : vector<100x256xbf16> to vector<9x256xbf16>
    %66 = vector.extract_strided_slice %22 {offsets = [91, 0], sizes = [9, 256], strides = [1, 1]} : vector<100x256xbf16> to vector<9x256xbf16>
    %67 = tpu.concatenate %63, %64, %65, %66 in 1 : vector<9x256xbf16>, vector<9x256xbf16>, vector<9x256xbf16>, vector<9x256xbf16> -> vector<9x1024xbf16>
    %68 = tpu.concatenate %27, %32, %37, %42, %47, %52, %57, %62, %67 in 0 : vector<9x1024xbf16>, vector<9x1024xbf16>, vector<9x1024xbf16>, vector<9x1024xbf16>, vector<9x1024xbf16>, vector<9x1024xbf16>, vector<9x1024xbf16>, vector<9x1024xbf16>, vector<9x1024xbf16> -> vector<81x1024xbf16>
    %c0_16 = arith.constant 0 : index
    %c0_17 = arith.constant 0 : index
    %69 = vector.load %arg4[%c0_16, %c0_17] : memref<1024x128xbf16, #tpu.memory_space<vmem>>, vector<1024x128xbf16>
    %cst_18 = arith.constant dense<0.000000e+00> : vector<81x128xf32>
    %70 = tpu.matmul %68, %69, %cst_18 {dimension_numbers = #tpu.dot_dimension_numbers<[1], [0], [0], [1], [0, 0, 1, 1], [], []>} : vector<81x1024xbf16>, vector<1024x128xbf16>, vector<81x128xf32> -> vector<81x128xf32>
    %c0_19 = arith.constant 0 : index
    %c0_20 = arith.constant 0 : index
    %71 = vector.load %arg5[%c0_19, %c0_20] : memref<1x128xf32, #tpu.memory_space<vmem>>, vector<1x128xf32>
    %72 = vector.broadcast %71 : vector<1x128xf32> to vector<81x128xf32>
    %73 = arith.addf %70, %72 : vector<81x128xf32>
    %cst_21 = arith.constant 0.000000e+00 : f32
    %74 = vector.broadcast %cst_21 : f32 to vector<81x128xf32>
    %75 = arith.maximumf %73, %74 : vector<81x128xf32>
    %76 = arith.truncf %75 : vector<81x128xf32> to vector<81x128xbf16>
    %77 = vector.extract_strided_slice %76 {offsets = [0, 0], sizes = [7, 128], strides = [1, 1]} : vector<81x128xbf16> to vector<7x128xbf16>
    %78 = vector.extract_strided_slice %76 {offsets = [1, 0], sizes = [7, 128], strides = [1, 1]} : vector<81x128xbf16> to vector<7x128xbf16>
    %79 = vector.extract_strided_slice %76 {offsets = [2, 0], sizes = [7, 128], strides = [1, 1]} : vector<81x128xbf16> to vector<7x128xbf16>
    %80 = vector.extract_strided_slice %76 {offsets = [9, 0], sizes = [7, 128], strides = [1, 1]} : vector<81x128xbf16> to vector<7x128xbf16>
    %81 = vector.extract_strided_slice %76 {offsets = [10, 0], sizes = [7, 128], strides = [1, 1]} : vector<81x128xbf16> to vector<7x128xbf16>
    %82 = vector.extract_strided_slice %76 {offsets = [11, 0], sizes = [7, 128], strides = [1, 1]} : vector<81x128xbf16> to vector<7x128xbf16>
    %83 = vector.extract_strided_slice %76 {offsets = [18, 0], sizes = [7, 128], strides = [1, 1]} : vector<81x128xbf16> to vector<7x128xbf16>
    %84 = vector.extract_strided_slice %76 {offsets = [19, 0], sizes = [7, 128], strides = [1, 1]} : vector<81x128xbf16> to vector<7x128xbf16>
    %85 = vector.extract_strided_slice %76 {offsets = [20, 0], sizes = [7, 128], strides = [1, 1]} : vector<81x128xbf16> to vector<7x128xbf16>
    %86 = tpu.concatenate %77, %78, %79, %80, %81, %82, %83, %84, %85 in 1 : vector<7x128xbf16>, vector<7x128xbf16>, vector<7x128xbf16>, vector<7x128xbf16>, vector<7x128xbf16>, vector<7x128xbf16>, vector<7x128xbf16>, vector<7x128xbf16>, vector<7x128xbf16> -> vector<7x1152xbf16>
    %87 = vector.extract_strided_slice %76 {offsets = [9, 0], sizes = [7, 128], strides = [1, 1]} : vector<81x128xbf16> to vector<7x128xbf16>
    %88 = vector.extract_strided_slice %76 {offsets = [10, 0], sizes = [7, 128], strides = [1, 1]} : vector<81x128xbf16> to vector<7x128xbf16>
    %89 = vector.extract_strided_slice %76 {offsets = [11, 0], sizes = [7, 128], strides = [1, 1]} : vector<81x128xbf16> to vector<7x128xbf16>
    %90 = vector.extract_strided_slice %76 {offsets = [18, 0], sizes = [7, 128], strides = [1, 1]} : vector<81x128xbf16> to vector<7x128xbf16>
    %91 = vector.extract_strided_slice %76 {offsets = [19, 0], sizes = [7, 128], strides = [1, 1]} : vector<81x128xbf16> to vector<7x128xbf16>
    %92 = vector.extract_strided_slice %76 {offsets = [20, 0], sizes = [7, 128], strides = [1, 1]} : vector<81x128xbf16> to vector<7x128xbf16>
    %93 = vector.extract_strided_slice %76 {offsets = [27, 0], sizes = [7, 128], strides = [1, 1]} : vector<81x128xbf16> to vector<7x128xbf16>
    %94 = vector.extract_strided_slice %76 {offsets = [28, 0], sizes = [7, 128], strides = [1, 1]} : vector<81x128xbf16> to vector<7x128xbf16>
    %95 = vector.extract_strided_slice %76 {offsets = [29, 0], sizes = [7, 128], strides = [1, 1]} : vector<81x128xbf16> to vector<7x128xbf16>
    %96 = tpu.concatenate %87, %88, %89, %90, %91, %92, %93, %94, %95 in 1 : vector<7x128xbf16>, vector<7x128xbf16>, vector<7x128xbf16>, vector<7x128xbf16>, vector<7x128xbf16>, vector<7x128xbf16>, vector<7x128xbf16>, vector<7x128xbf16>, vector<7x128xbf16> -> vector<7x1152xbf16>
    %97 = vector.extract_strided_slice %76 {offsets = [18, 0], sizes = [7, 128], strides = [1, 1]} : vector<81x128xbf16> to vector<7x128xbf16>
    %98 = vector.extract_strided_slice %76 {offsets = [19, 0], sizes = [7, 128], strides = [1, 1]} : vector<81x128xbf16> to vector<7x128xbf16>
    %99 = vector.extract_strided_slice %76 {offsets = [20, 0], sizes = [7, 128], strides = [1, 1]} : vector<81x128xbf16> to vector<7x128xbf16>
    %100 = vector.extract_strided_slice %76 {offsets = [27, 0], sizes = [7, 128], strides = [1, 1]} : vector<81x128xbf16> to vector<7x128xbf16>
    %101 = vector.extract_strided_slice %76 {offsets = [28, 0], sizes = [7, 128], strides = [1, 1]} : vector<81x128xbf16> to vector<7x128xbf16>
    %102 = vector.extract_strided_slice %76 {offsets = [29, 0], sizes = [7, 128], strides = [1, 1]} : vector<81x128xbf16> to vector<7x128xbf16>
    %103 = vector.extract_strided_slice %76 {offsets = [36, 0], sizes = [7, 128], strides = [1, 1]} : vector<81x128xbf16> to vector<7x128xbf16>
    %104 = vector.extract_strided_slice %76 {offsets = [37, 0], sizes = [7, 128], strides = [1, 1]} : vector<81x128xbf16> to vector<7x128xbf16>
    %105 = vector.extract_strided_slice %76 {offsets = [38, 0], sizes = [7, 128], strides = [1, 1]} : vector<81x128xbf16> to vector<7x128xbf16>
    %106 = tpu.concatenate %97, %98, %99, %100, %101, %102, %103, %104, %105 in 1 : vector<7x128xbf16>, vector<7x128xbf16>, vector<7x128xbf16>, vector<7x128xbf16>, vector<7x128xbf16>, vector<7x128xbf16>, vector<7x128xbf16>, vector<7x128xbf16>, vector<7x128xbf16> -> vector<7x1152xbf16>
    %107 = vector.extract_strided_slice %76 {offsets = [27, 0], sizes = [7, 128], strides = [1, 1]} : vector<81x128xbf16> to vector<7x128xbf16>
    %108 = vector.extract_strided_slice %76 {offsets = [28, 0], sizes = [7, 128], strides = [1, 1]} : vector<81x128xbf16> to vector<7x128xbf16>
    %109 = vector.extract_strided_slice %76 {offsets = [29, 0], sizes = [7, 128], strides = [1, 1]} : vector<81x128xbf16> to vector<7x128xbf16>
    %110 = vector.extract_strided_slice %76 {offsets = [36, 0], sizes = [7, 128], strides = [1, 1]} : vector<81x128xbf16> to vector<7x128xbf16>
    %111 = vector.extract_strided_slice %76 {offsets = [37, 0], sizes = [7, 128], strides = [1, 1]} : vector<81x128xbf16> to vector<7x128xbf16>
    %112 = vector.extract_strided_slice %76 {offsets = [38, 0], sizes = [7, 128], strides = [1, 1]} : vector<81x128xbf16> to vector<7x128xbf16>
    %113 = vector.extract_strided_slice %76 {offsets = [45, 0], sizes = [7, 128], strides = [1, 1]} : vector<81x128xbf16> to vector<7x128xbf16>
    %114 = vector.extract_strided_slice %76 {offsets = [46, 0], sizes = [7, 128], strides = [1, 1]} : vector<81x128xbf16> to vector<7x128xbf16>
    %115 = vector.extract_strided_slice %76 {offsets = [47, 0], sizes = [7, 128], strides = [1, 1]} : vector<81x128xbf16> to vector<7x128xbf16>
    %116 = tpu.concatenate %107, %108, %109, %110, %111, %112, %113, %114, %115 in 1 : vector<7x128xbf16>, vector<7x128xbf16>, vector<7x128xbf16>, vector<7x128xbf16>, vector<7x128xbf16>, vector<7x128xbf16>, vector<7x128xbf16>, vector<7x128xbf16>, vector<7x128xbf16> -> vector<7x1152xbf16>
    %117 = vector.extract_strided_slice %76 {offsets = [36, 0], sizes = [7, 128], strides = [1, 1]} : vector<81x128xbf16> to vector<7x128xbf16>
    %118 = vector.extract_strided_slice %76 {offsets = [37, 0], sizes = [7, 128], strides = [1, 1]} : vector<81x128xbf16> to vector<7x128xbf16>
    %119 = vector.extract_strided_slice %76 {offsets = [38, 0], sizes = [7, 128], strides = [1, 1]} : vector<81x128xbf16> to vector<7x128xbf16>
    %120 = vector.extract_strided_slice %76 {offsets = [45, 0], sizes = [7, 128], strides = [1, 1]} : vector<81x128xbf16> to vector<7x128xbf16>
    %121 = vector.extract_strided_slice %76 {offsets = [46, 0], sizes = [7, 128], strides = [1, 1]} : vector<81x128xbf16> to vector<7x128xbf16>
    %122 = vector.extract_strided_slice %76 {offsets = [47, 0], sizes = [7, 128], strides = [1, 1]} : vector<81x128xbf16> to vector<7x128xbf16>
    %123 = vector.extract_strided_slice %76 {offsets = [54, 0], sizes = [7, 128], strides = [1, 1]} : vector<81x128xbf16> to vector<7x128xbf16>
    %124 = vector.extract_strided_slice %76 {offsets = [55, 0], sizes = [7, 128], strides = [1, 1]} : vector<81x128xbf16> to vector<7x128xbf16>
    %125 = vector.extract_strided_slice %76 {offsets = [56, 0], sizes = [7, 128], strides = [1, 1]} : vector<81x128xbf16> to vector<7x128xbf16>
    %126 = tpu.concatenate %117, %118, %119, %120, %121, %122, %123, %124, %125 in 1 : vector<7x128xbf16>, vector<7x128xbf16>, vector<7x128xbf16>, vector<7x128xbf16>, vector<7x128xbf16>, vector<7x128xbf16>, vector<7x128xbf16>, vector<7x128xbf16>, vector<7x128xbf16> -> vector<7x1152xbf16>
    %127 = vector.extract_strided_slice %76 {offsets = [45, 0], sizes = [7, 128], strides = [1, 1]} : vector<81x128xbf16> to vector<7x128xbf16>
    %128 = vector.extract_strided_slice %76 {offsets = [46, 0], sizes = [7, 128], strides = [1, 1]} : vector<81x128xbf16> to vector<7x128xbf16>
    %129 = vector.extract_strided_slice %76 {offsets = [47, 0], sizes = [7, 128], strides = [1, 1]} : vector<81x128xbf16> to vector<7x128xbf16>
    %130 = vector.extract_strided_slice %76 {offsets = [54, 0], sizes = [7, 128], strides = [1, 1]} : vector<81x128xbf16> to vector<7x128xbf16>
    %131 = vector.extract_strided_slice %76 {offsets = [55, 0], sizes = [7, 128], strides = [1, 1]} : vector<81x128xbf16> to vector<7x128xbf16>
    %132 = vector.extract_strided_slice %76 {offsets = [56, 0], sizes = [7, 128], strides = [1, 1]} : vector<81x128xbf16> to vector<7x128xbf16>
    %133 = vector.extract_strided_slice %76 {offsets = [63, 0], sizes = [7, 128], strides = [1, 1]} : vector<81x128xbf16> to vector<7x128xbf16>
    %134 = vector.extract_strided_slice %76 {offsets = [64, 0], sizes = [7, 128], strides = [1, 1]} : vector<81x128xbf16> to vector<7x128xbf16>
    %135 = vector.extract_strided_slice %76 {offsets = [65, 0], sizes = [7, 128], strides = [1, 1]} : vector<81x128xbf16> to vector<7x128xbf16>
    %136 = tpu.concatenate %127, %128, %129, %130, %131, %132, %133, %134, %135 in 1 : vector<7x128xbf16>, vector<7x128xbf16>, vector<7x128xbf16>, vector<7x128xbf16>, vector<7x128xbf16>, vector<7x128xbf16>, vector<7x128xbf16>, vector<7x128xbf16>, vector<7x128xbf16> -> vector<7x1152xbf16>
    %137 = vector.extract_strided_slice %76 {offsets = [54, 0], sizes = [7, 128], strides = [1, 1]} : vector<81x128xbf16> to vector<7x128xbf16>
    %138 = vector.extract_strided_slice %76 {offsets = [55, 0], sizes = [7, 128], strides = [1, 1]} : vector<81x128xbf16> to vector<7x128xbf16>
    %139 = vector.extract_strided_slice %76 {offsets = [56, 0], sizes = [7, 128], strides = [1, 1]} : vector<81x128xbf16> to vector<7x128xbf16>
    %140 = vector.extract_strided_slice %76 {offsets = [63, 0], sizes = [7, 128], strides = [1, 1]} : vector<81x128xbf16> to vector<7x128xbf16>
    %141 = vector.extract_strided_slice %76 {offsets = [64, 0], sizes = [7, 128], strides = [1, 1]} : vector<81x128xbf16> to vector<7x128xbf16>
    %142 = vector.extract_strided_slice %76 {offsets = [65, 0], sizes = [7, 128], strides = [1, 1]} : vector<81x128xbf16> to vector<7x128xbf16>
    %143 = vector.extract_strided_slice %76 {offsets = [72, 0], sizes = [7, 128], strides = [1, 1]} : vector<81x128xbf16> to vector<7x128xbf16>
    %144 = vector.extract_strided_slice %76 {offsets = [73, 0], sizes = [7, 128], strides = [1, 1]} : vector<81x128xbf16> to vector<7x128xbf16>
    %145 = vector.extract_strided_slice %76 {offsets = [74, 0], sizes = [7, 128], strides = [1, 1]} : vector<81x128xbf16> to vector<7x128xbf16>
    %146 = tpu.concatenate %137, %138, %139, %140, %141, %142, %143, %144, %145 in 1 : vector<7x128xbf16>, vector<7x128xbf16>, vector<7x128xbf16>, vector<7x128xbf16>, vector<7x128xbf16>, vector<7x128xbf16>, vector<7x128xbf16>, vector<7x128xbf16>, vector<7x128xbf16> -> vector<7x1152xbf16>
    %147 = tpu.concatenate %86, %96, %106, %116, %126, %136, %146 in 0 : vector<7x1152xbf16>, vector<7x1152xbf16>, vector<7x1152xbf16>, vector<7x1152xbf16>, vector<7x1152xbf16>, vector<7x1152xbf16>, vector<7x1152xbf16> -> vector<49x1152xbf16>
    %c0_22 = arith.constant 0 : index
    %c0_23 = arith.constant 0 : index
    %148 = vector.load %arg6[%c0_22, %c0_23] : memref<1152x128xbf16, #tpu.memory_space<vmem>>, vector<1152x128xbf16>
    %cst_24 = arith.constant dense<0.000000e+00> : vector<49x128xf32>
    %149 = tpu.matmul %147, %148, %cst_24 {dimension_numbers = #tpu.dot_dimension_numbers<[1], [0], [0], [1], [0, 0, 1, 1], [], []>} : vector<49x1152xbf16>, vector<1152x128xbf16>, vector<49x128xf32> -> vector<49x128xf32>
    %c0_25 = arith.constant 0 : index
    %c0_26 = arith.constant 0 : index
    %150 = vector.load %arg7[%c0_25, %c0_26] : memref<1x128xf32, #tpu.memory_space<vmem>>, vector<1x128xf32>
    %151 = vector.broadcast %150 : vector<1x128xf32> to vector<49x128xf32>
    %152 = arith.addf %149, %151 : vector<49x128xf32>
    %cst_27 = arith.constant 0.000000e+00 : f32
    %153 = vector.broadcast %cst_27 : f32 to vector<49x128xf32>
    %154 = arith.maximumf %152, %153 : vector<49x128xf32>
    %155 = arith.truncf %154 : vector<49x128xf32> to vector<49x128xbf16>
    %c0_28 = arith.constant 0 : index
    %c0_29 = arith.constant 0 : index
    %c0_30 = arith.constant 0 : index
    %156 = vector.load %arg8[%c0_28, %c0_29, %c0_30] : memref<1x49x128xbf16, #tpu.memory_space<vmem>>, vector<1x49x128xbf16>
    %157 = vector.shape_cast %156 : vector<1x49x128xbf16> to vector<49x128xbf16>
    %158 = vector.shape_cast %155 : vector<49x128xbf16> to vector<1x49x128xbf16>
    tpu.vector_store %arg8[%c0_28, %c0_29, %c0_30], %158 {strides = array<i32>} : memref<1x49x128xbf16, #tpu.memory_space<vmem>>, vector<1x49x128xbf16>,
    return
  }
  func.func @transform_0(%arg0: i32) -> (i32, i32, i32) {
    %c0_i32 = arith.constant 0 : i32
    %c0_i32_0 = arith.constant 0 : i32
    %c0_i32_1 = arith.constant 0 : i32
    return %arg0, %c0_i32, %c0_i32_0 : i32, i32, i32
  }
  func.func @transform_1(%arg0: i32) -> (i32, i32) {
    %c0_i32 = arith.constant 0 : i32
    %c0_i32_0 = arith.constant 0 : i32
    %c0_i32_1 = arith.constant 0 : i32
    return %c0_i32, %c0_i32_0 : i32, i32
  }
  func.func @transform_2(%arg0: i32) -> (i32, i32) {
    %c0_i32 = arith.constant 0 : i32
    %c0_i32_0 = arith.constant 0 : i32
    %c0_i32_1 = arith.constant 0 : i32
    return %c0_i32, %c0_i32_0 : i32, i32
  }
  func.func @transform_3(%arg0: i32) -> (i32, i32) {
    %c0_i32 = arith.constant 0 : i32
    %c0_i32_0 = arith.constant 0 : i32
    %c0_i32_1 = arith.constant 0 : i32
    return %c0_i32, %c0_i32_0 : i32, i32
  }
  func.func @transform_4(%arg0: i32) -> (i32, i32) {
    %c0_i32 = arith.constant 0 : i32
    %c0_i32_0 = arith.constant 0 : i32
    %c0_i32_1 = arith.constant 0 : i32
    return %c0_i32, %c0_i32_0 : i32, i32
  }
  func.func @transform_5(%arg0: i32) -> (i32, i32) {
    %c0_i32 = arith.constant 0 : i32
    %c0_i32_0 = arith.constant 0 : i32
    %c0_i32_1 = arith.constant 0 : i32
    return %c0_i32, %c0_i32_0 : i32, i32
  }
  func.func @transform_6(%arg0: i32) -> (i32, i32) {
    %c0_i32 = arith.constant 0 : i32
    %c0_i32_0 = arith.constant 0 : i32
    %c0_i32_1 = arith.constant 0 : i32
    return %c0_i32, %c0_i32_0 : i32, i32
  }
  func.func @transform_7(%arg0: i32) -> (i32, i32, i32) {
    %c0_i32 = arith.constant 0 : i32
    %c0_i32_0 = arith.constant 0 : i32
    %c0_i32_1 = arith.constant 0 : i32
    return %arg0, %c0_i32, %c0_i32_0 : i32, i32, i32
  }
}

module attributes {stable_mosaic.version = 11 : i64} {
  func.func @_fc_fused_kernel(%arg0: i32, %arg1: memref<16x6272xbf16, #tpu.memory_space<vmem>>, %arg2: memref<6272x64xbf16, #tpu.memory_space<vmem>>, %arg3: memref<1x64xf32, #tpu.memory_space<vmem>>, %arg4: memref<64x128xbf16, #tpu.memory_space<vmem>>, %arg5: memref<1x128xf32, #tpu.memory_space<vmem>>, %arg6: memref<16x128xf32, #tpu.memory_space<vmem>>) attributes {dimension_semantics = [#tpu.dimension_semantics<parallel>], iteration_bounds = array<i64: 1>, scalar_prefetch = 0 : i64, scratch_operands = 0 : i64, tpu.core_type = #tpu.core_type<tc>, window_params = [{transform_indices = @transform_0, window_bounds = array<i64: 16, 6272>}, {pipeline_mode = #tpu.pipeline_mode<synchronous>, transform_indices = @transform_1, window_bounds = array<i64: 6272, 64>}, {pipeline_mode = #tpu.pipeline_mode<synchronous>, transform_indices = @transform_2, window_bounds = array<i64: 1, 64>}, {pipeline_mode = #tpu.pipeline_mode<synchronous>, transform_indices = @transform_3, window_bounds = array<i64: 64, 128>}, {pipeline_mode = #tpu.pipeline_mode<synchronous>, transform_indices = @transform_4, window_bounds = array<i64: 1, 128>}, {transform_indices = @transform_5, window_bounds = array<i64: 16, 128>}]} {
    %c0 = arith.constant 0 : index
    %c0_0 = arith.constant 0 : index
    %0 = vector.load %arg1[%c0, %c0_0] : memref<16x6272xbf16, #tpu.memory_space<vmem>>, vector<16x6272xbf16>
    %c0_1 = arith.constant 0 : index
    %c0_2 = arith.constant 0 : index
    %1 = vector.load %arg2[%c0_1, %c0_2] : memref<6272x64xbf16, #tpu.memory_space<vmem>>, vector<6272x64xbf16>
    %cst = arith.constant dense<0.000000e+00> : vector<16x64xf32>
    %2 = tpu.matmul %0, %1, %cst {dimension_numbers = #tpu.dot_dimension_numbers<[1], [0], [0], [1], [0, 0, 1, 1], [], []>} : vector<16x6272xbf16>, vector<6272x64xbf16>, vector<16x64xf32> -> vector<16x64xf32>
    %c0_3 = arith.constant 0 : index
    %c0_4 = arith.constant 0 : index
    %3 = vector.load %arg3[%c0_3, %c0_4] : memref<1x64xf32, #tpu.memory_space<vmem>>, vector<1x64xf32>
    %4 = vector.broadcast %3 : vector<1x64xf32> to vector<16x64xf32>
    %5 = arith.addf %2, %4 : vector<16x64xf32>
    %cst_5 = arith.constant 0.000000e+00 : f32
    %6 = vector.broadcast %cst_5 : f32 to vector<16x64xf32>
    %7 = arith.maximumf %5, %6 : vector<16x64xf32>
    %8 = arith.truncf %7 : vector<16x64xf32> to vector<16x64xbf16>
    %c0_6 = arith.constant 0 : index
    %c0_7 = arith.constant 0 : index
    %9 = vector.load %arg4[%c0_6, %c0_7] : memref<64x128xbf16, #tpu.memory_space<vmem>>, vector<64x128xbf16>
    %cst_8 = arith.constant dense<0.000000e+00> : vector<16x128xf32>
    %10 = tpu.matmul %8, %9, %cst_8 {dimension_numbers = #tpu.dot_dimension_numbers<[1], [0], [0], [1], [0, 0, 1, 1], [], []>} : vector<16x64xbf16>, vector<64x128xbf16>, vector<16x128xf32> -> vector<16x128xf32>
    %c0_9 = arith.constant 0 : index
    %c0_10 = arith.constant 0 : index
    %11 = vector.load %arg5[%c0_9, %c0_10] : memref<1x128xf32, #tpu.memory_space<vmem>>, vector<1x128xf32>
    %12 = vector.broadcast %11 : vector<1x128xf32> to vector<16x128xf32>
    %13 = arith.addf %10, %12 : vector<16x128xf32>
    %c0_11 = arith.constant 0 : index
    %c0_12 = arith.constant 0 : index
    %14 = vector.load %arg6[%c0_11, %c0_12] : memref<16x128xf32, #tpu.memory_space<vmem>>, vector<16x128xf32>
    tpu.vector_store %arg6[%c0_11, %c0_12], %13 {strides = array<i32>} : memref<16x128xf32, #tpu.memory_space<vmem>>, vector<16x128xf32>,
    return
  }
  func.func @transform_0(%arg0: i32) -> (i32, i32) {
    %c0_i32 = arith.constant 0 : i32
    %c0_i32_0 = arith.constant 0 : i32
    return %arg0, %c0_i32 : i32, i32
  }
  func.func @transform_1(%arg0: i32) -> (i32, i32) {
    %c0_i32 = arith.constant 0 : i32
    %c0_i32_0 = arith.constant 0 : i32
    %c0_i32_1 = arith.constant 0 : i32
    return %c0_i32, %c0_i32_0 : i32, i32
  }
  func.func @transform_2(%arg0: i32) -> (i32, i32) {
    %c0_i32 = arith.constant 0 : i32
    %c0_i32_0 = arith.constant 0 : i32
    %c0_i32_1 = arith.constant 0 : i32
    return %c0_i32, %c0_i32_0 : i32, i32
  }
  func.func @transform_3(%arg0: i32) -> (i32, i32) {
    %c0_i32 = arith.constant 0 : i32
    %c0_i32_0 = arith.constant 0 : i32
    %c0_i32_1 = arith.constant 0 : i32
    return %c0_i32, %c0_i32_0 : i32, i32
  }
  func.func @transform_4(%arg0: i32) -> (i32, i32) {
    %c0_i32 = arith.constant 0 : i32
    %c0_i32_0 = arith.constant 0 : i32
    %c0_i32_1 = arith.constant 0 : i32
    return %c0_i32, %c0_i32_0 : i32, i32
  }
  func.func @transform_5(%arg0: i32) -> (i32, i32) {
    %c0_i32 = arith.constant 0 : i32
    %c0_i32_0 = arith.constant 0 : i32
    return %arg0, %c0_i32 : i32, i32
  }
}

</mosaic_0001>

<llo_original>
// kernel: _lambda_.2
$region0: #{_lambda_.2}
  #allocation0 [shape = 'u32[]', space=smem, size = 0x4, offset = 0x4, fixed_abs, tag = 'smem constant byte address 0x4 - core index']
  #allocation1 [shape = 'u32[144,128]{1,0:T(1,128)}', space=vmem, size = 0x12000, scoped, tag = 'internal scratch']
  %s0 = inlined_call_operand.vmem [shape: u8[2,100,1024], index: 0, kind: input, shape index: {}]
  %s1 = inlined_call_operand.vmem [shape: bf16[256,64], index: 1, kind: input, shape index: {}]
  %s2 = inlined_call_operand.vmem [shape: f32[1,256], index: 2, kind: input, shape index: {}]
  %s3 = inlined_call_operand.vmem [shape: bf16[1024,128], index: 3, kind: input, shape index: {}]
  %s4 = inlined_call_operand.vmem [shape: f32[1,128], index: 4, kind: input, shape index: {}]
  %s5 = inlined_call_operand.vmem [shape: bf16[1152,128], index: 5, kind: input, shape index: {}]
  %s6 = inlined_call_operand.vmem [shape: f32[1,128], index: 6, kind: input, shape index: {}]
  %s7 = inlined_call_operand.vmem [shape: bf16[2,49,128], index: 7, kind: output, shape index: {}]
  %s8 = sld [smem:[#allocation0]]
  $region61: #{_lambda_.2} parent=0
    _
  %s10 = ssub.s32 1, %s8
  %s11 = scalar_select 0, %s10, %s8
  loop: start=0, step=1, limit=4
  $region2: #{_lambda_.2} parent=0 // loop_pre_header
    _
  $region3: #{_lambda_.2} parent=0 // loop_header
    %s13 = sphi 0, %s17
    %p14 = scmp.ge.s32.totalorder %s13, 4
    %s23 = sphi 0, %s25
    %s26 = sphi 0, %s23
    %s27 = sphi 0, %s26
    %s43 = sphi 0, %s27
    %s47 = sphi 0, %s47
    %s49 = sphi 0, %s47
    %s50 = sphi 0, %s49
    %s64 = sphi 0, %s50
    %s68 = sphi 0, %s68
    %s70 = sphi 0, %s68
    %s71 = sphi 0, %s70
    %s85 = sphi 0, %s71
    %s89 = sphi 0, %s89
    %s91 = sphi 0, %s89
    %s92 = sphi 0, %s91
    %s106 = sphi 0, %s92
    %s110 = sphi 0, %s110
    %s112 = sphi 0, %s110
    %s113 = sphi 0, %s112
    %s127 = sphi 0, %s113
    %s131 = sphi 0, %s131
    %s133 = sphi 0, %s131
    %s134 = sphi 0, %s133
    %s148 = sphi 0, %s134
    %s152 = sphi 0, %s152
    %s154 = sphi 0, %s152
    %s155 = sphi 0, %s154
    %s169 = sphi 0, %s155
    %s175 = sphi 0, %s177
    %s178 = sphi 0, %s175
    %s179 = sphi 0, %s178
    %s195 = sphi 0, %s179
  $region4: #{_lambda_.2} parent=0 // loop_header_branch
    %16 = sbr.rel (%p14) target = $region8
  $region5: #{_lambda_.2} parent=0 // loop_body
    %s18 = ssub.s32 %s13, 1
    %s19 = ssub.s32 %s13, 2
    %s20 = sadd.s32 %s13, 1
    %s21 = ssub.s32 %s13, %s20
    %p22 = scmp.eq.s32.totalorder %s21, 0
    %s24 = sadd.s32 %s23, 1
    %s25 = scalar_select %p22, %s23, %s24
    %p28 = pneg %p22
    %p29 = scmp.eq.s32.totalorder %s13, 1
    %p30 = por %p28, %p29
    %p31 = scmp.ne.s32.totalorder %s23, %s26
    %p32 = scmp.eq.s32.totalorder %s13, 0
    %p33 = por %p31, %p32
    %p34 = scmp.ne.s32.totalorder %s23, %s26
    %p35 = scmp.eq.s32.totalorder %s18, 1
    %p36 = por %p34, %p35
    %p37 = scmp.ne.s32.totalorder %s26, %s27
    %p38 = scmp.eq.s32.totalorder %s18, 0
    %p39 = por %p37, %p38
    %p40 = scmp.ne.s32.totalorder %s26, %s27
    %p41 = scmp.eq.s32.totalorder %s19, 1
    %p42 = por %p40, %p41
    %p44 = scmp.ne.s32.totalorder %s27, %s43
    %p45 = scmp.eq.s32.totalorder %s19, 0
    %p46 = por %p44, %p45
    %s48 = sadd.s32 %s47, 1
    %p51 = scmp.eq.s32.totalorder %s13, 1
    %p52 = scmp.ne.s32.totalorder %s47, %s49
    %p53 = scmp.eq.s32.totalorder %s13, 0
    %p54 = por %p52, %p53
    %p55 = scmp.ne.s32.totalorder %s47, %s49
    %p56 = scmp.eq.s32.totalorder %s18, 1
    %p57 = por %p55, %p56
    %p58 = scmp.ne.s32.totalorder %s49, %s50
    %p59 = scmp.eq.s32.totalorder %s18, 0
    %p60 = por %p58, %p59
    %p61 = scmp.ne.s32.totalorder %s49, %s50
    %p62 = scmp.eq.s32.totalorder %s19, 1
    %p63 = por %p61, %p62
    %p65 = scmp.ne.s32.totalorder %s50, %s64
    %p66 = scmp.eq.s32.totalorder %s19, 0
    %p67 = por %p65, %p66
    %s69 = sadd.s32 %s68, 1
    %p72 = scmp.eq.s32.totalorder %s13, 1
    %p73 = scmp.ne.s32.totalorder %s68, %s70
    %p74 = scmp.eq.s32.totalorder %s13, 0
    %p75 = por %p73, %p74
    %p76 = scmp.ne.s32.totalorder %s68, %s70
    %p77 = scmp.eq.s32.totalorder %s18, 1
    %p78 = por %p76, %p77
    %p79 = scmp.ne.s32.totalorder %s70, %s71
    %p80 = scmp.eq.s32.totalorder %s18, 0
    %p81 = por %p79, %p80
    %p82 = scmp.ne.s32.totalorder %s70, %s71
    %p83 = scmp.eq.s32.totalorder %s19, 1
    %p84 = por %p82, %p83
    %p86 = scmp.ne.s32.totalorder %s71, %s85
    %p87 = scmp.eq.s32.totalorder %s19, 0
    %p88 = por %p86, %p87
    %s90 = sadd.s32 %s89, 1
    %p93 = scmp.eq.s32.totalorder %s13, 1
    %p94 = scmp.ne.s32.totalorder %s89, %s91
    %p95 = scmp.eq.s32.totalorder %s13, 0
    %p96 = por %p94, %p95
    %p97 = scmp.ne.s32.totalorder %s89, %s91
    %p98 = scmp.eq.s32.totalorder %s18, 1
    %p99 = por %p97, %p98
    %p100 = scmp.ne.s32.totalorder %s91, %s92
    %p101 = scmp.eq.s32.totalorder %s18, 0
    %p102 = por %p100, %p101
    %p103 = scmp.ne.s32.totalorder %s91, %s92
    %p104 = scmp.eq.s32.totalorder %s19, 1
    %p105 = por %p103, %p104
    %p107 = scmp.ne.s32.totalorder %s92, %s106
    %p108 = scmp.eq.s32.totalorder %s19, 0
    %p109 = por %p107, %p108
    %s111 = sadd.s32 %s110, 1
    %p114 = scmp.eq.s32.totalorder %s13, 1
    %p115 = scmp.ne.s32.totalorder %s110, %s112
    %p116 = scmp.eq.s32.totalorder %s13, 0
    %p117 = por %p115, %p116
    %p118 = scmp.ne.s32.totalorder %s110, %s112
    %p119 = scmp.eq.s32.totalorder %s18, 1
    %p120 = por %p118, %p119
    %p121 = scmp.ne.s32.totalorder %s112, %s113
    %p122 = scmp.eq.s32.totalorder %s18, 0
    %p123 = por %p121, %p122
    %p124 = scmp.ne.s32.totalorder %s112, %s113
    %p125 = scmp.eq.s32.totalorder %s19, 1
    %p126 = por %p124, %p125
    %p128 = scmp.ne.s32.totalorder %s113, %s127
    %p129 = scmp.eq.s32.totalorder %s19, 0
    %p130 = por %p128, %p129
    %s132 = sadd.s32 %s131, 1
    %p135 = scmp.eq.s32.totalorder %s13, 1
    %p136 = scmp.ne.s32.totalorder %s131, %s133
    %p137 = scmp.eq.s32.totalorder %s13, 0
    %p138 = por %p136, %p137
    %p139 = scmp.ne.s32.totalorder %s131, %s133
    %p140 = scmp.eq.s32.totalorder %s18, 1
    %p141 = por %p139, %p140
    %p142 = scmp.ne.s32.totalorder %s133, %s134
    %p143 = scmp.eq.s32.totalorder %s18, 0
    %p144 = por %p142, %p143
    %p145 = scmp.ne.s32.totalorder %s133, %s134
    %p146 = scmp.eq.s32.totalorder %s19, 1
    %p147 = por %p145, %p146
    %p149 = scmp.ne.s32.totalorder %s134, %s148
    %p150 = scmp.eq.s32.totalorder %s19, 0
    %p151 = por %p149, %p150
    %s153 = sadd.s32 %s152, 1
    %p156 = scmp.eq.s32.totalorder %s13, 1
    %p157 = scmp.ne.s32.totalorder %s152, %s154
    %p158 = scmp.eq.s32.totalorder %s13, 0
    %p159 = por %p157, %p158
    %p160 = scmp.ne.s32.totalorder %s152, %s154
    %p161 = scmp.eq.s32.totalorder %s18, 1
    %p162 = por %p160, %p161
    %p163 = scmp.ne.s32.totalorder %s154, %s155
    %p164 = scmp.eq.s32.totalorder %s18, 0
    %p165 = por %p163, %p164
    %p166 = scmp.ne.s32.totalorder %s154, %s155
    %p167 = scmp.eq.s32.totalorder %s19, 1
    %p168 = por %p166, %p167
    %p170 = scmp.ne.s32.totalorder %s155, %s169
    %p171 = scmp.eq.s32.totalorder %s19, 0
    %p172 = por %p170, %p171
    %s173 = ssub.s32 %s13, %s20
    %p174 = scmp.eq.s32.totalorder %s173, 0
    %s176 = sadd.s32 %s175, 1
    %s177 = scalar_select %p174, %s175, %s176
    %p180 = pneg %p174
    %p181 = scmp.eq.s32.totalorder %s13, 1
    %p182 = por %p180, %p181
    %p183 = scmp.ne.s32.totalorder %s175, %s178
    %p184 = scmp.eq.s32.totalorder %s13, 0
    %p185 = por %p183, %p184
    %p186 = scmp.ne.s32.totalorder %s175, %s178
    %p187 = scmp.eq.s32.totalorder %s18, 1
    %p188 = por %p186, %p187
    %p189 = scmp.ne.s32.totalorder %s178, %s179
    %p190 = scmp.eq.s32.totalorder %s18, 0
    %p191 = por %p189, %p190
    %p192 = scmp.ne.s32.totalorder %s178, %s179
    %p193 = scmp.eq.s32.totalorder %s19, 1
    %p194 = por %p192, %p193
    %p196 = scmp.ne.s32.totalorder %s179, %s195
    %p197 = scmp.eq.s32.totalorder %s19, 0
    %p198 = por %p196, %p197
    %p199 = scmp.le.s32.totalorder 1, %s13
    %p200 = scmp.lt.s32.totalorder %s13, 3
    %p201 = pnand %p199, %p200
    %p202 = pneg %p201
    // Predicated region
    $region9: #{_lambda_.2} parent=5 // pred_check
      _
    $region10: #{_lambda_.2} parent=5 // pred_check_branch
      %204 = sbr.rel (%p201) target = $region12
    $region11: #{_lambda_.2} parent=5 // pred_region
      %s205 = ssub.s32 %s13, 1
      // Predicated region
      $region13: #{_lambda_.2} parent=11 // pred_check
        %p206 = pneg %p60
      $region14: #{_lambda_.2} parent=11 // pred_check_branch
        %208 = sbr.rel (%p206) target = $region16
      $region15: #{_lambda_.2} parent=11 // pred_region
        _
      $region16: #{_lambda_.2} parent=11 // pred_fallthru
        _
      // Predicated region
      $region17: #{_lambda_.2} parent=11 // pred_check
        %p209 = pneg %p81
      $region18: #{_lambda_.2} parent=11 // pred_check_branch
        %211 = sbr.rel (%p209) target = $region20
      $region19: #{_lambda_.2} parent=11 // pred_region
        _
      $region20: #{_lambda_.2} parent=11 // pred_fallthru
        _
      // Predicated region
      $region21: #{_lambda_.2} parent=11 // pred_check
        %p212 = pneg %p102
      $region22: #{_lambda_.2} parent=11 // pred_check_branch
        %214 = sbr.rel (%p212) target = $region24
      $region23: #{_lambda_.2} parent=11 // pred_region
        _
      $region24: #{_lambda_.2} parent=11 // pred_fallthru
        _
      // Predicated region
      $region25: #{_lambda_.2} parent=11 // pred_check
        %p215 = pneg %p123
      $region26: #{_lambda_.2} parent=11 // pred_check_branch
        %217 = sbr.rel (%p215) target = $region28
      $region27: #{_lambda_.2} parent=11 // pred_region
        _
      $region28: #{_lambda_.2} parent=11 // pred_fallthru
        _
      // Predicated region
      $region29: #{_lambda_.2} parent=11 // pred_check
        %p218 = pneg %p144
      $region30: #{_lambda_.2} parent=11 // pred_check_branch
        %220 = sbr.rel (%p218) target = $region32
      $region31: #{_lambda_.2} parent=11 // pred_region
        _
      $region32: #{_lambda_.2} parent=11 // pred_fallthru
        _
      // Predicated region
      $region33: #{_lambda_.2} parent=11 // pred_check
        %p221 = pneg %p165
      $region34: #{_lambda_.2} parent=11 // pred_check_branch
        %223 = sbr.rel (%p221) target = $region36
      $region35: #{_lambda_.2} parent=11 // pred_region
        _
      $region36: #{_lambda_.2} parent=11 // pred_fallthru
        _
    $region12: #{_lambda_.2} parent=5 // pred_fallthru
      _
    %p224 = scmp.lt.s32.totalorder %s13, 2
    // Predicated region
    $region37: #{_lambda_.2} parent=5 // pred_check
      %p225 = pneg %p224
    $region38: #{_lambda_.2} parent=5 // pred_check_branch
      %227 = sbr.rel (%p225) target = $region40
    $region39: #{_lambda_.2} parent=5 // pred_region
      // Predicated region
      $region41: #{_lambda_.2} parent=39 // pred_check
        %p228 = pneg %p33
      $region42: #{_lambda_.2} parent=39 // pred_check_branch
        %230 = sbr.rel (%p228) target = $region44
      $region43: #{_lambda_.2} parent=39 // pred_region
        %p231 = scmp.lt.s32.totalorder %s13, 1
        %s232 = scalar_select %p231, %s13, 1
        %s233 = smul.addr %s232, 104
        %s234 = smul.addr %s233, 2
        %s235 = scalar_lea.vmem %s0, %s234
      $region44: #{_lambda_.2} parent=39 // pred_fallthru
        _
    $region40: #{_lambda_.2} parent=5 // pred_fallthru
      _
    %p236 = scmp.le.s32.totalorder 1, %s13
    %p237 = scmp.lt.s32.totalorder %s13, 3
    %p238 = pnand %p236, %p237
    %p239 = pneg %p238
    // Predicated region
    $region45: #{_lambda_.2} parent=5 // pred_check
      _
    $region46: #{_lambda_.2} parent=5 // pred_check_branch
      %241 = sbr.rel (%p238) target = $region48
    $region47: #{_lambda_.2} parent=5 // pred_region
      %s242 = ssub.s32 %s13, 1
      %p243 = scmp.lt.s32.totalorder %s18, 1
      %s244 = scalar_select %p243, %s18, 1
      %s245 = smul.addr %s244, 104
      %s246 = smul.addr %s245, 2
      %s247 = scalar_lea.vmem %s0, %s246
      %p248 = pneg %p39
      %p249 = pneg %p36
      %p250 = pneg %p60
      %p251 = pneg %p57
      %p252 = pneg %p81
      %p253 = pneg %p78
      %p254 = pneg %p102
      %p255 = pneg %p99
      %p256 = pneg %p123
      %p257 = pneg %p120
      %p258 = pneg %p144
      %p259 = pneg %p141
      %p260 = pneg %p165
      %p261 = pneg %p162
      %p262 = pneg %p191
      %p263 = pneg %p188
      %p264 = scmp.lt.s32.totalorder %s18, 1
      %s265 = scalar_select %p264, %s18, 1
      %s266 = smul.addr %s265, 7
      %s267 = smul.addr %s266, 4
      %s268 = scalar_lea.vmem %s7, %s267
      %p269 = scmp.lt.s32.totalorder %s18, 1
      %s270 = scalar_select %p269, %s18, 1
      %s271 = smul.addr %s270, 104
      %s272 = smul.addr %s271, 2
      %s273 = scalar_lea.vmem %s0, %s272
      %p274 = scmp.lt.s32.totalorder %s18, 1
      %s275 = scalar_select %p274, %s18, 1
      %s276 = smul.addr %s275, 7
      %s277 = smul.addr %s276, 4
      %s278 = scalar_lea.vmem %s7, %s277
      %v280 = vld [vmem:[%s273] sm:$0xff]
      %v281 = vld [vmem:[%s273 + $0x8] sm:$0xff]
      %v282 = vld [vmem:[%s273 + $0x10] sm:$0xff]
      %v283 = vld [vmem:[%s273 + $0x18] sm:$0xff]
      %v284 = vld [vmem:[%s273 + $0x20] sm:$0xff]
      %v285 = vld [vmem:[%s273 + $0x28] sm:$0xff]
      %v286 = vld [vmem:[%s273 + $0x30] sm:$0xff]
      %v287 = vld [vmem:[%s273 + $0x38] sm:$0xff]
      %v288 = vld [vmem:[%s273 + $0x40] sm:$0xff]
      %v289 = vld [vmem:[%s273 + $0x48] sm:$0xff]
      %v290 = vld [vmem:[%s273 + $0x50] sm:$0xff]
      %v291 = vld [vmem:[%s273 + $0x58] sm:$0xff]
      %v292 = vld [vmem:[%s273 + $0x60] sm:$0xff]
      %v293 = vld [vmem:[%s273 + $0x68] sm:$0xff]
      %v294 = vld [vmem:[%s273 + $0x70] sm:$0xff]
      %v295 = vld [vmem:[%s273 + $0x78] sm:$0xff]
      %v296 = vld [vmem:[%s273 + $0x80] sm:$0xff]
      %v297 = vld [vmem:[%s273 + $0x88] sm:$0xff]
      %v298 = vld [vmem:[%s273 + $0x90] sm:$0xff]
      %v299 = vld [vmem:[%s273 + $0x98] sm:$0xff]
      %v300 = vld [vmem:[%s273 + $0xa0] sm:$0xff]
      %v301 = vld [vmem:[%s273 + $0xa8] sm:$0xff]
      %v302 = vld [vmem:[%s273 + $0xb0] sm:$0xff]
      %v303 = vld [vmem:[%s273 + $0xb8] sm:$0xff]
      %v304 = vld [vmem:[%s273 + $0xc0] sm:$0x55]
      %v305 = vld [vmem:[%s273 + $0xc8] sm:$0x55]
      %v306 = vunpack.c.l.u8.bf16 %v280
      %v307 = vunpack.c.h.u8.bf16 %v280
      %v308 = vunpack.c.l.u8.bf16 %v281
      %v309 = vunpack.c.h.u8.bf16 %v281
      %v310 = vunpack.c.l.u8.bf16 %v282
      %v311 = vunpack.c.h.u8.bf16 %v282
      %v312 = vunpack.c.l.u8.bf16 %v283
      %v313 = vunpack.c.h.u8.bf16 %v283
      %v314 = vunpack.c.l.u8.bf16 %v284
      %v315 = vunpack.c.h.u8.bf16 %v284
      %v316 = vunpack.c.l.u8.bf16 %v285
      %v317 = vunpack.c.h.u8.bf16 %v285
      %v318 = vunpack.c.l.u8.bf16 %v286
      %v319 = vunpack.c.h.u8.bf16 %v286
      %v320 = vunpack.c.l.u8.bf16 %v287
      %v321 = vunpack.c.h.u8.bf16 %v287
      %v322 = vunpack.c.l.u8.bf16 %v288
      %v323 = vunpack.c.h.u8.bf16 %v288
      %v324 = vunpack.c.l.u8.bf16 %v289
      %v325 = vunpack.c.h.u8.bf16 %v289
      %v326 = vunpack.c.l.u8.bf16 %v290
      %v327 = vunpack.c.h.u8.bf16 %v290
      %v328 = vunpack.c.l.u8.bf16 %v291
      %v329 = vunpack.c.h.u8.bf16 %v291
      %v330 = vunpack.c.l.u8.bf16 %v292
      %v331 = vunpack.c.h.u8.bf16 %v292
      %v332 = vunpack.c.l.u8.bf16 %v293
      %v333 = vunpack.c.h.u8.bf16 %v293
      %v334 = vunpack.c.l.u8.bf16 %v294
      %v335 = vunpack.c.h.u8.bf16 %v294
      %v336 = vunpack.c.l.u8.bf16 %v295
      %v337 = vunpack.c.h.u8.bf16 %v295
      %v338 = vunpack.c.l.u8.bf16 %v296
      %v339 = vunpack.c.h.u8.bf16 %v296
      %v340 = vunpack.c.l.u8.bf16 %v297
      %v341 = vunpack.c.h.u8.bf16 %v297
      %v342 = vunpack.c.l.u8.bf16 %v298
      %v343 = vunpack.c.h.u8.bf16 %v298
      %v344 = vunpack.c.l.u8.bf16 %v299
      %v345 = vunpack.c.h.u8.bf16 %v299
      %v346 = vunpack.c.l.u8.bf16 %v300
      %v347 = vunpack.c.h.u8.bf16 %v300
      %v348 = vunpack.c.l.u8.bf16 %v301
      %v349 = vunpack.c.h.u8.bf16 %v301
      %v350 = vunpack.c.l.u8.bf16 %v302
      %v351 = vunpack.c.h.u8.bf16 %v302
      %v352 = vunpack.c.l.u8.bf16 %v303
      %v353 = vunpack.c.h.u8.bf16 %v303
      %v354 = vunpack.c.l.u8.bf16 %v304
      %v355 = vunpack.c.h.u8.bf16 %v304
      %v356 = vunpack.c.l.u8.bf16 %v305
      %v357 = vunpack.c.h.u8.bf16 %v305
      %v358 = vld [vmem:[%s1] sm:$0xf]
      %v359 = vld [vmem:[%s1 + $0x4] sm:$0xf]
      %v360 = vld [vmem:[%s1 + $0x8] sm:$0xf]
      %v361 = vld [vmem:[%s1 + $0xc] sm:$0xf]
      %v362 = vld [vmem:[%s1 + $0x10] sm:$0xf]
      %v363 = vld [vmem:[%s1 + $0x14] sm:$0xf]
      %v364 = vld [vmem:[%s1 + $0x18] sm:$0xf]
      %v365 = vld [vmem:[%s1 + $0x1c] sm:$0xf]
      %v366 = vld [vmem:[%s1 + $0x20] sm:$0xf]
      %v367 = vld [vmem:[%s1 + $0x24] sm:$0xf]
      %v368 = vld [vmem:[%s1 + $0x28] sm:$0xf]
      %v369 = vld [vmem:[%s1 + $0x2c] sm:$0xf]
      %v370 = vld [vmem:[%s1 + $0x30] sm:$0xf]
      %v371 = vld [vmem:[%s1 + $0x34] sm:$0xf]
      %v372 = vld [vmem:[%s1 + $0x38] sm:$0xf]
      %v373 = vld [vmem:[%s1 + $0x3c] sm:$0xf]
      %v374 = vld [vmem:[%s1 + $0x40] sm:$0xf]
      %v375 = vld [vmem:[%s1 + $0x44] sm:$0xf]
      %v376 = vld [vmem:[%s1 + $0x48] sm:$0xf]
      %v377 = vld [vmem:[%s1 + $0x4c] sm:$0xf]
      %v378 = vld [vmem:[%s1 + $0x50] sm:$0xf]
      %v379 = vld [vmem:[%s1 + $0x54] sm:$0xf]
      %v380 = vld [vmem:[%s1 + $0x58] sm:$0xf]
      %v381 = vld [vmem:[%s1 + $0x5c] sm:$0xf]
      %v382 = vld [vmem:[%s1 + $0x60] sm:$0xf]
      %v383 = vld [vmem:[%s1 + $0x64] sm:$0xf]
      %v384 = vld [vmem:[%s1 + $0x68] sm:$0xf]
      %v385 = vld [vmem:[%s1 + $0x6c] sm:$0xf]
      %v386 = vld [vmem:[%s1 + $0x70] sm:$0xf]
      %v387 = vld [vmem:[%s1 + $0x74] sm:$0xf]
      %v388 = vld [vmem:[%s1 + $0x78] sm:$0xf]
      %v389 = vld [vmem:[%s1 + $0x7c] sm:$0xf]
      %v403 = vunpack.c.l.b16 %v306
      %v404 = vunpack.c.h.b16 %v306
      %v405 = vunpack.c.l.b16 %v310
      %v406 = vunpack.c.h.b16 %v310
      %v407 = vunpack.c.l.b16 %v314
      %v408 = vunpack.c.h.b16 %v314
      %v409 = vunpack.c.l.b16 %v318
      %v410 = vunpack.c.h.b16 %v318
      %v411 = vunpack.c.l.b16 %v322
      %v412 = vunpack.c.h.b16 %v322
      %v413 = vunpack.c.l.b16 %v326
      %v414 = vunpack.c.h.b16 %v326
      %v415 = vunpack.c.l.b16 %v330
      %v416 = vunpack.c.h.b16 %v330
      %v417 = vunpack.c.l.b16 %v334
      %v418 = vunpack.c.h.b16 %v334
      %v419 = vunpack.c.l.b16 %v338
      %v420 = vunpack.c.h.b16 %v338
      %v421 = vunpack.c.l.b16 %v342
      %v422 = vunpack.c.h.b16 %v342
      %v423 = vunpack.c.l.b16 %v346
      %v424 = vunpack.c.h.b16 %v346
      %v425 = vunpack.c.l.b16 %v350
      %v426 = vunpack.c.h.b16 %v350
      %v427 = vunpack.c.l.b16 %v354
      %v428 = vunpack.c.h.b16 %v354
      %v429 = vpack.c.b16 %v405, %v403
      %v430 = vpack.c.b16 %v406, %v404
      %v431 = vpack.c.b16 %v409, %v407
      %v432 = vpack.c.b16 %v410, %v408
      %v433 = vpack.c.b16 %v413, %v411
      %v434 = vpack.c.b16 %v414, %v412
      %v435 = vpack.c.b16 %v417, %v415
      %v436 = vpack.c.b16 %v418, %v416
      %v437 = vpack.c.b16 %v421, %v419
      %v438 = vpack.c.b16 %v422, %v420
      %v439 = vpack.c.b16 %v425, %v423
      %v440 = vpack.c.b16 %v426, %v424
      %v441 = vpack.c.b16 %v427, %v427
      %v442 = vpack.c.b16 %v428, %v428
      %v489 = vunpack.c.l.b16 %v358
      %v490 = vunpack.c.l.b16 %v359
      %v491 = vunpack.c.l.b16 %v360
      %v492 = vunpack.c.l.b16 %v361
      %v493 = vunpack.c.l.b16 %v362
      %v494 = vunpack.c.l.b16 %v363
      %v495 = vunpack.c.l.b16 %v364
      %v496 = vunpack.c.l.b16 %v365
      %v497 = vunpack.c.l.b16 %v366
      %v498 = vunpack.c.l.b16 %v367
      %v499 = vunpack.c.l.b16 %v368
      %v500 = vunpack.c.l.b16 %v369
      %v501 = vunpack.c.l.b16 %v370
      %v502 = vunpack.c.l.b16 %v371
      %v503 = vunpack.c.l.b16 %v372
      %v504 = vunpack.c.l.b16 %v373
      %v505 = vunpack.c.l.b16 %v374
      %v506 = vunpack.c.l.b16 %v375
      %v507 = vunpack.c.l.b16 %v376
      %v508 = vunpack.c.l.b16 %v377
      %v509 = vunpack.c.l.b16 %v378
      %v510 = vunpack.c.l.b16 %v379
      %v511 = vunpack.c.l.b16 %v380
      %v512 = vunpack.c.l.b16 %v381
      %v513 = vunpack.c.l.b16 %v382
      %v514 = vunpack.c.l.b16 %v383
      %v515 = vunpack.c.l.b16 %v384
      %v516 = vunpack.c.l.b16 %v385
      %v517 = vunpack.c.l.b16 %v386
      %v518 = vunpack.c.l.b16 %v387
      %v519 = vunpack.c.l.b16 %v388
      %v520 = vunpack.c.l.b16 %v389
      %v521 = vpack.c.b16 %v490, %v489
      %v522 = vpack.c.b16 %v492, %v491
      %v523 = vpack.c.b16 %v494, %v493
      %v524 = vpack.c.b16 %v496, %v495
      %v525 = vpack.c.b16 %v498, %v497
      %v526 = vpack.c.b16 %v500, %v499
      %v527 = vpack.c.b16 %v502, %v501
      %v528 = vpack.c.b16 %v504, %v503
      %v529 = vpack.c.b16 %v506, %v505
      %v530 = vpack.c.b16 %v508, %v507
      %v531 = vpack.c.b16 %v510, %v509
      %v532 = vpack.c.b16 %v512, %v511
      %v533 = vpack.c.b16 %v514, %v513
      %v534 = vpack.c.b16 %v516, %v515
      %v535 = vpack.c.b16 %v518, %v517
      %v536 = vpack.c.b16 %v520, %v519
      %553 = vmatprep.subr.bf16.mxu0 0
      %554 = vmatpush1.bf16.msra.mxu0 %v521
      %555 = vmatprep.subr.bf16.mxu0 0
      %556 = vmatpush1.bf16.msra.mxu0 %v522
      %557 = vmatprep.subr.bf16.mxu0 0
      %558 = vmatpush1.bf16.msra.mxu0 %v523
      %559 = vmatprep.subr.bf16.mxu0 0
      %560 = vmatpush1.bf16.msra.mxu0 %v524
      %561 = vmatprep.subr.bf16.mxu0 0
      %562 = vmatpush1.bf16.msra.mxu0 %v525
      %563 = vmatprep.subr.bf16.mxu0 0
      %564 = vmatpush1.bf16.msra.mxu0 %v526
      %565 = vmatprep.subr.bf16.mxu0 0
      %566 = vmatpush1.bf16.msra.mxu0 %v527
      %567 = vmatprep.subr.bf16.mxu0 0
      %568 = vmatpush1.bf16.msra.mxu0 %v528
      %569 = vmatprep.subr.bf16.mxu0 0
      %570 = vmatpush1.bf16.msra.mxu0 %v529
      %571 = vmatprep.subr.bf16.mxu0 0
      %572 = vmatpush1.bf16.msra.mxu0 %v530
      %573 = vmatprep.subr.bf16.mxu0 0
      %574 = vmatpush1.bf16.msra.mxu0 %v531
      %575 = vmatprep.subr.bf16.mxu0 0
      %576 = vmatpush1.bf16.msra.mxu0 %v532
      %577 = vmatprep.subr.bf16.mxu0 0
      %578 = vmatpush1.bf16.msra.mxu0 %v533
      %579 = vmatprep.subr.bf16.mxu0 0
      %580 = vmatpush1.bf16.msra.mxu0 %v534
      %581 = vmatprep.subr.bf16.mxu0 0
      %582 = vmatpush1.bf16.msra.mxu0 %v535
      %583 = vmatprep.subr.bf16.mxu0 0
      %584 = vmatpush1.bf16.msra.mxu0 %v536
      %585 = vmatprep.mubr.bf16.mxu0 %v430
      %586 = vmatmul.mubr.bf16.gmra.mrb[0].mxu0 %v429
      %v587 = vpop.f32.mrb[0].mxu0
      %v588 = vadd.f32 0.0, %v587
      %v589 = vpop.f32.mrb[0].mxu0
      %v590 = vpop.f32.mrb[0].mxu0
      %v591 = vadd.f32 0.0, %v590
      %v592 = vpop.f32.mrb[0].mxu0
      %593 = vmatprep.mubr.bf16.mxu0 %v432
      %594 = vmatmul.mubr.bf16.gmra.mrb[0].mxu0 %v431
      %v595 = vpop.f32.mrb[0].mxu0
      %v596 = vadd.f32 0.0, %v595
      %v597 = vpop.f32.mrb[0].mxu0
      %v598 = vpop.f32.mrb[0].mxu0
      %v599 = vadd.f32 0.0, %v598
      %v600 = vpop.f32.mrb[0].mxu0
      %601 = vmatprep.mubr.bf16.mxu0 %v434
      %602 = vmatmul.mubr.bf16.gmra.mrb[0].mxu0 %v433
      %v603 = vpop.f32.mrb[0].mxu0
      %v604 = vadd.f32 0.0, %v603
      %v605 = vpop.f32.mrb[0].mxu0
      %v606 = vpop.f32.mrb[0].mxu0
      %v607 = vadd.f32 0.0, %v606
      %v608 = vpop.f32.mrb[0].mxu0
      %609 = vmatprep.mubr.bf16.mxu0 %v436
      %610 = vmatmul.mubr.bf16.gmra.mrb[0].mxu0 %v435
      %v611 = vpop.f32.mrb[0].mxu0
      %v612 = vadd.f32 0.0, %v611
      %v613 = vpop.f32.mrb[0].mxu0
      %v614 = vpop.f32.mrb[0].mxu0
      %v615 = vadd.f32 0.0, %v614
      %v616 = vpop.f32.mrb[0].mxu0
      %617 = vmatprep.mubr.bf16.mxu0 %v438
      %618 = vmatmul.mubr.bf16.gmra.mrb[0].mxu0 %v437
      %v619 = vpop.f32.mrb[0].mxu0
      %v620 = vadd.f32 0.0, %v619
      %v621 = vpop.f32.mrb[0].mxu0
      %v622 = vpop.f32.mrb[0].mxu0
      %v623 = vadd.f32 0.0, %v622
      %v624 = vpop.f32.mrb[0].mxu0
      %625 = vmatprep.mubr.bf16.mxu0 %v440
      %626 = vmatmul.mubr.bf16.gmra.mrb[0].mxu0 %v439
      %v627 = vpop.f32.mrb[0].mxu0
      %v628 = vadd.f32 0.0, %v627
      %v629 = vpop.f32.mrb[0].mxu0
      %v630 = vpop.f32.mrb[0].mxu0
      %v631 = vadd.f32 0.0, %v630
      %v632 = vpop.f32.mrb[0].mxu0
      %633 = vmatprep.mubr.bf16.mxu0 %v442
      %634 = vmatmul.mubr.bf16.gmra.mrb[0].mxu0 %v441
      %v635 = vpop.f32.mrb[0].mxu0
      %v636 = vadd.f32 0.0, %v635
      %v637 = vpop.f32.mrb[0].mxu0
      %v638 = vpop.f32.mrb[0].mxu0
      %v639 = vpop.f32.mrb[0].mxu0
      %640 = vdwg.mxu0
      %v654 = vunpack.c.l.b16 %v307
      %v655 = vunpack.c.h.b16 %v307
      %v656 = vunpack.c.l.b16 %v311
      %v657 = vunpack.c.h.b16 %v311
      %v658 = vunpack.c.l.b16 %v315
      %v659 = vunpack.c.h.b16 %v315
      %v660 = vunpack.c.l.b16 %v319
      %v661 = vunpack.c.h.b16 %v319
      %v662 = vunpack.c.l.b16 %v323
      %v663 = vunpack.c.h.b16 %v323
      %v664 = vunpack.c.l.b16 %v327
      %v665 = vunpack.c.h.b16 %v327
      %v666 = vunpack.c.l.b16 %v331
      %v667 = vunpack.c.h.b16 %v331
      %v668 = vunpack.c.l.b16 %v335
      %v669 = vunpack.c.h.b16 %v335
      %v670 = vunpack.c.l.b16 %v339
      %v671 = vunpack.c.h.b16 %v339
      %v672 = vunpack.c.l.b16 %v343
      %v673 = vunpack.c.h.b16 %v343
      %v674 = vunpack.c.l.b16 %v347
      %v675 = vunpack.c.h.b16 %v347
      %v676 = vunpack.c.l.b16 %v351
      %v677 = vunpack.c.h.b16 %v351
      %v678 = vunpack.c.l.b16 %v355
      %v679 = vunpack.c.h.b16 %v355
      %v680 = vpack.c.b16 %v656, %v654
      %v681 = vpack.c.b16 %v657, %v655
      %v682 = vpack.c.b16 %v660, %v658
      %v683 = vpack.c.b16 %v661, %v659
      %v684 = vpack.c.b16 %v664, %v662
      %v685 = vpack.c.b16 %v665, %v663
      %v686 = vpack.c.b16 %v668, %v666
      %v687 = vpack.c.b16 %v669, %v667
      %v688 = vpack.c.b16 %v672, %v670
      %v689 = vpack.c.b16 %v673, %v671
      %v690 = vpack.c.b16 %v676, %v674
      %v691 = vpack.c.b16 %v677, %v675
      %v692 = vpack.c.b16 %v678, %v678
      %v693 = vpack.c.b16 %v679, %v679
      %708 = vmatprep.subr.bf16.mxu0 0
      %709 = vmatpush1.bf16.msra.mxu0 %v521
      %710 = vmatprep.subr.bf16.mxu0 0
      %711 = vmatpush1.bf16.msra.mxu0 %v522
      %712 = vmatprep.subr.bf16.mxu0 0
      %713 = vmatpush1.bf16.msra.mxu0 %v523
      %714 = vmatprep.subr.bf16.mxu0 0
      %715 = vmatpush1.bf16.msra.mxu0 %v524
      %716 = vmatprep.subr.bf16.mxu0 0
      %717 = vmatpush1.bf16.msra.mxu0 %v525
      %718 = vmatprep.subr.bf16.mxu0 0
      %719 = vmatpush1.bf16.msra.mxu0 %v526
      %720 = vmatprep.subr.bf16.mxu0 0
      %721 = vmatpush1.bf16.msra.mxu0 %v527
      %722 = vmatprep.subr.bf16.mxu0 0
      %723 = vmatpush1.bf16.msra.mxu0 %v528
      %724 = vmatprep.subr.bf16.mxu0 0
      %725 = vmatpush1.bf16.msra.mxu0 %v529
      %726 = vmatprep.subr.bf16.mxu0 0
      %727 = vmatpush1.bf16.msra.mxu0 %v530
      %728 = vmatprep.subr.bf16.mxu0 0
      %729 = vmatpush1.bf16.msra.mxu0 %v531
      %730 = vmatprep.subr.bf16.mxu0 0
      %731 = vmatpush1.bf16.msra.mxu0 %v532
      %732 = vmatprep.subr.bf16.mxu0 0
      %733 = vmatpush1.bf16.msra.mxu0 %v533
      %734 = vmatprep.subr.bf16.mxu0 0
      %735 = vmatpush1.bf16.msra.mxu0 %v534
      %736 = vmatprep.subr.bf16.mxu0 0
      %737 = vmatpush1.bf16.msra.mxu0 %v535
      %738 = vmatprep.subr.bf16.mxu0 0
      %739 = vmatpush1.bf16.msra.mxu0 %v536
      %740 = vmatprep.mubr.bf16.mxu0 %v681
      %741 = vmatmul.mubr.bf16.gmra.mrb[0].mxu0 %v680
      %v742 = vpop.f32.mrb[0].mxu0
      %v743 = vadd.f32 0.0, %v742
      %v744 = vpop.f32.mrb[0].mxu0
      %v745 = vpop.f32.mrb[0].mxu0
      %v746 = vadd.f32 0.0, %v745
      %v747 = vpop.f32.mrb[0].mxu0
      %748 = vmatprep.mubr.bf16.mxu0 %v683
      %749 = vmatmul.mubr.bf16.gmra.mrb[0].mxu0 %v682
      %v750 = vpop.f32.mrb[0].mxu0
      %v751 = vadd.f32 0.0, %v750
      %v752 = vpop.f32.mrb[0].mxu0
      %v753 = vpop.f32.mrb[0].mxu0
      %v754 = vadd.f32 0.0, %v753
      %v755 = vpop.f32.mrb[0].mxu0
      %756 = vmatprep.mubr.bf16.mxu0 %v685
      %757 = vmatmul.mubr.bf16.gmra.mrb[0].mxu0 %v684
      %v758 = vpop.f32.mrb[0].mxu0
      %v759 = vadd.f32 0.0, %v758
      %v760 = vpop.f32.mrb[0].mxu0
      %v761 = vpop.f32.mrb[0].mxu0
      %v762 = vadd.f32 0.0, %v761
      %v763 = vpop.f32.mrb[0].mxu0
      %764 = vmatprep.mubr.bf16.mxu0 %v687
      %765 = vmatmul.mubr.bf16.gmra.mrb[0].mxu0 %v686
      %v766 = vpop.f32.mrb[0].mxu0
      %v767 = vadd.f32 0.0, %v766
      %v768 = vpop.f32.mrb[0].mxu0
      %v769 = vpop.f32.mrb[0].mxu0
      %v770 = vadd.f32 0.0, %v769
      %v771 = vpop.f32.mrb[0].mxu0
      %772 = vmatprep.mubr.bf16.mxu0 %v689
      %773 = vmatmul.mubr.bf16.gmra.mrb[0].mxu0 %v688
      %v774 = vpop.f32.mrb[0].mxu0
      %v775 = vadd.f32 0.0, %v774
      %v776 = vpop.f32.mrb[0].mxu0
      %v777 = vpop.f32.mrb[0].mxu0
      %v778 = vadd.f32 0.0, %v777
      %v779 = vpop.f32.mrb[0].mxu0
      %780 = vmatprep.mubr.bf16.mxu0 %v691
      %781 = vmatmul.mubr.bf16.gmra.mrb[0].mxu0 %v690
      %v782 = vpop.f32.mrb[0].mxu0
      %v783 = vadd.f32 0.0, %v782
      %v784 = vpop.f32.mrb[0].mxu0
      %v785 = vpop.f32.mrb[0].mxu0
      %v786 = vadd.f32 0.0, %v785
      %v787 = vpop.f32.mrb[0].mxu0
      %788 = vmatprep.mubr.bf16.mxu0 %v693
      %789 = vmatmul.mubr.bf16.gmra.mrb[0].mxu0 %v692
      %v790 = vpop.f32.mrb[0].mxu0
      %v791 = vadd.f32 0.0, %v790
      %v792 = vpop.f32.mrb[0].mxu0
      %v793 = vpop.f32.mrb[0].mxu0
      %v794 = vpop.f32.mrb[0].mxu0
      %795 = vdwg.mxu0
      %v809 = vunpack.c.l.b16 %v308
      %v810 = vunpack.c.h.b16 %v308
      %v811 = vunpack.c.l.b16 %v312
      %v812 = vunpack.c.h.b16 %v312
      %v813 = vunpack.c.l.b16 %v316
      %v814 = vunpack.c.h.b16 %v316
      %v815 = vunpack.c.l.b16 %v320
      %v816 = vunpack.c.h.b16 %v320
      %v817 = vunpack.c.l.b16 %v324
      %v818 = vunpack.c.h.b16 %v324
      %v819 = vunpack.c.l.b16 %v328
      %v820 = vunpack.c.h.b16 %v328
      %v821 = vunpack.c.l.b16 %v332
      %v822 = vunpack.c.h.b16 %v332
      %v823 = vunpack.c.l.b16 %v336
      %v824 = vunpack.c.h.b16 %v336
      %v825 = vunpack.c.l.b16 %v340
      %v826 = vunpack.c.h.b16 %v340
      %v827 = vunpack.c.l.b16 %v344
      %v828 = vunpack.c.h.b16 %v344
      %v829 = vunpack.c.l.b16 %v348
      %v830 = vunpack.c.h.b16 %v348
      %v831 = vunpack.c.l.b16 %v352
      %v832 = vunpack.c.h.b16 %v352
      %v833 = vunpack.c.l.b16 %v356
      %v834 = vunpack.c.h.b16 %v356
      %v835 = vpack.c.b16 %v811, %v809
      %v836 = vpack.c.b16 %v812, %v810
      %v837 = vpack.c.b16 %v815, %v813
      %v838 = vpack.c.b16 %v816, %v814
      %v839 = vpack.c.b16 %v819, %v817
      %v840 = vpack.c.b16 %v820, %v818
      %v841 = vpack.c.b16 %v823, %v821
      %v842 = vpack.c.b16 %v824, %v822
      %v843 = vpack.c.b16 %v827, %v825
      %v844 = vpack.c.b16 %v828, %v826
      %v845 = vpack.c.b16 %v831, %v829
      %v846 = vpack.c.b16 %v832, %v830
      %v847 = vpack.c.b16 %v833, %v833
      %v848 = vpack.c.b16 %v834, %v834
      %863 = vmatprep.subr.bf16.mxu0 0
      %864 = vmatpush1.bf16.msra.mxu0 %v521
      %865 = vmatprep.subr.bf16.mxu0 0
      %866 = vmatpush1.bf16.msra.mxu0 %v522
      %867 = vmatprep.subr.bf16.mxu0 0
      %868 = vmatpush1.bf16.msra.mxu0 %v523
      %869 = vmatprep.subr.bf16.mxu0 0
      %870 = vmatpush1.bf16.msra.mxu0 %v524
      %871 = vmatprep.subr.bf16.mxu0 0
      %872 = vmatpush1.bf16.msra.mxu0 %v525
      %873 = vmatprep.subr.bf16.mxu0 0
      %874 = vmatpush1.bf16.msra.mxu0 %v526
      %875 = vmatprep.subr.bf16.mxu0 0
      %876 = vmatpush1.bf16.msra.mxu0 %v527
      %877 = vmatprep.subr.bf16.mxu0 0
      %878 = vmatpush1.bf16.msra.mxu0 %v528
      %879 = vmatprep.subr.bf16.mxu0 0
      %880 = vmatpush1.bf16.msra.mxu0 %v529
      %881 = vmatprep.subr.bf16.mxu0 0
      %882 = vmatpush1.bf16.msra.mxu0 %v530
      %883 = vmatprep.subr.bf16.mxu0 0
      %884 = vmatpush1.bf16.msra.mxu0 %v531
      %885 = vmatprep.subr.bf16.mxu0 0
      %886 = vmatpush1.bf16.msra.mxu0 %v532
      %887 = vmatprep.subr.bf16.mxu0 0
      %888 = vmatpush1.bf16.msra.mxu0 %v533
      %889 = vmatprep.subr.bf16.mxu0 0
      %890 = vmatpush1.bf16.msra.mxu0 %v534
      %891 = vmatprep.subr.bf16.mxu0 0
      %892 = vmatpush1.bf16.msra.mxu0 %v535
      %893 = vmatprep.subr.bf16.mxu0 0
      %894 = vmatpush1.bf16.msra.mxu0 %v536
      %895 = vmatprep.mubr.bf16.mxu0 %v836
      %896 = vmatmul.mubr.bf16.gmra.mrb[0].mxu0 %v835
      %v897 = vpop.f32.mrb[0].mxu0
      %v898 = vadd.f32 0.0, %v897
      %v899 = vpop.f32.mrb[0].mxu0
      %v900 = vpop.f32.mrb[0].mxu0
      %v901 = vadd.f32 0.0, %v900
      %v902 = vpop.f32.mrb[0].mxu0
      %903 = vmatprep.mubr.bf16.mxu0 %v838
      %904 = vmatmul.mubr.bf16.gmra.mrb[0].mxu0 %v837
      %v905 = vpop.f32.mrb[0].mxu0
      %v906 = vadd.f32 0.0, %v905
      %v907 = vpop.f32.mrb[0].mxu0
      %v908 = vpop.f32.mrb[0].mxu0
      %v909 = vadd.f32 0.0, %v908
      %v910 = vpop.f32.mrb[0].mxu0
      %911 = vmatprep.mubr.bf16.mxu0 %v840
      %912 = vmatmul.mubr.bf16.gmra.mrb[0].mxu0 %v839
      %v913 = vpop.f32.mrb[0].mxu0
      %v914 = vadd.f32 0.0, %v913
      %v915 = vpop.f32.mrb[0].mxu0
      %v916 = vpop.f32.mrb[0].mxu0
      %v917 = vadd.f32 0.0, %v916
      %v918 = vpop.f32.mrb[0].mxu0
      %919 = vmatprep.mubr.bf16.mxu0 %v842
      %920 = vmatmul.mubr.bf16.gmra.mrb[0].mxu0 %v841
      %v921 = vpop.f32.mrb[0].mxu0
      %v922 = vadd.f32 0.0, %v921
      %v923 = vpop.f32.mrb[0].mxu0
      %v924 = vpop.f32.mrb[0].mxu0
      %v925 = vadd.f32 0.0, %v924
      %v926 = vpop.f32.mrb[0].mxu0
      %927 = vmatprep.mubr.bf16.mxu0 %v844
      %928 = vmatmul.mubr.bf16.gmra.mrb[0].mxu0 %v843
      %v929 = vpop.f32.mrb[0].mxu0
      %v930 = vadd.f32 0.0, %v929
      %v931 = vpop.f32.mrb[0].mxu0
      %v932 = vpop.f32.mrb[0].mxu0
      %v933 = vadd.f32 0.0, %v932
      %v934 = vpop.f32.mrb[0].mxu0
      %935 = vmatprep.mubr.bf16.mxu0 %v846
      %936 = vmatmul.mubr.bf16.gmra.mrb[0].mxu0 %v845
      %v937 = vpop.f32.mrb[0].mxu0
      %v938 = vadd.f32 0.0, %v937
      %v939 = vpop.f32.mrb[0].mxu0
      %v940 = vpop.f32.mrb[0].mxu0
      %v941 = vadd.f32 0.0, %v940
      %v942 = vpop.f32.mrb[0].mxu0
      %943 = vmatprep.mubr.bf16.mxu0 %v848
      %944 = vmatmul.mubr.bf16.gmra.mrb[0].mxu0 %v847
      %v945 = vpop.f32.mrb[0].mxu0
      %v946 = vadd.f32 0.0, %v945
      %v947 = vpop.f32.mrb[0].mxu0
      %v948 = vpop.f32.mrb[0].mxu0
      %v949 = vpop.f32.mrb[0].mxu0
      %950 = vdwg.mxu0
      %v964 = vunpack.c.l.b16 %v309
      %v965 = vunpack.c.h.b16 %v309
      %v966 = vunpack.c.l.b16 %v313
      %v967 = vunpack.c.h.b16 %v313
      %v968 = vunpack.c.l.b16 %v317
      %v969 = vunpack.c.h.b16 %v317
      %v970 = vunpack.c.l.b16 %v321
      %v971 = vunpack.c.h.b16 %v321
      %v972 = vunpack.c.l.b16 %v325
      %v973 = vunpack.c.h.b16 %v325
      %v974 = vunpack.c.l.b16 %v329
      %v975 = vunpack.c.h.b16 %v329
      %v976 = vunpack.c.l.b16 %v333
      %v977 = vunpack.c.h.b16 %v333
      %v978 = vunpack.c.l.b16 %v337
      %v979 = vunpack.c.h.b16 %v337
      %v980 = vunpack.c.l.b16 %v341
      %v981 = vunpack.c.h.b16 %v341
      %v982 = vunpack.c.l.b16 %v345
      %v983 = vunpack.c.h.b16 %v345
      %v984 = vunpack.c.l.b16 %v349
      %v985 = vunpack.c.h.b16 %v349
      %v986 = vunpack.c.l.b16 %v353
      %v987 = vunpack.c.h.b16 %v353
      %v988 = vunpack.c.l.b16 %v357
      %v989 = vunpack.c.h.b16 %v357
      %v990 = vpack.c.b16 %v966, %v964
      %v991 = vpack.c.b16 %v967, %v965
      %v992 = vpack.c.b16 %v970, %v968
      %v993 = vpack.c.b16 %v971, %v969
      %v994 = vpack.c.b16 %v974, %v972
      %v995 = vpack.c.b16 %v975, %v973
      %v996 = vpack.c.b16 %v978, %v976
      %v997 = vpack.c.b16 %v979, %v977
      %v998 = vpack.c.b16 %v982, %v980
      %v999 = vpack.c.b16 %v983, %v981
      %v1000 = vpack.c.b16 %v986, %v984
      %v1001 = vpack.c.b16 %v987, %v985
      %v1002 = vpack.c.b16 %v988, %v988
      %v1003 = vpack.c.b16 %v989, %v989
      %1018 = vmatprep.subr.bf16.mxu0 0
      %1019 = vmatpush1.bf16.msra.mxu0 %v521
      %1020 = vmatprep.subr.bf16.mxu0 0
      %1021 = vmatpush1.bf16.msra.mxu0 %v522
      %1022 = vmatprep.subr.bf16.mxu0 0
      %1023 = vmatpush1.bf16.msra.mxu0 %v523
      %1024 = vmatprep.subr.bf16.mxu0 0
      %1025 = vmatpush1.bf16.msra.mxu0 %v524
      %1026 = vmatprep.subr.bf16.mxu0 0
      %1027 = vmatpush1.bf16.msra.mxu0 %v525
      %1028 = vmatprep.subr.bf16.mxu0 0
      %1029 = vmatpush1.bf16.msra.mxu0 %v526
      %1030 = vmatprep.subr.bf16.mxu0 0
      %1031 = vmatpush1.bf16.msra.mxu0 %v527
      %1032 = vmatprep.subr.bf16.mxu0 0
      %1033 = vmatpush1.bf16.msra.mxu0 %v528
      %1034 = vmatprep.subr.bf16.mxu0 0
      %1035 = vmatpush1.bf16.msra.mxu0 %v529
      %1036 = vmatprep.subr.bf16.mxu0 0
      %1037 = vmatpush1.bf16.msra.mxu0 %v530
      %1038 = vmatprep.subr.bf16.mxu0 0
      %1039 = vmatpush1.bf16.msra.mxu0 %v531
      %1040 = vmatprep.subr.bf16.mxu0 0
      %1041 = vmatpush1.bf16.msra.mxu0 %v532
      %1042 = vmatprep.subr.bf16.mxu0 0
      %1043 = vmatpush1.bf16.msra.mxu0 %v533
      %1044 = vmatprep.subr.bf16.mxu0 0
      %1045 = vmatpush1.bf16.msra.mxu0 %v534
      %1046 = vmatprep.subr.bf16.mxu0 0
      %1047 = vmatpush1.bf16.msra.mxu0 %v535
      %1048 = vmatprep.subr.bf16.mxu0 0
      %1049 = vmatpush1.bf16.msra.mxu0 %v536
      %1050 = vmatprep.mubr.bf16.mxu0 %v991
      %1051 = vmatmul.mubr.bf16.gmra.mrb[0].mxu0 %v990
      %v1052 = vpop.f32.mrb[0].mxu0
      %v1053 = vadd.f32 0.0, %v1052
      %v1054 = vpop.f32.mrb[0].mxu0
      %v1055 = vpop.f32.mrb[0].mxu0
      %v1056 = vadd.f32 0.0, %v1055
      %v1057 = vpop.f32.mrb[0].mxu0
      %1058 = vmatprep.mubr.bf16.mxu0 %v993
      %1059 = vmatmul.mubr.bf16.gmra.mrb[0].mxu0 %v992
      %v1060 = vpop.f32.mrb[0].mxu0
      %v1061 = vadd.f32 0.0, %v1060
      %v1062 = vpop.f32.mrb[0].mxu0
      %v1063 = vpop.f32.mrb[0].mxu0
      %v1064 = vadd.f32 0.0, %v1063
      %v1065 = vpop.f32.mrb[0].mxu0
      %1066 = vmatprep.mubr.bf16.mxu0 %v995
      %1067 = vmatmul.mubr.bf16.gmra.mrb[0].mxu0 %v994
      %v1068 = vpop.f32.mrb[0].mxu0
      %v1069 = vadd.f32 0.0, %v1068
      %v1070 = vpop.f32.mrb[0].mxu0
      %v1071 = vpop.f32.mrb[0].mxu0
      %v1072 = vadd.f32 0.0, %v1071
      %v1073 = vpop.f32.mrb[0].mxu0
      %1074 = vmatprep.mubr.bf16.mxu0 %v997
      %1075 = vmatmul.mubr.bf16.gmra.mrb[0].mxu0 %v996
      %v1076 = vpop.f32.mrb[0].mxu0
      %v1077 = vadd.f32 0.0, %v1076
      %v1078 = vpop.f32.mrb[0].mxu0
      %v1079 = vpop.f32.mrb[0].mxu0
      %v1080 = vadd.f32 0.0, %v1079
      %v1081 = vpop.f32.mrb[0].mxu0
      %1082 = vmatprep.mubr.bf16.mxu0 %v999
      %1083 = vmatmul.mubr.bf16.gmra.mrb[0].mxu0 %v998
      %v1084 = vpop.f32.mrb[0].mxu0
      %v1085 = vadd.f32 0.0, %v1084
      %v1086 = vpop.f32.mrb[0].mxu0
      %v1087 = vpop.f32.mrb[0].mxu0
      %v1088 = vadd.f32 0.0, %v1087
      %v1089 = vpop.f32.mrb[0].mxu0
      %1090 = vmatprep.mubr.bf16.mxu0 %v1001
      %1091 = vmatmul.mubr.bf16.gmra.mrb[0].mxu0 %v1000
      %v1092 = vpop.f32.mrb[0].mxu0
      %v1093 = vadd.f32 0.0, %v1092
      %v1094 = vpop.f32.mrb[0].mxu0
      %v1095 = vpop.f32.mrb[0].mxu0
      %v1096 = vadd.f32 0.0, %v1095
      %v1097 = vpop.f32.mrb[0].mxu0
      %1098 = vmatprep.mubr.bf16.mxu0 %v1003
      %1099 = vmatmul.mubr.bf16.gmra.mrb[0].mxu0 %v1002
      %v1100 = vpop.f32.mrb[0].mxu0
      %v1101 = vadd.f32 0.0, %v1100
      %v1102 = vpop.f32.mrb[0].mxu0
      %v1103 = vpop.f32.mrb[0].mxu0
      %v1104 = vpop.f32.mrb[0].mxu0
      %1105 = vdwg.mxu0
      %1119 = vrot.lane.b32.xlu0 %v743, 64
      %v1120 = vpop.permute.xlu0 %1119
      %1121 = vrot.lane.b32.xlu0 %v746, 64
      %v1122 = vpop.permute.xlu0 %1121
      %1123 = vrot.lane.b32.xlu0 %v751, 64
      %v1124 = vpop.permute.xlu0 %1123
      %1125 = vrot.lane.b32.xlu0 %v754, 64
      %v1126 = vpop.permute.xlu0 %1125
      %1127 = vrot.lane.b32.xlu0 %v759, 64
      %v1128 = vpop.permute.xlu0 %1127
      %1129 = vrot.lane.b32.xlu0 %v762, 64
      %v1130 = vpop.permute.xlu0 %1129
      %1131 = vrot.lane.b32.xlu0 %v767, 64
      %v1132 = vpop.permute.xlu0 %1131
      %1133 = vrot.lane.b32.xlu0 %v770, 64
      %v1134 = vpop.permute.xlu0 %1133
      %1135 = vrot.lane.b32.xlu0 %v775, 64
      %v1136 = vpop.permute.xlu0 %1135
      %1137 = vrot.lane.b32.xlu0 %v778, 64
      %v1138 = vpop.permute.xlu0 %1137
      %1139 = vrot.lane.b32.xlu0 %v783, 64
      %v1140 = vpop.permute.xlu0 %1139
      %1141 = vrot.lane.b32.xlu0 %v786, 64
      %v1142 = vpop.permute.xlu0 %1141
      %1143 = vrot.lane.b32.xlu0 %v791, 64
      %v1144 = vpop.permute.xlu0 %1143
      %1171 = vrot.lane.b32.xlu0 %v1053, 64
      %v1172 = vpop.permute.xlu0 %1171
      %1173 = vrot.lane.b32.xlu0 %v1056, 64
      %v1174 = vpop.permute.xlu0 %1173
      %1175 = vrot.lane.b32.xlu0 %v1061, 64
      %v1176 = vpop.permute.xlu0 %1175
      %1177 = vrot.lane.b32.xlu0 %v1064, 64
      %v1178 = vpop.permute.xlu0 %1177
      %1179 = vrot.lane.b32.xlu0 %v1069, 64
      %v1180 = vpop.permute.xlu0 %1179
      %1181 = vrot.lane.b32.xlu0 %v1072, 64
      %v1182 = vpop.permute.xlu0 %1181
      %1183 = vrot.lane.b32.xlu0 %v1077, 64
      %v1184 = vpop.permute.xlu0 %1183
      %1185 = vrot.lane.b32.xlu0 %v1080, 64
      %v1186 = vpop.permute.xlu0 %1185
      %1187 = vrot.lane.b32.xlu0 %v1085, 64
      %v1188 = vpop.permute.xlu0 %1187
      %1189 = vrot.lane.b32.xlu0 %v1088, 64
      %v1190 = vpop.permute.xlu0 %1189
      %1191 = vrot.lane.b32.xlu0 %v1093, 64
      %v1192 = vpop.permute.xlu0 %1191
      %1193 = vrot.lane.b32.xlu0 %v1096, 64
      %v1194 = vpop.permute.xlu0 %1193
      %1195 = vrot.lane.b32.xlu0 %v1101, 64
      %v1196 = vpop.permute.xlu0 %1195
      %vm1210 = vcmask 523264
      %v1211 = vsel %vm1210, %v588, %v1120
      %v1212 = vsel %vm1210, %v591, %v1122
      %v1213 = vsel %vm1210, %v596, %v1124
      %v1214 = vsel %vm1210, %v599, %v1126
      %v1215 = vsel %vm1210, %v604, %v1128
      %v1216 = vsel %vm1210, %v607, %v1130
      %v1217 = vsel %vm1210, %v612, %v1132
      %v1218 = vsel %vm1210, %v615, %v1134
      %v1219 = vsel %vm1210, %v620, %v1136
      %v1220 = vsel %vm1210, %v623, %v1138
      %v1221 = vsel %vm1210, %v628, %v1140
      %v1222 = vsel %vm1210, %v631, %v1142
      %v1223 = vsel %vm1210, %v636, %v1144
      %v1224 = vsel %vm1210, %v898, %v1172
      %v1225 = vsel %vm1210, %v901, %v1174
      %v1226 = vsel %vm1210, %v906, %v1176
      %v1227 = vsel %vm1210, %v909, %v1178
      %v1228 = vsel %vm1210, %v914, %v1180
      %v1229 = vsel %vm1210, %v917, %v1182
      %v1230 = vsel %vm1210, %v922, %v1184
      %v1231 = vsel %vm1210, %v925, %v1186
      %v1232 = vsel %vm1210, %v930, %v1188
      %v1233 = vsel %vm1210, %v933, %v1190
      %v1234 = vsel %vm1210, %v938, %v1192
      %v1235 = vsel %vm1210, %v941, %v1194
      %v1236 = vsel %vm1210, %v946, %v1196
      %v1237 = vld [vmem:[%s2] sm:$0x3]
      %v1239 = vlaneseq
      %v1240 = vshrl.u32 %v1239, 7
      %v1241 = vsub.s32 0, %v1240
      %v1242 = vrot.slane %v1237, %v1241
      %v1243 = vlaneseq
      %v1244 = vshrl.u32 %v1243, 7
      %v1245 = vsub.s32 1, %v1244
      %v1246 = vrot.slane %v1237, %v1245
      %v1249 = vadd.f32 %v1211, %v1242
      %v1250 = vadd.f32 %v1224, %v1246
      %v1251 = vadd.f32 %v1212, %v1242
      %v1252 = vadd.f32 %v1225, %v1246
      %v1253 = vadd.f32 %v1213, %v1242
      %v1254 = vadd.f32 %v1226, %v1246
      %v1255 = vadd.f32 %v1214, %v1242
      %v1256 = vadd.f32 %v1227, %v1246
      %v1257 = vadd.f32 %v1215, %v1242
      %v1258 = vadd.f32 %v1228, %v1246
      %v1259 = vadd.f32 %v1216, %v1242
      %v1260 = vadd.f32 %v1229, %v1246
      %v1261 = vadd.f32 %v1217, %v1242
      %v1262 = vadd.f32 %v1230, %v1246
      %v1263 = vadd.f32 %v1218, %v1242
      %v1264 = vadd.f32 %v1231, %v1246
      %v1265 = vadd.f32 %v1219, %v1242
      %v1266 = vadd.f32 %v1232, %v1246
      %v1267 = vadd.f32 %v1220, %v1242
      %v1268 = vadd.f32 %v1233, %v1246
      %v1269 = vadd.f32 %v1221, %v1242
      %v1270 = vadd.f32 %v1234, %v1246
      %v1271 = vadd.f32 %v1222, %v1242
      %v1272 = vadd.f32 %v1235, %v1246
      %v1273 = vadd.f32 %v1223, %v1242
      %v1274 = vadd.f32 %v1236, %v1246
      %v1275 = vmax.f32 %v1249, 0.0
      %v1276 = vmax.f32 %v1250, 0.0
      %v1277 = vmax.f32 %v1251, 0.0
      %v1278 = vmax.f32 %v1252, 0.0
      %v1279 = vmax.f32 %v1253, 0.0
      %v1280 = vmax.f32 %v1254, 0.0
      %v1281 = vmax.f32 %v1255, 0.0
      %v1282 = vmax.f32 %v1256, 0.0
      %v1283 = vmax.f32 %v1257, 0.0
      %v1284 = vmax.f32 %v1258, 0.0
      %v1285 = vmax.f32 %v1259, 0.0
      %v1286 = vmax.f32 %v1260, 0.0
      %v1287 = vmax.f32 %v1261, 0.0
      %v1288 = vmax.f32 %v1262, 0.0
      %v1289 = vmax.f32 %v1263, 0.0
      %v1290 = vmax.f32 %v1264, 0.0
      %v1291 = vmax.f32 %v1265, 0.0
      %v1292 = vmax.f32 %v1266, 0.0
      %v1293 = vmax.f32 %v1267, 0.0
      %v1294 = vmax.f32 %v1268, 0.0
      %v1295 = vmax.f32 %v1269, 0.0
      %v1296 = vmax.f32 %v1270, 0.0
      %v1297 = vmax.f32 %v1271, 0.0
      %v1298 = vmax.f32 %v1272, 0.0
      %v1299 = vmax.f32 %v1273, 0.0
      %v1300 = vmax.f32 %v1274, 0.0
      %v1301 = vpack.c.bf16 %v1277, %v1275
      %v1302 = vpack.c.bf16 %v1278, %v1276
      %v1303 = vpack.c.bf16 %v1281, %v1279
      %v1304 = vpack.c.bf16 %v1282, %v1280
      %v1305 = vpack.c.bf16 %v1285, %v1283
      %v1306 = vpack.c.bf16 %v1286, %v1284
      %v1307 = vpack.c.bf16 %v1289, %v1287
      %v1308 = vpack.c.bf16 %v1290, %v1288
      %v1309 = vpack.c.bf16 %v1293, %v1291
      %v1310 = vpack.c.bf16 %v1294, %v1292
      %v1311 = vpack.c.bf16 %v1297, %v1295
      %v1312 = vpack.c.bf16 %v1298, %v1296
      %v1313 = vpack.c.bf16 %v1299, %v1299
      %v1314 = vpack.c.bf16 %v1300, %v1300
      %v1316 = vshrl.u32 %v1301, 16
      %v1318 = vshll.u32 %v1301, 16
      %v1320 = vrot.slane %v1318, 1
      %v1321 = vor.u32 %v1316, %v1320
      %v1323 = vshrl.u32 %v1302, 16
      %v1325 = vshll.u32 %v1302, 16
      %v1327 = vrot.slane %v1325, 1
      %v1328 = vor.u32 %v1323, %v1327
      %vm1335 = vcmask 1042432
      %v1336 = vrot.slane %v1301, 5
      %v1337 = vrot.slane %v1303, 5
      %v1338 = vsel %vm1335, %v1336, %v1337
      %v1339 = vrot.slane %v1302, 5
      %v1340 = vrot.slane %v1304, 5
      %v1341 = vsel %vm1335, %v1339, %v1340
      %vm1344 = vsmask.f32 2304
      %v1345 = vrot.slane %v1316, 5
      %v1346 = vrot.slane %v1318, 6
      %v1347 = vor.u32 %v1345, %v1346
      %v1349 = vshrl.u32 %v1303, 16
      %v1351 = vrot.slane %v1349, 5
      %v1352 = vshll.u32 %v1303, 16
      %v1354 = vrot.slane %v1352, 6
      %v1355 = vor.u32 %v1351, %v1354
      %v1356 = vsel %vm1344, %v1347, %v1355
      %v1357 = vrot.slane %v1323, 5
      %v1358 = vrot.slane %v1325, 6
      %v1359 = vor.u32 %v1357, %v1358
      %v1361 = vshrl.u32 %v1304, 16
      %v1363 = vrot.slane %v1361, 5
      %v1364 = vshll.u32 %v1304, 16
      %v1366 = vrot.slane %v1364, 6
      %v1367 = vor.u32 %v1363, %v1366
      %v1368 = vsel %vm1344, %v1359, %v1367
      %vm1371 = vsmask.f32 7424
      %v1372 = vrot.slane %v1352, 1
      %v1373 = vsel %vm1371, %v1321, %v1372
      %v1374 = vrot.slane %v1364, 1
      %v1375 = vsel %vm1371, %v1328, %v1374
      %v1376 = vor.u32 %v1349, %v1372
      %v1377 = vor.u32 %v1361, %v1374
      %v1380 = vrot.slane %v1305, 5
      %v1381 = vsel %vm1335, %v1337, %v1380
      %v1382 = vrot.slane %v1306, 5
      %v1383 = vsel %vm1335, %v1340, %v1382
      %v1385 = vshrl.u32 %v1305, 16
      %v1387 = vrot.slane %v1385, 5
      %v1388 = vshll.u32 %v1305, 16
      %v1390 = vrot.slane %v1388, 6
      %v1391 = vor.u32 %v1387, %v1390
      %v1392 = vsel %vm1344, %v1351, %v1391
      %v1394 = vshrl.u32 %v1306, 16
      %v1396 = vrot.slane %v1394, 5
      %v1397 = vshll.u32 %v1306, 16
      %v1399 = vrot.slane %v1397, 6
      %v1400 = vor.u32 %v1396, %v1399
      %v1401 = vsel %vm1344, %v1363, %v1400
      %v1402 = vrot.slane %v1388, 1
      %v1403 = vsel %vm1371, %v1349, %v1402
      %v1404 = vrot.slane %v1397, 1
      %v1405 = vsel %vm1371, %v1361, %v1404
      %v1406 = vor.u32 %v1385, %v1402
      %v1407 = vor.u32 %v1394, %v1404
      %v1410 = vrot.slane %v1307, 5
      %v1411 = vsel %vm1335, %v1380, %v1410
      %v1412 = vrot.slane %v1308, 5
      %v1413 = vsel %vm1335, %v1382, %v1412
      %v1415 = vshrl.u32 %v1307, 16
      %v1417 = vrot.slane %v1415, 5
      %v1418 = vshll.u32 %v1307, 16
      %v1420 = vrot.slane %v1418, 6
      %v1421 = vor.u32 %v1417, %v1420
      %v1422 = vsel %vm1344, %v1391, %v1421
      %v1424 = vshrl.u32 %v1308, 16
      %v1426 = vrot.slane %v1424, 5
      %v1427 = vshll.u32 %v1308, 16
      %v1429 = vrot.slane %v1427, 6
      %v1430 = vor.u32 %v1426, %v1429
      %v1431 = vsel %vm1344, %v1400, %v1430
      %v1432 = vrot.slane %v1418, 1
      %v1433 = vsel %vm1371, %v1406, %v1432
      %v1434 = vrot.slane %v1427, 1
      %v1435 = vsel %vm1371, %v1407, %v1434
      %v1436 = vor.u32 %v1415, %v1432
      %v1437 = vor.u32 %v1424, %v1434
      %v1440 = vrot.slane %v1309, 5
      %v1441 = vsel %vm1335, %v1410, %v1440
      %v1442 = vrot.slane %v1310, 5
      %v1443 = vsel %vm1335, %v1412, %v1442
      %v1445 = vshrl.u32 %v1309, 16
      %v1447 = vrot.slane %v1445, 5
      %v1448 = vshll.u32 %v1309, 16
      %v1450 = vrot.slane %v1448, 6
      %v1451 = vor.u32 %v1447, %v1450
      %v1452 = vsel %vm1344, %v1421, %v1451
      %v1454 = vshrl.u32 %v1310, 16
      %v1456 = vrot.slane %v1454, 5
      %v1457 = vshll.u32 %v1310, 16
      %v1459 = vrot.slane %v1457, 6
      %v1460 = vor.u32 %v1456, %v1459
      %v1461 = vsel %vm1344, %v1430, %v1460
      %v1462 = vrot.slane %v1448, 1
      %v1463 = vsel %vm1371, %v1436, %v1462
      %v1464 = vrot.slane %v1457, 1
      %v1465 = vsel %vm1371, %v1437, %v1464
      %v1466 = vor.u32 %v1445, %v1462
      %v1467 = vor.u32 %v1454, %v1464
      %v1470 = vrot.slane %v1311, 5
      %v1471 = vrot.slane %v1312, 5
      %v1473 = vshrl.u32 %v1311, 16
      %v1475 = vrot.slane %v1473, 5
      %v1476 = vshll.u32 %v1311, 16
      %v1478 = vrot.slane %v1476, 6
      %v1479 = vor.u32 %v1475, %v1478
      %v1481 = vshrl.u32 %v1312, 16
      %v1483 = vrot.slane %v1481, 5
      %v1484 = vshll.u32 %v1312, 16
      %v1486 = vrot.slane %v1484, 6
      %v1487 = vor.u32 %v1483, %v1486
      %v1488 = vrot.slane %v1476, 1
      %v1489 = vor.u32 %v1473, %v1488
      %v1490 = vrot.slane %v1484, 1
      %v1491 = vor.u32 %v1481, %v1490
      %v1494 = vrot.slane %v1313, 5
      %v1495 = vsel %vm1335, %v1470, %v1494
      %v1496 = vrot.slane %v1314, 5
      %v1497 = vsel %vm1335, %v1471, %v1496
      %v1499 = vshrl.u32 %v1313, 16
      %v1501 = vrot.slane %v1499, 5
      %v1502 = vshll.u32 %v1313, 16
      %v1504 = vrot.slane %v1502, 6
      %v1505 = vor.u32 %v1501, %v1504
      %v1506 = vsel %vm1344, %v1479, %v1505
      %v1508 = vshrl.u32 %v1314, 16
      %v1510 = vrot.slane %v1508, 5
      %v1511 = vshll.u32 %v1314, 16
      %v1513 = vrot.slane %v1511, 6
      %v1514 = vor.u32 %v1510, %v1513
      %v1515 = vsel %vm1344, %v1487, %v1514
      %v1517 = vshrl.u32 %v1373, 16
      %v1519 = vshll.u32 %v1373, 16
      %v1521 = vrot.slane %v1519, 1
      %v1522 = vor.u32 %v1517, %v1521
      %v1524 = vshll.u32 %v1376, 16
      %v1526 = vrot.slane %v1524, 1
      %v1527 = vsel %vm1371, %v1522, %v1526
      %v1529 = vshrl.u32 %v1375, 16
      %v1531 = vshll.u32 %v1375, 16
      %v1533 = vrot.slane %v1531, 1
      %v1534 = vor.u32 %v1529, %v1533
      %v1536 = vshll.u32 %v1377, 16
      %v1538 = vrot.slane %v1536, 1
      %v1539 = vsel %vm1371, %v1534, %v1538
      %v1541 = vshrl.u32 %v1337, 16
      %v1543 = vshll.u32 %v1337, 16
      %v1545 = vrot.slane %v1543, 1
      %v1546 = vor.u32 %v1541, %v1545
      %v1547 = vsel %vm1371, %v1546, %v1545
      %v1549 = vshrl.u32 %v1340, 16
      %v1551 = vshll.u32 %v1340, 16
      %v1553 = vrot.slane %v1551, 1
      %v1554 = vor.u32 %v1549, %v1553
      %v1555 = vsel %vm1371, %v1554, %v1553
      %v1557 = vshrl.u32 %v1355, 16
      %v1559 = vshll.u32 %v1355, 16
      %v1561 = vrot.slane %v1559, 1
      %v1562 = vor.u32 %v1557, %v1561
      %v1563 = vsel %vm1371, %v1562, %v1561
      %v1565 = vshrl.u32 %v1367, 16
      %v1567 = vshll.u32 %v1367, 16
      %v1569 = vrot.slane %v1567, 1
      %v1570 = vor.u32 %v1565, %v1569
      %v1571 = vsel %vm1371, %v1570, %v1569
      %v1572 = vshrl.u32 %v1376, 16
      %v1574 = vor.u32 %v1572, %v1526
      %v1575 = vshrl.u32 %v1377, 16
      %v1577 = vor.u32 %v1575, %v1538
      %v1586 = vrot.slane %v1303, 1
      %v1587 = vrot.slane %v1304, 1
      %v1588 = vrot.slane %v1376, 1
      %v1589 = vrot.slane %v1377, 1
      %v1590 = vrot.slane %v1381, 1
      %v1591 = vrot.slane %v1383, 1
      %v1592 = vrot.slane %v1392, 1
      %v1593 = vrot.slane %v1401, 1
      %vm1594 = vsmask.f32 6400
      %v1595 = vrot.slane %v1349, 1
      %v1596 = vrot.slane %v1352, 2
      %v1597 = vor.u32 %v1595, %v1596
      %v1598 = vrot.slane %v1385, 1
      %v1599 = vrot.slane %v1388, 2
      %v1600 = vor.u32 %v1598, %v1599
      %v1601 = vsel %vm1594, %v1597, %v1600
      %v1602 = vrot.slane %v1361, 1
      %v1603 = vrot.slane %v1364, 2
      %v1604 = vor.u32 %v1602, %v1603
      %v1605 = vrot.slane %v1394, 1
      %v1606 = vrot.slane %v1397, 2
      %v1607 = vor.u32 %v1605, %v1606
      %v1608 = vsel %vm1594, %v1604, %v1607
      %v1610 = vshrl.u32 %v1403, 16
      %v1612 = vrot.slane %v1610, 1
      %v1613 = vshll.u32 %v1403, 16
      %v1615 = vrot.slane %v1613, 2
      %v1616 = vor.u32 %v1612, %v1615
      %v1618 = vshrl.u32 %v1406, 16
      %v1620 = vrot.slane %v1618, 1
      %v1621 = vshll.u32 %v1406, 16
      %v1623 = vrot.slane %v1621, 2
      %v1624 = vor.u32 %v1620, %v1623
      %v1625 = vsel %vm1594, %v1616, %v1624
      %v1627 = vshrl.u32 %v1405, 16
      %v1629 = vrot.slane %v1627, 1
      %v1630 = vshll.u32 %v1405, 16
      %v1632 = vrot.slane %v1630, 2
      %v1633 = vor.u32 %v1629, %v1632
      %v1635 = vshrl.u32 %v1407, 16
      %v1637 = vrot.slane %v1635, 1
      %v1638 = vshll.u32 %v1407, 16
      %v1640 = vrot.slane %v1638, 2
      %v1641 = vor.u32 %v1637, %v1640
      %v1642 = vsel %vm1594, %v1633, %v1641
      %v1644 = vshrl.u32 %v1380, 16
      %v1646 = vrot.slane %v1644, 1
      %v1647 = vshll.u32 %v1380, 16
      %v1649 = vrot.slane %v1647, 2
      %v1650 = vor.u32 %v1646, %v1649
      %v1652 = vshrl.u32 %v1411, 16
      %v1654 = vrot.slane %v1652, 1
      %v1655 = vshll.u32 %v1411, 16
      %v1657 = vrot.slane %v1655, 2
      %v1658 = vor.u32 %v1654, %v1657
      %v1659 = vsel %vm1594, %v1650, %v1658
      %v1661 = vshrl.u32 %v1382, 16
      %v1663 = vrot.slane %v1661, 1
      %v1664 = vshll.u32 %v1382, 16
      %v1666 = vrot.slane %v1664, 2
      %v1667 = vor.u32 %v1663, %v1666
      %v1669 = vshrl.u32 %v1413, 16
      %v1671 = vrot.slane %v1669, 1
      %v1672 = vshll.u32 %v1413, 16
      %v1674 = vrot.slane %v1672, 2
      %v1675 = vor.u32 %v1671, %v1674
      %v1676 = vsel %vm1594, %v1667, %v1675
      %v1678 = vshrl.u32 %v1391, 16
      %v1680 = vrot.slane %v1678, 1
      %v1681 = vshll.u32 %v1391, 16
      %v1683 = vrot.slane %v1681, 2
      %v1684 = vor.u32 %v1680, %v1683
      %v1686 = vshrl.u32 %v1422, 16
      %v1688 = vrot.slane %v1686, 1
      %v1689 = vshll.u32 %v1422, 16
      %v1691 = vrot.slane %v1689, 2
      %v1692 = vor.u32 %v1688, %v1691
      %v1693 = vsel %vm1594, %v1684, %v1692
      %v1695 = vshrl.u32 %v1400, 16
      %v1697 = vrot.slane %v1695, 1
      %v1698 = vshll.u32 %v1400, 16
      %v1700 = vrot.slane %v1698, 2
      %v1701 = vor.u32 %v1697, %v1700
      %v1703 = vshrl.u32 %v1431, 16
      %v1705 = vrot.slane %v1703, 1
      %v1706 = vshll.u32 %v1431, 16
      %v1708 = vrot.slane %v1706, 2
      %v1709 = vor.u32 %v1705, %v1708
      %v1710 = vsel %vm1594, %v1701, %v1709
      %vm1719 = vcmask 1045504
      %v1720 = vrot.slane %v1305, 2
      %v1721 = vrot.slane %v1307, 2
      %v1722 = vsel %vm1719, %v1720, %v1721
      %v1723 = vrot.slane %v1306, 2
      %v1724 = vrot.slane %v1308, 2
      %v1725 = vsel %vm1719, %v1723, %v1724
      %v1726 = vrot.slane %v1433, 2
      %v1727 = vrot.slane %v1415, 2
      %v1728 = vsel %vm1719, %v1726, %v1727
      %v1729 = vrot.slane %v1435, 2
      %v1730 = vrot.slane %v1424, 2
      %v1731 = vsel %vm1719, %v1729, %v1730
      %v1732 = vrot.slane %v1410, 2
      %v1733 = vsel %vm1719, %v1732, %v1732
      %v1734 = vrot.slane %v1412, 2
      %v1735 = vsel %vm1719, %v1734, %v1734
      %v1736 = vrot.slane %v1421, 2
      %v1737 = vrot.slane %v1417, 2
      %v1738 = vsel %vm1719, %v1736, %v1737
      %v1739 = vrot.slane %v1430, 2
      %v1740 = vrot.slane %v1426, 2
      %v1741 = vsel %vm1719, %v1739, %v1740
      %v1742 = vrot.slane %v1418, 3
      %v1743 = vor.u32 %v1727, %v1742
      %v1744 = vrot.slane %v1427, 3
      %v1745 = vor.u32 %v1730, %v1744
      %v1747 = vshrl.u32 %v1436, 16
      %v1749 = vrot.slane %v1747, 2
      %v1750 = vshll.u32 %v1436, 16
      %v1752 = vrot.slane %v1750, 3
      %v1753 = vor.u32 %v1749, %v1752
      %v1755 = vshrl.u32 %v1437, 16
      %v1757 = vrot.slane %v1755, 2
      %v1758 = vshll.u32 %v1437, 16
      %v1760 = vrot.slane %v1758, 3
      %v1761 = vor.u32 %v1757, %v1760
      %v1763 = vshrl.u32 %v1441, 16
      %v1765 = vrot.slane %v1763, 2
      %v1766 = vshll.u32 %v1441, 16
      %v1768 = vrot.slane %v1766, 3
      %v1769 = vor.u32 %v1765, %v1768
      %v1771 = vshrl.u32 %v1443, 16
      %v1773 = vrot.slane %v1771, 2
      %v1774 = vshll.u32 %v1443, 16
      %v1776 = vrot.slane %v1774, 3
      %v1777 = vor.u32 %v1773, %v1776
      %v1779 = vshrl.u32 %v1452, 16
      %v1781 = vrot.slane %v1779, 2
      %v1782 = vshll.u32 %v1452, 16
      %v1784 = vrot.slane %v1782, 3
      %v1785 = vor.u32 %v1781, %v1784
      %v1787 = vshrl.u32 %v1461, 16
      %v1789 = vrot.slane %v1787, 2
      %v1790 = vshll.u32 %v1461, 16
      %v1792 = vrot.slane %v1790, 3
      %v1793 = vor.u32 %v1789, %v1792
      %vm1802 = vcmask 1044480
      %v1803 = vrot.slane %v1307, 3
      %v1804 = vrot.slane %v1309, 3
      %v1805 = vsel %vm1802, %v1803, %v1804
      %v1806 = vrot.slane %v1308, 3
      %v1807 = vrot.slane %v1310, 3
      %v1808 = vsel %vm1802, %v1806, %v1807
      %v1809 = vrot.slane %v1463, 3
      %v1810 = vrot.slane %v1466, 3
      %v1811 = vsel %vm1802, %v1809, %v1810
      %v1812 = vrot.slane %v1465, 3
      %v1813 = vrot.slane %v1467, 3
      %v1814 = vsel %vm1802, %v1812, %v1813
      %v1815 = vrot.slane %v1440, 3
      %v1816 = vsel %vm1802, %v1815, %v1815
      %v1817 = vrot.slane %v1442, 3
      %v1818 = vsel %vm1802, %v1817, %v1817
      %v1819 = vrot.slane %v1451, 3
      %v1820 = vsel %vm1802, %v1819, %v1819
      %v1821 = vrot.slane %v1460, 3
      %v1822 = vsel %vm1802, %v1821, %v1821
      %v1823 = vrot.slane %v1448, 4
      %v1824 = vrot.slane %v1457, 4
      %v1826 = vshll.u32 %v1466, 16
      %v1828 = vrot.slane %v1826, 4
      %v1830 = vshll.u32 %v1467, 16
      %v1832 = vrot.slane %v1830, 4
      %v1834 = vshll.u32 %v1470, 16
      %v1836 = vrot.slane %v1834, 4
      %v1838 = vshll.u32 %v1471, 16
      %v1840 = vrot.slane %v1838, 4
      %v1842 = vshll.u32 %v1479, 16
      %v1844 = vrot.slane %v1842, 4
      %v1846 = vshll.u32 %v1487, 16
      %v1848 = vrot.slane %v1846, 4
      %v1849 = vrot.slane %v1445, 3
      %v1850 = vor.u32 %v1849, %v1823
      %v1851 = vrot.slane %v1454, 3
      %v1852 = vor.u32 %v1851, %v1824
      %v1853 = vshrl.u32 %v1466, 16
      %v1855 = vrot.slane %v1853, 3
      %v1856 = vor.u32 %v1855, %v1828
      %v1857 = vshrl.u32 %v1467, 16
      %v1859 = vrot.slane %v1857, 3
      %v1860 = vor.u32 %v1859, %v1832
      %v1861 = vshrl.u32 %v1470, 16
      %v1863 = vrot.slane %v1861, 3
      %v1864 = vor.u32 %v1863, %v1836
      %v1865 = vshrl.u32 %v1471, 16
      %v1867 = vrot.slane %v1865, 3
      %v1868 = vor.u32 %v1867, %v1840
      %v1869 = vshrl.u32 %v1479, 16
      %v1871 = vrot.slane %v1869, 3
      %v1872 = vor.u32 %v1871, %v1844
      %v1873 = vshrl.u32 %v1487, 16
      %v1875 = vrot.slane %v1873, 3
      %v1876 = vor.u32 %v1875, %v1848
      %v1885 = vrot.slane %v1311, 4
      %v1886 = vrot.slane %v1312, 4
      %v1887 = vrot.slane %v1489, 4
      %v1888 = vrot.slane %v1491, 4
      %v1889 = vrot.slane %v1495, 4
      %v1890 = vrot.slane %v1497, 4
      %v1891 = vrot.slane %v1506, 4
      %v1892 = vrot.slane %v1515, 4
      %vm1901 = vsmask.f32 4352
      %vm1902 = vmand %vm1802, %vm1901
      %v1903 = vsel %vm1902, %v1301, %v1373
      %v1904 = vsel %vm1902, %v1302, %v1375
      %v1905 = vsel %vm1902, %v1321, %v1527
      %v1906 = vsel %vm1902, %v1328, %v1539
      %v1907 = vsel %vm1902, %v1338, %v1547
      %v1908 = vsel %vm1902, %v1341, %v1555
      %v1909 = vsel %vm1902, %v1356, %v1563
      %v1910 = vsel %vm1902, %v1368, %v1571
      %vm1911 = vcmask 1040384
      %v1913 = vsel %vm1911, %v1376, %v1586
      %v1916 = vsel %vm1911, %v1377, %v1587
      %v1920 = vsel %vm1911, %v1574, %v1588
      %v1924 = vsel %vm1911, %v1577, %v1589
      %v1928 = vsel %vm1911, %v1546, %v1590
      %v1932 = vsel %vm1911, %v1554, %v1591
      %v1936 = vsel %vm1911, %v1562, %v1592
      %v1940 = vsel %vm1911, %v1570, %v1593
      %vm1942 = vsmask.f32 5376
      %vm1943 = vmand %vm1719, %vm1942
      %v1944 = vsel %vm1943, %v1913, %v1601
      %v1945 = vsel %vm1943, %v1916, %v1608
      %v1946 = vsel %vm1943, %v1920, %v1625
      %v1947 = vsel %vm1943, %v1924, %v1642
      %v1948 = vsel %vm1943, %v1928, %v1659
      %v1949 = vsel %vm1943, %v1932, %v1676
      %v1950 = vsel %vm1943, %v1936, %v1693
      %v1951 = vsel %vm1943, %v1940, %v1710
      %vm1952 = vcmask 1041408
      %v1955 = vsel %vm1952, %v1600, %v1722
      %v1959 = vsel %vm1952, %v1607, %v1725
      %v1963 = vsel %vm1952, %v1624, %v1728
      %v1967 = vsel %vm1952, %v1641, %v1731
      %v1971 = vsel %vm1952, %v1658, %v1733
      %v1975 = vsel %vm1952, %v1675, %v1735
      %v1979 = vsel %vm1952, %v1692, %v1738
      %v1983 = vsel %vm1952, %v1709, %v1741
      %vm1985 = vcmask 1046528
      %vm1986 = vmand %vm1985, %vm1594
      %v1987 = vsel %vm1986, %v1955, %v1743
      %v1988 = vsel %vm1986, %v1959, %v1745
      %v1989 = vsel %vm1986, %v1963, %v1753
      %v1990 = vsel %vm1986, %v1967, %v1761
      %v1991 = vsel %vm1986, %v1971, %v1769
      %v1992 = vsel %vm1986, %v1975, %v1777
      %v1993 = vsel %vm1986, %v1979, %v1785
      %v1994 = vsel %vm1986, %v1983, %v1793
      %vm1995 = vcmask 1042432
      %v1998 = vsel %vm1995, %v1743, %v1805
      %v2002 = vsel %vm1995, %v1745, %v1808
      %v2006 = vsel %vm1995, %v1753, %v1811
      %v2010 = vsel %vm1995, %v1761, %v1814
      %v2014 = vsel %vm1995, %v1769, %v1816
      %v2018 = vsel %vm1995, %v1777, %v1818
      %v2022 = vsel %vm1995, %v1785, %v1820
      %v2026 = vsel %vm1995, %v1793, %v1822
      %vm2028 = vcmask 1047552
      %vm2029 = vmand %vm2028, %vm1371
      %v2030 = vsel %vm2029, %v1998, %v1823
      %v2031 = vsel %vm2029, %v2002, %v1824
      %v2032 = vsel %vm2029, %v2006, %v1828
      %v2033 = vsel %vm2029, %v2010, %v1832
      %v2034 = vsel %vm2029, %v2014, %v1836
      %v2035 = vsel %vm2029, %v2018, %v1840
      %v2036 = vsel %vm2029, %v2022, %v1844
      %v2037 = vsel %vm2029, %v2026, %v1848
      %vm2038 = vcmask 1043456
      %v2041 = vsel %vm2038, %v1850, %v1885
      %v2045 = vsel %vm2038, %v1852, %v1886
      %v2049 = vsel %vm2038, %v1856, %v1887
      %v2053 = vsel %vm2038, %v1860, %v1888
      %v2057 = vsel %vm2038, %v1864, %v1889
      %v2061 = vsel %vm2038, %v1868, %v1890
      %v2065 = vsel %vm2038, %v1872, %v1891
      %v2069 = vsel %vm2038, %v1876, %v1892
      %v2071 = vld [vmem:[%s3] sm:$0xf]
      %v2072 = vld [vmem:[%s3 + $0x4] sm:$0xf]
      %v2073 = vld [vmem:[%s3 + $0x8] sm:$0xf]
      %v2074 = vld [vmem:[%s3 + $0xc] sm:$0xf]
      %v2075 = vld [vmem:[%s3 + $0x10] sm:$0xf]
      %v2076 = vld [vmem:[%s3 + $0x14] sm:$0xf]
      %v2077 = vld [vmem:[%s3 + $0x18] sm:$0xf]
      %v2078 = vld [vmem:[%s3 + $0x1c] sm:$0xf]
      %v2079 = vld [vmem:[%s3 + $0x20] sm:$0xf]
      %v2080 = vld [vmem:[%s3 + $0x24] sm:$0xf]
      %v2081 = vld [vmem:[%s3 + $0x28] sm:$0xf]
      %v2082 = vld [vmem:[%s3 + $0x2c] sm:$0xf]
      %v2083 = vld [vmem:[%s3 + $0x30] sm:$0xf]
      %v2084 = vld [vmem:[%s3 + $0x34] sm:$0xf]
      %v2085 = vld [vmem:[%s3 + $0x38] sm:$0xf]
      %v2086 = vld [vmem:[%s3 + $0x3c] sm:$0xf]
      %v2087 = vld [vmem:[%s3 + $0x40] sm:$0xf]
      %v2088 = vld [vmem:[%s3 + $0x44] sm:$0xf]
      %v2089 = vld [vmem:[%s3 + $0x48] sm:$0xf]
      %v2090 = vld [vmem:[%s3 + $0x4c] sm:$0xf]
      %v2091 = vld [vmem:[%s3 + $0x50] sm:$0xf]
      %v2092 = vld [vmem:[%s3 + $0x54] sm:$0xf]
      %v2093 = vld [vmem:[%s3 + $0x58] sm:$0xf]
      %v2094 = vld [vmem:[%s3 + $0x5c] sm:$0xf]
      %v2095 = vld [vmem:[%s3 + $0x60] sm:$0xf]
      %v2096 = vld [vmem:[%s3 + $0x64] sm:$0xf]
      %v2097 = vld [vmem:[%s3 + $0x68] sm:$0xf]
      %v2098 = vld [vmem:[%s3 + $0x6c] sm:$0xf]
      %v2099 = vld [vmem:[%s3 + $0x70] sm:$0xf]
      %v2100 = vld [vmem:[%s3 + $0x74] sm:$0xf]
      %v2101 = vld [vmem:[%s3 + $0x78] sm:$0xf]
      %v2102 = vld [vmem:[%s3 + $0x7c] sm:$0xf]
      %v2103 = vld [vmem:[%s3 + $0x80] sm:$0xf]
      %v2104 = vld [vmem:[%s3 + $0x84] sm:$0xf]
      %v2105 = vld [vmem:[%s3 + $0x88] sm:$0xf]
      %v2106 = vld [vmem:[%s3 + $0x8c] sm:$0xf]
      %v2107 = vld [vmem:[%s3 + $0x90] sm:$0xf]
      %v2108 = vld [vmem:[%s3 + $0x94] sm:$0xf]
      %v2109 = vld [vmem:[%s3 + $0x98] sm:$0xf]
      %v2110 = vld [vmem:[%s3 + $0x9c] sm:$0xf]
      %v2111 = vld [vmem:[%s3 + $0xa0] sm:$0xf]
      %v2112 = vld [vmem:[%s3 + $0xa4] sm:$0xf]
      %v2113 = vld [vmem:[%s3 + $0xa8] sm:$0xf]
      %v2114 = vld [vmem:[%s3 + $0xac] sm:$0xf]
      %v2115 = vld [vmem:[%s3 + $0xb0] sm:$0xf]
      %v2116 = vld [vmem:[%s3 + $0xb4] sm:$0xf]
      %v2117 = vld [vmem:[%s3 + $0xb8] sm:$0xf]
      %v2118 = vld [vmem:[%s3 + $0xbc] sm:$0xf]
      %v2119 = vld [vmem:[%s3 + $0xc0] sm:$0xf]
      %v2120 = vld [vmem:[%s3 + $0xc4] sm:$0xf]
      %v2121 = vld [vmem:[%s3 + $0xc8] sm:$0xf]
      %v2122 = vld [vmem:[%s3 + $0xcc] sm:$0xf]
      %v2123 = vld [vmem:[%s3 + $0xd0] sm:$0xf]
      %v2124 = vld [vmem:[%s3 + $0xd4] sm:$0xf]
      %v2125 = vld [vmem:[%s3 + $0xd8] sm:$0xf]
      %v2126 = vld [vmem:[%s3 + $0xdc] sm:$0xf]
      %v2127 = vld [vmem:[%s3 + $0xe0] sm:$0xf]
      %v2128 = vld [vmem:[%s3 + $0xe4] sm:$0xf]
      %v2129 = vld [vmem:[%s3 + $0xe8] sm:$0xf]
      %v2130 = vld [vmem:[%s3 + $0xec] sm:$0xf]
      %v2131 = vld [vmem:[%s3 + $0xf0] sm:$0xf]
      %v2132 = vld [vmem:[%s3 + $0xf4] sm:$0xf]
      %v2133 = vld [vmem:[%s3 + $0xf8] sm:$0xf]
      %v2134 = vld [vmem:[%s3 + $0xfc] sm:$0xf]
      %v2135 = vld [vmem:[%s3 + $0x100] sm:$0xf]
      %v2136 = vld [vmem:[%s3 + $0x104] sm:$0xf]
      %v2137 = vld [vmem:[%s3 + $0x108] sm:$0xf]
      %v2138 = vld [vmem:[%s3 + $0x10c] sm:$0xf]
      %v2139 = vld [vmem:[%s3 + $0x110] sm:$0xf]
      %v2140 = vld [vmem:[%s3 + $0x114] sm:$0xf]
      %v2141 = vld [vmem:[%s3 + $0x118] sm:$0xf]
      %v2142 = vld [vmem:[%s3 + $0x11c] sm:$0xf]
      %v2143 = vld [vmem:[%s3 + $0x120] sm:$0xf]
      %v2144 = vld [vmem:[%s3 + $0x124] sm:$0xf]
      %v2145 = vld [vmem:[%s3 + $0x128] sm:$0xf]
      %v2146 = vld [vmem:[%s3 + $0x12c] sm:$0xf]
      %v2147 = vld [vmem:[%s3 + $0x130] sm:$0xf]
      %v2148 = vld [vmem:[%s3 + $0x134] sm:$0xf]
      %v2149 = vld [vmem:[%s3 + $0x138] sm:$0xf]
      %v2150 = vld [vmem:[%s3 + $0x13c] sm:$0xf]
      %v2151 = vld [vmem:[%s3 + $0x140] sm:$0xf]
      %v2152 = vld [vmem:[%s3 + $0x144] sm:$0xf]
      %v2153 = vld [vmem:[%s3 + $0x148] sm:$0xf]
      %v2154 = vld [vmem:[%s3 + $0x14c] sm:$0xf]
      %v2155 = vld [vmem:[%s3 + $0x150] sm:$0xf]
      %v2156 = vld [vmem:[%s3 + $0x154] sm:$0xf]
      %v2157 = vld [vmem:[%s3 + $0x158] sm:$0xf]
      %v2158 = vld [vmem:[%s3 + $0x15c] sm:$0xf]
      %v2159 = vld [vmem:[%s3 + $0x160] sm:$0xf]
      %v2160 = vld [vmem:[%s3 + $0x164] sm:$0xf]
      %v2161 = vld [vmem:[%s3 + $0x168] sm:$0xf]
      %v2162 = vld [vmem:[%s3 + $0x16c] sm:$0xf]
      %v2163 = vld [vmem:[%s3 + $0x170] sm:$0xf]
      %v2164 = vld [vmem:[%s3 + $0x174] sm:$0xf]
      %v2165 = vld [vmem:[%s3 + $0x178] sm:$0xf]
      %v2166 = vld [vmem:[%s3 + $0x17c] sm:$0xf]
      %v2167 = vld [vmem:[%s3 + $0x180] sm:$0xf]
      %v2168 = vld [vmem:[%s3 + $0x184] sm:$0xf]
      %v2169 = vld [vmem:[%s3 + $0x188] sm:$0xf]
      %v2170 = vld [vmem:[%s3 + $0x18c] sm:$0xf]
      %v2171 = vld [vmem:[%s3 + $0x190] sm:$0xf]
      %v2172 = vld [vmem:[%s3 + $0x194] sm:$0xf]
      %v2173 = vld [vmem:[%s3 + $0x198] sm:$0xf]
      %v2174 = vld [vmem:[%s3 + $0x19c] sm:$0xf]
      %v2175 = vld [vmem:[%s3 + $0x1a0] sm:$0xf]
      %v2176 = vld [vmem:[%s3 + $0x1a4] sm:$0xf]
      %v2177 = vld [vmem:[%s3 + $0x1a8] sm:$0xf]
      %v2178 = vld [vmem:[%s3 + $0x1ac] sm:$0xf]
      %v2179 = vld [vmem:[%s3 + $0x1b0] sm:$0xf]
      %v2180 = vld [vmem:[%s3 + $0x1b4] sm:$0xf]
      %v2181 = vld [vmem:[%s3 + $0x1b8] sm:$0xf]
      %v2182 = vld [vmem:[%s3 + $0x1bc] sm:$0xf]
      %v2183 = vld [vmem:[%s3 + $0x1c0] sm:$0xf]
      %v2184 = vld [vmem:[%s3 + $0x1c4] sm:$0xf]
      %v2185 = vld [vmem:[%s3 + $0x1c8] sm:$0xf]
      %v2186 = vld [vmem:[%s3 + $0x1cc] sm:$0xf]
      %v2187 = vld [vmem:[%s3 + $0x1d0] sm:$0xf]
      %v2188 = vld [vmem:[%s3 + $0x1d4] sm:$0xf]
      %v2189 = vld [vmem:[%s3 + $0x1d8] sm:$0xf]
      %v2190 = vld [vmem:[%s3 + $0x1dc] sm:$0xf]
      %v2191 = vld [vmem:[%s3 + $0x1e0] sm:$0xf]
      %v2192 = vld [vmem:[%s3 + $0x1e4] sm:$0xf]
      %v2193 = vld [vmem:[%s3 + $0x1e8] sm:$0xf]
      %v2194 = vld [vmem:[%s3 + $0x1ec] sm:$0xf]
      %v2195 = vld [vmem:[%s3 + $0x1f0] sm:$0xf]
      %v2196 = vld [vmem:[%s3 + $0x1f4] sm:$0xf]
      %v2197 = vld [vmem:[%s3 + $0x1f8] sm:$0xf]
      %v2198 = vld [vmem:[%s3 + $0x1fc] sm:$0xf]
      %v2199 = vld [vmem:[%s4] sm:$0x1]
      %v2201 = vlaneseq
      %v2202 = vshrl.u32 %v2201, 7
      %v2203 = vsub.s32 0, %v2202
      %v2204 = vrot.slane %v2199, %v2203
      %v2334 = vunpack.c.l.b16 %v2071
      %v2335 = vunpack.c.l.b16 %v2072
      %v2336 = vunpack.c.l.b16 %v2073
      %v2337 = vunpack.c.l.b16 %v2074
      %v2338 = vunpack.c.l.b16 %v2075
      %v2339 = vunpack.c.l.b16 %v2076
      %v2340 = vunpack.c.l.b16 %v2077
      %v2341 = vunpack.c.l.b16 %v2078
      %v2342 = vunpack.c.l.b16 %v2079
      %v2343 = vunpack.c.l.b16 %v2080
      %v2344 = vunpack.c.l.b16 %v2081
      %v2345 = vunpack.c.l.b16 %v2082
      %v2346 = vunpack.c.l.b16 %v2083
      %v2347 = vunpack.c.l.b16 %v2084
      %v2348 = vunpack.c.l.b16 %v2085
      %v2349 = vunpack.c.l.b16 %v2086
      %v2350 = vunpack.c.l.b16 %v2087
      %v2351 = vunpack.c.l.b16 %v2088
      %v2352 = vunpack.c.l.b16 %v2089
      %v2353 = vunpack.c.l.b16 %v2090
      %v2354 = vunpack.c.l.b16 %v2091
      %v2355 = vunpack.c.l.b16 %v2092
      %v2356 = vunpack.c.l.b16 %v2093
      %v2357 = vunpack.c.l.b16 %v2094
      %v2358 = vunpack.c.l.b16 %v2095
      %v2359 = vunpack.c.l.b16 %v2096
      %v2360 = vunpack.c.l.b16 %v2097
      %v2361 = vunpack.c.l.b16 %v2098
      %v2362 = vunpack.c.l.b16 %v2099
      %v2363 = vunpack.c.l.b16 %v2100
      %v2364 = vunpack.c.l.b16 %v2101
      %v2365 = vunpack.c.l.b16 %v2102
      %v2366 = vunpack.c.l.b16 %v2103
      %v2367 = vunpack.c.l.b16 %v2104
      %v2368 = vunpack.c.l.b16 %v2105
      %v2369 = vunpack.c.l.b16 %v2106
      %v2370 = vunpack.c.l.b16 %v2107
      %v2371 = vunpack.c.l.b16 %v2108
      %v2372 = vunpack.c.l.b16 %v2109
      %v2373 = vunpack.c.l.b16 %v2110
      %v2374 = vunpack.c.l.b16 %v2111
      %v2375 = vunpack.c.l.b16 %v2112
      %v2376 = vunpack.c.l.b16 %v2113
      %v2377 = vunpack.c.l.b16 %v2114
      %v2378 = vunpack.c.l.b16 %v2115
      %v2379 = vunpack.c.l.b16 %v2116
      %v2380 = vunpack.c.l.b16 %v2117
      %v2381 = vunpack.c.l.b16 %v2118
      %v2382 = vunpack.c.l.b16 %v2119
      %v2383 = vunpack.c.l.b16 %v2120
      %v2384 = vunpack.c.l.b16 %v2121
      %v2385 = vunpack.c.l.b16 %v2122
      %v2386 = vunpack.c.l.b16 %v2123
      %v2387 = vunpack.c.l.b16 %v2124
      %v2388 = vunpack.c.l.b16 %v2125
      %v2389 = vunpack.c.l.b16 %v2126
      %v2390 = vunpack.c.l.b16 %v2127
      %v2391 = vunpack.c.l.b16 %v2128
      %v2392 = vunpack.c.l.b16 %v2129
      %v2393 = vunpack.c.l.b16 %v2130
      %v2394 = vunpack.c.l.b16 %v2131
      %v2395 = vunpack.c.l.b16 %v2132
      %v2396 = vunpack.c.l.b16 %v2133
      %v2397 = vunpack.c.l.b16 %v2134
      %v2398 = vunpack.c.l.b16 %v2135
      %v2399 = vunpack.c.l.b16 %v2136
      %v2400 = vunpack.c.l.b16 %v2137
      %v2401 = vunpack.c.l.b16 %v2138
      %v2402 = vunpack.c.l.b16 %v2139
      %v2403 = vunpack.c.l.b16 %v2140
      %v2404 = vunpack.c.l.b16 %v2141
      %v2405 = vunpack.c.l.b16 %v2142
      %v2406 = vunpack.c.l.b16 %v2143
      %v2407 = vunpack.c.l.b16 %v2144
      %v2408 = vunpack.c.l.b16 %v2145
      %v2409 = vunpack.c.l.b16 %v2146
      %v2410 = vunpack.c.l.b16 %v2147
      %v2411 = vunpack.c.l.b16 %v2148
      %v2412 = vunpack.c.l.b16 %v2149
      %v2413 = vunpack.c.l.b16 %v2150
      %v2414 = vunpack.c.l.b16 %v2151
      %v2415 = vunpack.c.l.b16 %v2152
      %v2416 = vunpack.c.l.b16 %v2153
      %v2417 = vunpack.c.l.b16 %v2154
      %v2418 = vunpack.c.l.b16 %v2155
      %v2419 = vunpack.c.l.b16 %v2156
      %v2420 = vunpack.c.l.b16 %v2157
      %v2421 = vunpack.c.l.b16 %v2158
      %v2422 = vunpack.c.l.b16 %v2159
      %v2423 = vunpack.c.l.b16 %v2160
      %v2424 = vunpack.c.l.b16 %v2161
      %v2425 = vunpack.c.l.b16 %v2162
      %v2426 = vunpack.c.l.b16 %v2163
      %v2427 = vunpack.c.l.b16 %v2164
      %v2428 = vunpack.c.l.b16 %v2165
      %v2429 = vunpack.c.l.b16 %v2166
      %v2430 = vunpack.c.l.b16 %v2167
      %v2431 = vunpack.c.l.b16 %v2168
      %v2432 = vunpack.c.l.b16 %v2169
      %v2433 = vunpack.c.l.b16 %v2170
      %v2434 = vunpack.c.l.b16 %v2171
      %v2435 = vunpack.c.l.b16 %v2172
      %v2436 = vunpack.c.l.b16 %v2173
      %v2437 = vunpack.c.l.b16 %v2174
      %v2438 = vunpack.c.l.b16 %v2175
      %v2439 = vunpack.c.l.b16 %v2176
      %v2440 = vunpack.c.l.b16 %v2177
      %v2441 = vunpack.c.l.b16 %v2178
      %v2442 = vunpack.c.l.b16 %v2179
      %v2443 = vunpack.c.l.b16 %v2180
      %v2444 = vunpack.c.l.b16 %v2181
      %v2445 = vunpack.c.l.b16 %v2182
      %v2446 = vunpack.c.l.b16 %v2183
      %v2447 = vunpack.c.l.b16 %v2184
      %v2448 = vunpack.c.l.b16 %v2185
      %v2449 = vunpack.c.l.b16 %v2186
      %v2450 = vunpack.c.l.b16 %v2187
      %v2451 = vunpack.c.l.b16 %v2188
      %v2452 = vunpack.c.l.b16 %v2189
      %v2453 = vunpack.c.l.b16 %v2190
      %v2454 = vunpack.c.l.b16 %v2191
      %v2455 = vunpack.c.l.b16 %v2192
      %v2456 = vunpack.c.l.b16 %v2193
      %v2457 = vunpack.c.l.b16 %v2194
      %v2458 = vunpack.c.l.b16 %v2195
      %v2459 = vunpack.c.l.b16 %v2196
      %v2460 = vunpack.c.l.b16 %v2197
      %v2461 = vunpack.c.l.b16 %v2198
      %v2462 = vpack.c.b16 %v2335, %v2334
      %v2463 = vpack.c.b16 %v2337, %v2336
      %v2464 = vpack.c.b16 %v2339, %v2338
      %v2465 = vpack.c.b16 %v2341, %v2340
      %v2466 = vpack.c.b16 %v2343, %v2342
      %v2467 = vpack.c.b16 %v2345, %v2344
      %v2468 = vpack.c.b16 %v2347, %v2346
      %v2469 = vpack.c.b16 %v2349, %v2348
      %v2470 = vpack.c.b16 %v2351, %v2350
      %v2471 = vpack.c.b16 %v2353, %v2352
      %v2472 = vpack.c.b16 %v2355, %v2354
      %v2473 = vpack.c.b16 %v2357, %v2356
      %v2474 = vpack.c.b16 %v2359, %v2358
      %v2475 = vpack.c.b16 %v2361, %v2360
      %v2476 = vpack.c.b16 %v2363, %v2362
      %v2477 = vpack.c.b16 %v2365, %v2364
      %v2478 = vpack.c.b16 %v2367, %v2366
      %v2479 = vpack.c.b16 %v2369, %v2368
      %v2480 = vpack.c.b16 %v2371, %v2370
      %v2481 = vpack.c.b16 %v2373, %v2372
      %v2482 = vpack.c.b16 %v2375, %v2374
      %v2483 = vpack.c.b16 %v2377, %v2376
      %v2484 = vpack.c.b16 %v2379, %v2378
      %v2485 = vpack.c.b16 %v2381, %v2380
      %v2486 = vpack.c.b16 %v2383, %v2382
      %v2487 = vpack.c.b16 %v2385, %v2384
      %v2488 = vpack.c.b16 %v2387, %v2386
      %v2489 = vpack.c.b16 %v2389, %v2388
      %v2490 = vpack.c.b16 %v2391, %v2390
      %v2491 = vpack.c.b16 %v2393, %v2392
      %v2492 = vpack.c.b16 %v2395, %v2394
      %v2493 = vpack.c.b16 %v2397, %v2396
      %v2494 = vpack.c.b16 %v2399, %v2398
      %v2495 = vpack.c.b16 %v2401, %v2400
      %v2496 = vpack.c.b16 %v2403, %v2402
      %v2497 = vpack.c.b16 %v2405, %v2404
      %v2498 = vpack.c.b16 %v2407, %v2406
      %v2499 = vpack.c.b16 %v2409, %v2408
      %v2500 = vpack.c.b16 %v2411, %v2410
      %v2501 = vpack.c.b16 %v2413, %v2412
      %v2502 = vpack.c.b16 %v2415, %v2414
      %v2503 = vpack.c.b16 %v2417, %v2416
      %v2504 = vpack.c.b16 %v2419, %v2418
      %v2505 = vpack.c.b16 %v2421, %v2420
      %v2506 = vpack.c.b16 %v2423, %v2422
      %v2507 = vpack.c.b16 %v2425, %v2424
      %v2508 = vpack.c.b16 %v2427, %v2426
      %v2509 = vpack.c.b16 %v2429, %v2428
      %v2510 = vpack.c.b16 %v2431, %v2430
      %v2511 = vpack.c.b16 %v2433, %v2432
      %v2512 = vpack.c.b16 %v2435, %v2434
      %v2513 = vpack.c.b16 %v2437, %v2436
      %v2514 = vpack.c.b16 %v2439, %v2438
      %v2515 = vpack.c.b16 %v2441, %v2440
      %v2516 = vpack.c.b16 %v2443, %v2442
      %v2517 = vpack.c.b16 %v2445, %v2444
      %v2518 = vpack.c.b16 %v2447, %v2446
      %v2519 = vpack.c.b16 %v2449, %v2448
      %v2520 = vpack.c.b16 %v2451, %v2450
      %v2521 = vpack.c.b16 %v2453, %v2452
      %v2522 = vpack.c.b16 %v2455, %v2454
      %v2523 = vpack.c.b16 %v2457, %v2456
      %v2524 = vpack.c.b16 %v2459, %v2458
      %v2525 = vpack.c.b16 %v2461, %v2460
      %2590 = vmatprep.subr.bf16.mxu0 0
      %2591 = vmatpush1.bf16.msra.mxu0 %v2462
      %2592 = vmatprep.subr.bf16.mxu0 0
      %2593 = vmatpush1.bf16.msra.mxu0 %v2463
      %2594 = vmatprep.subr.bf16.mxu0 0
      %2595 = vmatpush1.bf16.msra.mxu0 %v2464
      %2596 = vmatprep.subr.bf16.mxu0 0
      %2597 = vmatpush1.bf16.msra.mxu0 %v2465
      %2598 = vmatprep.subr.bf16.mxu0 0
      %2599 = vmatpush1.bf16.msra.mxu0 %v2466
      %2600 = vmatprep.subr.bf16.mxu0 0
      %2601 = vmatpush1.bf16.msra.mxu0 %v2467
      %2602 = vmatprep.subr.bf16.mxu0 0
      %2603 = vmatpush1.bf16.msra.mxu0 %v2468
      %2604 = vmatprep.subr.bf16.mxu0 0
      %2605 = vmatpush1.bf16.msra.mxu0 %v2469
      %2606 = vmatprep.subr.bf16.mxu0 0
      %2607 = vmatpush1.bf16.msra.mxu0 %v2470
      %2608 = vmatprep.subr.bf16.mxu0 0
      %2609 = vmatpush1.bf16.msra.mxu0 %v2471
      %2610 = vmatprep.subr.bf16.mxu0 0
      %2611 = vmatpush1.bf16.msra.mxu0 %v2472
      %2612 = vmatprep.subr.bf16.mxu0 0
      %2613 = vmatpush1.bf16.msra.mxu0 %v2473
      %2614 = vmatprep.subr.bf16.mxu0 0
      %2615 = vmatpush1.bf16.msra.mxu0 %v2474
      %2616 = vmatprep.subr.bf16.mxu0 0
      %2617 = vmatpush1.bf16.msra.mxu0 %v2475
      %2618 = vmatprep.subr.bf16.mxu0 0
      %2619 = vmatpush1.bf16.msra.mxu0 %v2476
      %2620 = vmatprep.subr.bf16.mxu0 0
      %2621 = vmatpush1.bf16.msra.mxu0 %v2477
      %2622 = vmatprep.mubr.bf16.mxu0 %v1904
      %2623 = vmatmul.mubr.bf16.gmra.mrb[0].mxu0 %v1903
      %v2624 = vpop.f32.mrb[0].mxu0
      %v2625 = vadd.f32 %v2204, %v2624
      %v2626 = vpop.f32.mrb[0].mxu0
      %v2627 = vpop.f32.mrb[0].mxu0
      %v2628 = vadd.f32 %v2204, %v2627
      %v2629 = vpop.f32.mrb[0].mxu0
      %2630 = vmatprep.mubr.bf16.mxu0 %v1945
      %2631 = vmatmul.mubr.bf16.gmra.mrb[0].mxu0 %v1944
      %v2632 = vpop.f32.mrb[0].mxu0
      %v2633 = vadd.f32 %v2204, %v2632
      %v2634 = vpop.f32.mrb[0].mxu0
      %v2635 = vpop.f32.mrb[0].mxu0
      %v2636 = vadd.f32 %v2204, %v2635
      %v2637 = vpop.f32.mrb[0].mxu0
      %2638 = vmatprep.mubr.bf16.mxu0 %v1988
      %2639 = vmatmul.mubr.bf16.gmra.mrb[0].mxu0 %v1987
      %v2640 = vpop.f32.mrb[0].mxu0
      %v2641 = vadd.f32 %v2204, %v2640
      %v2642 = vpop.f32.mrb[0].mxu0
      %v2643 = vpop.f32.mrb[0].mxu0
      %v2644 = vadd.f32 %v2204, %v2643
      %v2645 = vpop.f32.mrb[0].mxu0
      %2646 = vmatprep.mubr.bf16.mxu0 %v2031
      %2647 = vmatmul.mubr.bf16.gmra.mrb[0].mxu0 %v2030
      %v2648 = vpop.f32.mrb[0].mxu0
      %v2649 = vadd.f32 %v2204, %v2648
      %v2650 = vpop.f32.mrb[0].mxu0
      %v2651 = vpop.f32.mrb[0].mxu0
      %v2652 = vadd.f32 %v2204, %v2651
      %v2653 = vpop.f32.mrb[0].mxu0
      %2654 = vmatprep.mubr.bf16.mxu0 %v2045
      %2655 = vmatmul.mubr.bf16.gmra.mrb[0].mxu0 %v2041
      %v2656 = vpop.f32.mrb[0].mxu0
      %v2657 = vadd.f32 %v2204, %v2656
      %v2658 = vpop.f32.mrb[0].mxu0
      %v2659 = vpop.f32.mrb[0].mxu0
      %v2660 = vadd.f32 %v2204, %v2659
      %v2661 = vpop.f32.mrb[0].mxu0
      %2662 = vmatprep.mubr.bf16.mxu0 %v1886
      %2663 = vmatmul.mubr.bf16.gmra.mrb[0].mxu0 %v1885
      %v2664 = vpop.f32.mrb[0].mxu0
      %v2665 = vadd.f32 %v2204, %v2664
      %v2666 = vpop.f32.mrb[0].mxu0
      %v2667 = vpop.f32.mrb[0].mxu0
      %v2668 = vpop.f32.mrb[0].mxu0
      %2669 = vdwg.mxu0
      %2670 = vmatprep.subr.bf16.mxu0 0
      %2671 = vmatpush1.bf16.msra.mxu0 %v2478
      %2672 = vmatprep.subr.bf16.mxu0 0
      %2673 = vmatpush1.bf16.msra.mxu0 %v2479
      %2674 = vmatprep.subr.bf16.mxu0 0
      %2675 = vmatpush1.bf16.msra.mxu0 %v2480
      %2676 = vmatprep.subr.bf16.mxu0 0
      %2677 = vmatpush1.bf16.msra.mxu0 %v2481
      %2678 = vmatprep.subr.bf16.mxu0 0
      %2679 = vmatpush1.bf16.msra.mxu0 %v2482
      %2680 = vmatprep.subr.bf16.mxu0 0
      %2681 = vmatpush1.bf16.msra.mxu0 %v2483
      %2682 = vmatprep.subr.bf16.mxu0 0
      %2683 = vmatpush1.bf16.msra.mxu0 %v2484
      %2684 = vmatprep.subr.bf16.mxu0 0
      %2685 = vmatpush1.bf16.msra.mxu0 %v2485
      %2686 = vmatprep.subr.bf16.mxu0 0
      %2687 = vmatpush1.bf16.msra.mxu0 %v2486
      %2688 = vmatprep.subr.bf16.mxu0 0
      %2689 = vmatpush1.bf16.msra.mxu0 %v2487
      %2690 = vmatprep.subr.bf16.mxu0 0
      %2691 = vmatpush1.bf16.msra.mxu0 %v2488
      %2692 = vmatprep.subr.bf16.mxu0 0
      %2693 = vmatpush1.bf16.msra.mxu0 %v2489
      %2694 = vmatprep.subr.bf16.mxu0 0
      %2695 = vmatpush1.bf16.msra.mxu0 %v2490
      %2696 = vmatprep.subr.bf16.mxu0 0
      %2697 = vmatpush1.bf16.msra.mxu0 %v2491
      %2698 = vmatprep.subr.bf16.mxu0 0
      %2699 = vmatpush1.bf16.msra.mxu0 %v2492
      %2700 = vmatprep.subr.bf16.mxu0 0
      %2701 = vmatpush1.bf16.msra.mxu0 %v2493
      %2702 = vmatprep.mubr.bf16.mxu0 %v1906
      %2703 = vmatmul.mubr.bf16.gmra.mrb[0].mxu0 %v1905
      %v2704 = vpop.f32.mrb[0].mxu0
      %v2705 = vadd.f32 %v2625, %v2704
      %v2706 = vpop.f32.mrb[0].mxu0
      %v2707 = vpop.f32.mrb[0].mxu0
      %v2708 = vadd.f32 %v2628, %v2707
      %v2709 = vpop.f32.mrb[0].mxu0
      %2710 = vmatprep.mubr.bf16.mxu0 %v1947
      %2711 = vmatmul.mubr.bf16.gmra.mrb[0].mxu0 %v1946
      %v2712 = vpop.f32.mrb[0].mxu0
      %v2713 = vadd.f32 %v2633, %v2712
      %v2714 = vpop.f32.mrb[0].mxu0
      %v2715 = vpop.f32.mrb[0].mxu0
      %v2716 = vadd.f32 %v2636, %v2715
      %v2717 = vpop.f32.mrb[0].mxu0
      %2718 = vmatprep.mubr.bf16.mxu0 %v1990
      %2719 = vmatmul.mubr.bf16.gmra.mrb[0].mxu0 %v1989
      %v2720 = vpop.f32.mrb[0].mxu0
      %v2721 = vadd.f32 %v2641, %v2720
      %v2722 = vpop.f32.mrb[0].mxu0
      %v2723 = vpop.f32.mrb[0].mxu0
      %v2724 = vadd.f32 %v2644, %v2723
      %v2725 = vpop.f32.mrb[0].mxu0
      %2726 = vmatprep.mubr.bf16.mxu0 %v2033
      %2727 = vmatmul.mubr.bf16.gmra.mrb[0].mxu0 %v2032
      %v2728 = vpop.f32.mrb[0].mxu0
      %v2729 = vadd.f32 %v2649, %v2728
      %v2730 = vpop.f32.mrb[0].mxu0
      %v2731 = vpop.f32.mrb[0].mxu0
      %v2732 = vadd.f32 %v2652, %v2731
      %v2733 = vpop.f32.mrb[0].mxu0
      %2734 = vmatprep.mubr.bf16.mxu0 %v2053
      %2735 = vmatmul.mubr.bf16.gmra.mrb[0].mxu0 %v2049
      %v2736 = vpop.f32.mrb[0].mxu0
      %v2737 = vadd.f32 %v2657, %v2736
      %v2738 = vpop.f32.mrb[0].mxu0
      %v2739 = vpop.f32.mrb[0].mxu0
      %v2740 = vadd.f32 %v2660, %v2739
      %v2741 = vpop.f32.mrb[0].mxu0
      %2742 = vmatprep.mubr.bf16.mxu0 %v1888
      %2743 = vmatmul.mubr.bf16.gmra.mrb[0].mxu0 %v1887
      %v2744 = vpop.f32.mrb[0].mxu0
      %v2745 = vadd.f32 %v2665, %v2744
      %v2746 = vpop.f32.mrb[0].mxu0
      %v2747 = vpop.f32.mrb[0].mxu0
      %v2748 = vpop.f32.mrb[0].mxu0
      %2749 = vdwg.mxu0
      %2750 = vmatprep.subr.bf16.mxu0 0
      %2751 = vmatpush1.bf16.msra.mxu0 %v2494
      %2752 = vmatprep.subr.bf16.mxu0 0
      %2753 = vmatpush1.bf16.msra.mxu0 %v2495
      %2754 = vmatprep.subr.bf16.mxu0 0
      %2755 = vmatpush1.bf16.msra.mxu0 %v2496
      %2756 = vmatprep.subr.bf16.mxu0 0
      %2757 = vmatpush1.bf16.msra.mxu0 %v2497
      %2758 = vmatprep.subr.bf16.mxu0 0
      %2759 = vmatpush1.bf16.msra.mxu0 %v2498
      %2760 = vmatprep.subr.bf16.mxu0 0
      %2761 = vmatpush1.bf16.msra.mxu0 %v2499
      %2762 = vmatprep.subr.bf16.mxu0 0
      %2763 = vmatpush1.bf16.msra.mxu0 %v2500
      %2764 = vmatprep.subr.bf16.mxu0 0
      %2765 = vmatpush1.bf16.msra.mxu0 %v2501
      %2766 = vmatprep.subr.bf16.mxu0 0
      %2767 = vmatpush1.bf16.msra.mxu0 %v2502
      %2768 = vmatprep.subr.bf16.mxu0 0
      %2769 = vmatpush1.bf16.msra.mxu0 %v2503
      %2770 = vmatprep.subr.bf16.mxu0 0
      %2771 = vmatpush1.bf16.msra.mxu0 %v2504
      %2772 = vmatprep.subr.bf16.mxu0 0
      %2773 = vmatpush1.bf16.msra.mxu0 %v2505
      %2774 = vmatprep.subr.bf16.mxu0 0
      %2775 = vmatpush1.bf16.msra.mxu0 %v2506
      %2776 = vmatprep.subr.bf16.mxu0 0
      %2777 = vmatpush1.bf16.msra.mxu0 %v2507
      %2778 = vmatprep.subr.bf16.mxu0 0
      %2779 = vmatpush1.bf16.msra.mxu0 %v2508
      %2780 = vmatprep.subr.bf16.mxu0 0
      %2781 = vmatpush1.bf16.msra.mxu0 %v2509
      %2782 = vmatprep.mubr.bf16.mxu0 %v1908
      %2783 = vmatmul.mubr.bf16.gmra.mrb[0].mxu0 %v1907
      %v2784 = vpop.f32.mrb[0].mxu0
      %v2785 = vadd.f32 %v2705, %v2784
      %v2786 = vpop.f32.mrb[0].mxu0
      %v2787 = vpop.f32.mrb[0].mxu0
      %v2788 = vadd.f32 %v2708, %v2787
      %v2789 = vpop.f32.mrb[0].mxu0
      %2790 = vmatprep.mubr.bf16.mxu0 %v1949
      %2791 = vmatmul.mubr.bf16.gmra.mrb[0].mxu0 %v1948
      %v2792 = vpop.f32.mrb[0].mxu0
      %v2793 = vadd.f32 %v2713, %v2792
      %v2794 = vpop.f32.mrb[0].mxu0
      %v2795 = vpop.f32.mrb[0].mxu0
      %v2796 = vadd.f32 %v2716, %v2795
      %v2797 = vpop.f32.mrb[0].mxu0
      %2798 = vmatprep.mubr.bf16.mxu0 %v1992
      %2799 = vmatmul.mubr.bf16.gmra.mrb[0].mxu0 %v1991
      %v2800 = vpop.f32.mrb[0].mxu0
      %v2801 = vadd.f32 %v2721, %v2800
      %v2802 = vpop.f32.mrb[0].mxu0
      %v2803 = vpop.f32.mrb[0].mxu0
      %v2804 = vadd.f32 %v2724, %v2803
      %v2805 = vpop.f32.mrb[0].mxu0
      %2806 = vmatprep.mubr.bf16.mxu0 %v2035
      %2807 = vmatmul.mubr.bf16.gmra.mrb[0].mxu0 %v2034
      %v2808 = vpop.f32.mrb[0].mxu0
      %v2809 = vadd.f32 %v2729, %v2808
      %v2810 = vpop.f32.mrb[0].mxu0
      %v2811 = vpop.f32.mrb[0].mxu0
      %v2812 = vadd.f32 %v2732, %v2811
      %v2813 = vpop.f32.mrb[0].mxu0
      %2814 = vmatprep.mubr.bf16.mxu0 %v2061
      %2815 = vmatmul.mubr.bf16.gmra.mrb[0].mxu0 %v2057
      %v2816 = vpop.f32.mrb[0].mxu0
      %v2817 = vadd.f32 %v2737, %v2816
      %v2818 = vpop.f32.mrb[0].mxu0
      %v2819 = vpop.f32.mrb[0].mxu0
      %v2820 = vadd.f32 %v2740, %v2819
      %v2821 = vpop.f32.mrb[0].mxu0
      %2822 = vmatprep.mubr.bf16.mxu0 %v1890
      %2823 = vmatmul.mubr.bf16.gmra.mrb[0].mxu0 %v1889
      %v2824 = vpop.f32.mrb[0].mxu0
      %v2825 = vadd.f32 %v2745, %v2824
      %v2826 = vpop.f32.mrb[0].mxu0
      %v2827 = vpop.f32.mrb[0].mxu0
      %v2828 = vpop.f32.mrb[0].mxu0
      %2829 = vdwg.mxu0
      %2830 = vmatprep.subr.bf16.mxu0 0
      %2831 = vmatpush1.bf16.msra.mxu0 %v2510
      %2832 = vmatprep.subr.bf16.mxu0 0
      %2833 = vmatpush1.bf16.msra.mxu0 %v2511
      %2834 = vmatprep.subr.bf16.mxu0 0
      %2835 = vmatpush1.bf16.msra.mxu0 %v2512
      %2836 = vmatprep.subr.bf16.mxu0 0
      %2837 = vmatpush1.bf16.msra.mxu0 %v2513
      %2838 = vmatprep.subr.bf16.mxu0 0
      %2839 = vmatpush1.bf16.msra.mxu0 %v2514
      %2840 = vmatprep.subr.bf16.mxu0 0
      %2841 = vmatpush1.bf16.msra.mxu0 %v2515
      %2842 = vmatprep.subr.bf16.mxu0 0
      %2843 = vmatpush1.bf16.msra.mxu0 %v2516
      %2844 = vmatprep.subr.bf16.mxu0 0
      %2845 = vmatpush1.bf16.msra.mxu0 %v2517
      %2846 = vmatprep.subr.bf16.mxu0 0
      %2847 = vmatpush1.bf16.msra.mxu0 %v2518
      %2848 = vmatprep.subr.bf16.mxu0 0
      %2849 = vmatpush1.bf16.msra.mxu0 %v2519
      %2850 = vmatprep.subr.bf16.mxu0 0
      %2851 = vmatpush1.bf16.msra.mxu0 %v2520
      %2852 = vmatprep.subr.bf16.mxu0 0
      %2853 = vmatpush1.bf16.msra.mxu0 %v2521
      %2854 = vmatprep.subr.bf16.mxu0 0
      %2855 = vmatpush1.bf16.msra.mxu0 %v2522
      %2856 = vmatprep.subr.bf16.mxu0 0
      %2857 = vmatpush1.bf16.msra.mxu0 %v2523
      %2858 = vmatprep.subr.bf16.mxu0 0
      %2859 = vmatpush1.bf16.msra.mxu0 %v2524
      %2860 = vmatprep.subr.bf16.mxu0 0
      %2861 = vmatpush1.bf16.msra.mxu0 %v2525
      %2862 = vmatprep.mubr.bf16.mxu0 %v1910
      %2863 = vmatmul.mubr.bf16.gmra.mrb[0].mxu0 %v1909
      %v2864 = vpop.f32.mrb[0].mxu0
      %v2865 = vadd.f32 %v2785, %v2864
      %v2866 = vpop.f32.mrb[0].mxu0
      %v2867 = vpop.f32.mrb[0].mxu0
      %v2868 = vadd.f32 %v2788, %v2867
      %v2869 = vpop.f32.mrb[0].mxu0
      %2870 = vmatprep.mubr.bf16.mxu0 %v1951
      %2871 = vmatmul.mubr.bf16.gmra.mrb[0].mxu0 %v1950
      %v2872 = vpop.f32.mrb[0].mxu0
      %v2873 = vadd.f32 %v2793, %v2872
      %v2874 = vpop.f32.mrb[0].mxu0
      %v2875 = vpop.f32.mrb[0].mxu0
      %v2876 = vadd.f32 %v2796, %v2875
      %v2877 = vpop.f32.mrb[0].mxu0
      %2878 = vmatprep.mubr.bf16.mxu0 %v1994
      %2879 = vmatmul.mubr.bf16.gmra.mrb[0].mxu0 %v1993
      %v2880 = vpop.f32.mrb[0].mxu0
      %v2881 = vadd.f32 %v2801, %v2880
      %v2882 = vpop.f32.mrb[0].mxu0
      %v2883 = vpop.f32.mrb[0].mxu0
      %v2884 = vadd.f32 %v2804, %v2883
      %v2885 = vpop.f32.mrb[0].mxu0
      %2886 = vmatprep.mubr.bf16.mxu0 %v2037
      %2887 = vmatmul.mubr.bf16.gmra.mrb[0].mxu0 %v2036
      %v2888 = vpop.f32.mrb[0].mxu0
      %v2889 = vadd.f32 %v2809, %v2888
      %v2890 = vpop.f32.mrb[0].mxu0
      %v2891 = vpop.f32.mrb[0].mxu0
      %v2892 = vadd.f32 %v2812, %v2891
      %v2893 = vpop.f32.mrb[0].mxu0
      %2894 = vmatprep.mubr.bf16.mxu0 %v2069
      %2895 = vmatmul.mubr.bf16.gmra.mrb[0].mxu0 %v2065
      %v2896 = vpop.f32.mrb[0].mxu0
      %v2897 = vadd.f32 %v2817, %v2896
      %v2898 = vpop.f32.mrb[0].mxu0
      %v2899 = vpop.f32.mrb[0].mxu0
      %v2900 = vadd.f32 %v2820, %v2899
      %v2901 = vpop.f32.mrb[0].mxu0
      %2902 = vmatprep.mubr.bf16.mxu0 %v1892
      %2903 = vmatmul.mubr.bf16.gmra.mrb[0].mxu0 %v1891
      %v2904 = vpop.f32.mrb[0].mxu0
      %v2905 = vadd.f32 %v2825, %v2904
      %v2906 = vpop.f32.mrb[0].mxu0
      %v2907 = vpop.f32.mrb[0].mxu0
      %v2908 = vpop.f32.mrb[0].mxu0
      %2909 = vdwg.mxu0
      %v2910 = vmax.f32 %v2865, 0.0
      %v2911 = vmax.f32 %v2868, 0.0
      %v2912 = vmax.f32 %v2873, 0.0
      %v2913 = vmax.f32 %v2876, 0.0
      %v2914 = vmax.f32 %v2881, 0.0
      %v2915 = vmax.f32 %v2884, 0.0
      %v2916 = vmax.f32 %v2889, 0.0
      %v2917 = vmax.f32 %v2892, 0.0
      %v2918 = vmax.f32 %v2897, 0.0
      %v2919 = vmax.f32 %v2900, 0.0
      %v2920 = vmax.f32 %v2905, 0.0
      %v2921 = vpack.c.bf16 %v2911, %v2910
      %v2922 = vpack.c.bf16 %v2913, %v2912
      %v2923 = vpack.c.bf16 %v2915, %v2914
      %v2924 = vpack.c.bf16 %v2917, %v2916
      %v2925 = vpack.c.bf16 %v2919, %v2918
      %v2926 = vpack.c.bf16 %v2920, %v2920
      %v2928 = vshrl.u32 %v2921, 16
      %v2930 = vshll.u32 %v2921, 16
      %v2932 = vrot.slane %v2930, 1
      %v2933 = vor.u32 %v2928, %v2932
      %v2936 = vrot.slane %v2921, 1
      %v2938 = vrot.slane %v2928, 4
      %v2939 = vrot.slane %v2930, 5
      %v2940 = vor.u32 %v2938, %v2939
      %v2943 = vrot.slane %v2921, 5
      %v2944 = vrot.slane %v2922, 5
      %v2945 = vsel %vm1335, %v2943, %v2944
      %v2947 = vrot.slane %v2928, 5
      %v2948 = vrot.slane %v2930, 6
      %v2949 = vor.u32 %v2947, %v2948
      %v2951 = vshrl.u32 %v2922, 16
      %v2953 = vrot.slane %v2951, 5
      %v2954 = vshll.u32 %v2922, 16
      %v2956 = vrot.slane %v2954, 6
      %v2957 = vor.u32 %v2953, %v2956
      %v2958 = vsel %vm1344, %v2949, %v2957
      %v2960 = vrot.slane %v2922, 1
      %v2962 = vrot.slane %v2951, 1
      %v2963 = vrot.slane %v2954, 2
      %v2964 = vor.u32 %v2962, %v2963
      %v2966 = vrot.slane %v2922, 2
      %v2968 = vrot.slane %v2954, 1
      %v2969 = vsel %vm1371, %v2933, %v2968
      %v2970 = vsel %vm1985, %v2936, %v2960
      %v2971 = vrot.slane %v2951, 4
      %v2972 = vrot.slane %v2954, 5
      %v2973 = vor.u32 %v2971, %v2972
      %v2975 = vrot.slane %v2923, 1
      %v2976 = vsel %vm1985, %v2960, %v2975
      %v2978 = vshrl.u32 %v2923, 16
      %v2980 = vrot.slane %v2978, 1
      %v2981 = vshll.u32 %v2923, 16
      %v2983 = vrot.slane %v2981, 2
      %v2984 = vor.u32 %v2980, %v2983
      %v2985 = vsel %vm1594, %v2964, %v2984
      %v2986 = vrot.slane %v2923, 2
      %v2987 = vsel %vm1719, %v2966, %v2986
      %v2988 = vor.u32 %v2951, %v2968
      %vm2989 = vsmask.f32 3328
      %v2990 = vrot.slane %v2978, 4
      %v2991 = vrot.slane %v2981, 5
      %v2992 = vor.u32 %v2990, %v2991
      %v2993 = vsel %vm2989, %v2973, %v2992
      %v2994 = vrot.slane %v2923, 5
      %v2995 = vsel %vm1335, %v2944, %v2994
      %v2996 = vrot.slane %v2978, 5
      %v2997 = vrot.slane %v2981, 6
      %v2998 = vor.u32 %v2996, %v2997
      %v2999 = vsel %vm1344, %v2957, %v2998
      %v3000 = vrot.slane %v2981, 1
      %v3001 = vsel %vm1371, %v2988, %v3000
      %v3002 = vor.u32 %v2978, %v3000
      %v3004 = vrot.slane %v2924, 1
      %v3005 = vsel %vm1985, %v2975, %v3004
      %v3007 = vshrl.u32 %v2924, 16
      %v3009 = vrot.slane %v3007, 1
      %v3010 = vshll.u32 %v2924, 16
      %v3012 = vrot.slane %v3010, 2
      %v3013 = vor.u32 %v3009, %v3012
      %v3014 = vsel %vm1594, %v2984, %v3013
      %v3015 = vrot.slane %v2924, 2
      %v3016 = vsel %vm1719, %v2986, %v3015
      %v3017 = vrot.slane %v3007, 4
      %v3018 = vrot.slane %v3010, 5
      %v3019 = vor.u32 %v3017, %v3018
      %v3020 = vsel %vm2989, %v2992, %v3019
      %v3021 = vrot.slane %v2924, 5
      %v3022 = vsel %vm1335, %v2994, %v3021
      %v3023 = vrot.slane %v3007, 5
      %v3024 = vrot.slane %v3010, 6
      %v3025 = vor.u32 %v3023, %v3024
      %v3026 = vsel %vm1344, %v2996, %v3025
      %v3027 = vrot.slane %v3010, 1
      %v3028 = vsel %vm1371, %v3002, %v3027
      %v3029 = vor.u32 %v3007, %v3027
      %v3031 = vrot.slane %v2925, 1
      %v3032 = vsel %vm1985, %v3004, %v3031
      %v3034 = vshrl.u32 %v2925, 16
      %v3036 = vrot.slane %v3034, 1
      %v3037 = vshll.u32 %v2925, 16
      %v3039 = vrot.slane %v3037, 2
      %v3040 = vor.u32 %v3036, %v3039
      %v3041 = vrot.slane %v2925, 2
      %v3042 = vrot.slane %v3034, 4
      %v3043 = vrot.slane %v3037, 5
      %v3044 = vor.u32 %v3042, %v3043
      %v3045 = vsel %vm2989, %v3017, %v3044
      %v3046 = vrot.slane %v2925, 5
      %v3047 = vrot.slane %v3034, 5
      %v3048 = vrot.slane %v3037, 6
      %v3049 = vor.u32 %v3047, %v3048
      %v3051 = vrot.slane %v2926, 2
      %v3052 = vsel %vm1719, %v3041, %v3051
      %v3053 = vrot.slane %v2969, 1
      %v3054 = vrot.slane %v2970, 1
      %v3055 = vrot.slane %v2973, 1
      %v3056 = vrot.slane %v2944, 1
      %v3057 = vrot.slane %v2957, 1
      %v3058 = vrot.slane %v2976, 1
      %v3059 = vrot.slane %v2985, 1
      %v3060 = vrot.slane %v2987, 1
      %v3069 = vrot.slane %v2988, 2
      %v3070 = vrot.slane %v2960, 2
      %v3071 = vrot.slane %v2993, 2
      %v3072 = vrot.slane %v2995, 2
      %v3073 = vrot.slane %v2999, 2
      %v3074 = vrot.slane %v2975, 2
      %v3075 = vrot.slane %v2984, 2
      %v3076 = vrot.slane %v2986, 2
      %v3085 = vrot.slane %v2922, 3
      %v3086 = vrot.slane %v2923, 3
      %v3087 = vsel %vm1802, %v3085, %v3086
      %v3088 = vrot.slane %v3001, 3
      %v3089 = vrot.slane %v3002, 3
      %v3090 = vsel %vm1802, %v3088, %v3089
      %v3091 = vrot.slane %v2976, 3
      %v3092 = vrot.slane %v2975, 3
      %v3093 = vsel %vm1802, %v3091, %v3092
      %v3094 = vrot.slane %v2992, 3
      %v3095 = vsel %vm1802, %v3094, %v3094
      %v3096 = vrot.slane %v2994, 3
      %v3097 = vsel %vm1802, %v3096, %v3096
      %v3098 = vrot.slane %v2998, 3
      %v3099 = vsel %vm1802, %v3098, %v3098
      %v3100 = vrot.slane %v3005, 3
      %v3101 = vrot.slane %v3004, 3
      %v3102 = vsel %vm1802, %v3100, %v3101
      %v3103 = vrot.slane %v3014, 3
      %v3104 = vrot.slane %v3013, 3
      %v3105 = vsel %vm1802, %v3103, %v3104
      %v3106 = vrot.slane %v3016, 3
      %v3107 = vrot.slane %v3015, 3
      %v3108 = vsel %vm1802, %v3106, %v3107
      %v3118 = vrot.slane %v2923, 4
      %v3119 = vrot.slane %v3002, 4
      %v3120 = vrot.slane %v2975, 4
      %v3121 = vrot.slane %v3020, 4
      %v3122 = vrot.slane %v3022, 4
      %v3123 = vrot.slane %v3026, 4
      %v3124 = vrot.slane %v3004, 4
      %v3125 = vrot.slane %v3013, 4
      %v3126 = vrot.slane %v3015, 4
      %v3136 = vrot.slane %v3028, 5
      %v3137 = vrot.slane %v3029, 5
      %v3138 = vsel %vm1335, %v3136, %v3137
      %v3139 = vrot.slane %v3005, 5
      %v3140 = vrot.slane %v3004, 5
      %v3141 = vsel %vm1335, %v3139, %v3140
      %v3142 = vrot.slane %v3019, 5
      %v3143 = vsel %vm1335, %v3142, %v3142
      %v3144 = vrot.slane %v3021, 5
      %v3145 = vsel %vm1335, %v3144, %v3144
      %v3146 = vrot.slane %v3025, 5
      %v3147 = vsel %vm1335, %v3146, %v3146
      %v3148 = vrot.slane %v3032, 5
      %v3149 = vrot.slane %v3031, 5
      %v3150 = vsel %vm1335, %v3148, %v3149
      %v3151 = vrot.slane %v3040, 5
      %v3152 = vsel %vm1335, %v3151, %v3151
      %v3153 = vrot.slane %v3041, 5
      %v3154 = vsel %vm1335, %v3153, %v3153
      %v3164 = vrot.slane %v2924, 6
      %v3165 = vrot.slane %v3029, 6
      %v3166 = vrot.slane %v3004, 6
      %v3167 = vrot.slane %v3045, 6
      %v3168 = vrot.slane %v3046, 6
      %v3169 = vrot.slane %v3049, 6
      %v3170 = vrot.slane %v3031, 6
      %v3171 = vrot.slane %v3040, 6
      %v3172 = vrot.slane %v3052, 6
      %vm3182 = vcmask 1043456
      %vm3183 = vmand %vm3182, %vm2989
      %v3184 = vsel %vm3183, %v2921, %v2936
      %v3185 = vsel %vm3183, %v2933, %v3053
      %v3186 = vsel %vm3183, %v2936, %v3054
      %v3187 = vsel %vm3183, %v2940, %v3055
      %v3188 = vsel %vm3183, %v2945, %v3056
      %v3189 = vsel %vm3183, %v2958, %v3057
      %v3190 = vsel %vm3183, %v2960, %v3058
      %v3191 = vsel %vm3183, %v2964, %v3059
      %v3192 = vsel %vm3183, %v2966, %v3060
      %vm3193 = vcmask 1046528
      %v3196 = vsel %vm3193, %v3184, %v2966
      %v3200 = vsel %vm3193, %v3185, %v3069
      %v3204 = vsel %vm3193, %v3186, %v3070
      %v3208 = vsel %vm3193, %v3187, %v3071
      %v3212 = vsel %vm3193, %v3188, %v3072
      %v3216 = vsel %vm3193, %v3189, %v3073
      %v3220 = vsel %vm3193, %v3190, %v3074
      %v3224 = vsel %vm3193, %v3191, %v3075
      %v3228 = vsel %vm3193, %v3192, %v3076
      %vm3230 = vmand %vm1335, %vm1344
      %v3231 = vsel %vm3230, %v2966, %v3087
      %v3232 = vsel %vm3230, %v3069, %v3090
      %v3233 = vsel %vm3230, %v3070, %v3093
      %v3234 = vsel %vm3230, %v3071, %v3095
      %v3235 = vsel %vm3230, %v3072, %v3097
      %v3236 = vsel %vm3230, %v3073, %v3099
      %v3237 = vsel %vm3230, %v3074, %v3102
      %v3238 = vsel %vm3230, %v3075, %v3105
      %v3239 = vsel %vm3230, %v3076, %v3108
      %vm3240 = vcmask 1045504
      %v3243 = vsel %vm3240, %v3231, %v3118
      %v3247 = vsel %vm3240, %v3232, %v3119
      %v3251 = vsel %vm3240, %v3233, %v3120
      %v3255 = vsel %vm3240, %v3234, %v3121
      %v3259 = vsel %vm3240, %v3235, %v3122
      %v3263 = vsel %vm3240, %v3236, %v3123
      %v3267 = vsel %vm3240, %v3237, %v3124
      %v3271 = vsel %vm3240, %v3238, %v3125
      %v3275 = vsel %vm3240, %v3239, %v3126
      %vm3277 = vcmask 1041408
      %vm3278 = vsmask.f32 1280
      %vm3279 = vmand %vm3277, %vm3278
      %v3280 = vsel %vm3279, %v3118, %v3022
      %v3281 = vsel %vm3279, %v3119, %v3138
      %v3282 = vsel %vm3279, %v3120, %v3141
      %v3283 = vsel %vm3279, %v3121, %v3143
      %v3284 = vsel %vm3279, %v3122, %v3145
      %v3285 = vsel %vm3279, %v3123, %v3147
      %v3286 = vsel %vm3279, %v3124, %v3150
      %v3287 = vsel %vm3279, %v3125, %v3152
      %v3288 = vsel %vm3279, %v3126, %v3154
      %vm3289 = vcmask 1044480
      %v3292 = vsel %vm3289, %v3280, %v3164
      %v3296 = vsel %vm3289, %v3281, %v3165
      %v3300 = vsel %vm3289, %v3282, %v3166
      %v3304 = vsel %vm3289, %v3283, %v3167
      %v3308 = vsel %vm3289, %v3284, %v3168
      %v3312 = vsel %vm3289, %v3285, %v3169
      %v3316 = vsel %vm3289, %v3286, %v3170
      %v3320 = vsel %vm3289, %v3287, %v3171
      %v3324 = vsel %vm3289, %v3288, %v3172
      %v3326 = vld [vmem:[%s5] sm:$0xf]
      %v3327 = vld [vmem:[%s5 + $0x4] sm:$0xf]
      %v3328 = vld [vmem:[%s5 + $0x8] sm:$0xf]
      %v3329 = vld [vmem:[%s5 + $0xc] sm:$0xf]
      %v3330 = vld [vmem:[%s5 + $0x10] sm:$0xf]
      %v3331 = vld [vmem:[%s5 + $0x14] sm:$0xf]
      %v3332 = vld [vmem:[%s5 + $0x18] sm:$0xf]
      %v3333 = vld [vmem:[%s5 + $0x1c] sm:$0xf]
      %v3334 = vld [vmem:[%s5 + $0x20] sm:$0xf]
      %v3335 = vld [vmem:[%s5 + $0x24] sm:$0xf]
      %v3336 = vld [vmem:[%s5 + $0x28] sm:$0xf]
      %v3337 = vld [vmem:[%s5 + $0x2c] sm:$0xf]
      %v3338 = vld [vmem:[%s5 + $0x30] sm:$0xf]
      %v3339 = vld [vmem:[%s5 + $0x34] sm:$0xf]
      %v3340 = vld [vmem:[%s5 + $0x38] sm:$0xf]
      %v3341 = vld [vmem:[%s5 + $0x3c] sm:$0xf]
      %v3342 = vld [vmem:[%s5 + $0x40] sm:$0xf]
      %v3343 = vld [vmem:[%s5 + $0x44] sm:$0xf]
      %v3344 = vld [vmem:[%s5 + $0x48] sm:$0xf]
      %v3345 = vld [vmem:[%s5 + $0x4c] sm:$0xf]
      %v3346 = vld [vmem:[%s5 + $0x50] sm:$0xf]
      %v3347 = vld [vmem:[%s5 + $0x54] sm:$0xf]
      %v3348 = vld [vmem:[%s5 + $0x58] sm:$0xf]
      %v3349 = vld [vmem:[%s5 + $0x5c] sm:$0xf]
      %v3350 = vld [vmem:[%s5 + $0x60] sm:$0xf]
      %v3351 = vld [vmem:[%s5 + $0x64] sm:$0xf]
      %v3352 = vld [vmem:[%s5 + $0x68] sm:$0xf]
      %v3353 = vld [vmem:[%s5 + $0x6c] sm:$0xf]
      %v3354 = vld [vmem:[%s5 + $0x70] sm:$0xf]
      %v3355 = vld [vmem:[%s5 + $0x74] sm:$0xf]
      %v3356 = vld [vmem:[%s5 + $0x78] sm:$0xf]
      %v3357 = vld [vmem:[%s5 + $0x7c] sm:$0xf]
      %v3358 = vld [vmem:[%s5 + $0x80] sm:$0xf]
      %v3359 = vld [vmem:[%s5 + $0x84] sm:$0xf]
      %v3360 = vld [vmem:[%s5 + $0x88] sm:$0xf]
      %v3361 = vld [vmem:[%s5 + $0x8c] sm:$0xf]
      %v3362 = vld [vmem:[%s5 + $0x90] sm:$0xf]
      %v3363 = vld [vmem:[%s5 + $0x94] sm:$0xf]
      %v3364 = vld [vmem:[%s5 + $0x98] sm:$0xf]
      %v3365 = vld [vmem:[%s5 + $0x9c] sm:$0xf]
      %v3366 = vld [vmem:[%s5 + $0xa0] sm:$0xf]
      %v3367 = vld [vmem:[%s5 + $0xa4] sm:$0xf]
      %v3368 = vld [vmem:[%s5 + $0xa8] sm:$0xf]
      %v3369 = vld [vmem:[%s5 + $0xac] sm:$0xf]
      %v3370 = vld [vmem:[%s5 + $0xb0] sm:$0xf]
      %v3371 = vld [vmem:[%s5 + $0xb4] sm:$0xf]
      %v3372 = vld [vmem:[%s5 + $0xb8] sm:$0xf]
      %v3373 = vld [vmem:[%s5 + $0xbc] sm:$0xf]
      %v3374 = vld [vmem:[%s5 + $0xc0] sm:$0xf]
      %v3375 = vld [vmem:[%s5 + $0xc4] sm:$0xf]
      %v3376 = vld [vmem:[%s5 + $0xc8] sm:$0xf]
      %v3377 = vld [vmem:[%s5 + $0xcc] sm:$0xf]
      %v3378 = vld [vmem:[%s5 + $0xd0] sm:$0xf]
      %v3379 = vld [vmem:[%s5 + $0xd4] sm:$0xf]
      %v3380 = vld [vmem:[%s5 + $0xd8] sm:$0xf]
      %v3381 = vld [vmem:[%s5 + $0xdc] sm:$0xf]
      %v3382 = vld [vmem:[%s5 + $0xe0] sm:$0xf]
      %v3383 = vld [vmem:[%s5 + $0xe4] sm:$0xf]
      %v3384 = vld [vmem:[%s5 + $0xe8] sm:$0xf]
      %v3385 = vld [vmem:[%s5 + $0xec] sm:$0xf]
      %v3386 = vld [vmem:[%s5 + $0xf0] sm:$0xf]
      %v3387 = vld [vmem:[%s5 + $0xf4] sm:$0xf]
      %v3388 = vld [vmem:[%s5 + $0xf8] sm:$0xf]
      %v3389 = vld [vmem:[%s5 + $0xfc] sm:$0xf]
      %v3390 = vld [vmem:[%s5 + $0x100] sm:$0xf]
      %v3391 = vld [vmem:[%s5 + $0x104] sm:$0xf]
      %v3392 = vld [vmem:[%s5 + $0x108] sm:$0xf]
      %v3393 = vld [vmem:[%s5 + $0x10c] sm:$0xf]
      %v3394 = vld [vmem:[%s5 + $0x110] sm:$0xf]
      %v3395 = vld [vmem:[%s5 + $0x114] sm:$0xf]
      %v3396 = vld [vmem:[%s5 + $0x118] sm:$0xf]
      %v3397 = vld [vmem:[%s5 + $0x11c] sm:$0xf]
      %v3398 = vld [vmem:[%s5 + $0x120] sm:$0xf]
      %v3399 = vld [vmem:[%s5 + $0x124] sm:$0xf]
      %v3400 = vld [vmem:[%s5 + $0x128] sm:$0xf]
      %v3401 = vld [vmem:[%s5 + $0x12c] sm:$0xf]
      %v3402 = vld [vmem:[%s5 + $0x130] sm:$0xf]
      %v3403 = vld [vmem:[%s5 + $0x134] sm:$0xf]
      %v3404 = vld [vmem:[%s5 + $0x138] sm:$0xf]
      %v3405 = vld [vmem:[%s5 + $0x13c] sm:$0xf]
      %v3406 = vld [vmem:[%s5 + $0x140] sm:$0xf]
      %v3407 = vld [vmem:[%s5 + $0x144] sm:$0xf]
      %v3408 = vld [vmem:[%s5 + $0x148] sm:$0xf]
      %v3409 = vld [vmem:[%s5 + $0x14c] sm:$0xf]
      %v3410 = vld [vmem:[%s5 + $0x150] sm:$0xf]
      %v3411 = vld [vmem:[%s5 + $0x154] sm:$0xf]
      %v3412 = vld [vmem:[%s5 + $0x158] sm:$0xf]
      %v3413 = vld [vmem:[%s5 + $0x15c] sm:$0xf]
      %v3414 = vld [vmem:[%s5 + $0x160] sm:$0xf]
      %v3415 = vld [vmem:[%s5 + $0x164] sm:$0xf]
      %v3416 = vld [vmem:[%s5 + $0x168] sm:$0xf]
      %v3417 = vld [vmem:[%s5 + $0x16c] sm:$0xf]
      %v3418 = vld [vmem:[%s5 + $0x170] sm:$0xf]
      %v3419 = vld [vmem:[%s5 + $0x174] sm:$0xf]
      %v3420 = vld [vmem:[%s5 + $0x178] sm:$0xf]
      %v3421 = vld [vmem:[%s5 + $0x17c] sm:$0xf]
      %v3422 = vld [vmem:[%s5 + $0x180] sm:$0xf]
      %v3423 = vld [vmem:[%s5 + $0x184] sm:$0xf]
      %v3424 = vld [vmem:[%s5 + $0x188] sm:$0xf]
      %v3425 = vld [vmem:[%s5 + $0x18c] sm:$0xf]
      %v3426 = vld [vmem:[%s5 + $0x190] sm:$0xf]
      %v3427 = vld [vmem:[%s5 + $0x194] sm:$0xf]
      %v3428 = vld [vmem:[%s5 + $0x198] sm:$0xf]
      %v3429 = vld [vmem:[%s5 + $0x19c] sm:$0xf]
      %v3430 = vld [vmem:[%s5 + $0x1a0] sm:$0xf]
      %v3431 = vld [vmem:[%s5 + $0x1a4] sm:$0xf]
      %v3432 = vld [vmem:[%s5 + $0x1a8] sm:$0xf]
      %v3433 = vld [vmem:[%s5 + $0x1ac] sm:$0xf]
      %v3434 = vld [vmem:[%s5 + $0x1b0] sm:$0xf]
      %v3435 = vld [vmem:[%s5 + $0x1b4] sm:$0xf]
      %v3436 = vld [vmem:[%s5 + $0x1b8] sm:$0xf]
      %v3437 = vld [vmem:[%s5 + $0x1bc] sm:$0xf]
      %v3438 = vld [vmem:[%s5 + $0x1c0] sm:$0xf]
      %v3439 = vld [vmem:[%s5 + $0x1c4] sm:$0xf]
      %v3440 = vld [vmem:[%s5 + $0x1c8] sm:$0xf]
      %v3441 = vld [vmem:[%s5 + $0x1cc] sm:$0xf]
      %v3442 = vld [vmem:[%s5 + $0x1d0] sm:$0xf]
      %v3443 = vld [vmem:[%s5 + $0x1d4] sm:$0xf]
      %v3444 = vld [vmem:[%s5 + $0x1d8] sm:$0xf]
      %v3445 = vld [vmem:[%s5 + $0x1dc] sm:$0xf]
      %v3446 = vld [vmem:[%s5 + $0x1e0] sm:$0xf]
      %v3447 = vld [vmem:[%s5 + $0x1e4] sm:$0xf]
      %v3448 = vld [vmem:[%s5 + $0x1e8] sm:$0xf]
      %v3449 = vld [vmem:[%s5 + $0x1ec] sm:$0xf]
      %v3450 = vld [vmem:[%s5 + $0x1f0] sm:$0xf]
      %v3451 = vld [vmem:[%s5 + $0x1f4] sm:$0xf]
      %v3452 = vld [vmem:[%s5 + $0x1f8] sm:$0xf]
      %v3453 = vld [vmem:[%s5 + $0x1fc] sm:$0xf]
      %v3454 = vld [vmem:[%s5 + $0x200] sm:$0xf]
      %v3455 = vld [vmem:[%s5 + $0x204] sm:$0xf]
      %v3456 = vld [vmem:[%s5 + $0x208] sm:$0xf]
      %v3457 = vld [vmem:[%s5 + $0x20c] sm:$0xf]
      %v3458 = vld [vmem:[%s5 + $0x210] sm:$0xf]
      %v3459 = vld [vmem:[%s5 + $0x214] sm:$0xf]
      %v3460 = vld [vmem:[%s5 + $0x218] sm:$0xf]
      %v3461 = vld [vmem:[%s5 + $0x21c] sm:$0xf]
      %v3462 = vld [vmem:[%s5 + $0x220] sm:$0xf]
      %v3463 = vld [vmem:[%s5 + $0x224] sm:$0xf]
      %v3464 = vld [vmem:[%s5 + $0x228] sm:$0xf]
      %v3465 = vld [vmem:[%s5 + $0x22c] sm:$0xf]
      %v3466 = vld [vmem:[%s5 + $0x230] sm:$0xf]
      %v3467 = vld [vmem:[%s5 + $0x234] sm:$0xf]
      %v3468 = vld [vmem:[%s5 + $0x238] sm:$0xf]
      %v3469 = vld [vmem:[%s5 + $0x23c] sm:$0xf]
      %v3470 = vld [vmem:[%s6] sm:$0x1]
      %v3472 = vlaneseq
      %v3473 = vshrl.u32 %v3472, 7
      %v3474 = vsub.s32 0, %v3473
      %v3475 = vrot.slane %v3470, %v3474
      %v3621 = vunpack.c.l.b16 %v3326
      %v3622 = vunpack.c.l.b16 %v3327
      %v3623 = vunpack.c.l.b16 %v3328
      %v3624 = vunpack.c.l.b16 %v3329
      %v3625 = vunpack.c.l.b16 %v3330
      %v3626 = vunpack.c.l.b16 %v3331
      %v3627 = vunpack.c.l.b16 %v3332
      %v3628 = vunpack.c.l.b16 %v3333
      %v3629 = vunpack.c.l.b16 %v3334
      %v3630 = vunpack.c.l.b16 %v3335
      %v3631 = vunpack.c.l.b16 %v3336
      %v3632 = vunpack.c.l.b16 %v3337
      %v3633 = vunpack.c.l.b16 %v3338
      %v3634 = vunpack.c.l.b16 %v3339
      %v3635 = vunpack.c.l.b16 %v3340
      %v3636 = vunpack.c.l.b16 %v3341
      %v3637 = vunpack.c.l.b16 %v3342
      %v3638 = vunpack.c.l.b16 %v3343
      %v3639 = vunpack.c.l.b16 %v3344
      %v3640 = vunpack.c.l.b16 %v3345
      %v3641 = vunpack.c.l.b16 %v3346
      %v3642 = vunpack.c.l.b16 %v3347
      %v3643 = vunpack.c.l.b16 %v3348
      %v3644 = vunpack.c.l.b16 %v3349
      %v3645 = vunpack.c.l.b16 %v3350
      %v3646 = vunpack.c.l.b16 %v3351
      %v3647 = vunpack.c.l.b16 %v3352
      %v3648 = vunpack.c.l.b16 %v3353
      %v3649 = vunpack.c.l.b16 %v3354
      %v3650 = vunpack.c.l.b16 %v3355
      %v3651 = vunpack.c.l.b16 %v3356
      %v3652 = vunpack.c.l.b16 %v3357
      %v3653 = vunpack.c.l.b16 %v3358
      %v3654 = vunpack.c.l.b16 %v3359
      %v3655 = vunpack.c.l.b16 %v3360
      %v3656 = vunpack.c.l.b16 %v3361
      %v3657 = vunpack.c.l.b16 %v3362
      %v3658 = vunpack.c.l.b16 %v3363
      %v3659 = vunpack.c.l.b16 %v3364
      %v3660 = vunpack.c.l.b16 %v3365
      %v3661 = vunpack.c.l.b16 %v3366
      %v3662 = vunpack.c.l.b16 %v3367
      %v3663 = vunpack.c.l.b16 %v3368
      %v3664 = vunpack.c.l.b16 %v3369
      %v3665 = vunpack.c.l.b16 %v3370
      %v3666 = vunpack.c.l.b16 %v3371
      %v3667 = vunpack.c.l.b16 %v3372
      %v3668 = vunpack.c.l.b16 %v3373
      %v3669 = vunpack.c.l.b16 %v3374
      %v3670 = vunpack.c.l.b16 %v3375
      %v3671 = vunpack.c.l.b16 %v3376
      %v3672 = vunpack.c.l.b16 %v3377
      %v3673 = vunpack.c.l.b16 %v3378
      %v3674 = vunpack.c.l.b16 %v3379
      %v3675 = vunpack.c.l.b16 %v3380
      %v3676 = vunpack.c.l.b16 %v3381
      %v3677 = vunpack.c.l.b16 %v3382
      %v3678 = vunpack.c.l.b16 %v3383
      %v3679 = vunpack.c.l.b16 %v3384
      %v3680 = vunpack.c.l.b16 %v3385
      %v3681 = vunpack.c.l.b16 %v3386
      %v3682 = vunpack.c.l.b16 %v3387
      %v3683 = vunpack.c.l.b16 %v3388
      %v3684 = vunpack.c.l.b16 %v3389
      %v3685 = vunpack.c.l.b16 %v3390
      %v3686 = vunpack.c.l.b16 %v3391
      %v3687 = vunpack.c.l.b16 %v3392
      %v3688 = vunpack.c.l.b16 %v3393
      %v3689 = vunpack.c.l.b16 %v3394
      %v3690 = vunpack.c.l.b16 %v3395
      %v3691 = vunpack.c.l.b16 %v3396
      %v3692 = vunpack.c.l.b16 %v3397
      %v3693 = vunpack.c.l.b16 %v3398
      %v3694 = vunpack.c.l.b16 %v3399
      %v3695 = vunpack.c.l.b16 %v3400
      %v3696 = vunpack.c.l.b16 %v3401
      %v3697 = vunpack.c.l.b16 %v3402
      %v3698 = vunpack.c.l.b16 %v3403
      %v3699 = vunpack.c.l.b16 %v3404
      %v3700 = vunpack.c.l.b16 %v3405
      %v3701 = vunpack.c.l.b16 %v3406
      %v3702 = vunpack.c.l.b16 %v3407
      %v3703 = vunpack.c.l.b16 %v3408
      %v3704 = vunpack.c.l.b16 %v3409
      %v3705 = vunpack.c.l.b16 %v3410
      %v3706 = vunpack.c.l.b16 %v3411
      %v3707 = vunpack.c.l.b16 %v3412
      %v3708 = vunpack.c.l.b16 %v3413
      %v3709 = vunpack.c.l.b16 %v3414
      %v3710 = vunpack.c.l.b16 %v3415
      %v3711 = vunpack.c.l.b16 %v3416
      %v3712 = vunpack.c.l.b16 %v3417
      %v3713 = vunpack.c.l.b16 %v3418
      %v3714 = vunpack.c.l.b16 %v3419
      %v3715 = vunpack.c.l.b16 %v3420
      %v3716 = vunpack.c.l.b16 %v3421
      %v3717 = vunpack.c.l.b16 %v3422
      %v3718 = vunpack.c.l.b16 %v3423
      %v3719 = vunpack.c.l.b16 %v3424
      %v3720 = vunpack.c.l.b16 %v3425
      %v3721 = vunpack.c.l.b16 %v3426
      %v3722 = vunpack.c.l.b16 %v3427
      %v3723 = vunpack.c.l.b16 %v3428
      %v3724 = vunpack.c.l.b16 %v3429
      %v3725 = vunpack.c.l.b16 %v3430
      %v3726 = vunpack.c.l.b16 %v3431
      %v3727 = vunpack.c.l.b16 %v3432
      %v3728 = vunpack.c.l.b16 %v3433
      %v3729 = vunpack.c.l.b16 %v3434
      %v3730 = vunpack.c.l.b16 %v3435
      %v3731 = vunpack.c.l.b16 %v3436
      %v3732 = vunpack.c.l.b16 %v3437
      %v3733 = vunpack.c.l.b16 %v3438
      %v3734 = vunpack.c.l.b16 %v3439
      %v3735 = vunpack.c.l.b16 %v3440
      %v3736 = vunpack.c.l.b16 %v3441
      %v3737 = vunpack.c.l.b16 %v3442
      %v3738 = vunpack.c.l.b16 %v3443
      %v3739 = vunpack.c.l.b16 %v3444
      %v3740 = vunpack.c.l.b16 %v3445
      %v3741 = vunpack.c.l.b16 %v3446
      %v3742 = vunpack.c.l.b16 %v3447
      %v3743 = vunpack.c.l.b16 %v3448
      %v3744 = vunpack.c.l.b16 %v3449
      %v3745 = vunpack.c.l.b16 %v3450
      %v3746 = vunpack.c.l.b16 %v3451
      %v3747 = vunpack.c.l.b16 %v3452
      %v3748 = vunpack.c.l.b16 %v3453
      %v3749 = vunpack.c.l.b16 %v3454
      %v3750 = vunpack.c.l.b16 %v3455
      %v3751 = vunpack.c.l.b16 %v3456
      %v3752 = vunpack.c.l.b16 %v3457
      %v3753 = vunpack.c.l.b16 %v3458
      %v3754 = vunpack.c.l.b16 %v3459
      %v3755 = vunpack.c.l.b16 %v3460
      %v3756 = vunpack.c.l.b16 %v3461
      %v3757 = vunpack.c.l.b16 %v3462
      %v3758 = vunpack.c.l.b16 %v3463
      %v3759 = vunpack.c.l.b16 %v3464
      %v3760 = vunpack.c.l.b16 %v3465
      %v3761 = vunpack.c.l.b16 %v3466
      %v3762 = vunpack.c.l.b16 %v3467
      %v3763 = vunpack.c.l.b16 %v3468
      %v3764 = vunpack.c.l.b16 %v3469
      %v3765 = vpack.c.b16 %v3622, %v3621
      %v3766 = vpack.c.b16 %v3624, %v3623
      %v3767 = vpack.c.b16 %v3626, %v3625
      %v3768 = vpack.c.b16 %v3628, %v3627
      %v3769 = vpack.c.b16 %v3630, %v3629
      %v3770 = vpack.c.b16 %v3632, %v3631
      %v3771 = vpack.c.b16 %v3634, %v3633
      %v3772 = vpack.c.b16 %v3636, %v3635
      %v3773 = vpack.c.b16 %v3638, %v3637
      %v3774 = vpack.c.b16 %v3640, %v3639
      %v3775 = vpack.c.b16 %v3642, %v3641
      %v3776 = vpack.c.b16 %v3644, %v3643
      %v3777 = vpack.c.b16 %v3646, %v3645
      %v3778 = vpack.c.b16 %v3648, %v3647
      %v3779 = vpack.c.b16 %v3650, %v3649
      %v3780 = vpack.c.b16 %v3652, %v3651
      %v3781 = vpack.c.b16 %v3654, %v3653
      %v3782 = vpack.c.b16 %v3656, %v3655
      %v3783 = vpack.c.b16 %v3658, %v3657
      %v3784 = vpack.c.b16 %v3660, %v3659
      %v3785 = vpack.c.b16 %v3662, %v3661
      %v3786 = vpack.c.b16 %v3664, %v3663
      %v3787 = vpack.c.b16 %v3666, %v3665
      %v3788 = vpack.c.b16 %v3668, %v3667
      %v3789 = vpack.c.b16 %v3670, %v3669
      %v3790 = vpack.c.b16 %v3672, %v3671
      %v3791 = vpack.c.b16 %v3674, %v3673
      %v3792 = vpack.c.b16 %v3676, %v3675
      %v3793 = vpack.c.b16 %v3678, %v3677
      %v3794 = vpack.c.b16 %v3680, %v3679
      %v3795 = vpack.c.b16 %v3682, %v3681
      %v3796 = vpack.c.b16 %v3684, %v3683
      %v3797 = vpack.c.b16 %v3686, %v3685
      %v3798 = vpack.c.b16 %v3688, %v3687
      %v3799 = vpack.c.b16 %v3690, %v3689
      %v3800 = vpack.c.b16 %v3692, %v3691
      %v3801 = vpack.c.b16 %v3694, %v3693
      %v3802 = vpack.c.b16 %v3696, %v3695
      %v3803 = vpack.c.b16 %v3698, %v3697
      %v3804 = vpack.c.b16 %v3700, %v3699
      %v3805 = vpack.c.b16 %v3702, %v3701
      %v3806 = vpack.c.b16 %v3704, %v3703
      %v3807 = vpack.c.b16 %v3706, %v3705
      %v3808 = vpack.c.b16 %v3708, %v3707
      %v3809 = vpack.c.b16 %v3710, %v3709
      %v3810 = vpack.c.b16 %v3712, %v3711
      %v3811 = vpack.c.b16 %v3714, %v3713
      %v3812 = vpack.c.b16 %v3716, %v3715
      %v3813 = vpack.c.b16 %v3718, %v3717
      %v3814 = vpack.c.b16 %v3720, %v3719
      %v3815 = vpack.c.b16 %v3722, %v3721
      %v3816 = vpack.c.b16 %v3724, %v3723
      %v3817 = vpack.c.b16 %v3726, %v3725
      %v3818 = vpack.c.b16 %v3728, %v3727
      %v3819 = vpack.c.b16 %v3730, %v3729
      %v3820 = vpack.c.b16 %v3732, %v3731
      %v3821 = vpack.c.b16 %v3734, %v3733
      %v3822 = vpack.c.b16 %v3736, %v3735
      %v3823 = vpack.c.b16 %v3738, %v3737
      %v3824 = vpack.c.b16 %v3740, %v3739
      %v3825 = vpack.c.b16 %v3742, %v3741
      %v3826 = vpack.c.b16 %v3744, %v3743
      %v3827 = vpack.c.b16 %v3746, %v3745
      %v3828 = vpack.c.b16 %v3748, %v3747
      %v3829 = vpack.c.b16 %v3750, %v3749
      %v3830 = vpack.c.b16 %v3752, %v3751
      %v3831 = vpack.c.b16 %v3754, %v3753
      %v3832 = vpack.c.b16 %v3756, %v3755
      %v3833 = vpack.c.b16 %v3758, %v3757
      %v3834 = vpack.c.b16 %v3760, %v3759
      %v3835 = vpack.c.b16 %v3762, %v3761
      %v3836 = vpack.c.b16 %v3764, %v3763
      %3909 = vmatprep.subr.bf16.mxu0 0
      %3910 = vmatpush1.bf16.msra.mxu0 %v3765
      %3911 = vmatprep.subr.bf16.mxu0 0
      %3912 = vmatpush1.bf16.msra.mxu0 %v3766
      %3913 = vmatprep.subr.bf16.mxu0 0
      %3914 = vmatpush1.bf16.msra.mxu0 %v3767
      %3915 = vmatprep.subr.bf16.mxu0 0
      %3916 = vmatpush1.bf16.msra.mxu0 %v3768
      %3917 = vmatprep.subr.bf16.mxu0 0
      %3918 = vmatpush1.bf16.msra.mxu0 %v3769
      %3919 = vmatprep.subr.bf16.mxu0 0
      %3920 = vmatpush1.bf16.msra.mxu0 %v3770
      %3921 = vmatprep.subr.bf16.mxu0 0
      %3922 = vmatpush1.bf16.msra.mxu0 %v3771
      %3923 = vmatprep.subr.bf16.mxu0 0
      %3924 = vmatpush1.bf16.msra.mxu0 %v3772
      %3925 = vmatprep.subr.bf16.mxu0 0
      %3926 = vmatpush1.bf16.msra.mxu0 %v3773
      %3927 = vmatprep.subr.bf16.mxu0 0
      %3928 = vmatpush1.bf16.msra.mxu0 %v3774
      %3929 = vmatprep.subr.bf16.mxu0 0
      %3930 = vmatpush1.bf16.msra.mxu0 %v3775
      %3931 = vmatprep.subr.bf16.mxu0 0
      %3932 = vmatpush1.bf16.msra.mxu0 %v3776
      %3933 = vmatprep.subr.bf16.mxu0 0
      %3934 = vmatpush1.bf16.msra.mxu0 %v3777
      %3935 = vmatprep.subr.bf16.mxu0 0
      %3936 = vmatpush1.bf16.msra.mxu0 %v3778
      %3937 = vmatprep.subr.bf16.mxu0 0
      %3938 = vmatpush1.bf16.msra.mxu0 %v3779
      %3939 = vmatprep.subr.bf16.mxu0 0
      %3940 = vmatpush1.bf16.msra.mxu0 %v3780
      %3941 = vmatprep.mubr.bf16.mxu0 %v3200
      %3942 = vmatmul.mubr.bf16.gmra.mrb[0].mxu0 %v3196
      %v3943 = vpop.f32.mrb[0].mxu0
      %v3944 = vadd.f32 %v3475, %v3943
      %v3945 = vpop.f32.mrb[0].mxu0
      %v3946 = vpop.f32.mrb[0].mxu0
      %v3947 = vadd.f32 %v3475, %v3946
      %v3948 = vpop.f32.mrb[0].mxu0
      %3949 = vmatprep.mubr.bf16.mxu0 %v3247
      %3950 = vmatmul.mubr.bf16.gmra.mrb[0].mxu0 %v3243
      %v3951 = vpop.f32.mrb[0].mxu0
      %v3952 = vadd.f32 %v3475, %v3951
      %v3953 = vpop.f32.mrb[0].mxu0
      %v3954 = vpop.f32.mrb[0].mxu0
      %v3955 = vadd.f32 %v3475, %v3954
      %v3956 = vpop.f32.mrb[0].mxu0
      %3957 = vmatprep.mubr.bf16.mxu0 %v3296
      %3958 = vmatmul.mubr.bf16.gmra.mrb[0].mxu0 %v3292
      %v3959 = vpop.f32.mrb[0].mxu0
      %v3960 = vadd.f32 %v3475, %v3959
      %v3961 = vpop.f32.mrb[0].mxu0
      %v3962 = vpop.f32.mrb[0].mxu0
      %v3963 = vadd.f32 %v3475, %v3962
      %v3964 = vpop.f32.mrb[0].mxu0
      %3965 = vmatprep.mubr.bf16.mxu0 %v3165
      %3966 = vmatmul.mubr.bf16.gmra.mrb[0].mxu0 %v3164
      %v3967 = vpop.f32.mrb[0].mxu0
      %v3968 = vadd.f32 %v3475, %v3967
      %v3969 = vpop.f32.mrb[0].mxu0
      %v3970 = vpop.f32.mrb[0].mxu0
      %v3971 = vpop.f32.mrb[0].mxu0
      %3972 = vdwg.mxu0
      %3973 = vmatprep.subr.bf16.mxu0 0
      %3974 = vmatpush1.bf16.msra.mxu0 %v3781
      %3975 = vmatprep.subr.bf16.mxu0 0
      %3976 = vmatpush1.bf16.msra.mxu0 %v3782
      %3977 = vmatprep.subr.bf16.mxu0 0
      %3978 = vmatpush1.bf16.msra.mxu0 %v3783
      %3979 = vmatprep.subr.bf16.mxu0 0
      %3980 = vmatpush1.bf16.msra.mxu0 %v3784
      %3981 = vmatprep.subr.bf16.mxu0 0
      %3982 = vmatpush1.bf16.msra.mxu0 %v3785
      %3983 = vmatprep.subr.bf16.mxu0 0
      %3984 = vmatpush1.bf16.msra.mxu0 %v3786
      %3985 = vmatprep.subr.bf16.mxu0 0
      %3986 = vmatpush1.bf16.msra.mxu0 %v3787
      %3987 = vmatprep.subr.bf16.mxu0 0
      %3988 = vmatpush1.bf16.msra.mxu0 %v3788
      %3989 = vmatprep.subr.bf16.mxu0 0
      %3990 = vmatpush1.bf16.msra.mxu0 %v3789
      %3991 = vmatprep.subr.bf16.mxu0 0
      %3992 = vmatpush1.bf16.msra.mxu0 %v3790
      %3993 = vmatprep.subr.bf16.mxu0 0
      %3994 = vmatpush1.bf16.msra.mxu0 %v3791
      %3995 = vmatprep.subr.bf16.mxu0 0
      %3996 = vmatpush1.bf16.msra.mxu0 %v3792
      %3997 = vmatprep.subr.bf16.mxu0 0
      %3998 = vmatpush1.bf16.msra.mxu0 %v3793
      %3999 = vmatprep.subr.bf16.mxu0 0
      %4000 = vmatpush1.bf16.msra.mxu0 %v3794
      %4001 = vmatprep.subr.bf16.mxu0 0
      %4002 = vmatpush1.bf16.msra.mxu0 %v3795
      %4003 = vmatprep.subr.bf16.mxu0 0
      %4004 = vmatpush1.bf16.msra.mxu0 %v3796
      %4005 = vmatprep.mubr.bf16.mxu0 %v3208
      %4006 = vmatmul.mubr.bf16.gmra.mrb[0].mxu0 %v3204
      %v4007 = vpop.f32.mrb[0].mxu0
      %v4008 = vadd.f32 %v3944, %v4007
      %v4009 = vpop.f32.mrb[0].mxu0
      %v4010 = vpop.f32.mrb[0].mxu0
      %v4011 = vadd.f32 %v3947, %v4010
      %v4012 = vpop.f32.mrb[0].mxu0
      %4013 = vmatprep.mubr.bf16.mxu0 %v3255
      %4014 = vmatmul.mubr.bf16.gmra.mrb[0].mxu0 %v3251
      %v4015 = vpop.f32.mrb[0].mxu0
      %v4016 = vadd.f32 %v3952, %v4015
      %v4017 = vpop.f32.mrb[0].mxu0
      %v4018 = vpop.f32.mrb[0].mxu0
      %v4019 = vadd.f32 %v3955, %v4018
      %v4020 = vpop.f32.mrb[0].mxu0
      %4021 = vmatprep.mubr.bf16.mxu0 %v3304
      %4022 = vmatmul.mubr.bf16.gmra.mrb[0].mxu0 %v3300
      %v4023 = vpop.f32.mrb[0].mxu0
      %v4024 = vadd.f32 %v3960, %v4023
      %v4025 = vpop.f32.mrb[0].mxu0
      %v4026 = vpop.f32.mrb[0].mxu0
      %v4027 = vadd.f32 %v3963, %v4026
      %v4028 = vpop.f32.mrb[0].mxu0
      %4029 = vmatprep.mubr.bf16.mxu0 %v3167
      %4030 = vmatmul.mubr.bf16.gmra.mrb[0].mxu0 %v3166
      %v4031 = vpop.f32.mrb[0].mxu0
      %v4032 = vadd.f32 %v3968, %v4031
      %v4033 = vpop.f32.mrb[0].mxu0
      %v4034 = vpop.f32.mrb[0].mxu0
      %v4035 = vpop.f32.mrb[0].mxu0
      %4036 = vdwg.mxu0
      %4037 = vmatprep.subr.bf16.mxu0 0
      %4038 = vmatpush1.bf16.msra.mxu0 %v3797
      %4039 = vmatprep.subr.bf16.mxu0 0
      %4040 = vmatpush1.bf16.msra.mxu0 %v3798
      %4041 = vmatprep.subr.bf16.mxu0 0
      %4042 = vmatpush1.bf16.msra.mxu0 %v3799
      %4043 = vmatprep.subr.bf16.mxu0 0
      %4044 = vmatpush1.bf16.msra.mxu0 %v3800
      %4045 = vmatprep.subr.bf16.mxu0 0
      %4046 = vmatpush1.bf16.msra.mxu0 %v3801
      %4047 = vmatprep.subr.bf16.mxu0 0
      %4048 = vmatpush1.bf16.msra.mxu0 %v3802
      %4049 = vmatprep.subr.bf16.mxu0 0
      %4050 = vmatpush1.bf16.msra.mxu0 %v3803
      %4051 = vmatprep.subr.bf16.mxu0 0
      %4052 = vmatpush1.bf16.msra.mxu0 %v3804
      %4053 = vmatprep.subr.bf16.mxu0 0
      %4054 = vmatpush1.bf16.msra.mxu0 %v3805
      %4055 = vmatprep.subr.bf16.mxu0 0
      %4056 = vmatpush1.bf16.msra.mxu0 %v3806
      %4057 = vmatprep.subr.bf16.mxu0 0
      %4058 = vmatpush1.bf16.msra.mxu0 %v3807
      %4059 = vmatprep.subr.bf16.mxu0 0
      %4060 = vmatpush1.bf16.msra.mxu0 %v3808
      %4061 = vmatprep.subr.bf16.mxu0 0
      %4062 = vmatpush1.bf16.msra.mxu0 %v3809
      %4063 = vmatprep.subr.bf16.mxu0 0
      %4064 = vmatpush1.bf16.msra.mxu0 %v3810
      %4065 = vmatprep.subr.bf16.mxu0 0
      %4066 = vmatpush1.bf16.msra.mxu0 %v3811
      %4067 = vmatprep.subr.bf16.mxu0 0
      %4068 = vmatpush1.bf16.msra.mxu0 %v3812
      %4069 = vmatprep.mubr.bf16.mxu0 %v3216
      %4070 = vmatmul.mubr.bf16.gmra.mrb[0].mxu0 %v3212
      %v4071 = vpop.f32.mrb[0].mxu0
      %v4072 = vadd.f32 %v4008, %v4071
      %v4073 = vpop.f32.mrb[0].mxu0
      %v4074 = vpop.f32.mrb[0].mxu0
      %v4075 = vadd.f32 %v4011, %v4074
      %v4076 = vpop.f32.mrb[0].mxu0
      %4077 = vmatprep.mubr.bf16.mxu0 %v3263
      %4078 = vmatmul.mubr.bf16.gmra.mrb[0].mxu0 %v3259
      %v4079 = vpop.f32.mrb[0].mxu0
      %v4080 = vadd.f32 %v4016, %v4079
      %v4081 = vpop.f32.mrb[0].mxu0
      %v4082 = vpop.f32.mrb[0].mxu0
      %v4083 = vadd.f32 %v4019, %v4082
      %v4084 = vpop.f32.mrb[0].mxu0
      %4085 = vmatprep.mubr.bf16.mxu0 %v3312
      %4086 = vmatmul.mubr.bf16.gmra.mrb[0].mxu0 %v3308
      %v4087 = vpop.f32.mrb[0].mxu0
      %v4088 = vadd.f32 %v4024, %v4087
      %v4089 = vpop.f32.mrb[0].mxu0
      %v4090 = vpop.f32.mrb[0].mxu0
      %v4091 = vadd.f32 %v4027, %v4090
      %v4092 = vpop.f32.mrb[0].mxu0
      %4093 = vmatprep.mubr.bf16.mxu0 %v3169
      %4094 = vmatmul.mubr.bf16.gmra.mrb[0].mxu0 %v3168
      %v4095 = vpop.f32.mrb[0].mxu0
      %v4096 = vadd.f32 %v4032, %v4095
      %v4097 = vpop.f32.mrb[0].mxu0
      %v4098 = vpop.f32.mrb[0].mxu0
      %v4099 = vpop.f32.mrb[0].mxu0
      %4100 = vdwg.mxu0
      %4101 = vmatprep.subr.bf16.mxu0 0
      %4102 = vmatpush1.bf16.msra.mxu0 %v3813
      %4103 = vmatprep.subr.bf16.mxu0 0
      %4104 = vmatpush1.bf16.msra.mxu0 %v3814
      %4105 = vmatprep.subr.bf16.mxu0 0
      %4106 = vmatpush1.bf16.msra.mxu0 %v3815
      %4107 = vmatprep.subr.bf16.mxu0 0
      %4108 = vmatpush1.bf16.msra.mxu0 %v3816
      %4109 = vmatprep.subr.bf16.mxu0 0
      %4110 = vmatpush1.bf16.msra.mxu0 %v3817
      %4111 = vmatprep.subr.bf16.mxu0 0
      %4112 = vmatpush1.bf16.msra.mxu0 %v3818
      %4113 = vmatprep.subr.bf16.mxu0 0
      %4114 = vmatpush1.bf16.msra.mxu0 %v3819
      %4115 = vmatprep.subr.bf16.mxu0 0
      %4116 = vmatpush1.bf16.msra.mxu0 %v3820
      %4117 = vmatprep.subr.bf16.mxu0 0
      %4118 = vmatpush1.bf16.msra.mxu0 %v3821
      %4119 = vmatprep.subr.bf16.mxu0 0
      %4120 = vmatpush1.bf16.msra.mxu0 %v3822
      %4121 = vmatprep.subr.bf16.mxu0 0
      %4122 = vmatpush1.bf16.msra.mxu0 %v3823
      %4123 = vmatprep.subr.bf16.mxu0 0
      %4124 = vmatpush1.bf16.msra.mxu0 %v3824
      %4125 = vmatprep.subr.bf16.mxu0 0
      %4126 = vmatpush1.bf16.msra.mxu0 %v3825
      %4127 = vmatprep.subr.bf16.mxu0 0
      %4128 = vmatpush1.bf16.msra.mxu0 %v3826
      %4129 = vmatprep.subr.bf16.mxu0 0
      %4130 = vmatpush1.bf16.msra.mxu0 %v3827
      %4131 = vmatprep.subr.bf16.mxu0 0
      %4132 = vmatpush1.bf16.msra.mxu0 %v3828
      %4133 = vmatprep.mubr.bf16.mxu0 %v3224
      %4134 = vmatmul.mubr.bf16.gmra.mrb[0].mxu0 %v3220
      %v4135 = vpop.f32.mrb[0].mxu0
      %v4136 = vadd.f32 %v4072, %v4135
      %v4137 = vpop.f32.mrb[0].mxu0
      %v4138 = vpop.f32.mrb[0].mxu0
      %v4139 = vadd.f32 %v4075, %v4138
      %v4140 = vpop.f32.mrb[0].mxu0
      %4141 = vmatprep.mubr.bf16.mxu0 %v3271
      %4142 = vmatmul.mubr.bf16.gmra.mrb[0].mxu0 %v3267
      %v4143 = vpop.f32.mrb[0].mxu0
      %v4144 = vadd.f32 %v4080, %v4143
      %v4145 = vpop.f32.mrb[0].mxu0
      %v4146 = vpop.f32.mrb[0].mxu0
      %v4147 = vadd.f32 %v4083, %v4146
      %v4148 = vpop.f32.mrb[0].mxu0
      %4149 = vmatprep.mubr.bf16.mxu0 %v3320
      %4150 = vmatmul.mubr.bf16.gmra.mrb[0].mxu0 %v3316
      %v4151 = vpop.f32.mrb[0].mxu0
      %v4152 = vadd.f32 %v4088, %v4151
      %v4153 = vpop.f32.mrb[0].mxu0
      %v4154 = vpop.f32.mrb[0].mxu0
      %v4155 = vadd.f32 %v4091, %v4154
      %v4156 = vpop.f32.mrb[0].mxu0
      %4157 = vmatprep.mubr.bf16.mxu0 %v3171
      %4158 = vmatmul.mubr.bf16.gmra.mrb[0].mxu0 %v3170
      %v4159 = vpop.f32.mrb[0].mxu0
      %v4160 = vadd.f32 %v4096, %v4159
      %v4161 = vpop.f32.mrb[0].mxu0
      %v4162 = vpop.f32.mrb[0].mxu0
      %v4163 = vpop.f32.mrb[0].mxu0
      %4164 = vdwg.mxu0
      %4165 = vmatprep.subr.bf16.mxu0 0
      %4166 = vmatpush1.bf16.msra.mxu0 %v3829
      %4167 = vmatprep.subr.bf16.mxu0 0
      %4168 = vmatpush1.bf16.msra.mxu0 %v3830
      %4169 = vmatprep.subr.bf16.mxu0 0
      %4170 = vmatpush1.bf16.msra.mxu0 %v3831
      %4171 = vmatprep.subr.bf16.mxu0 0
      %4172 = vmatpush1.bf16.msra.mxu0 %v3832
      %4173 = vmatprep.subr.bf16.mxu0 0
      %4174 = vmatpush1.bf16.msra.mxu0 %v3833
      %4175 = vmatprep.subr.bf16.mxu0 0
      %4176 = vmatpush1.bf16.msra.mxu0 %v3834
      %4177 = vmatprep.subr.bf16.mxu0 0
      %4178 = vmatpush1.bf16.msra.mxu0 %v3835
      %4179 = vmatprep.subr.bf16.mxu0 0
      %4180 = vmatpush1.bf16.msra.mxu0 %v3836
      %4181 = vmatprep.subr.bf16.mxu0 0
      %4182 = vmatpush1.bf16.msra.mxu0 0
      %4183 = vmatprep.subr.bf16.mxu0 0
      %4184 = vmatpush1.bf16.msra.mxu0 0
      %4185 = vmatprep.subr.bf16.mxu0 0
      %4186 = vmatpush1.bf16.msra.mxu0 0
      %4187 = vmatprep.subr.bf16.mxu0 0
      %4188 = vmatpush1.bf16.msra.mxu0 0
      %4189 = vmatprep.subr.bf16.mxu0 0
      %4190 = vmatpush1.bf16.msra.mxu0 0
      %4191 = vmatprep.subr.bf16.mxu0 0
      %4192 = vmatpush1.bf16.msra.mxu0 0
      %4193 = vmatprep.subr.bf16.mxu0 0
      %4194 = vmatpush1.bf16.msra.mxu0 0
      %4195 = vmatprep.subr.bf16.mxu0 0
      %4196 = vmatpush1.bf16.msra.mxu0 0
      %4197 = vmatprep.mubr.bf16.mxu0 0
      %4198 = vmatmul.mubr.bf16.gmra.mrb[0].mxu0 %v3228
      %v4199 = vpop.f32.mrb[0].mxu0
      %v4200 = vadd.f32 %v4136, %v4199
      %v4201 = vpop.f32.mrb[0].mxu0
      %v4202 = vpop.f32.mrb[0].mxu0
      %v4203 = vadd.f32 %v4139, %v4202
      %v4204 = vpop.f32.mrb[0].mxu0
      %4205 = vmatprep.mubr.bf16.mxu0 0
      %4206 = vmatmul.mubr.bf16.gmra.mrb[0].mxu0 %v3275
      %v4207 = vpop.f32.mrb[0].mxu0
      %v4208 = vadd.f32 %v4144, %v4207
      %v4209 = vpop.f32.mrb[0].mxu0
      %v4210 = vpop.f32.mrb[0].mxu0
      %v4211 = vadd.f32 %v4147, %v4210
      %v4212 = vpop.f32.mrb[0].mxu0
      %4213 = vmatprep.mubr.bf16.mxu0 0
      %4214 = vmatmul.mubr.bf16.gmra.mrb[0].mxu0 %v3324
      %v4215 = vpop.f32.mrb[0].mxu0
      %v4216 = vadd.f32 %v4152, %v4215
      %v4217 = vpop.f32.mrb[0].mxu0
      %v4218 = vpop.f32.mrb[0].mxu0
      %v4219 = vadd.f32 %v4155, %v4218
      %v4220 = vpop.f32.mrb[0].mxu0
      %4221 = vmatprep.mubr.bf16.mxu0 0
      %4222 = vmatmul.mubr.bf16.gmra.mrb[0].mxu0 %v3172
      %v4223 = vpop.f32.mrb[0].mxu0
      %v4224 = vadd.f32 %v4160, %v4223
      %v4225 = vpop.f32.mrb[0].mxu0
      %v4226 = vpop.f32.mrb[0].mxu0
      %v4227 = vpop.f32.mrb[0].mxu0
      %4228 = vdwg.mxu0
      %v4229 = vmax.f32 %v4200, 0.0
      %v4230 = vmax.f32 %v4203, 0.0
      %v4231 = vmax.f32 %v4208, 0.0
      %v4232 = vmax.f32 %v4211, 0.0
      %v4233 = vmax.f32 %v4216, 0.0
      %v4234 = vmax.f32 %v4219, 0.0
      %v4235 = vmax.f32 %v4224, 0.0
      %v4236 = vpack.c.bf16 %v4230, %v4229
      %v4237 = vpack.c.bf16 %v4232, %v4231
      %v4238 = vpack.c.bf16 %v4234, %v4233
      %v4239 = vpack.c.bf16 %v4235, %v4235
      %v4244 = vunpack.c.l.b16 %v4236
      %v4245 = vunpack.c.h.b16 %v4236
      %v4246 = vunpack.c.l.b16 %v4237
      %v4247 = vunpack.c.h.b16 %v4237
      %v4248 = vunpack.c.l.b16 %v4238
      %v4249 = vunpack.c.h.b16 %v4238
      %v4250 = vunpack.c.l.b16 %v4239
      %v4251 = vpack.c.b16 %v4244, %v4244
      %v4252 = vpack.c.b16 %v4245, %v4245
      %v4253 = vpack.c.b16 %v4246, %v4246
      %v4254 = vpack.c.b16 %v4247, %v4247
      %v4255 = vpack.c.b16 %v4248, %v4248
      %v4256 = vpack.c.b16 %v4249, %v4249
      %v4257 = vpack.c.b16 %v4250, %v4250
      %4265 = vst [vmem:[%s278] sm:$0xf] %v4251
      %4266 = vst [vmem:[%s278 + $0x4] sm:$0xf] %v4252
      %4267 = vst [vmem:[%s278 + $0x8] sm:$0xf] %v4253
      %4268 = vst [vmem:[%s278 + $0xc] sm:$0xf] %v4254
      %4269 = vst [vmem:[%s278 + $0x10] sm:$0xf] %v4255
      %4270 = vst [vmem:[%s278 + $0x14] sm:$0xf] %v4256
      %vm4271 = vcmask 1040384
      %vm4272 = vsmask.f32 256
      %vm4273 = vmand %vm4271, %vm4272
      %v4274 = vld [vmem:[%s278 + $0x18] sm:$0x1]
      %v4275 = vsel %vm4273, %v4257, %v4274
      %4276 = vst [vmem:[%s278 + $0x18] sm:$0x1] %v4275
      %p4277 = scmp.lt.s32.totalorder %s18, 1
      %s4278 = scalar_select %p4277, %s18, 1
      %s4279 = smul.addr %s4278, 7
      %s4280 = smul.addr %s4279, 4
      %s4281 = scalar_lea.vmem %s7, %s4280
      // Predicated region
      $region49: #{_lambda_.2} parent=47 // pred_check
        %p4282 = pneg %p188
      $region50: #{_lambda_.2} parent=47 // pred_check_branch
        %4284 = sbr.rel (%p4282) target = $region52
      $region51: #{_lambda_.2} parent=47 // pred_region
        _
      $region52: #{_lambda_.2} parent=47 // pred_fallthru
        _
    $region48: #{_lambda_.2} parent=5 // pred_fallthru
      _
    %p4285 = scmp.le.s32.totalorder 2, %s13
    // Predicated region
    $region53: #{_lambda_.2} parent=5 // pred_check
      %p4286 = pneg %p4285
    $region54: #{_lambda_.2} parent=5 // pred_check_branch
      %4288 = sbr.rel (%p4286) target = $region56
    $region55: #{_lambda_.2} parent=5 // pred_region
      %s4289 = ssub.s32 %s13, 2
      // Predicated region
      $region57: #{_lambda_.2} parent=55 // pred_check
        %p4290 = pneg %p194
      $region58: #{_lambda_.2} parent=55 // pred_check_branch
        %4292 = sbr.rel (%p4290) target = $region60
      $region59: #{_lambda_.2} parent=55 // pred_region
        %p4293 = scmp.lt.s32.totalorder %s19, 1
        %s4294 = scalar_select %p4293, %s19, 1
        %s4295 = smul.addr %s4294, 7
        %s4296 = smul.addr %s4295, 4
        %s4297 = scalar_lea.vmem %s7, %s4296
      $region60: #{_lambda_.2} parent=55 // pred_fallthru
        _
    $region56: #{_lambda_.2} parent=5 // pred_fallthru
      _
  $region6: #{_lambda_.2} parent=0 // loop_footer
    %s17 = sadd.s32 1, %s13
  $region7: #{_lambda_.2} parent=0 // loop_footer_branch
    %12 = sbr.rel target = $region3
  $region8: #{_lambda_.2} parent=0 // loop_exit
    _

// kernel: _lambda_.3
$region0: #{_lambda_.3}
  #allocation0 [shape = 'u32[]', space=smem, size = 0x4, offset = 0x4, fixed_abs, tag = 'smem constant byte address 0x4 - core index']
  #allocation1 [shape = 'u32[144,128]{1,0:T(1,128)}', space=vmem, size = 0x12000, scoped, tag = 'internal scratch']
  %s0 = inlined_call_operand.vmem [shape: bf16[16,6272], index: 0, kind: input, shape index: {}]
  %s1 = inlined_call_operand.vmem [shape: bf16[6272,64], index: 1, kind: input, shape index: {}]
  %s2 = inlined_call_operand.vmem [shape: f32[1,64], index: 2, kind: input, shape index: {}]
  %s3 = inlined_call_operand.vmem [shape: bf16[64,128], index: 3, kind: input, shape index: {}]
  %s4 = inlined_call_operand.vmem [shape: f32[1,128], index: 4, kind: input, shape index: {}]
  %s5 = inlined_call_operand.vmem [shape: f32[16,128], index: 5, kind: output, shape index: {}]
  %s6 = sld [smem:[#allocation0]]
  $region30: #{_lambda_.3} parent=0
    _
  %s8 = ssub.s32 1, %s6
  %s9 = scalar_select 0, %s8, %s6
  // Predicated region
  $region2: #{_lambda_.3} parent=0 // pred_check
    _
  $region3: #{_lambda_.3} parent=0 // pred_check_branch
    %11 = sbr.rel (0) target = $region5
  $region4: #{_lambda_.3} parent=0 // pred_region
    _
  $region5: #{_lambda_.3} parent=0 // pred_fallthru
    _
  // Predicated region
  $region6: #{_lambda_.3} parent=0 // pred_check
    _
  $region7: #{_lambda_.3} parent=0 // pred_check_branch
    %13 = sbr.rel (0) target = $region9
  $region8: #{_lambda_.3} parent=0 // pred_region
    _
  $region9: #{_lambda_.3} parent=0 // pred_fallthru
    _
  // Predicated region
  $region10: #{_lambda_.3} parent=0 // pred_check
    _
  $region11: #{_lambda_.3} parent=0 // pred_check_branch
    %15 = sbr.rel (0) target = $region13
  $region12: #{_lambda_.3} parent=0 // pred_region
    _
  $region13: #{_lambda_.3} parent=0 // pred_fallthru
    _
  // Predicated region
  $region14: #{_lambda_.3} parent=0 // pred_check
    _
  $region15: #{_lambda_.3} parent=0 // pred_check_branch
    %17 = sbr.rel (0) target = $region17
  $region16: #{_lambda_.3} parent=0 // pred_region
    _
  $region17: #{_lambda_.3} parent=0 // pred_fallthru
    _
  // Predicated region
  $region18: #{_lambda_.3} parent=0 // pred_check
    _
  $region19: #{_lambda_.3} parent=0 // pred_check_branch
    %19 = sbr.rel (0) target = $region21
  $region20: #{_lambda_.3} parent=0 // pred_region
    _
  $region21: #{_lambda_.3} parent=0 // pred_fallthru
    _
  %v21 = vld [vmem:[%s0] sm:$0xff]
  %v22 = vld [vmem:[%s0 + $0x8] sm:$0xff]
  %v23 = vld [vmem:[%s0 + $0x10] sm:$0xff]
  %v24 = vld [vmem:[%s0 + $0x18] sm:$0xff]
  %v25 = vld [vmem:[%s0 + $0x20] sm:$0xff]
  %v26 = vld [vmem:[%s0 + $0x28] sm:$0xff]
  %v27 = vld [vmem:[%s0 + $0x30] sm:$0xff]
  %v28 = vld [vmem:[%s0 + $0x38] sm:$0xff]
  %v29 = vld [vmem:[%s0 + $0x40] sm:$0xff]
  %v30 = vld [vmem:[%s0 + $0x48] sm:$0xff]
  %v31 = vld [vmem:[%s0 + $0x50] sm:$0xff]
  %v32 = vld [vmem:[%s0 + $0x58] sm:$0xff]
  %v33 = vld [vmem:[%s0 + $0x60] sm:$0xff]
  %v34 = vld [vmem:[%s0 + $0x68] sm:$0xff]
  %v35 = vld [vmem:[%s0 + $0x70] sm:$0xff]
  %v36 = vld [vmem:[%s0 + $0x78] sm:$0xff]
  %v37 = vld [vmem:[%s0 + $0x80] sm:$0xff]
  %v38 = vld [vmem:[%s0 + $0x88] sm:$0xff]
  %v39 = vld [vmem:[%s0 + $0x90] sm:$0xff]
  %v40 = vld [vmem:[%s0 + $0x98] sm:$0xff]
  %v41 = vld [vmem:[%s0 + $0xa0] sm:$0xff]
  %v42 = vld [vmem:[%s0 + $0xa8] sm:$0xff]
  %v43 = vld [vmem:[%s0 + $0xb0] sm:$0xff]
  %v44 = vld [vmem:[%s0 + $0xb8] sm:$0xff]
  %v45 = vld [vmem:[%s0 + $0xc0] sm:$0xf]
  %v46 = vld [vmem:[%s0 + $0xc4] sm:$0xff]
  %v47 = vld [vmem:[%s0 + $0xcc] sm:$0xff]
  %v48 = vld [vmem:[%s0 + $0xd4] sm:$0xff]
  %v49 = vld [vmem:[%s0 + $0xdc] sm:$0xff]
  %v50 = vld [vmem:[%s0 + $0xe4] sm:$0xff]
  %v51 = vld [vmem:[%s0 + $0xec] sm:$0xff]
  %v52 = vld [vmem:[%s0 + $0xf4] sm:$0xff]
  %v53 = vld [vmem:[%s0 + $0xfc] sm:$0xff]
  %v54 = vld [vmem:[%s0 + $0x104] sm:$0xff]
  %v55 = vld [vmem:[%s0 + $0x10c] sm:$0xff]
  %v56 = vld [vmem:[%s0 + $0x114] sm:$0xff]
  %v57 = vld [vmem:[%s0 + $0x11c] sm:$0xff]
  %v58 = vld [vmem:[%s0 + $0x124] sm:$0xff]
  %v59 = vld [vmem:[%s0 + $0x12c] sm:$0xff]
  %v60 = vld [vmem:[%s0 + $0x134] sm:$0xff]
  %v61 = vld [vmem:[%s0 + $0x13c] sm:$0xff]
  %v62 = vld [vmem:[%s0 + $0x144] sm:$0xff]
  %v63 = vld [vmem:[%s0 + $0x14c] sm:$0xff]
  %v64 = vld [vmem:[%s0 + $0x154] sm:$0xff]
  %v65 = vld [vmem:[%s0 + $0x15c] sm:$0xff]
  %v66 = vld [vmem:[%s0 + $0x164] sm:$0xff]
  %v67 = vld [vmem:[%s0 + $0x16c] sm:$0xff]
  %v68 = vld [vmem:[%s0 + $0x174] sm:$0xff]
  %v69 = vld [vmem:[%s0 + $0x17c] sm:$0xff]
  %v70 = vld [vmem:[%s0 + $0x184] sm:$0xf]
  %v71 = vld [vmem:[%s1] sm:$0xf]
  %v72 = vld [vmem:[%s1 + $0x4] sm:$0xf]
  %v73 = vld [vmem:[%s1 + $0x8] sm:$0xf]
  %v74 = vld [vmem:[%s1 + $0xc] sm:$0xf]
  %v75 = vld [vmem:[%s1 + $0x10] sm:$0xf]
  %v76 = vld [vmem:[%s1 + $0x14] sm:$0xf]
  %v77 = vld [vmem:[%s1 + $0x18] sm:$0xf]
  %v78 = vld [vmem:[%s1 + $0x1c] sm:$0xf]
  %v79 = vld [vmem:[%s1 + $0x20] sm:$0xf]
  %v80 = vld [vmem:[%s1 + $0x24] sm:$0xf]
  %v81 = vld [vmem:[%s1 + $0x28] sm:$0xf]
  %v82 = vld [vmem:[%s1 + $0x2c] sm:$0xf]
  %v83 = vld [vmem:[%s1 + $0x30] sm:$0xf]
  %v84 = vld [vmem:[%s1 + $0x34] sm:$0xf]
  %v85 = vld [vmem:[%s1 + $0x38] sm:$0xf]
  %v86 = vld [vmem:[%s1 + $0x3c] sm:$0xf]
  %v87 = vld [vmem:[%s1 + $0x40] sm:$0xf]
  %v88 = vld [vmem:[%s1 + $0x44] sm:$0xf]
  %v89 = vld [vmem:[%s1 + $0x48] sm:$0xf]
  %v90 = vld [vmem:[%s1 + $0x4c] sm:$0xf]
  %v91 = vld [vmem:[%s1 + $0x50] sm:$0xf]
  %v92 = vld [vmem:[%s1 + $0x54] sm:$0xf]
  %v93 = vld [vmem:[%s1 + $0x58] sm:$0xf]
  %v94 = vld [vmem:[%s1 + $0x5c] sm:$0xf]
  %v95 = vld [vmem:[%s1 + $0x60] sm:$0xf]
  %v96 = vld [vmem:[%s1 + $0x64] sm:$0xf]
  %v97 = vld [vmem:[%s1 + $0x68] sm:$0xf]
  %v98 = vld [vmem:[%s1 + $0x6c] sm:$0xf]
  %v99 = vld [vmem:[%s1 + $0x70] sm:$0xf]
  %v100 = vld [vmem:[%s1 + $0x74] sm:$0xf]
  %v101 = vld [vmem:[%s1 + $0x78] sm:$0xf]
  %v102 = vld [vmem:[%s1 + $0x7c] sm:$0xf]
  %v103 = vld [vmem:[%s1 + $0x80] sm:$0xf]
  %v104 = vld [vmem:[%s1 + $0x84] sm:$0xf]
  %v105 = vld [vmem:[%s1 + $0x88] sm:$0xf]
  %v106 = vld [vmem:[%s1 + $0x8c] sm:$0xf]
  %v107 = vld [vmem:[%s1 + $0x90] sm:$0xf]
  %v108 = vld [vmem:[%s1 + $0x94] sm:$0xf]
  %v109 = vld [vmem:[%s1 + $0x98] sm:$0xf]
  %v110 = vld [vmem:[%s1 + $0x9c] sm:$0xf]
  %v111 = vld [vmem:[%s1 + $0xa0] sm:$0xf]
  %v112 = vld [vmem:[%s1 + $0xa4] sm:$0xf]
  %v113 = vld [vmem:[%s1 + $0xa8] sm:$0xf]
  %v114 = vld [vmem:[%s1 + $0xac] sm:$0xf]
  %v115 = vld [vmem:[%s1 + $0xb0] sm:$0xf]
  %v116 = vld [vmem:[%s1 + $0xb4] sm:$0xf]
  %v117 = vld [vmem:[%s1 + $0xb8] sm:$0xf]
  %v118 = vld [vmem:[%s1 + $0xbc] sm:$0xf]
  %v119 = vld [vmem:[%s1 + $0xc0] sm:$0xf]
  %v120 = vld [vmem:[%s1 + $0xc4] sm:$0xf]
  %v121 = vld [vmem:[%s1 + $0xc8] sm:$0xf]
  %v122 = vld [vmem:[%s1 + $0xcc] sm:$0xf]
  %v123 = vld [vmem:[%s1 + $0xd0] sm:$0xf]
  %v124 = vld [vmem:[%s1 + $0xd4] sm:$0xf]
  %v125 = vld [vmem:[%s1 + $0xd8] sm:$0xf]
  %v126 = vld [vmem:[%s1 + $0xdc] sm:$0xf]
  %v127 = vld [vmem:[%s1 + $0xe0] sm:$0xf]
  %v128 = vld [vmem:[%s1 + $0xe4] sm:$0xf]
  %v129 = vld [vmem:[%s1 + $0xe8] sm:$0xf]
  %v130 = vld [vmem:[%s1 + $0xec] sm:$0xf]
  %v131 = vld [vmem:[%s1 + $0xf0] sm:$0xf]
  %v132 = vld [vmem:[%s1 + $0xf4] sm:$0xf]
  %v133 = vld [vmem:[%s1 + $0xf8] sm:$0xf]
  %v134 = vld [vmem:[%s1 + $0xfc] sm:$0xf]
  %v135 = vld [vmem:[%s1 + $0x100] sm:$0xf]
  %v136 = vld [vmem:[%s1 + $0x104] sm:$0xf]
  %v137 = vld [vmem:[%s1 + $0x108] sm:$0xf]
  %v138 = vld [vmem:[%s1 + $0x10c] sm:$0xf]
  %v139 = vld [vmem:[%s1 + $0x110] sm:$0xf]
  %v140 = vld [vmem:[%s1 + $0x114] sm:$0xf]
  %v141 = vld [vmem:[%s1 + $0x118] sm:$0xf]
  %v142 = vld [vmem:[%s1 + $0x11c] sm:$0xf]
  %v143 = vld [vmem:[%s1 + $0x120] sm:$0xf]
  %v144 = vld [vmem:[%s1 + $0x124] sm:$0xf]
  %v145 = vld [vmem:[%s1 + $0x128] sm:$0xf]
  %v146 = vld [vmem:[%s1 + $0x12c] sm:$0xf]
  %v147 = vld [vmem:[%s1 + $0x130] sm:$0xf]
  %v148 = vld [vmem:[%s1 + $0x134] sm:$0xf]
  %v149 = vld [vmem:[%s1 + $0x138] sm:$0xf]
  %v150 = vld [vmem:[%s1 + $0x13c] sm:$0xf]
  %v151 = vld [vmem:[%s1 + $0x140] sm:$0xf]
  %v152 = vld [vmem:[%s1 + $0x144] sm:$0xf]
  %v153 = vld [vmem:[%s1 + $0x148] sm:$0xf]
  %v154 = vld [vmem:[%s1 + $0x14c] sm:$0xf]
  %v155 = vld [vmem:[%s1 + $0x150] sm:$0xf]
  %v156 = vld [vmem:[%s1 + $0x154] sm:$0xf]
  %v157 = vld [vmem:[%s1 + $0x158] sm:$0xf]
  %v158 = vld [vmem:[%s1 + $0x15c] sm:$0xf]
  %v159 = vld [vmem:[%s1 + $0x160] sm:$0xf]
  %v160 = vld [vmem:[%s1 + $0x164] sm:$0xf]
  %v161 = vld [vmem:[%s1 + $0x168] sm:$0xf]
  %v162 = vld [vmem:[%s1 + $0x16c] sm:$0xf]
  %v163 = vld [vmem:[%s1 + $0x170] sm:$0xf]
  %v164 = vld [vmem:[%s1 + $0x174] sm:$0xf]
  %v165 = vld [vmem:[%s1 + $0x178] sm:$0xf]
  %v166 = vld [vmem:[%s1 + $0x17c] sm:$0xf]
  %v167 = vld [vmem:[%s1 + $0x180] sm:$0xf]
  %v168 = vld [vmem:[%s1 + $0x184] sm:$0xf]
  %v169 = vld [vmem:[%s1 + $0x188] sm:$0xf]
  %v170 = vld [vmem:[%s1 + $0x18c] sm:$0xf]
  %v171 = vld [vmem:[%s1 + $0x190] sm:$0xf]
  %v172 = vld [vmem:[%s1 + $0x194] sm:$0xf]
  %v173 = vld [vmem:[%s1 + $0x198] sm:$0xf]
  %v174 = vld [vmem:[%s1 + $0x19c] sm:$0xf]
  %v175 = vld [vmem:[%s1 + $0x1a0] sm:$0xf]
  %v176 = vld [vmem:[%s1 + $0x1a4] sm:$0xf]
  %v177 = vld [vmem:[%s1 + $0x1a8] sm:$0xf]
  %v178 = vld [vmem:[%s1 + $0x1ac] sm:$0xf]
  %v179 = vld [vmem:[%s1 + $0x1b0] sm:$0xf]
  %v180 = vld [vmem:[%s1 + $0x1b4] sm:$0xf]
  %v181 = vld [vmem:[%s1 + $0x1b8] sm:$0xf]
  %v182 = vld [vmem:[%s1 + $0x1bc] sm:$0xf]
  %v183 = vld [vmem:[%s1 + $0x1c0] sm:$0xf]
  %v184 = vld [vmem:[%s1 + $0x1c4] sm:$0xf]
  %v185 = vld [vmem:[%s1 + $0x1c8] sm:$0xf]
  %v186 = vld [vmem:[%s1 + $0x1cc] sm:$0xf]
  %v187 = vld [vmem:[%s1 + $0x1d0] sm:$0xf]
  %v188 = vld [vmem:[%s1 + $0x1d4] sm:$0xf]
  %v189 = vld [vmem:[%s1 + $0x1d8] sm:$0xf]
  %v190 = vld [vmem:[%s1 + $0x1dc] sm:$0xf]
  %v191 = vld [vmem:[%s1 + $0x1e0] sm:$0xf]
  %v192 = vld [vmem:[%s1 + $0x1e4] sm:$0xf]
  %v193 = vld [vmem:[%s1 + $0x1e8] sm:$0xf]
  %v194 = vld [vmem:[%s1 + $0x1ec] sm:$0xf]
  %v195 = vld [vmem:[%s1 + $0x1f0] sm:$0xf]
  %v196 = vld [vmem:[%s1 + $0x1f4] sm:$0xf]
  %v197 = vld [vmem:[%s1 + $0x1f8] sm:$0xf]
  %v198 = vld [vmem:[%s1 + $0x1fc] sm:$0xf]
  %v199 = vld [vmem:[%s1 + $0x200] sm:$0xf]
  %v200 = vld [vmem:[%s1 + $0x204] sm:$0xf]
  %v201 = vld [vmem:[%s1 + $0x208] sm:$0xf]
  %v202 = vld [vmem:[%s1 + $0x20c] sm:$0xf]
  %v203 = vld [vmem:[%s1 + $0x210] sm:$0xf]
  %v204 = vld [vmem:[%s1 + $0x214] sm:$0xf]
  %v205 = vld [vmem:[%s1 + $0x218] sm:$0xf]
  %v206 = vld [vmem:[%s1 + $0x21c] sm:$0xf]
  %v207 = vld [vmem:[%s1 + $0x220] sm:$0xf]
  %v208 = vld [vmem:[%s1 + $0x224] sm:$0xf]
  %v209 = vld [vmem:[%s1 + $0x228] sm:$0xf]
  %v210 = vld [vmem:[%s1 + $0x22c] sm:$0xf]
  %v211 = vld [vmem:[%s1 + $0x230] sm:$0xf]
  %v212 = vld [vmem:[%s1 + $0x234] sm:$0xf]
  %v213 = vld [vmem:[%s1 + $0x238] sm:$0xf]
  %v214 = vld [vmem:[%s1 + $0x23c] sm:$0xf]
  %v215 = vld [vmem:[%s1 + $0x240] sm:$0xf]
  %v216 = vld [vmem:[%s1 + $0x244] sm:$0xf]
  %v217 = vld [vmem:[%s1 + $0x248] sm:$0xf]
  %v218 = vld [vmem:[%s1 + $0x24c] sm:$0xf]
  %v219 = vld [vmem:[%s1 + $0x250] sm:$0xf]
  %v220 = vld [vmem:[%s1 + $0x254] sm:$0xf]
  %v221 = vld [vmem:[%s1 + $0x258] sm:$0xf]
  %v222 = vld [vmem:[%s1 + $0x25c] sm:$0xf]
  %v223 = vld [vmem:[%s1 + $0x260] sm:$0xf]
  %v224 = vld [vmem:[%s1 + $0x264] sm:$0xf]
  %v225 = vld [vmem:[%s1 + $0x268] sm:$0xf]
  %v226 = vld [vmem:[%s1 + $0x26c] sm:$0xf]
  %v227 = vld [vmem:[%s1 + $0x270] sm:$0xf]
  %v228 = vld [vmem:[%s1 + $0x274] sm:$0xf]
  %v229 = vld [vmem:[%s1 + $0x278] sm:$0xf]
  %v230 = vld [vmem:[%s1 + $0x27c] sm:$0xf]
  %v231 = vld [vmem:[%s1 + $0x280] sm:$0xf]
  %v232 = vld [vmem:[%s1 + $0x284] sm:$0xf]
  %v233 = vld [vmem:[%s1 + $0x288] sm:$0xf]
  %v234 = vld [vmem:[%s1 + $0x28c] sm:$0xf]
  %v235 = vld [vmem:[%s1 + $0x290] sm:$0xf]
  %v236 = vld [vmem:[%s1 + $0x294] sm:$0xf]
  %v237 = vld [vmem:[%s1 + $0x298] sm:$0xf]
  %v238 = vld [vmem:[%s1 + $0x29c] sm:$0xf]
  %v239 = vld [vmem:[%s1 + $0x2a0] sm:$0xf]
  %v240 = vld [vmem:[%s1 + $0x2a4] sm:$0xf]
  %v241 = vld [vmem:[%s1 + $0x2a8] sm:$0xf]
  %v242 = vld [vmem:[%s1 + $0x2ac] sm:$0xf]
  %v243 = vld [vmem:[%s1 + $0x2b0] sm:$0xf]
  %v244 = vld [vmem:[%s1 + $0x2b4] sm:$0xf]
  %v245 = vld [vmem:[%s1 + $0x2b8] sm:$0xf]
  %v246 = vld [vmem:[%s1 + $0x2bc] sm:$0xf]
  %v247 = vld [vmem:[%s1 + $0x2c0] sm:$0xf]
  %v248 = vld [vmem:[%s1 + $0x2c4] sm:$0xf]
  %v249 = vld [vmem:[%s1 + $0x2c8] sm:$0xf]
  %v250 = vld [vmem:[%s1 + $0x2cc] sm:$0xf]
  %v251 = vld [vmem:[%s1 + $0x2d0] sm:$0xf]
  %v252 = vld [vmem:[%s1 + $0x2d4] sm:$0xf]
  %v253 = vld [vmem:[%s1 + $0x2d8] sm:$0xf]
  %v254 = vld [vmem:[%s1 + $0x2dc] sm:$0xf]
  %v255 = vld [vmem:[%s1 + $0x2e0] sm:$0xf]
  %v256 = vld [vmem:[%s1 + $0x2e4] sm:$0xf]
  %v257 = vld [vmem:[%s1 + $0x2e8] sm:$0xf]
  %v258 = vld [vmem:[%s1 + $0x2ec] sm:$0xf]
  %v259 = vld [vmem:[%s1 + $0x2f0] sm:$0xf]
  %v260 = vld [vmem:[%s1 + $0x2f4] sm:$0xf]
  %v261 = vld [vmem:[%s1 + $0x2f8] sm:$0xf]
  %v262 = vld [vmem:[%s1 + $0x2fc] sm:$0xf]
  %v263 = vld [vmem:[%s1 + $0x300] sm:$0xf]
  %v264 = vld [vmem:[%s1 + $0x304] sm:$0xf]
  %v265 = vld [vmem:[%s1 + $0x308] sm:$0xf]
  %v266 = vld [vmem:[%s1 + $0x30c] sm:$0xf]
  %v267 = vld [vmem:[%s1 + $0x310] sm:$0xf]
  %v268 = vld [vmem:[%s1 + $0x314] sm:$0xf]
  %v269 = vld [vmem:[%s1 + $0x318] sm:$0xf]
  %v270 = vld [vmem:[%s1 + $0x31c] sm:$0xf]
  %v271 = vld [vmem:[%s1 + $0x320] sm:$0xf]
  %v272 = vld [vmem:[%s1 + $0x324] sm:$0xf]
  %v273 = vld [vmem:[%s1 + $0x328] sm:$0xf]
  %v274 = vld [vmem:[%s1 + $0x32c] sm:$0xf]
  %v275 = vld [vmem:[%s1 + $0x330] sm:$0xf]
  %v276 = vld [vmem:[%s1 + $0x334] sm:$0xf]
  %v277 = vld [vmem:[%s1 + $0x338] sm:$0xf]
  %v278 = vld [vmem:[%s1 + $0x33c] sm:$0xf]
  %v279 = vld [vmem:[%s1 + $0x340] sm:$0xf]
  %v280 = vld [vmem:[%s1 + $0x344] sm:$0xf]
  %v281 = vld [vmem:[%s1 + $0x348] sm:$0xf]
  %v282 = vld [vmem:[%s1 + $0x34c] sm:$0xf]
  %v283 = vld [vmem:[%s1 + $0x350] sm:$0xf]
  %v284 = vld [vmem:[%s1 + $0x354] sm:$0xf]
  %v285 = vld [vmem:[%s1 + $0x358] sm:$0xf]
  %v286 = vld [vmem:[%s1 + $0x35c] sm:$0xf]
  %v287 = vld [vmem:[%s1 + $0x360] sm:$0xf]
  %v288 = vld [vmem:[%s1 + $0x364] sm:$0xf]
  %v289 = vld [vmem:[%s1 + $0x368] sm:$0xf]
  %v290 = vld [vmem:[%s1 + $0x36c] sm:$0xf]
  %v291 = vld [vmem:[%s1 + $0x370] sm:$0xf]
  %v292 = vld [vmem:[%s1 + $0x374] sm:$0xf]
  %v293 = vld [vmem:[%s1 + $0x378] sm:$0xf]
  %v294 = vld [vmem:[%s1 + $0x37c] sm:$0xf]
  %v295 = vld [vmem:[%s1 + $0x380] sm:$0xf]
  %v296 = vld [vmem:[%s1 + $0x384] sm:$0xf]
  %v297 = vld [vmem:[%s1 + $0x388] sm:$0xf]
  %v298 = vld [vmem:[%s1 + $0x38c] sm:$0xf]
  %v299 = vld [vmem:[%s1 + $0x390] sm:$0xf]
  %v300 = vld [vmem:[%s1 + $0x394] sm:$0xf]
  %v301 = vld [vmem:[%s1 + $0x398] sm:$0xf]
  %v302 = vld [vmem:[%s1 + $0x39c] sm:$0xf]
  %v303 = vld [vmem:[%s1 + $0x3a0] sm:$0xf]
  %v304 = vld [vmem:[%s1 + $0x3a4] sm:$0xf]
  %v305 = vld [vmem:[%s1 + $0x3a8] sm:$0xf]
  %v306 = vld [vmem:[%s1 + $0x3ac] sm:$0xf]
  %v307 = vld [vmem:[%s1 + $0x3b0] sm:$0xf]
  %v308 = vld [vmem:[%s1 + $0x3b4] sm:$0xf]
  %v309 = vld [vmem:[%s1 + $0x3b8] sm:$0xf]
  %v310 = vld [vmem:[%s1 + $0x3bc] sm:$0xf]
  %v311 = vld [vmem:[%s1 + $0x3c0] sm:$0xf]
  %v312 = vld [vmem:[%s1 + $0x3c4] sm:$0xf]
  %v313 = vld [vmem:[%s1 + $0x3c8] sm:$0xf]
  %v314 = vld [vmem:[%s1 + $0x3cc] sm:$0xf]
  %v315 = vld [vmem:[%s1 + $0x3d0] sm:$0xf]
  %v316 = vld [vmem:[%s1 + $0x3d4] sm:$0xf]
  %v317 = vld [vmem:[%s1 + $0x3d8] sm:$0xf]
  %v318 = vld [vmem:[%s1 + $0x3dc] sm:$0xf]
  %v319 = vld [vmem:[%s1 + $0x3e0] sm:$0xf]
  %v320 = vld [vmem:[%s1 + $0x3e4] sm:$0xf]
  %v321 = vld [vmem:[%s1 + $0x3e8] sm:$0xf]
  %v322 = vld [vmem:[%s1 + $0x3ec] sm:$0xf]
  %v323 = vld [vmem:[%s1 + $0x3f0] sm:$0xf]
  %v324 = vld [vmem:[%s1 + $0x3f4] sm:$0xf]
  %v325 = vld [vmem:[%s1 + $0x3f8] sm:$0xf]
  %v326 = vld [vmem:[%s1 + $0x3fc] sm:$0xf]
  %v327 = vld [vmem:[%s1 + $0x400] sm:$0xf]
  %v328 = vld [vmem:[%s1 + $0x404] sm:$0xf]
  %v329 = vld [vmem:[%s1 + $0x408] sm:$0xf]
  %v330 = vld [vmem:[%s1 + $0x40c] sm:$0xf]
  %v331 = vld [vmem:[%s1 + $0x410] sm:$0xf]
  %v332 = vld [vmem:[%s1 + $0x414] sm:$0xf]
  %v333 = vld [vmem:[%s1 + $0x418] sm:$0xf]
  %v334 = vld [vmem:[%s1 + $0x41c] sm:$0xf]
  %v335 = vld [vmem:[%s1 + $0x420] sm:$0xf]
  %v336 = vld [vmem:[%s1 + $0x424] sm:$0xf]
  %v337 = vld [vmem:[%s1 + $0x428] sm:$0xf]
  %v338 = vld [vmem:[%s1 + $0x42c] sm:$0xf]
  %v339 = vld [vmem:[%s1 + $0x430] sm:$0xf]
  %v340 = vld [vmem:[%s1 + $0x434] sm:$0xf]
  %v341 = vld [vmem:[%s1 + $0x438] sm:$0xf]
  %v342 = vld [vmem:[%s1 + $0x43c] sm:$0xf]
  %v343 = vld [vmem:[%s1 + $0x440] sm:$0xf]
  %v344 = vld [vmem:[%s1 + $0x444] sm:$0xf]
  %v345 = vld [vmem:[%s1 + $0x448] sm:$0xf]
  %v346 = vld [vmem:[%s1 + $0x44c] sm:$0xf]
  %v347 = vld [vmem:[%s1 + $0x450] sm:$0xf]
  %v348 = vld [vmem:[%s1 + $0x454] sm:$0xf]
  %v349 = vld [vmem:[%s1 + $0x458] sm:$0xf]
  %v350 = vld [vmem:[%s1 + $0x45c] sm:$0xf]
  %v351 = vld [vmem:[%s1 + $0x460] sm:$0xf]
  %v352 = vld [vmem:[%s1 + $0x464] sm:$0xf]
  %v353 = vld [vmem:[%s1 + $0x468] sm:$0xf]
  %v354 = vld [vmem:[%s1 + $0x46c] sm:$0xf]
  %v355 = vld [vmem:[%s1 + $0x470] sm:$0xf]
  %v356 = vld [vmem:[%s1 + $0x474] sm:$0xf]
  %v357 = vld [vmem:[%s1 + $0x478] sm:$0xf]
  %v358 = vld [vmem:[%s1 + $0x47c] sm:$0xf]
  %v359 = vld [vmem:[%s1 + $0x480] sm:$0xf]
  %v360 = vld [vmem:[%s1 + $0x484] sm:$0xf]
  %v361 = vld [vmem:[%s1 + $0x488] sm:$0xf]
  %v362 = vld [vmem:[%s1 + $0x48c] sm:$0xf]
  %v363 = vld [vmem:[%s1 + $0x490] sm:$0xf]
  %v364 = vld [vmem:[%s1 + $0x494] sm:$0xf]
  %v365 = vld [vmem:[%s1 + $0x498] sm:$0xf]
  %v366 = vld [vmem:[%s1 + $0x49c] sm:$0xf]
  %v367 = vld [vmem:[%s1 + $0x4a0] sm:$0xf]
  %v368 = vld [vmem:[%s1 + $0x4a4] sm:$0xf]
  %v369 = vld [vmem:[%s1 + $0x4a8] sm:$0xf]
  %v370 = vld [vmem:[%s1 + $0x4ac] sm:$0xf]
  %v371 = vld [vmem:[%s1 + $0x4b0] sm:$0xf]
  %v372 = vld [vmem:[%s1 + $0x4b4] sm:$0xf]
  %v373 = vld [vmem:[%s1 + $0x4b8] sm:$0xf]
  %v374 = vld [vmem:[%s1 + $0x4bc] sm:$0xf]
  %v375 = vld [vmem:[%s1 + $0x4c0] sm:$0xf]
  %v376 = vld [vmem:[%s1 + $0x4c4] sm:$0xf]
  %v377 = vld [vmem:[%s1 + $0x4c8] sm:$0xf]
  %v378 = vld [vmem:[%s1 + $0x4cc] sm:$0xf]
  %v379 = vld [vmem:[%s1 + $0x4d0] sm:$0xf]
  %v380 = vld [vmem:[%s1 + $0x4d4] sm:$0xf]
  %v381 = vld [vmem:[%s1 + $0x4d8] sm:$0xf]
  %v382 = vld [vmem:[%s1 + $0x4dc] sm:$0xf]
  %v383 = vld [vmem:[%s1 + $0x4e0] sm:$0xf]
  %v384 = vld [vmem:[%s1 + $0x4e4] sm:$0xf]
  %v385 = vld [vmem:[%s1 + $0x4e8] sm:$0xf]
  %v386 = vld [vmem:[%s1 + $0x4ec] sm:$0xf]
  %v387 = vld [vmem:[%s1 + $0x4f0] sm:$0xf]
  %v388 = vld [vmem:[%s1 + $0x4f4] sm:$0xf]
  %v389 = vld [vmem:[%s1 + $0x4f8] sm:$0xf]
  %v390 = vld [vmem:[%s1 + $0x4fc] sm:$0xf]
  %v391 = vld [vmem:[%s1 + $0x500] sm:$0xf]
  %v392 = vld [vmem:[%s1 + $0x504] sm:$0xf]
  %v393 = vld [vmem:[%s1 + $0x508] sm:$0xf]
  %v394 = vld [vmem:[%s1 + $0x50c] sm:$0xf]
  %v395 = vld [vmem:[%s1 + $0x510] sm:$0xf]
  %v396 = vld [vmem:[%s1 + $0x514] sm:$0xf]
  %v397 = vld [vmem:[%s1 + $0x518] sm:$0xf]
  %v398 = vld [vmem:[%s1 + $0x51c] sm:$0xf]
  %v399 = vld [vmem:[%s1 + $0x520] sm:$0xf]
  %v400 = vld [vmem:[%s1 + $0x524] sm:$0xf]
  %v401 = vld [vmem:[%s1 + $0x528] sm:$0xf]
  %v402 = vld [vmem:[%s1 + $0x52c] sm:$0xf]
  %v403 = vld [vmem:[%s1 + $0x530] sm:$0xf]
  %v404 = vld [vmem:[%s1 + $0x534] sm:$0xf]
  %v405 = vld [vmem:[%s1 + $0x538] sm:$0xf]
  %v406 = vld [vmem:[%s1 + $0x53c] sm:$0xf]
  %v407 = vld [vmem:[%s1 + $0x540] sm:$0xf]
  %v408 = vld [vmem:[%s1 + $0x544] sm:$0xf]
  %v409 = vld [vmem:[%s1 + $0x548] sm:$0xf]
  %v410 = vld [vmem:[%s1 + $0x54c] sm:$0xf]
  %v411 = vld [vmem:[%s1 + $0x550] sm:$0xf]
  %v412 = vld [vmem:[%s1 + $0x554] sm:$0xf]
  %v413 = vld [vmem:[%s1 + $0x558] sm:$0xf]
  %v414 = vld [vmem:[%s1 + $0x55c] sm:$0xf]
  %v415 = vld [vmem:[%s1 + $0x560] sm:$0xf]
  %v416 = vld [vmem:[%s1 + $0x564] sm:$0xf]
  %v417 = vld [vmem:[%s1 + $0x568] sm:$0xf]
  %v418 = vld [vmem:[%s1 + $0x56c] sm:$0xf]
  %v419 = vld [vmem:[%s1 + $0x570] sm:$0xf]
  %v420 = vld [vmem:[%s1 + $0x574] sm:$0xf]
  %v421 = vld [vmem:[%s1 + $0x578] sm:$0xf]
  %v422 = vld [vmem:[%s1 + $0x57c] sm:$0xf]
  %v423 = vld [vmem:[%s1 + $0x580] sm:$0xf]
  %v424 = vld [vmem:[%s1 + $0x584] sm:$0xf]
  %v425 = vld [vmem:[%s1 + $0x588] sm:$0xf]
  %v426 = vld [vmem:[%s1 + $0x58c] sm:$0xf]
  %v427 = vld [vmem:[%s1 + $0x590] sm:$0xf]
  %v428 = vld [vmem:[%s1 + $0x594] sm:$0xf]
  %v429 = vld [vmem:[%s1 + $0x598] sm:$0xf]
  %v430 = vld [vmem:[%s1 + $0x59c] sm:$0xf]
  %v431 = vld [vmem:[%s1 + $0x5a0] sm:$0xf]
  %v432 = vld [vmem:[%s1 + $0x5a4] sm:$0xf]
  %v433 = vld [vmem:[%s1 + $0x5a8] sm:$0xf]
  %v434 = vld [vmem:[%s1 + $0x5ac] sm:$0xf]
  %v435 = vld [vmem:[%s1 + $0x5b0] sm:$0xf]
  %v436 = vld [vmem:[%s1 + $0x5b4] sm:$0xf]
  %v437 = vld [vmem:[%s1 + $0x5b8] sm:$0xf]
  %v438 = vld [vmem:[%s1 + $0x5bc] sm:$0xf]
  %v439 = vld [vmem:[%s1 + $0x5c0] sm:$0xf]
  %v440 = vld [vmem:[%s1 + $0x5c4] sm:$0xf]
  %v441 = vld [vmem:[%s1 + $0x5c8] sm:$0xf]
  %v442 = vld [vmem:[%s1 + $0x5cc] sm:$0xf]
  %v443 = vld [vmem:[%s1 + $0x5d0] sm:$0xf]
  %v444 = vld [vmem:[%s1 + $0x5d4] sm:$0xf]
  %v445 = vld [vmem:[%s1 + $0x5d8] sm:$0xf]
  %v446 = vld [vmem:[%s1 + $0x5dc] sm:$0xf]
  %v447 = vld [vmem:[%s1 + $0x5e0] sm:$0xf]
  %v448 = vld [vmem:[%s1 + $0x5e4] sm:$0xf]
  %v449 = vld [vmem:[%s1 + $0x5e8] sm:$0xf]
  %v450 = vld [vmem:[%s1 + $0x5ec] sm:$0xf]
  %v451 = vld [vmem:[%s1 + $0x5f0] sm:$0xf]
  %v452 = vld [vmem:[%s1 + $0x5f4] sm:$0xf]
  %v453 = vld [vmem:[%s1 + $0x5f8] sm:$0xf]
  %v454 = vld [vmem:[%s1 + $0x5fc] sm:$0xf]
  %v455 = vld [vmem:[%s1 + $0x600] sm:$0xf]
  %v456 = vld [vmem:[%s1 + $0x604] sm:$0xf]
  %v457 = vld [vmem:[%s1 + $0x608] sm:$0xf]
  %v458 = vld [vmem:[%s1 + $0x60c] sm:$0xf]
  %v459 = vld [vmem:[%s1 + $0x610] sm:$0xf]
  %v460 = vld [vmem:[%s1 + $0x614] sm:$0xf]
  %v461 = vld [vmem:[%s1 + $0x618] sm:$0xf]
  %v462 = vld [vmem:[%s1 + $0x61c] sm:$0xf]
  %v463 = vld [vmem:[%s1 + $0x620] sm:$0xf]
  %v464 = vld [vmem:[%s1 + $0x624] sm:$0xf]
  %v465 = vld [vmem:[%s1 + $0x628] sm:$0xf]
  %v466 = vld [vmem:[%s1 + $0x62c] sm:$0xf]
  %v467 = vld [vmem:[%s1 + $0x630] sm:$0xf]
  %v468 = vld [vmem:[%s1 + $0x634] sm:$0xf]
  %v469 = vld [vmem:[%s1 + $0x638] sm:$0xf]
  %v470 = vld [vmem:[%s1 + $0x63c] sm:$0xf]
  %v471 = vld [vmem:[%s1 + $0x640] sm:$0xf]
  %v472 = vld [vmem:[%s1 + $0x644] sm:$0xf]
  %v473 = vld [vmem:[%s1 + $0x648] sm:$0xf]
  %v474 = vld [vmem:[%s1 + $0x64c] sm:$0xf]
  %v475 = vld [vmem:[%s1 + $0x650] sm:$0xf]
  %v476 = vld [vmem:[%s1 + $0x654] sm:$0xf]
  %v477 = vld [vmem:[%s1 + $0x658] sm:$0xf]
  %v478 = vld [vmem:[%s1 + $0x65c] sm:$0xf]
  %v479 = vld [vmem:[%s1 + $0x660] sm:$0xf]
  %v480 = vld [vmem:[%s1 + $0x664] sm:$0xf]
  %v481 = vld [vmem:[%s1 + $0x668] sm:$0xf]
  %v482 = vld [vmem:[%s1 + $0x66c] sm:$0xf]
  %v483 = vld [vmem:[%s1 + $0x670] sm:$0xf]
  %v484 = vld [vmem:[%s1 + $0x674] sm:$0xf]
  %v485 = vld [vmem:[%s1 + $0x678] sm:$0xf]
  %v486 = vld [vmem:[%s1 + $0x67c] sm:$0xf]
  %v487 = vld [vmem:[%s1 + $0x680] sm:$0xf]
  %v488 = vld [vmem:[%s1 + $0x684] sm:$0xf]
  %v489 = vld [vmem:[%s1 + $0x688] sm:$0xf]
  %v490 = vld [vmem:[%s1 + $0x68c] sm:$0xf]
  %v491 = vld [vmem:[%s1 + $0x690] sm:$0xf]
  %v492 = vld [vmem:[%s1 + $0x694] sm:$0xf]
  %v493 = vld [vmem:[%s1 + $0x698] sm:$0xf]
  %v494 = vld [vmem:[%s1 + $0x69c] sm:$0xf]
  %v495 = vld [vmem:[%s1 + $0x6a0] sm:$0xf]
  %v496 = vld [vmem:[%s1 + $0x6a4] sm:$0xf]
  %v497 = vld [vmem:[%s1 + $0x6a8] sm:$0xf]
  %v498 = vld [vmem:[%s1 + $0x6ac] sm:$0xf]
  %v499 = vld [vmem:[%s1 + $0x6b0] sm:$0xf]
  %v500 = vld [vmem:[%s1 + $0x6b4] sm:$0xf]
  %v501 = vld [vmem:[%s1 + $0x6b8] sm:$0xf]
  %v502 = vld [vmem:[%s1 + $0x6bc] sm:$0xf]
  %v503 = vld [vmem:[%s1 + $0x6c0] sm:$0xf]
  %v504 = vld [vmem:[%s1 + $0x6c4] sm:$0xf]
  %v505 = vld [vmem:[%s1 + $0x6c8] sm:$0xf]
  %v506 = vld [vmem:[%s1 + $0x6cc] sm:$0xf]
  %v507 = vld [vmem:[%s1 + $0x6d0] sm:$0xf]
  %v508 = vld [vmem:[%s1 + $0x6d4] sm:$0xf]
  %v509 = vld [vmem:[%s1 + $0x6d8] sm:$0xf]
  %v510 = vld [vmem:[%s1 + $0x6dc] sm:$0xf]
  %v511 = vld [vmem:[%s1 + $0x6e0] sm:$0xf]
  %v512 = vld [vmem:[%s1 + $0x6e4] sm:$0xf]
  %v513 = vld [vmem:[%s1 + $0x6e8] sm:$0xf]
  %v514 = vld [vmem:[%s1 + $0x6ec] sm:$0xf]
  %v515 = vld [vmem:[%s1 + $0x6f0] sm:$0xf]
  %v516 = vld [vmem:[%s1 + $0x6f4] sm:$0xf]
  %v517 = vld [vmem:[%s1 + $0x6f8] sm:$0xf]
  %v518 = vld [vmem:[%s1 + $0x6fc] sm:$0xf]
  %v519 = vld [vmem:[%s1 + $0x700] sm:$0xf]
  %v520 = vld [vmem:[%s1 + $0x704] sm:$0xf]
  %v521 = vld [vmem:[%s1 + $0x708] sm:$0xf]
  %v522 = vld [vmem:[%s1 + $0x70c] sm:$0xf]
  %v523 = vld [vmem:[%s1 + $0x710] sm:$0xf]
  %v524 = vld [vmem:[%s1 + $0x714] sm:$0xf]
  %v525 = vld [vmem:[%s1 + $0x718] sm:$0xf]
  %v526 = vld [vmem:[%s1 + $0x71c] sm:$0xf]
  %v527 = vld [vmem:[%s1 + $0x720] sm:$0xf]
  %v528 = vld [vmem:[%s1 + $0x724] sm:$0xf]
  %v529 = vld [vmem:[%s1 + $0x728] sm:$0xf]
  %v530 = vld [vmem:[%s1 + $0x72c] sm:$0xf]
  %v531 = vld [vmem:[%s1 + $0x730] sm:$0xf]
  %v532 = vld [vmem:[%s1 + $0x734] sm:$0xf]
  %v533 = vld [vmem:[%s1 + $0x738] sm:$0xf]
  %v534 = vld [vmem:[%s1 + $0x73c] sm:$0xf]
  %v535 = vld [vmem:[%s1 + $0x740] sm:$0xf]
  %v536 = vld [vmem:[%s1 + $0x744] sm:$0xf]
  %v537 = vld [vmem:[%s1 + $0x748] sm:$0xf]
  %v538 = vld [vmem:[%s1 + $0x74c] sm:$0xf]
  %v539 = vld [vmem:[%s1 + $0x750] sm:$0xf]
  %v540 = vld [vmem:[%s1 + $0x754] sm:$0xf]
  %v541 = vld [vmem:[%s1 + $0x758] sm:$0xf]
  %v542 = vld [vmem:[%s1 + $0x75c] sm:$0xf]
  %v543 = vld [vmem:[%s1 + $0x760] sm:$0xf]
  %v544 = vld [vmem:[%s1 + $0x764] sm:$0xf]
  %v545 = vld [vmem:[%s1 + $0x768] sm:$0xf]
  %v546 = vld [vmem:[%s1 + $0x76c] sm:$0xf]
  %v547 = vld [vmem:[%s1 + $0x770] sm:$0xf]
  %v548 = vld [vmem:[%s1 + $0x774] sm:$0xf]
  %v549 = vld [vmem:[%s1 + $0x778] sm:$0xf]
  %v550 = vld [vmem:[%s1 + $0x77c] sm:$0xf]
  %v551 = vld [vmem:[%s1 + $0x780] sm:$0xf]
  %v552 = vld [vmem:[%s1 + $0x784] sm:$0xf]
  %v553 = vld [vmem:[%s1 + $0x788] sm:$0xf]
  %v554 = vld [vmem:[%s1 + $0x78c] sm:$0xf]
  %v555 = vld [vmem:[%s1 + $0x790] sm:$0xf]
  %v556 = vld [vmem:[%s1 + $0x794] sm:$0xf]
  %v557 = vld [vmem:[%s1 + $0x798] sm:$0xf]
  %v558 = vld [vmem:[%s1 + $0x79c] sm:$0xf]
  %v559 = vld [vmem:[%s1 + $0x7a0] sm:$0xf]
  %v560 = vld [vmem:[%s1 + $0x7a4] sm:$0xf]
  %v561 = vld [vmem:[%s1 + $0x7a8] sm:$0xf]
  %v562 = vld [vmem:[%s1 + $0x7ac] sm:$0xf]
  %v563 = vld [vmem:[%s1 + $0x7b0] sm:$0xf]
  %v564 = vld [vmem:[%s1 + $0x7b4] sm:$0xf]
  %v565 = vld [vmem:[%s1 + $0x7b8] sm:$0xf]
  %v566 = vld [vmem:[%s1 + $0x7bc] sm:$0xf]
  %v567 = vld [vmem:[%s1 + $0x7c0] sm:$0xf]
  %v568 = vld [vmem:[%s1 + $0x7c4] sm:$0xf]
  %v569 = vld [vmem:[%s1 + $0x7c8] sm:$0xf]
  %v570 = vld [vmem:[%s1 + $0x7cc] sm:$0xf]
  %v571 = vld [vmem:[%s1 + $0x7d0] sm:$0xf]
  %v572 = vld [vmem:[%s1 + $0x7d4] sm:$0xf]
  %v573 = vld [vmem:[%s1 + $0x7d8] sm:$0xf]
  %v574 = vld [vmem:[%s1 + $0x7dc] sm:$0xf]
  %v575 = vld [vmem:[%s1 + $0x7e0] sm:$0xf]
  %v576 = vld [vmem:[%s1 + $0x7e4] sm:$0xf]
  %v577 = vld [vmem:[%s1 + $0x7e8] sm:$0xf]
  %v578 = vld [vmem:[%s1 + $0x7ec] sm:$0xf]
  %v579 = vld [vmem:[%s1 + $0x7f0] sm:$0xf]
  %v580 = vld [vmem:[%s1 + $0x7f4] sm:$0xf]
  %v581 = vld [vmem:[%s1 + $0x7f8] sm:$0xf]
  %v582 = vld [vmem:[%s1 + $0x7fc] sm:$0xf]
  %v583 = vld [vmem:[%s1 + $0x800] sm:$0xf]
  %v584 = vld [vmem:[%s1 + $0x804] sm:$0xf]
  %v585 = vld [vmem:[%s1 + $0x808] sm:$0xf]
  %v586 = vld [vmem:[%s1 + $0x80c] sm:$0xf]
  %v587 = vld [vmem:[%s1 + $0x810] sm:$0xf]
  %v588 = vld [vmem:[%s1 + $0x814] sm:$0xf]
  %v589 = vld [vmem:[%s1 + $0x818] sm:$0xf]
  %v590 = vld [vmem:[%s1 + $0x81c] sm:$0xf]
  %v591 = vld [vmem:[%s1 + $0x820] sm:$0xf]
  %v592 = vld [vmem:[%s1 + $0x824] sm:$0xf]
  %v593 = vld [vmem:[%s1 + $0x828] sm:$0xf]
  %v594 = vld [vmem:[%s1 + $0x82c] sm:$0xf]
  %v595 = vld [vmem:[%s1 + $0x830] sm:$0xf]
  %v596 = vld [vmem:[%s1 + $0x834] sm:$0xf]
  %v597 = vld [vmem:[%s1 + $0x838] sm:$0xf]
  %v598 = vld [vmem:[%s1 + $0x83c] sm:$0xf]
  %v599 = vld [vmem:[%s1 + $0x840] sm:$0xf]
  %v600 = vld [vmem:[%s1 + $0x844] sm:$0xf]
  %v601 = vld [vmem:[%s1 + $0x848] sm:$0xf]
  %v602 = vld [vmem:[%s1 + $0x84c] sm:$0xf]
  %v603 = vld [vmem:[%s1 + $0x850] sm:$0xf]
  %v604 = vld [vmem:[%s1 + $0x854] sm:$0xf]
  %v605 = vld [vmem:[%s1 + $0x858] sm:$0xf]
  %v606 = vld [vmem:[%s1 + $0x85c] sm:$0xf]
  %v607 = vld [vmem:[%s1 + $0x860] sm:$0xf]
  %v608 = vld [vmem:[%s1 + $0x864] sm:$0xf]
  %v609 = vld [vmem:[%s1 + $0x868] sm:$0xf]
  %v610 = vld [vmem:[%s1 + $0x86c] sm:$0xf]
  %v611 = vld [vmem:[%s1 + $0x870] sm:$0xf]
  %v612 = vld [vmem:[%s1 + $0x874] sm:$0xf]
  %v613 = vld [vmem:[%s1 + $0x878] sm:$0xf]
  %v614 = vld [vmem:[%s1 + $0x87c] sm:$0xf]
  %v615 = vld [vmem:[%s1 + $0x880] sm:$0xf]
  %v616 = vld [vmem:[%s1 + $0x884] sm:$0xf]
  %v617 = vld [vmem:[%s1 + $0x888] sm:$0xf]
  %v618 = vld [vmem:[%s1 + $0x88c] sm:$0xf]
  %v619 = vld [vmem:[%s1 + $0x890] sm:$0xf]
  %v620 = vld [vmem:[%s1 + $0x894] sm:$0xf]
  %v621 = vld [vmem:[%s1 + $0x898] sm:$0xf]
  %v622 = vld [vmem:[%s1 + $0x89c] sm:$0xf]
  %v623 = vld [vmem:[%s1 + $0x8a0] sm:$0xf]
  %v624 = vld [vmem:[%s1 + $0x8a4] sm:$0xf]
  %v625 = vld [vmem:[%s1 + $0x8a8] sm:$0xf]
  %v626 = vld [vmem:[%s1 + $0x8ac] sm:$0xf]
  %v627 = vld [vmem:[%s1 + $0x8b0] sm:$0xf]
  %v628 = vld [vmem:[%s1 + $0x8b4] sm:$0xf]
  %v629 = vld [vmem:[%s1 + $0x8b8] sm:$0xf]
  %v630 = vld [vmem:[%s1 + $0x8bc] sm:$0xf]
  %v631 = vld [vmem:[%s1 + $0x8c0] sm:$0xf]
  %v632 = vld [vmem:[%s1 + $0x8c4] sm:$0xf]
  %v633 = vld [vmem:[%s1 + $0x8c8] sm:$0xf]
  %v634 = vld [vmem:[%s1 + $0x8cc] sm:$0xf]
  %v635 = vld [vmem:[%s1 + $0x8d0] sm:$0xf]
  %v636 = vld [vmem:[%s1 + $0x8d4] sm:$0xf]
  %v637 = vld [vmem:[%s1 + $0x8d8] sm:$0xf]
  %v638 = vld [vmem:[%s1 + $0x8dc] sm:$0xf]
  %v639 = vld [vmem:[%s1 + $0x8e0] sm:$0xf]
  %v640 = vld [vmem:[%s1 + $0x8e4] sm:$0xf]
  %v641 = vld [vmem:[%s1 + $0x8e8] sm:$0xf]
  %v642 = vld [vmem:[%s1 + $0x8ec] sm:$0xf]
  %v643 = vld [vmem:[%s1 + $0x8f0] sm:$0xf]
  %v644 = vld [vmem:[%s1 + $0x8f4] sm:$0xf]
  %v645 = vld [vmem:[%s1 + $0x8f8] sm:$0xf]
  %v646 = vld [vmem:[%s1 + $0x8fc] sm:$0xf]
  %v647 = vld [vmem:[%s1 + $0x900] sm:$0xf]
  %v648 = vld [vmem:[%s1 + $0x904] sm:$0xf]
  %v649 = vld [vmem:[%s1 + $0x908] sm:$0xf]
  %v650 = vld [vmem:[%s1 + $0x90c] sm:$0xf]
  %v651 = vld [vmem:[%s1 + $0x910] sm:$0xf]
  %v652 = vld [vmem:[%s1 + $0x914] sm:$0xf]
  %v653 = vld [vmem:[%s1 + $0x918] sm:$0xf]
  %v654 = vld [vmem:[%s1 + $0x91c] sm:$0xf]
  %v655 = vld [vmem:[%s1 + $0x920] sm:$0xf]
  %v656 = vld [vmem:[%s1 + $0x924] sm:$0xf]
  %v657 = vld [vmem:[%s1 + $0x928] sm:$0xf]
  %v658 = vld [vmem:[%s1 + $0x92c] sm:$0xf]
  %v659 = vld [vmem:[%s1 + $0x930] sm:$0xf]
  %v660 = vld [vmem:[%s1 + $0x934] sm:$0xf]
  %v661 = vld [vmem:[%s1 + $0x938] sm:$0xf]
  %v662 = vld [vmem:[%s1 + $0x93c] sm:$0xf]
  %v663 = vld [vmem:[%s1 + $0x940] sm:$0xf]
  %v664 = vld [vmem:[%s1 + $0x944] sm:$0xf]
  %v665 = vld [vmem:[%s1 + $0x948] sm:$0xf]
  %v666 = vld [vmem:[%s1 + $0x94c] sm:$0xf]
  %v667 = vld [vmem:[%s1 + $0x950] sm:$0xf]
  %v668 = vld [vmem:[%s1 + $0x954] sm:$0xf]
  %v669 = vld [vmem:[%s1 + $0x958] sm:$0xf]
  %v670 = vld [vmem:[%s1 + $0x95c] sm:$0xf]
  %v671 = vld [vmem:[%s1 + $0x960] sm:$0xf]
  %v672 = vld [vmem:[%s1 + $0x964] sm:$0xf]
  %v673 = vld [vmem:[%s1 + $0x968] sm:$0xf]
  %v674 = vld [vmem:[%s1 + $0x96c] sm:$0xf]
  %v675 = vld [vmem:[%s1 + $0x970] sm:$0xf]
  %v676 = vld [vmem:[%s1 + $0x974] sm:$0xf]
  %v677 = vld [vmem:[%s1 + $0x978] sm:$0xf]
  %v678 = vld [vmem:[%s1 + $0x97c] sm:$0xf]
  %v679 = vld [vmem:[%s1 + $0x980] sm:$0xf]
  %v680 = vld [vmem:[%s1 + $0x984] sm:$0xf]
  %v681 = vld [vmem:[%s1 + $0x988] sm:$0xf]
  %v682 = vld [vmem:[%s1 + $0x98c] sm:$0xf]
  %v683 = vld [vmem:[%s1 + $0x990] sm:$0xf]
  %v684 = vld [vmem:[%s1 + $0x994] sm:$0xf]
  %v685 = vld [vmem:[%s1 + $0x998] sm:$0xf]
  %v686 = vld [vmem:[%s1 + $0x99c] sm:$0xf]
  %v687 = vld [vmem:[%s1 + $0x9a0] sm:$0xf]
  %v688 = vld [vmem:[%s1 + $0x9a4] sm:$0xf]
  %v689 = vld [vmem:[%s1 + $0x9a8] sm:$0xf]
  %v690 = vld [vmem:[%s1 + $0x9ac] sm:$0xf]
  %v691 = vld [vmem:[%s1 + $0x9b0] sm:$0xf]
  %v692 = vld [vmem:[%s1 + $0x9b4] sm:$0xf]
  %v693 = vld [vmem:[%s1 + $0x9b8] sm:$0xf]
  %v694 = vld [vmem:[%s1 + $0x9bc] sm:$0xf]
  %v695 = vld [vmem:[%s1 + $0x9c0] sm:$0xf]
  %v696 = vld [vmem:[%s1 + $0x9c4] sm:$0xf]
  %v697 = vld [vmem:[%s1 + $0x9c8] sm:$0xf]
  %v698 = vld [vmem:[%s1 + $0x9cc] sm:$0xf]
  %v699 = vld [vmem:[%s1 + $0x9d0] sm:$0xf]
  %v700 = vld [vmem:[%s1 + $0x9d4] sm:$0xf]
  %v701 = vld [vmem:[%s1 + $0x9d8] sm:$0xf]
  %v702 = vld [vmem:[%s1 + $0x9dc] sm:$0xf]
  %v703 = vld [vmem:[%s1 + $0x9e0] sm:$0xf]
  %v704 = vld [vmem:[%s1 + $0x9e4] sm:$0xf]
  %v705 = vld [vmem:[%s1 + $0x9e8] sm:$0xf]
  %v706 = vld [vmem:[%s1 + $0x9ec] sm:$0xf]
  %v707 = vld [vmem:[%s1 + $0x9f0] sm:$0xf]
  %v708 = vld [vmem:[%s1 + $0x9f4] sm:$0xf]
  %v709 = vld [vmem:[%s1 + $0x9f8] sm:$0xf]
  %v710 = vld [vmem:[%s1 + $0x9fc] sm:$0xf]
  %v711 = vld [vmem:[%s1 + $0xa00] sm:$0xf]
  %v712 = vld [vmem:[%s1 + $0xa04] sm:$0xf]
  %v713 = vld [vmem:[%s1 + $0xa08] sm:$0xf]
  %v714 = vld [vmem:[%s1 + $0xa0c] sm:$0xf]
  %v715 = vld [vmem:[%s1 + $0xa10] sm:$0xf]
  %v716 = vld [vmem:[%s1 + $0xa14] sm:$0xf]
  %v717 = vld [vmem:[%s1 + $0xa18] sm:$0xf]
  %v718 = vld [vmem:[%s1 + $0xa1c] sm:$0xf]
  %v719 = vld [vmem:[%s1 + $0xa20] sm:$0xf]
  %v720 = vld [vmem:[%s1 + $0xa24] sm:$0xf]
  %v721 = vld [vmem:[%s1 + $0xa28] sm:$0xf]
  %v722 = vld [vmem:[%s1 + $0xa2c] sm:$0xf]
  %v723 = vld [vmem:[%s1 + $0xa30] sm:$0xf]
  %v724 = vld [vmem:[%s1 + $0xa34] sm:$0xf]
  %v725 = vld [vmem:[%s1 + $0xa38] sm:$0xf]
  %v726 = vld [vmem:[%s1 + $0xa3c] sm:$0xf]
  %v727 = vld [vmem:[%s1 + $0xa40] sm:$0xf]
  %v728 = vld [vmem:[%s1 + $0xa44] sm:$0xf]
  %v729 = vld [vmem:[%s1 + $0xa48] sm:$0xf]
  %v730 = vld [vmem:[%s1 + $0xa4c] sm:$0xf]
  %v731 = vld [vmem:[%s1 + $0xa50] sm:$0xf]
  %v732 = vld [vmem:[%s1 + $0xa54] sm:$0xf]
  %v733 = vld [vmem:[%s1 + $0xa58] sm:$0xf]
  %v734 = vld [vmem:[%s1 + $0xa5c] sm:$0xf]
  %v735 = vld [vmem:[%s1 + $0xa60] sm:$0xf]
  %v736 = vld [vmem:[%s1 + $0xa64] sm:$0xf]
  %v737 = vld [vmem:[%s1 + $0xa68] sm:$0xf]
  %v738 = vld [vmem:[%s1 + $0xa6c] sm:$0xf]
  %v739 = vld [vmem:[%s1 + $0xa70] sm:$0xf]
  %v740 = vld [vmem:[%s1 + $0xa74] sm:$0xf]
  %v741 = vld [vmem:[%s1 + $0xa78] sm:$0xf]
  %v742 = vld [vmem:[%s1 + $0xa7c] sm:$0xf]
  %v743 = vld [vmem:[%s1 + $0xa80] sm:$0xf]
  %v744 = vld [vmem:[%s1 + $0xa84] sm:$0xf]
  %v745 = vld [vmem:[%s1 + $0xa88] sm:$0xf]
  %v746 = vld [vmem:[%s1 + $0xa8c] sm:$0xf]
  %v747 = vld [vmem:[%s1 + $0xa90] sm:$0xf]
  %v748 = vld [vmem:[%s1 + $0xa94] sm:$0xf]
  %v749 = vld [vmem:[%s1 + $0xa98] sm:$0xf]
  %v750 = vld [vmem:[%s1 + $0xa9c] sm:$0xf]
  %v751 = vld [vmem:[%s1 + $0xaa0] sm:$0xf]
  %v752 = vld [vmem:[%s1 + $0xaa4] sm:$0xf]
  %v753 = vld [vmem:[%s1 + $0xaa8] sm:$0xf]
  %v754 = vld [vmem:[%s1 + $0xaac] sm:$0xf]
  %v755 = vld [vmem:[%s1 + $0xab0] sm:$0xf]
  %v756 = vld [vmem:[%s1 + $0xab4] sm:$0xf]
  %v757 = vld [vmem:[%s1 + $0xab8] sm:$0xf]
  %v758 = vld [vmem:[%s1 + $0xabc] sm:$0xf]
  %v759 = vld [vmem:[%s1 + $0xac0] sm:$0xf]
  %v760 = vld [vmem:[%s1 + $0xac4] sm:$0xf]
  %v761 = vld [vmem:[%s1 + $0xac8] sm:$0xf]
  %v762 = vld [vmem:[%s1 + $0xacc] sm:$0xf]
  %v763 = vld [vmem:[%s1 + $0xad0] sm:$0xf]
  %v764 = vld [vmem:[%s1 + $0xad4] sm:$0xf]
  %v765 = vld [vmem:[%s1 + $0xad8] sm:$0xf]
  %v766 = vld [vmem:[%s1 + $0xadc] sm:$0xf]
  %v767 = vld [vmem:[%s1 + $0xae0] sm:$0xf]
  %v768 = vld [vmem:[%s1 + $0xae4] sm:$0xf]
  %v769 = vld [vmem:[%s1 + $0xae8] sm:$0xf]
  %v770 = vld [vmem:[%s1 + $0xaec] sm:$0xf]
  %v771 = vld [vmem:[%s1 + $0xaf0] sm:$0xf]
  %v772 = vld [vmem:[%s1 + $0xaf4] sm:$0xf]
  %v773 = vld [vmem:[%s1 + $0xaf8] sm:$0xf]
  %v774 = vld [vmem:[%s1 + $0xafc] sm:$0xf]
  %v775 = vld [vmem:[%s1 + $0xb00] sm:$0xf]
  %v776 = vld [vmem:[%s1 + $0xb04] sm:$0xf]
  %v777 = vld [vmem:[%s1 + $0xb08] sm:$0xf]
  %v778 = vld [vmem:[%s1 + $0xb0c] sm:$0xf]
  %v779 = vld [vmem:[%s1 + $0xb10] sm:$0xf]
  %v780 = vld [vmem:[%s1 + $0xb14] sm:$0xf]
  %v781 = vld [vmem:[%s1 + $0xb18] sm:$0xf]
  %v782 = vld [vmem:[%s1 + $0xb1c] sm:$0xf]
  %v783 = vld [vmem:[%s1 + $0xb20] sm:$0xf]
  %v784 = vld [vmem:[%s1 + $0xb24] sm:$0xf]
  %v785 = vld [vmem:[%s1 + $0xb28] sm:$0xf]
  %v786 = vld [vmem:[%s1 + $0xb2c] sm:$0xf]
  %v787 = vld [vmem:[%s1 + $0xb30] sm:$0xf]
  %v788 = vld [vmem:[%s1 + $0xb34] sm:$0xf]
  %v789 = vld [vmem:[%s1 + $0xb38] sm:$0xf]
  %v790 = vld [vmem:[%s1 + $0xb3c] sm:$0xf]
  %v791 = vld [vmem:[%s1 + $0xb40] sm:$0xf]
  %v792 = vld [vmem:[%s1 + $0xb44] sm:$0xf]
  %v793 = vld [vmem:[%s1 + $0xb48] sm:$0xf]
  %v794 = vld [vmem:[%s1 + $0xb4c] sm:$0xf]
  %v795 = vld [vmem:[%s1 + $0xb50] sm:$0xf]
  %v796 = vld [vmem:[%s1 + $0xb54] sm:$0xf]
  %v797 = vld [vmem:[%s1 + $0xb58] sm:$0xf]
  %v798 = vld [vmem:[%s1 + $0xb5c] sm:$0xf]
  %v799 = vld [vmem:[%s1 + $0xb60] sm:$0xf]
  %v800 = vld [vmem:[%s1 + $0xb64] sm:$0xf]
  %v801 = vld [vmem:[%s1 + $0xb68] sm:$0xf]
  %v802 = vld [vmem:[%s1 + $0xb6c] sm:$0xf]
  %v803 = vld [vmem:[%s1 + $0xb70] sm:$0xf]
  %v804 = vld [vmem:[%s1 + $0xb74] sm:$0xf]
  %v805 = vld [vmem:[%s1 + $0xb78] sm:$0xf]
  %v806 = vld [vmem:[%s1 + $0xb7c] sm:$0xf]
  %v807 = vld [vmem:[%s1 + $0xb80] sm:$0xf]
  %v808 = vld [vmem:[%s1 + $0xb84] sm:$0xf]
  %v809 = vld [vmem:[%s1 + $0xb88] sm:$0xf]
  %v810 = vld [vmem:[%s1 + $0xb8c] sm:$0xf]
  %v811 = vld [vmem:[%s1 + $0xb90] sm:$0xf]
  %v812 = vld [vmem:[%s1 + $0xb94] sm:$0xf]
  %v813 = vld [vmem:[%s1 + $0xb98] sm:$0xf]
  %v814 = vld [vmem:[%s1 + $0xb9c] sm:$0xf]
  %v815 = vld [vmem:[%s1 + $0xba0] sm:$0xf]
  %v816 = vld [vmem:[%s1 + $0xba4] sm:$0xf]
  %v817 = vld [vmem:[%s1 + $0xba8] sm:$0xf]
  %v818 = vld [vmem:[%s1 + $0xbac] sm:$0xf]
  %v819 = vld [vmem:[%s1 + $0xbb0] sm:$0xf]
  %v820 = vld [vmem:[%s1 + $0xbb4] sm:$0xf]
  %v821 = vld [vmem:[%s1 + $0xbb8] sm:$0xf]
  %v822 = vld [vmem:[%s1 + $0xbbc] sm:$0xf]
  %v823 = vld [vmem:[%s1 + $0xbc0] sm:$0xf]
  %v824 = vld [vmem:[%s1 + $0xbc4] sm:$0xf]
  %v825 = vld [vmem:[%s1 + $0xbc8] sm:$0xf]
  %v826 = vld [vmem:[%s1 + $0xbcc] sm:$0xf]
  %v827 = vld [vmem:[%s1 + $0xbd0] sm:$0xf]
  %v828 = vld [vmem:[%s1 + $0xbd4] sm:$0xf]
  %v829 = vld [vmem:[%s1 + $0xbd8] sm:$0xf]
  %v830 = vld [vmem:[%s1 + $0xbdc] sm:$0xf]
  %v831 = vld [vmem:[%s1 + $0xbe0] sm:$0xf]
  %v832 = vld [vmem:[%s1 + $0xbe4] sm:$0xf]
  %v833 = vld [vmem:[%s1 + $0xbe8] sm:$0xf]
  %v834 = vld [vmem:[%s1 + $0xbec] sm:$0xf]
  %v835 = vld [vmem:[%s1 + $0xbf0] sm:$0xf]
  %v836 = vld [vmem:[%s1 + $0xbf4] sm:$0xf]
  %v837 = vld [vmem:[%s1 + $0xbf8] sm:$0xf]
  %v838 = vld [vmem:[%s1 + $0xbfc] sm:$0xf]
  %v839 = vld [vmem:[%s1 + $0xc00] sm:$0xf]
  %v840 = vld [vmem:[%s1 + $0xc04] sm:$0xf]
  %v841 = vld [vmem:[%s1 + $0xc08] sm:$0xf]
  %v842 = vld [vmem:[%s1 + $0xc0c] sm:$0xf]
  %v843 = vld [vmem:[%s1 + $0xc10] sm:$0xf]
  %v844 = vld [vmem:[%s1 + $0xc14] sm:$0xf]
  %v845 = vld [vmem:[%s1 + $0xc18] sm:$0xf]
  %v846 = vld [vmem:[%s1 + $0xc1c] sm:$0xf]
  %v847 = vld [vmem:[%s1 + $0xc20] sm:$0xf]
  %v848 = vld [vmem:[%s1 + $0xc24] sm:$0xf]
  %v849 = vld [vmem:[%s1 + $0xc28] sm:$0xf]
  %v850 = vld [vmem:[%s1 + $0xc2c] sm:$0xf]
  %v851 = vld [vmem:[%s1 + $0xc30] sm:$0xf]
  %v852 = vld [vmem:[%s1 + $0xc34] sm:$0xf]
  %v853 = vld [vmem:[%s1 + $0xc38] sm:$0xf]
  %v854 = vld [vmem:[%s1 + $0xc3c] sm:$0xf]
  %v855 = vld [vmem:[%s2] sm:$0x1]
  %v857 = vlaneseq
  %v858 = vshrl.u32 %v857, 7
  %v859 = vsub.s32 0, %v858
  %v860 = vrot.slane %v855, %v859
  %v912 = vunpack.c.l.b16 %v21
  %v913 = vunpack.c.h.b16 %v21
  %v914 = vunpack.c.l.b16 %v22
  %v915 = vunpack.c.h.b16 %v22
  %v916 = vunpack.c.l.b16 %v23
  %v917 = vunpack.c.h.b16 %v23
  %v918 = vunpack.c.l.b16 %v24
  %v919 = vunpack.c.h.b16 %v24
  %v920 = vunpack.c.l.b16 %v25
  %v921 = vunpack.c.h.b16 %v25
  %v922 = vunpack.c.l.b16 %v26
  %v923 = vunpack.c.h.b16 %v26
  %v924 = vunpack.c.l.b16 %v27
  %v925 = vunpack.c.h.b16 %v27
  %v926 = vunpack.c.l.b16 %v28
  %v927 = vunpack.c.h.b16 %v28
  %v928 = vunpack.c.l.b16 %v29
  %v929 = vunpack.c.h.b16 %v29
  %v930 = vunpack.c.l.b16 %v30
  %v931 = vunpack.c.h.b16 %v30
  %v932 = vunpack.c.l.b16 %v31
  %v933 = vunpack.c.h.b16 %v31
  %v934 = vunpack.c.l.b16 %v32
  %v935 = vunpack.c.h.b16 %v32
  %v936 = vunpack.c.l.b16 %v33
  %v937 = vunpack.c.h.b16 %v33
  %v938 = vunpack.c.l.b16 %v34
  %v939 = vunpack.c.h.b16 %v34
  %v940 = vunpack.c.l.b16 %v35
  %v941 = vunpack.c.h.b16 %v35
  %v942 = vunpack.c.l.b16 %v36
  %v943 = vunpack.c.h.b16 %v36
  %v944 = vunpack.c.l.b16 %v37
  %v945 = vunpack.c.h.b16 %v37
  %v946 = vunpack.c.l.b16 %v38
  %v947 = vunpack.c.h.b16 %v38
  %v948 = vunpack.c.l.b16 %v39
  %v949 = vunpack.c.h.b16 %v39
  %v950 = vunpack.c.l.b16 %v40
  %v951 = vunpack.c.h.b16 %v40
  %v952 = vunpack.c.l.b16 %v41
  %v953 = vunpack.c.h.b16 %v41
  %v954 = vunpack.c.l.b16 %v42
  %v955 = vunpack.c.h.b16 %v42
  %v956 = vunpack.c.l.b16 %v43
  %v957 = vunpack.c.h.b16 %v43
  %v958 = vunpack.c.l.b16 %v44
  %v959 = vunpack.c.h.b16 %v44
  %v960 = vunpack.c.l.b16 %v45
  %v961 = vunpack.c.l.b16 %v46
  %v962 = vunpack.c.h.b16 %v46
  %v963 = vunpack.c.l.b16 %v47
  %v964 = vunpack.c.h.b16 %v47
  %v965 = vunpack.c.l.b16 %v48
  %v966 = vunpack.c.h.b16 %v48
  %v967 = vunpack.c.l.b16 %v49
  %v968 = vunpack.c.h.b16 %v49
  %v969 = vunpack.c.l.b16 %v50
  %v970 = vunpack.c.h.b16 %v50
  %v971 = vunpack.c.l.b16 %v51
  %v972 = vunpack.c.h.b16 %v51
  %v973 = vunpack.c.l.b16 %v52
  %v974 = vunpack.c.h.b16 %v52
  %v975 = vunpack.c.l.b16 %v53
  %v976 = vunpack.c.h.b16 %v53
  %v977 = vunpack.c.l.b16 %v54
  %v978 = vunpack.c.h.b16 %v54
  %v979 = vunpack.c.l.b16 %v55
  %v980 = vunpack.c.h.b16 %v55
  %v981 = vunpack.c.l.b16 %v56
  %v982 = vunpack.c.h.b16 %v56
  %v983 = vunpack.c.l.b16 %v57
  %v984 = vunpack.c.h.b16 %v57
  %v985 = vunpack.c.l.b16 %v58
  %v986 = vunpack.c.h.b16 %v58
  %v987 = vunpack.c.l.b16 %v59
  %v988 = vunpack.c.h.b16 %v59
  %v989 = vunpack.c.l.b16 %v60
  %v990 = vunpack.c.h.b16 %v60
  %v991 = vunpack.c.l.b16 %v61
  %v992 = vunpack.c.h.b16 %v61
  %v993 = vunpack.c.l.b16 %v62
  %v994 = vunpack.c.h.b16 %v62
  %v995 = vunpack.c.l.b16 %v63
  %v996 = vunpack.c.h.b16 %v63
  %v997 = vunpack.c.l.b16 %v64
  %v998 = vunpack.c.h.b16 %v64
  %v999 = vunpack.c.l.b16 %v65
  %v1000 = vunpack.c.h.b16 %v65
  %v1001 = vunpack.c.l.b16 %v66
  %v1002 = vunpack.c.h.b16 %v66
  %v1003 = vunpack.c.l.b16 %v67
  %v1004 = vunpack.c.h.b16 %v67
  %v1005 = vunpack.c.l.b16 %v68
  %v1006 = vunpack.c.h.b16 %v68
  %v1007 = vunpack.c.l.b16 %v69
  %v1008 = vunpack.c.h.b16 %v69
  %v1009 = vunpack.c.l.b16 %v70
  %v1010 = vpack.c.b16 %v961, %v912
  %v1011 = vpack.c.b16 %v962, %v913
  %v1012 = vpack.c.b16 %v963, %v914
  %v1013 = vpack.c.b16 %v964, %v915
  %v1014 = vpack.c.b16 %v965, %v916
  %v1015 = vpack.c.b16 %v966, %v917
  %v1016 = vpack.c.b16 %v967, %v918
  %v1017 = vpack.c.b16 %v968, %v919
  %v1018 = vpack.c.b16 %v969, %v920
  %v1019 = vpack.c.b16 %v970, %v921
  %v1020 = vpack.c.b16 %v971, %v922
  %v1021 = vpack.c.b16 %v972, %v923
  %v1022 = vpack.c.b16 %v973, %v924
  %v1023 = vpack.c.b16 %v974, %v925
  %v1024 = vpack.c.b16 %v975, %v926
  %v1025 = vpack.c.b16 %v976, %v927
  %v1026 = vpack.c.b16 %v977, %v928
  %v1027 = vpack.c.b16 %v978, %v929
  %v1028 = vpack.c.b16 %v979, %v930
  %v1029 = vpack.c.b16 %v980, %v931
  %v1030 = vpack.c.b16 %v981, %v932
  %v1031 = vpack.c.b16 %v982, %v933
  %v1032 = vpack.c.b16 %v983, %v934
  %v1033 = vpack.c.b16 %v984, %v935
  %v1034 = vpack.c.b16 %v985, %v936
  %v1035 = vpack.c.b16 %v986, %v937
  %v1036 = vpack.c.b16 %v987, %v938
  %v1037 = vpack.c.b16 %v988, %v939
  %v1038 = vpack.c.b16 %v989, %v940
  %v1039 = vpack.c.b16 %v990, %v941
  %v1040 = vpack.c.b16 %v991, %v942
  %v1041 = vpack.c.b16 %v992, %v943
  %v1042 = vpack.c.b16 %v993, %v944
  %v1043 = vpack.c.b16 %v994, %v945
  %v1044 = vpack.c.b16 %v995, %v946
  %v1045 = vpack.c.b16 %v996, %v947
  %v1046 = vpack.c.b16 %v997, %v948
  %v1047 = vpack.c.b16 %v998, %v949
  %v1048 = vpack.c.b16 %v999, %v950
  %v1049 = vpack.c.b16 %v1000, %v951
  %v1050 = vpack.c.b16 %v1001, %v952
  %v1051 = vpack.c.b16 %v1002, %v953
  %v1052 = vpack.c.b16 %v1003, %v954
  %v1053 = vpack.c.b16 %v1004, %v955
  %v1054 = vpack.c.b16 %v1005, %v956
  %v1055 = vpack.c.b16 %v1006, %v957
  %v1056 = vpack.c.b16 %v1007, %v958
  %v1057 = vpack.c.b16 %v1008, %v959
  %v1058 = vpack.c.b16 %v1009, %v960
  %v1892 = vunpack.c.l.b16 %v71
  %v1893 = vunpack.c.l.b16 %v72
  %v1894 = vunpack.c.l.b16 %v73
  %v1895 = vunpack.c.l.b16 %v74
  %v1896 = vunpack.c.l.b16 %v75
  %v1897 = vunpack.c.l.b16 %v76
  %v1898 = vunpack.c.l.b16 %v77
  %v1899 = vunpack.c.l.b16 %v78
  %v1900 = vunpack.c.l.b16 %v79
  %v1901 = vunpack.c.l.b16 %v80
  %v1902 = vunpack.c.l.b16 %v81
  %v1903 = vunpack.c.l.b16 %v82
  %v1904 = vunpack.c.l.b16 %v83
  %v1905 = vunpack.c.l.b16 %v84
  %v1906 = vunpack.c.l.b16 %v85
  %v1907 = vunpack.c.l.b16 %v86
  %v1908 = vunpack.c.l.b16 %v87
  %v1909 = vunpack.c.l.b16 %v88
  %v1910 = vunpack.c.l.b16 %v89
  %v1911 = vunpack.c.l.b16 %v90
  %v1912 = vunpack.c.l.b16 %v91
  %v1913 = vunpack.c.l.b16 %v92
  %v1914 = vunpack.c.l.b16 %v93
  %v1915 = vunpack.c.l.b16 %v94
  %v1916 = vunpack.c.l.b16 %v95
  %v1917 = vunpack.c.l.b16 %v96
  %v1918 = vunpack.c.l.b16 %v97
  %v1919 = vunpack.c.l.b16 %v98
  %v1920 = vunpack.c.l.b16 %v99
  %v1921 = vunpack.c.l.b16 %v100
  %v1922 = vunpack.c.l.b16 %v101
  %v1923 = vunpack.c.l.b16 %v102
  %v1924 = vunpack.c.l.b16 %v103
  %v1925 = vunpack.c.l.b16 %v104
  %v1926 = vunpack.c.l.b16 %v105
  %v1927 = vunpack.c.l.b16 %v106
  %v1928 = vunpack.c.l.b16 %v107
  %v1929 = vunpack.c.l.b16 %v108
  %v1930 = vunpack.c.l.b16 %v109
  %v1931 = vunpack.c.l.b16 %v110
  %v1932 = vunpack.c.l.b16 %v111
  %v1933 = vunpack.c.l.b16 %v112
  %v1934 = vunpack.c.l.b16 %v113
  %v1935 = vunpack.c.l.b16 %v114
  %v1936 = vunpack.c.l.b16 %v115
  %v1937 = vunpack.c.l.b16 %v116
  %v1938 = vunpack.c.l.b16 %v117
  %v1939 = vunpack.c.l.b16 %v118
  %v1940 = vunpack.c.l.b16 %v119
  %v1941 = vunpack.c.l.b16 %v120
  %v1942 = vunpack.c.l.b16 %v121
  %v1943 = vunpack.c.l.b16 %v122
  %v1944 = vunpack.c.l.b16 %v123
  %v1945 = vunpack.c.l.b16 %v124
  %v1946 = vunpack.c.l.b16 %v125
  %v1947 = vunpack.c.l.b16 %v126
  %v1948 = vunpack.c.l.b16 %v127
  %v1949 = vunpack.c.l.b16 %v128
  %v1950 = vunpack.c.l.b16 %v129
  %v1951 = vunpack.c.l.b16 %v130
  %v1952 = vunpack.c.l.b16 %v131
  %v1953 = vunpack.c.l.b16 %v132
  %v1954 = vunpack.c.l.b16 %v133
  %v1955 = vunpack.c.l.b16 %v134
  %v1956 = vunpack.c.l.b16 %v135
  %v1957 = vunpack.c.l.b16 %v136
  %v1958 = vunpack.c.l.b16 %v137
  %v1959 = vunpack.c.l.b16 %v138
  %v1960 = vunpack.c.l.b16 %v139
  %v1961 = vunpack.c.l.b16 %v140
  %v1962 = vunpack.c.l.b16 %v141
  %v1963 = vunpack.c.l.b16 %v142
  %v1964 = vunpack.c.l.b16 %v143
  %v1965 = vunpack.c.l.b16 %v144
  %v1966 = vunpack.c.l.b16 %v145
  %v1967 = vunpack.c.l.b16 %v146
  %v1968 = vunpack.c.l.b16 %v147
  %v1969 = vunpack.c.l.b16 %v148
  %v1970 = vunpack.c.l.b16 %v149
  %v1971 = vunpack.c.l.b16 %v150
  %v1972 = vunpack.c.l.b16 %v151
  %v1973 = vunpack.c.l.b16 %v152
  %v1974 = vunpack.c.l.b16 %v153
  %v1975 = vunpack.c.l.b16 %v154
  %v1976 = vunpack.c.l.b16 %v155
  %v1977 = vunpack.c.l.b16 %v156
  %v1978 = vunpack.c.l.b16 %v157
  %v1979 = vunpack.c.l.b16 %v158
  %v1980 = vunpack.c.l.b16 %v159
  %v1981 = vunpack.c.l.b16 %v160
  %v1982 = vunpack.c.l.b16 %v161
  %v1983 = vunpack.c.l.b16 %v162
  %v1984 = vunpack.c.l.b16 %v163
  %v1985 = vunpack.c.l.b16 %v164
  %v1986 = vunpack.c.l.b16 %v165
  %v1987 = vunpack.c.l.b16 %v166
  %v1988 = vunpack.c.l.b16 %v167
  %v1989 = vunpack.c.l.b16 %v168
  %v1990 = vunpack.c.l.b16 %v169
  %v1991 = vunpack.c.l.b16 %v170
  %v1992 = vunpack.c.l.b16 %v171
  %v1993 = vunpack.c.l.b16 %v172
  %v1994 = vunpack.c.l.b16 %v173
  %v1995 = vunpack.c.l.b16 %v174
  %v1996 = vunpack.c.l.b16 %v175
  %v1997 = vunpack.c.l.b16 %v176
  %v1998 = vunpack.c.l.b16 %v177
  %v1999 = vunpack.c.l.b16 %v178
  %v2000 = vunpack.c.l.b16 %v179
  %v2001 = vunpack.c.l.b16 %v180
  %v2002 = vunpack.c.l.b16 %v181
  %v2003 = vunpack.c.l.b16 %v182
  %v2004 = vunpack.c.l.b16 %v183
  %v2005 = vunpack.c.l.b16 %v184
  %v2006 = vunpack.c.l.b16 %v185
  %v2007 = vunpack.c.l.b16 %v186
  %v2008 = vunpack.c.l.b16 %v187
  %v2009 = vunpack.c.l.b16 %v188
  %v2010 = vunpack.c.l.b16 %v189
  %v2011 = vunpack.c.l.b16 %v190
  %v2012 = vunpack.c.l.b16 %v191
  %v2013 = vunpack.c.l.b16 %v192
  %v2014 = vunpack.c.l.b16 %v193
  %v2015 = vunpack.c.l.b16 %v194
  %v2016 = vunpack.c.l.b16 %v195
  %v2017 = vunpack.c.l.b16 %v196
  %v2018 = vunpack.c.l.b16 %v197
  %v2019 = vunpack.c.l.b16 %v198
  %v2020 = vunpack.c.l.b16 %v199
  %v2021 = vunpack.c.l.b16 %v200
  %v2022 = vunpack.c.l.b16 %v201
  %v2023 = vunpack.c.l.b16 %v202
  %v2024 = vunpack.c.l.b16 %v203
  %v2025 = vunpack.c.l.b16 %v204
  %v2026 = vunpack.c.l.b16 %v205
  %v2027 = vunpack.c.l.b16 %v206
  %v2028 = vunpack.c.l.b16 %v207
  %v2029 = vunpack.c.l.b16 %v208
  %v2030 = vunpack.c.l.b16 %v209
  %v2031 = vunpack.c.l.b16 %v210
  %v2032 = vunpack.c.l.b16 %v211
  %v2033 = vunpack.c.l.b16 %v212
  %v2034 = vunpack.c.l.b16 %v213
  %v2035 = vunpack.c.l.b16 %v214
  %v2036 = vunpack.c.l.b16 %v215
  %v2037 = vunpack.c.l.b16 %v216
  %v2038 = vunpack.c.l.b16 %v217
  %v2039 = vunpack.c.l.b16 %v218
  %v2040 = vunpack.c.l.b16 %v219
  %v2041 = vunpack.c.l.b16 %v220
  %v2042 = vunpack.c.l.b16 %v221
  %v2043 = vunpack.c.l.b16 %v222
  %v2044 = vunpack.c.l.b16 %v223
  %v2045 = vunpack.c.l.b16 %v224
  %v2046 = vunpack.c.l.b16 %v225
  %v2047 = vunpack.c.l.b16 %v226
  %v2048 = vunpack.c.l.b16 %v227
  %v2049 = vunpack.c.l.b16 %v228
  %v2050 = vunpack.c.l.b16 %v229
  %v2051 = vunpack.c.l.b16 %v230
  %v2052 = vunpack.c.l.b16 %v231
  %v2053 = vunpack.c.l.b16 %v232
  %v2054 = vunpack.c.l.b16 %v233
  %v2055 = vunpack.c.l.b16 %v234
  %v2056 = vunpack.c.l.b16 %v235
  %v2057 = vunpack.c.l.b16 %v236
  %v2058 = vunpack.c.l.b16 %v237
  %v2059 = vunpack.c.l.b16 %v238
  %v2060 = vunpack.c.l.b16 %v239
  %v2061 = vunpack.c.l.b16 %v240
  %v2062 = vunpack.c.l.b16 %v241
  %v2063 = vunpack.c.l.b16 %v242
  %v2064 = vunpack.c.l.b16 %v243
  %v2065 = vunpack.c.l.b16 %v244
  %v2066 = vunpack.c.l.b16 %v245
  %v2067 = vunpack.c.l.b16 %v246
  %v2068 = vunpack.c.l.b16 %v247
  %v2069 = vunpack.c.l.b16 %v248
  %v2070 = vunpack.c.l.b16 %v249
  %v2071 = vunpack.c.l.b16 %v250
  %v2072 = vunpack.c.l.b16 %v251
  %v2073 = vunpack.c.l.b16 %v252
  %v2074 = vunpack.c.l.b16 %v253
  %v2075 = vunpack.c.l.b16 %v254
  %v2076 = vunpack.c.l.b16 %v255
  %v2077 = vunpack.c.l.b16 %v256
  %v2078 = vunpack.c.l.b16 %v257
  %v2079 = vunpack.c.l.b16 %v258
  %v2080 = vunpack.c.l.b16 %v259
  %v2081 = vunpack.c.l.b16 %v260
  %v2082 = vunpack.c.l.b16 %v261
  %v2083 = vunpack.c.l.b16 %v262
  %v2084 = vunpack.c.l.b16 %v263
  %v2085 = vunpack.c.l.b16 %v264
  %v2086 = vunpack.c.l.b16 %v265
  %v2087 = vunpack.c.l.b16 %v266
  %v2088 = vunpack.c.l.b16 %v267
  %v2089 = vunpack.c.l.b16 %v268
  %v2090 = vunpack.c.l.b16 %v269
  %v2091 = vunpack.c.l.b16 %v270
  %v2092 = vunpack.c.l.b16 %v271
  %v2093 = vunpack.c.l.b16 %v272
  %v2094 = vunpack.c.l.b16 %v273
  %v2095 = vunpack.c.l.b16 %v274
  %v2096 = vunpack.c.l.b16 %v275
  %v2097 = vunpack.c.l.b16 %v276
  %v2098 = vunpack.c.l.b16 %v277
  %v2099 = vunpack.c.l.b16 %v278
  %v2100 = vunpack.c.l.b16 %v279
  %v2101 = vunpack.c.l.b16 %v280
  %v2102 = vunpack.c.l.b16 %v281
  %v2103 = vunpack.c.l.b16 %v282
  %v2104 = vunpack.c.l.b16 %v283
  %v2105 = vunpack.c.l.b16 %v284
  %v2106 = vunpack.c.l.b16 %v285
  %v2107 = vunpack.c.l.b16 %v286
  %v2108 = vunpack.c.l.b16 %v287
  %v2109 = vunpack.c.l.b16 %v288
  %v2110 = vunpack.c.l.b16 %v289
  %v2111 = vunpack.c.l.b16 %v290
  %v2112 = vunpack.c.l.b16 %v291
  %v2113 = vunpack.c.l.b16 %v292
  %v2114 = vunpack.c.l.b16 %v293
  %v2115 = vunpack.c.l.b16 %v294
  %v2116 = vunpack.c.l.b16 %v295
  %v2117 = vunpack.c.l.b16 %v296
  %v2118 = vunpack.c.l.b16 %v297
  %v2119 = vunpack.c.l.b16 %v298
  %v2120 = vunpack.c.l.b16 %v299
  %v2121 = vunpack.c.l.b16 %v300
  %v2122 = vunpack.c.l.b16 %v301
  %v2123 = vunpack.c.l.b16 %v302
  %v2124 = vunpack.c.l.b16 %v303
  %v2125 = vunpack.c.l.b16 %v304
  %v2126 = vunpack.c.l.b16 %v305
  %v2127 = vunpack.c.l.b16 %v306
  %v2128 = vunpack.c.l.b16 %v307
  %v2129 = vunpack.c.l.b16 %v308
  %v2130 = vunpack.c.l.b16 %v309
  %v2131 = vunpack.c.l.b16 %v310
  %v2132 = vunpack.c.l.b16 %v311
  %v2133 = vunpack.c.l.b16 %v312
  %v2134 = vunpack.c.l.b16 %v313
  %v2135 = vunpack.c.l.b16 %v314
  %v2136 = vunpack.c.l.b16 %v315
  %v2137 = vunpack.c.l.b16 %v316
  %v2138 = vunpack.c.l.b16 %v317
  %v2139 = vunpack.c.l.b16 %v318
  %v2140 = vunpack.c.l.b16 %v319
  %v2141 = vunpack.c.l.b16 %v320
  %v2142 = vunpack.c.l.b16 %v321
  %v2143 = vunpack.c.l.b16 %v322
  %v2144 = vunpack.c.l.b16 %v323
  %v2145 = vunpack.c.l.b16 %v324
  %v2146 = vunpack.c.l.b16 %v325
  %v2147 = vunpack.c.l.b16 %v326
  %v2148 = vunpack.c.l.b16 %v327
  %v2149 = vunpack.c.l.b16 %v328
  %v2150 = vunpack.c.l.b16 %v329
  %v2151 = vunpack.c.l.b16 %v330
  %v2152 = vunpack.c.l.b16 %v331
  %v2153 = vunpack.c.l.b16 %v332
  %v2154 = vunpack.c.l.b16 %v333
  %v2155 = vunpack.c.l.b16 %v334
  %v2156 = vunpack.c.l.b16 %v335
  %v2157 = vunpack.c.l.b16 %v336
  %v2158 = vunpack.c.l.b16 %v337
  %v2159 = vunpack.c.l.b16 %v338
  %v2160 = vunpack.c.l.b16 %v339
  %v2161 = vunpack.c.l.b16 %v340
  %v2162 = vunpack.c.l.b16 %v341
  %v2163 = vunpack.c.l.b16 %v342
  %v2164 = vunpack.c.l.b16 %v343
  %v2165 = vunpack.c.l.b16 %v344
  %v2166 = vunpack.c.l.b16 %v345
  %v2167 = vunpack.c.l.b16 %v346
  %v2168 = vunpack.c.l.b16 %v347
  %v2169 = vunpack.c.l.b16 %v348
  %v2170 = vunpack.c.l.b16 %v349
  %v2171 = vunpack.c.l.b16 %v350
  %v2172 = vunpack.c.l.b16 %v351
  %v2173 = vunpack.c.l.b16 %v352
  %v2174 = vunpack.c.l.b16 %v353
  %v2175 = vunpack.c.l.b16 %v354
  %v2176 = vunpack.c.l.b16 %v355
  %v2177 = vunpack.c.l.b16 %v356
  %v2178 = vunpack.c.l.b16 %v357
  %v2179 = vunpack.c.l.b16 %v358
  %v2180 = vunpack.c.l.b16 %v359
  %v2181 = vunpack.c.l.b16 %v360
  %v2182 = vunpack.c.l.b16 %v361
  %v2183 = vunpack.c.l.b16 %v362
  %v2184 = vunpack.c.l.b16 %v363
  %v2185 = vunpack.c.l.b16 %v364
  %v2186 = vunpack.c.l.b16 %v365
  %v2187 = vunpack.c.l.b16 %v366
  %v2188 = vunpack.c.l.b16 %v367
  %v2189 = vunpack.c.l.b16 %v368
  %v2190 = vunpack.c.l.b16 %v369
  %v2191 = vunpack.c.l.b16 %v370
  %v2192 = vunpack.c.l.b16 %v371
  %v2193 = vunpack.c.l.b16 %v372
  %v2194 = vunpack.c.l.b16 %v373
  %v2195 = vunpack.c.l.b16 %v374
  %v2196 = vunpack.c.l.b16 %v375
  %v2197 = vunpack.c.l.b16 %v376
  %v2198 = vunpack.c.l.b16 %v377
  %v2199 = vunpack.c.l.b16 %v378
  %v2200 = vunpack.c.l.b16 %v379
  %v2201 = vunpack.c.l.b16 %v380
  %v2202 = vunpack.c.l.b16 %v381
  %v2203 = vunpack.c.l.b16 %v382
  %v2204 = vunpack.c.l.b16 %v383
  %v2205 = vunpack.c.l.b16 %v384
  %v2206 = vunpack.c.l.b16 %v385
  %v2207 = vunpack.c.l.b16 %v386
  %v2208 = vunpack.c.l.b16 %v387
  %v2209 = vunpack.c.l.b16 %v388
  %v2210 = vunpack.c.l.b16 %v389
  %v2211 = vunpack.c.l.b16 %v390
  %v2212 = vunpack.c.l.b16 %v391
  %v2213 = vunpack.c.l.b16 %v392
  %v2214 = vunpack.c.l.b16 %v393
  %v2215 = vunpack.c.l.b16 %v394
  %v2216 = vunpack.c.l.b16 %v395
  %v2217 = vunpack.c.l.b16 %v396
  %v2218 = vunpack.c.l.b16 %v397
  %v2219 = vunpack.c.l.b16 %v398
  %v2220 = vunpack.c.l.b16 %v399
  %v2221 = vunpack.c.l.b16 %v400
  %v2222 = vunpack.c.l.b16 %v401
  %v2223 = vunpack.c.l.b16 %v402
  %v2224 = vunpack.c.l.b16 %v403
  %v2225 = vunpack.c.l.b16 %v404
  %v2226 = vunpack.c.l.b16 %v405
  %v2227 = vunpack.c.l.b16 %v406
  %v2228 = vunpack.c.l.b16 %v407
  %v2229 = vunpack.c.l.b16 %v408
  %v2230 = vunpack.c.l.b16 %v409
  %v2231 = vunpack.c.l.b16 %v410
  %v2232 = vunpack.c.l.b16 %v411
  %v2233 = vunpack.c.l.b16 %v412
  %v2234 = vunpack.c.l.b16 %v413
  %v2235 = vunpack.c.l.b16 %v414
  %v2236 = vunpack.c.l.b16 %v415
  %v2237 = vunpack.c.l.b16 %v416
  %v2238 = vunpack.c.l.b16 %v417
  %v2239 = vunpack.c.l.b16 %v418
  %v2240 = vunpack.c.l.b16 %v419
  %v2241 = vunpack.c.l.b16 %v420
  %v2242 = vunpack.c.l.b16 %v421
  %v2243 = vunpack.c.l.b16 %v422
  %v2244 = vunpack.c.l.b16 %v423
  %v2245 = vunpack.c.l.b16 %v424
  %v2246 = vunpack.c.l.b16 %v425
  %v2247 = vunpack.c.l.b16 %v426
  %v2248 = vunpack.c.l.b16 %v427
  %v2249 = vunpack.c.l.b16 %v428
  %v2250 = vunpack.c.l.b16 %v429
  %v2251 = vunpack.c.l.b16 %v430
  %v2252 = vunpack.c.l.b16 %v431
  %v2253 = vunpack.c.l.b16 %v432
  %v2254 = vunpack.c.l.b16 %v433
  %v2255 = vunpack.c.l.b16 %v434
  %v2256 = vunpack.c.l.b16 %v435
  %v2257 = vunpack.c.l.b16 %v436
  %v2258 = vunpack.c.l.b16 %v437
  %v2259 = vunpack.c.l.b16 %v438
  %v2260 = vunpack.c.l.b16 %v439
  %v2261 = vunpack.c.l.b16 %v440
  %v2262 = vunpack.c.l.b16 %v441
  %v2263 = vunpack.c.l.b16 %v442
  %v2264 = vunpack.c.l.b16 %v443
  %v2265 = vunpack.c.l.b16 %v444
  %v2266 = vunpack.c.l.b16 %v445
  %v2267 = vunpack.c.l.b16 %v446
  %v2268 = vunpack.c.l.b16 %v447
  %v2269 = vunpack.c.l.b16 %v448
  %v2270 = vunpack.c.l.b16 %v449
  %v2271 = vunpack.c.l.b16 %v450
  %v2272 = vunpack.c.l.b16 %v451
  %v2273 = vunpack.c.l.b16 %v452
  %v2274 = vunpack.c.l.b16 %v453
  %v2275 = vunpack.c.l.b16 %v454
  %v2276 = vunpack.c.l.b16 %v455
  %v2277 = vunpack.c.l.b16 %v456
  %v2278 = vunpack.c.l.b16 %v457
  %v2279 = vunpack.c.l.b16 %v458
  %v2280 = vunpack.c.l.b16 %v459
  %v2281 = vunpack.c.l.b16 %v460
  %v2282 = vunpack.c.l.b16 %v461
  %v2283 = vunpack.c.l.b16 %v462
  %v2284 = vunpack.c.l.b16 %v463
  %v2285 = vunpack.c.l.b16 %v464
  %v2286 = vunpack.c.l.b16 %v465
  %v2287 = vunpack.c.l.b16 %v466
  %v2288 = vunpack.c.l.b16 %v467
  %v2289 = vunpack.c.l.b16 %v468
  %v2290 = vunpack.c.l.b16 %v469
  %v2291 = vunpack.c.l.b16 %v470
  %v2292 = vunpack.c.l.b16 %v471
  %v2293 = vunpack.c.l.b16 %v472
  %v2294 = vunpack.c.l.b16 %v473
  %v2295 = vunpack.c.l.b16 %v474
  %v2296 = vunpack.c.l.b16 %v475
  %v2297 = vunpack.c.l.b16 %v476
  %v2298 = vunpack.c.l.b16 %v477
  %v2299 = vunpack.c.l.b16 %v478
  %v2300 = vunpack.c.l.b16 %v479
  %v2301 = vunpack.c.l.b16 %v480
  %v2302 = vunpack.c.l.b16 %v481
  %v2303 = vunpack.c.l.b16 %v482
  %v2304 = vunpack.c.l.b16 %v483
  %v2305 = vunpack.c.l.b16 %v484
  %v2306 = vunpack.c.l.b16 %v485
  %v2307 = vunpack.c.l.b16 %v486
  %v2308 = vunpack.c.l.b16 %v487
  %v2309 = vunpack.c.l.b16 %v488
  %v2310 = vunpack.c.l.b16 %v489
  %v2311 = vunpack.c.l.b16 %v490
  %v2312 = vunpack.c.l.b16 %v491
  %v2313 = vunpack.c.l.b16 %v492
  %v2314 = vunpack.c.l.b16 %v493
  %v2315 = vunpack.c.l.b16 %v494
  %v2316 = vunpack.c.l.b16 %v495
  %v2317 = vunpack.c.l.b16 %v496
  %v2318 = vunpack.c.l.b16 %v497
  %v2319 = vunpack.c.l.b16 %v498
  %v2320 = vunpack.c.l.b16 %v499
  %v2321 = vunpack.c.l.b16 %v500
  %v2322 = vunpack.c.l.b16 %v501
  %v2323 = vunpack.c.l.b16 %v502
  %v2324 = vunpack.c.l.b16 %v503
  %v2325 = vunpack.c.l.b16 %v504
  %v2326 = vunpack.c.l.b16 %v505
  %v2327 = vunpack.c.l.b16 %v506
  %v2328 = vunpack.c.l.b16 %v507
  %v2329 = vunpack.c.l.b16 %v508
  %v2330 = vunpack.c.l.b16 %v509
  %v2331 = vunpack.c.l.b16 %v510
  %v2332 = vunpack.c.l.b16 %v511
  %v2333 = vunpack.c.l.b16 %v512
  %v2334 = vunpack.c.l.b16 %v513
  %v2335 = vunpack.c.l.b16 %v514
  %v2336 = vunpack.c.l.b16 %v515
  %v2337 = vunpack.c.l.b16 %v516
  %v2338 = vunpack.c.l.b16 %v517
  %v2339 = vunpack.c.l.b16 %v518
  %v2340 = vunpack.c.l.b16 %v519
  %v2341 = vunpack.c.l.b16 %v520
  %v2342 = vunpack.c.l.b16 %v521
  %v2343 = vunpack.c.l.b16 %v522
  %v2344 = vunpack.c.l.b16 %v523
  %v2345 = vunpack.c.l.b16 %v524
  %v2346 = vunpack.c.l.b16 %v525
  %v2347 = vunpack.c.l.b16 %v526
  %v2348 = vunpack.c.l.b16 %v527
  %v2349 = vunpack.c.l.b16 %v528
  %v2350 = vunpack.c.l.b16 %v529
  %v2351 = vunpack.c.l.b16 %v530
  %v2352 = vunpack.c.l.b16 %v531
  %v2353 = vunpack.c.l.b16 %v532
  %v2354 = vunpack.c.l.b16 %v533
  %v2355 = vunpack.c.l.b16 %v534
  %v2356 = vunpack.c.l.b16 %v535
  %v2357 = vunpack.c.l.b16 %v536
  %v2358 = vunpack.c.l.b16 %v537
  %v2359 = vunpack.c.l.b16 %v538
  %v2360 = vunpack.c.l.b16 %v539
  %v2361 = vunpack.c.l.b16 %v540
  %v2362 = vunpack.c.l.b16 %v541
  %v2363 = vunpack.c.l.b16 %v542
  %v2364 = vunpack.c.l.b16 %v543
  %v2365 = vunpack.c.l.b16 %v544
  %v2366 = vunpack.c.l.b16 %v545
  %v2367 = vunpack.c.l.b16 %v546
  %v2368 = vunpack.c.l.b16 %v547
  %v2369 = vunpack.c.l.b16 %v548
  %v2370 = vunpack.c.l.b16 %v549
  %v2371 = vunpack.c.l.b16 %v550
  %v2372 = vunpack.c.l.b16 %v551
  %v2373 = vunpack.c.l.b16 %v552
  %v2374 = vunpack.c.l.b16 %v553
  %v2375 = vunpack.c.l.b16 %v554
  %v2376 = vunpack.c.l.b16 %v555
  %v2377 = vunpack.c.l.b16 %v556
  %v2378 = vunpack.c.l.b16 %v557
  %v2379 = vunpack.c.l.b16 %v558
  %v2380 = vunpack.c.l.b16 %v559
  %v2381 = vunpack.c.l.b16 %v560
  %v2382 = vunpack.c.l.b16 %v561
  %v2383 = vunpack.c.l.b16 %v562
  %v2384 = vunpack.c.l.b16 %v563
  %v2385 = vunpack.c.l.b16 %v564
  %v2386 = vunpack.c.l.b16 %v565
  %v2387 = vunpack.c.l.b16 %v566
  %v2388 = vunpack.c.l.b16 %v567
  %v2389 = vunpack.c.l.b16 %v568
  %v2390 = vunpack.c.l.b16 %v569
  %v2391 = vunpack.c.l.b16 %v570
  %v2392 = vunpack.c.l.b16 %v571
  %v2393 = vunpack.c.l.b16 %v572
  %v2394 = vunpack.c.l.b16 %v573
  %v2395 = vunpack.c.l.b16 %v574
  %v2396 = vunpack.c.l.b16 %v575
  %v2397 = vunpack.c.l.b16 %v576
  %v2398 = vunpack.c.l.b16 %v577
  %v2399 = vunpack.c.l.b16 %v578
  %v2400 = vunpack.c.l.b16 %v579
  %v2401 = vunpack.c.l.b16 %v580
  %v2402 = vunpack.c.l.b16 %v581
  %v2403 = vunpack.c.l.b16 %v582
  %v2404 = vunpack.c.l.b16 %v583
  %v2405 = vunpack.c.l.b16 %v584
  %v2406 = vunpack.c.l.b16 %v585
  %v2407 = vunpack.c.l.b16 %v586
  %v2408 = vunpack.c.l.b16 %v587
  %v2409 = vunpack.c.l.b16 %v588
  %v2410 = vunpack.c.l.b16 %v589
  %v2411 = vunpack.c.l.b16 %v590
  %v2412 = vunpack.c.l.b16 %v591
  %v2413 = vunpack.c.l.b16 %v592
  %v2414 = vunpack.c.l.b16 %v593
  %v2415 = vunpack.c.l.b16 %v594
  %v2416 = vunpack.c.l.b16 %v595
  %v2417 = vunpack.c.l.b16 %v596
  %v2418 = vunpack.c.l.b16 %v597
  %v2419 = vunpack.c.l.b16 %v598
  %v2420 = vunpack.c.l.b16 %v599
  %v2421 = vunpack.c.l.b16 %v600
  %v2422 = vunpack.c.l.b16 %v601
  %v2423 = vunpack.c.l.b16 %v602
  %v2424 = vunpack.c.l.b16 %v603
  %v2425 = vunpack.c.l.b16 %v604
  %v2426 = vunpack.c.l.b16 %v605
  %v2427 = vunpack.c.l.b16 %v606
  %v2428 = vunpack.c.l.b16 %v607
  %v2429 = vunpack.c.l.b16 %v608
  %v2430 = vunpack.c.l.b16 %v609
  %v2431 = vunpack.c.l.b16 %v610
  %v2432 = vunpack.c.l.b16 %v611
  %v2433 = vunpack.c.l.b16 %v612
  %v2434 = vunpack.c.l.b16 %v613
  %v2435 = vunpack.c.l.b16 %v614
  %v2436 = vunpack.c.l.b16 %v615
  %v2437 = vunpack.c.l.b16 %v616
  %v2438 = vunpack.c.l.b16 %v617
  %v2439 = vunpack.c.l.b16 %v618
  %v2440 = vunpack.c.l.b16 %v619
  %v2441 = vunpack.c.l.b16 %v620
  %v2442 = vunpack.c.l.b16 %v621
  %v2443 = vunpack.c.l.b16 %v622
  %v2444 = vunpack.c.l.b16 %v623
  %v2445 = vunpack.c.l.b16 %v624
  %v2446 = vunpack.c.l.b16 %v625
  %v2447 = vunpack.c.l.b16 %v626
  %v2448 = vunpack.c.l.b16 %v627
  %v2449 = vunpack.c.l.b16 %v628
  %v2450 = vunpack.c.l.b16 %v629
  %v2451 = vunpack.c.l.b16 %v630
  %v2452 = vunpack.c.l.b16 %v631
  %v2453 = vunpack.c.l.b16 %v632
  %v2454 = vunpack.c.l.b16 %v633
  %v2455 = vunpack.c.l.b16 %v634
  %v2456 = vunpack.c.l.b16 %v635
  %v2457 = vunpack.c.l.b16 %v636
  %v2458 = vunpack.c.l.b16 %v637
  %v2459 = vunpack.c.l.b16 %v638
  %v2460 = vunpack.c.l.b16 %v639
  %v2461 = vunpack.c.l.b16 %v640
  %v2462 = vunpack.c.l.b16 %v641
  %v2463 = vunpack.c.l.b16 %v642
  %v2464 = vunpack.c.l.b16 %v643
  %v2465 = vunpack.c.l.b16 %v644
  %v2466 = vunpack.c.l.b16 %v645
  %v2467 = vunpack.c.l.b16 %v646
  %v2468 = vunpack.c.l.b16 %v647
  %v2469 = vunpack.c.l.b16 %v648
  %v2470 = vunpack.c.l.b16 %v649
  %v2471 = vunpack.c.l.b16 %v650
  %v2472 = vunpack.c.l.b16 %v651
  %v2473 = vunpack.c.l.b16 %v652
  %v2474 = vunpack.c.l.b16 %v653
  %v2475 = vunpack.c.l.b16 %v654
  %v2476 = vunpack.c.l.b16 %v655
  %v2477 = vunpack.c.l.b16 %v656
  %v2478 = vunpack.c.l.b16 %v657
  %v2479 = vunpack.c.l.b16 %v658
  %v2480 = vunpack.c.l.b16 %v659
  %v2481 = vunpack.c.l.b16 %v660
  %v2482 = vunpack.c.l.b16 %v661
  %v2483 = vunpack.c.l.b16 %v662
  %v2484 = vunpack.c.l.b16 %v663
  %v2485 = vunpack.c.l.b16 %v664
  %v2486 = vunpack.c.l.b16 %v665
  %v2487 = vunpack.c.l.b16 %v666
  %v2488 = vunpack.c.l.b16 %v667
  %v2489 = vunpack.c.l.b16 %v668
  %v2490 = vunpack.c.l.b16 %v669
  %v2491 = vunpack.c.l.b16 %v670
  %v2492 = vunpack.c.l.b16 %v671
  %v2493 = vunpack.c.l.b16 %v672
  %v2494 = vunpack.c.l.b16 %v673
  %v2495 = vunpack.c.l.b16 %v674
  %v2496 = vunpack.c.l.b16 %v675
  %v2497 = vunpack.c.l.b16 %v676
  %v2498 = vunpack.c.l.b16 %v677
  %v2499 = vunpack.c.l.b16 %v678
  %v2500 = vunpack.c.l.b16 %v679
  %v2501 = vunpack.c.l.b16 %v680
  %v2502 = vunpack.c.l.b16 %v681
  %v2503 = vunpack.c.l.b16 %v682
  %v2504 = vunpack.c.l.b16 %v683
  %v2505 = vunpack.c.l.b16 %v684
  %v2506 = vunpack.c.l.b16 %v685
  %v2507 = vunpack.c.l.b16 %v686
  %v2508 = vunpack.c.l.b16 %v687
  %v2509 = vunpack.c.l.b16 %v688
  %v2510 = vunpack.c.l.b16 %v689
  %v2511 = vunpack.c.l.b16 %v690
  %v2512 = vunpack.c.l.b16 %v691
  %v2513 = vunpack.c.l.b16 %v692
  %v2514 = vunpack.c.l.b16 %v693
  %v2515 = vunpack.c.l.b16 %v694
  %v2516 = vunpack.c.l.b16 %v695
  %v2517 = vunpack.c.l.b16 %v696
  %v2518 = vunpack.c.l.b16 %v697
  %v2519 = vunpack.c.l.b16 %v698
  %v2520 = vunpack.c.l.b16 %v699
  %v2521 = vunpack.c.l.b16 %v700
  %v2522 = vunpack.c.l.b16 %v701
  %v2523 = vunpack.c.l.b16 %v702
  %v2524 = vunpack.c.l.b16 %v703
  %v2525 = vunpack.c.l.b16 %v704
  %v2526 = vunpack.c.l.b16 %v705
  %v2527 = vunpack.c.l.b16 %v706
  %v2528 = vunpack.c.l.b16 %v707
  %v2529 = vunpack.c.l.b16 %v708
  %v2530 = vunpack.c.l.b16 %v709
  %v2531 = vunpack.c.l.b16 %v710
  %v2532 = vunpack.c.l.b16 %v711
  %v2533 = vunpack.c.l.b16 %v712
  %v2534 = vunpack.c.l.b16 %v713
  %v2535 = vunpack.c.l.b16 %v714
  %v2536 = vunpack.c.l.b16 %v715
  %v2537 = vunpack.c.l.b16 %v716
  %v2538 = vunpack.c.l.b16 %v717
  %v2539 = vunpack.c.l.b16 %v718
  %v2540 = vunpack.c.l.b16 %v719
  %v2541 = vunpack.c.l.b16 %v720
  %v2542 = vunpack.c.l.b16 %v721
  %v2543 = vunpack.c.l.b16 %v722
  %v2544 = vunpack.c.l.b16 %v723
  %v2545 = vunpack.c.l.b16 %v724
  %v2546 = vunpack.c.l.b16 %v725
  %v2547 = vunpack.c.l.b16 %v726
  %v2548 = vunpack.c.l.b16 %v727
  %v2549 = vunpack.c.l.b16 %v728
  %v2550 = vunpack.c.l.b16 %v729
  %v2551 = vunpack.c.l.b16 %v730
  %v2552 = vunpack.c.l.b16 %v731
  %v2553 = vunpack.c.l.b16 %v732
  %v2554 = vunpack.c.l.b16 %v733
  %v2555 = vunpack.c.l.b16 %v734
  %v2556 = vunpack.c.l.b16 %v735
  %v2557 = vunpack.c.l.b16 %v736
  %v2558 = vunpack.c.l.b16 %v737
  %v2559 = vunpack.c.l.b16 %v738
  %v2560 = vunpack.c.l.b16 %v739
  %v2561 = vunpack.c.l.b16 %v740
  %v2562 = vunpack.c.l.b16 %v741
  %v2563 = vunpack.c.l.b16 %v742
  %v2564 = vunpack.c.l.b16 %v743
  %v2565 = vunpack.c.l.b16 %v744
  %v2566 = vunpack.c.l.b16 %v745
  %v2567 = vunpack.c.l.b16 %v746
  %v2568 = vunpack.c.l.b16 %v747
  %v2569 = vunpack.c.l.b16 %v748
  %v2570 = vunpack.c.l.b16 %v749
  %v2571 = vunpack.c.l.b16 %v750
  %v2572 = vunpack.c.l.b16 %v751
  %v2573 = vunpack.c.l.b16 %v752
  %v2574 = vunpack.c.l.b16 %v753
  %v2575 = vunpack.c.l.b16 %v754
  %v2576 = vunpack.c.l.b16 %v755
  %v2577 = vunpack.c.l.b16 %v756
  %v2578 = vunpack.c.l.b16 %v757
  %v2579 = vunpack.c.l.b16 %v758
  %v2580 = vunpack.c.l.b16 %v759
  %v2581 = vunpack.c.l.b16 %v760
  %v2582 = vunpack.c.l.b16 %v761
  %v2583 = vunpack.c.l.b16 %v762
  %v2584 = vunpack.c.l.b16 %v763
  %v2585 = vunpack.c.l.b16 %v764
  %v2586 = vunpack.c.l.b16 %v765
  %v2587 = vunpack.c.l.b16 %v766
  %v2588 = vunpack.c.l.b16 %v767
  %v2589 = vunpack.c.l.b16 %v768
  %v2590 = vunpack.c.l.b16 %v769
  %v2591 = vunpack.c.l.b16 %v770
  %v2592 = vunpack.c.l.b16 %v771
  %v2593 = vunpack.c.l.b16 %v772
  %v2594 = vunpack.c.l.b16 %v773
  %v2595 = vunpack.c.l.b16 %v774
  %v2596 = vunpack.c.l.b16 %v775
  %v2597 = vunpack.c.l.b16 %v776
  %v2598 = vunpack.c.l.b16 %v777
  %v2599 = vunpack.c.l.b16 %v778
  %v2600 = vunpack.c.l.b16 %v779
  %v2601 = vunpack.c.l.b16 %v780
  %v2602 = vunpack.c.l.b16 %v781
  %v2603 = vunpack.c.l.b16 %v782
  %v2604 = vunpack.c.l.b16 %v783
  %v2605 = vunpack.c.l.b16 %v784
  %v2606 = vunpack.c.l.b16 %v785
  %v2607 = vunpack.c.l.b16 %v786
  %v2608 = vunpack.c.l.b16 %v787
  %v2609 = vunpack.c.l.b16 %v788
  %v2610 = vunpack.c.l.b16 %v789
  %v2611 = vunpack.c.l.b16 %v790
  %v2612 = vunpack.c.l.b16 %v791
  %v2613 = vunpack.c.l.b16 %v792
  %v2614 = vunpack.c.l.b16 %v793
  %v2615 = vunpack.c.l.b16 %v794
  %v2616 = vunpack.c.l.b16 %v795
  %v2617 = vunpack.c.l.b16 %v796
  %v2618 = vunpack.c.l.b16 %v797
  %v2619 = vunpack.c.l.b16 %v798
  %v2620 = vunpack.c.l.b16 %v799
  %v2621 = vunpack.c.l.b16 %v800
  %v2622 = vunpack.c.l.b16 %v801
  %v2623 = vunpack.c.l.b16 %v802
  %v2624 = vunpack.c.l.b16 %v803
  %v2625 = vunpack.c.l.b16 %v804
  %v2626 = vunpack.c.l.b16 %v805
  %v2627 = vunpack.c.l.b16 %v806
  %v2628 = vunpack.c.l.b16 %v807
  %v2629 = vunpack.c.l.b16 %v808
  %v2630 = vunpack.c.l.b16 %v809
  %v2631 = vunpack.c.l.b16 %v810
  %v2632 = vunpack.c.l.b16 %v811
  %v2633 = vunpack.c.l.b16 %v812
  %v2634 = vunpack.c.l.b16 %v813
  %v2635 = vunpack.c.l.b16 %v814
  %v2636 = vunpack.c.l.b16 %v815
  %v2637 = vunpack.c.l.b16 %v816
  %v2638 = vunpack.c.l.b16 %v817
  %v2639 = vunpack.c.l.b16 %v818
  %v2640 = vunpack.c.l.b16 %v819
  %v2641 = vunpack.c.l.b16 %v820
  %v2642 = vunpack.c.l.b16 %v821
  %v2643 = vunpack.c.l.b16 %v822
  %v2644 = vunpack.c.l.b16 %v823
  %v2645 = vunpack.c.l.b16 %v824
  %v2646 = vunpack.c.l.b16 %v825
  %v2647 = vunpack.c.l.b16 %v826
  %v2648 = vunpack.c.l.b16 %v827
  %v2649 = vunpack.c.l.b16 %v828
  %v2650 = vunpack.c.l.b16 %v829
  %v2651 = vunpack.c.l.b16 %v830
  %v2652 = vunpack.c.l.b16 %v831
  %v2653 = vunpack.c.l.b16 %v832
  %v2654 = vunpack.c.l.b16 %v833
  %v2655 = vunpack.c.l.b16 %v834
  %v2656 = vunpack.c.l.b16 %v835
  %v2657 = vunpack.c.l.b16 %v836
  %v2658 = vunpack.c.l.b16 %v837
  %v2659 = vunpack.c.l.b16 %v838
  %v2660 = vunpack.c.l.b16 %v839
  %v2661 = vunpack.c.l.b16 %v840
  %v2662 = vunpack.c.l.b16 %v841
  %v2663 = vunpack.c.l.b16 %v842
  %v2664 = vunpack.c.l.b16 %v843
  %v2665 = vunpack.c.l.b16 %v844
  %v2666 = vunpack.c.l.b16 %v845
  %v2667 = vunpack.c.l.b16 %v846
  %v2668 = vunpack.c.l.b16 %v847
  %v2669 = vunpack.c.l.b16 %v848
  %v2670 = vunpack.c.l.b16 %v849
  %v2671 = vunpack.c.l.b16 %v850
  %v2672 = vunpack.c.l.b16 %v851
  %v2673 = vunpack.c.l.b16 %v852
  %v2674 = vunpack.c.l.b16 %v853
  %v2675 = vunpack.c.l.b16 %v854
  %v2676 = vpack.c.b16 %v1893, %v1892
  %v2677 = vpack.c.b16 %v1895, %v1894
  %v2678 = vpack.c.b16 %v1897, %v1896
  %v2679 = vpack.c.b16 %v1899, %v1898
  %v2680 = vpack.c.b16 %v1901, %v1900
  %v2681 = vpack.c.b16 %v1903, %v1902
  %v2682 = vpack.c.b16 %v1905, %v1904
  %v2683 = vpack.c.b16 %v1907, %v1906
  %v2684 = vpack.c.b16 %v1909, %v1908
  %v2685 = vpack.c.b16 %v1911, %v1910
  %v2686 = vpack.c.b16 %v1913, %v1912
  %v2687 = vpack.c.b16 %v1915, %v1914
  %v2688 = vpack.c.b16 %v1917, %v1916
  %v2689 = vpack.c.b16 %v1919, %v1918
  %v2690 = vpack.c.b16 %v1921, %v1920
  %v2691 = vpack.c.b16 %v1923, %v1922
  %v2692 = vpack.c.b16 %v1925, %v1924
  %v2693 = vpack.c.b16 %v1927, %v1926
  %v2694 = vpack.c.b16 %v1929, %v1928
  %v2695 = vpack.c.b16 %v1931, %v1930
  %v2696 = vpack.c.b16 %v1933, %v1932
  %v2697 = vpack.c.b16 %v1935, %v1934
  %v2698 = vpack.c.b16 %v1937, %v1936
  %v2699 = vpack.c.b16 %v1939, %v1938
  %v2700 = vpack.c.b16 %v1941, %v1940
  %v2701 = vpack.c.b16 %v1943, %v1942
  %v2702 = vpack.c.b16 %v1945, %v1944
  %v2703 = vpack.c.b16 %v1947, %v1946
  %v2704 = vpack.c.b16 %v1949, %v1948
  %v2705 = vpack.c.b16 %v1951, %v1950
  %v2706 = vpack.c.b16 %v1953, %v1952
  %v2707 = vpack.c.b16 %v1955, %v1954
  %v2708 = vpack.c.b16 %v1957, %v1956
  %v2709 = vpack.c.b16 %v1959, %v1958
  %v2710 = vpack.c.b16 %v1961, %v1960
  %v2711 = vpack.c.b16 %v1963, %v1962
  %v2712 = vpack.c.b16 %v1965, %v1964
  %v2713 = vpack.c.b16 %v1967, %v1966
  %v2714 = vpack.c.b16 %v1969, %v1968
  %v2715 = vpack.c.b16 %v1971, %v1970
  %v2716 = vpack.c.b16 %v1973, %v1972
  %v2717 = vpack.c.b16 %v1975, %v1974
  %v2718 = vpack.c.b16 %v1977, %v1976
  %v2719 = vpack.c.b16 %v1979, %v1978
  %v2720 = vpack.c.b16 %v1981, %v1980
  %v2721 = vpack.c.b16 %v1983, %v1982
  %v2722 = vpack.c.b16 %v1985, %v1984
  %v2723 = vpack.c.b16 %v1987, %v1986
  %v2724 = vpack.c.b16 %v1989, %v1988
  %v2725 = vpack.c.b16 %v1991, %v1990
  %v2726 = vpack.c.b16 %v1993, %v1992
  %v2727 = vpack.c.b16 %v1995, %v1994
  %v2728 = vpack.c.b16 %v1997, %v1996
  %v2729 = vpack.c.b16 %v1999, %v1998
  %v2730 = vpack.c.b16 %v2001, %v2000
  %v2731 = vpack.c.b16 %v2003, %v2002
  %v2732 = vpack.c.b16 %v2005, %v2004
  %v2733 = vpack.c.b16 %v2007, %v2006
  %v2734 = vpack.c.b16 %v2009, %v2008
  %v2735 = vpack.c.b16 %v2011, %v2010
  %v2736 = vpack.c.b16 %v2013, %v2012
  %v2737 = vpack.c.b16 %v2015, %v2014
  %v2738 = vpack.c.b16 %v2017, %v2016
  %v2739 = vpack.c.b16 %v2019, %v2018
  %v2740 = vpack.c.b16 %v2021, %v2020
  %v2741 = vpack.c.b16 %v2023, %v2022
  %v2742 = vpack.c.b16 %v2025, %v2024
  %v2743 = vpack.c.b16 %v2027, %v2026
  %v2744 = vpack.c.b16 %v2029, %v2028
  %v2745 = vpack.c.b16 %v2031, %v2030
  %v2746 = vpack.c.b16 %v2033, %v2032
  %v2747 = vpack.c.b16 %v2035, %v2034
  %v2748 = vpack.c.b16 %v2037, %v2036
  %v2749 = vpack.c.b16 %v2039, %v2038
  %v2750 = vpack.c.b16 %v2041, %v2040
  %v2751 = vpack.c.b16 %v2043, %v2042
  %v2752 = vpack.c.b16 %v2045, %v2044
  %v2753 = vpack.c.b16 %v2047, %v2046
  %v2754 = vpack.c.b16 %v2049, %v2048
  %v2755 = vpack.c.b16 %v2051, %v2050
  %v2756 = vpack.c.b16 %v2053, %v2052
  %v2757 = vpack.c.b16 %v2055, %v2054
  %v2758 = vpack.c.b16 %v2057, %v2056
  %v2759 = vpack.c.b16 %v2059, %v2058
  %v2760 = vpack.c.b16 %v2061, %v2060
  %v2761 = vpack.c.b16 %v2063, %v2062
  %v2762 = vpack.c.b16 %v2065, %v2064
  %v2763 = vpack.c.b16 %v2067, %v2066
  %v2764 = vpack.c.b16 %v2069, %v2068
  %v2765 = vpack.c.b16 %v2071, %v2070
  %v2766 = vpack.c.b16 %v2073, %v2072
  %v2767 = vpack.c.b16 %v2075, %v2074
  %v2768 = vpack.c.b16 %v2077, %v2076
  %v2769 = vpack.c.b16 %v2079, %v2078
  %v2770 = vpack.c.b16 %v2081, %v2080
  %v2771 = vpack.c.b16 %v2083, %v2082
  %v2772 = vpack.c.b16 %v2085, %v2084
  %v2773 = vpack.c.b16 %v2087, %v2086
  %v2774 = vpack.c.b16 %v2089, %v2088
  %v2775 = vpack.c.b16 %v2091, %v2090
  %v2776 = vpack.c.b16 %v2093, %v2092
  %v2777 = vpack.c.b16 %v2095, %v2094
  %v2778 = vpack.c.b16 %v2097, %v2096
  %v2779 = vpack.c.b16 %v2099, %v2098
  %v2780 = vpack.c.b16 %v2101, %v2100
  %v2781 = vpack.c.b16 %v2103, %v2102
  %v2782 = vpack.c.b16 %v2105, %v2104
  %v2783 = vpack.c.b16 %v2107, %v2106
  %v2784 = vpack.c.b16 %v2109, %v2108
  %v2785 = vpack.c.b16 %v2111, %v2110
  %v2786 = vpack.c.b16 %v2113, %v2112
  %v2787 = vpack.c.b16 %v2115, %v2114
  %v2788 = vpack.c.b16 %v2117, %v2116
  %v2789 = vpack.c.b16 %v2119, %v2118
  %v2790 = vpack.c.b16 %v2121, %v2120
  %v2791 = vpack.c.b16 %v2123, %v2122
  %v2792 = vpack.c.b16 %v2125, %v2124
  %v2793 = vpack.c.b16 %v2127, %v2126
  %v2794 = vpack.c.b16 %v2129, %v2128
  %v2795 = vpack.c.b16 %v2131, %v2130
  %v2796 = vpack.c.b16 %v2133, %v2132
  %v2797 = vpack.c.b16 %v2135, %v2134
  %v2798 = vpack.c.b16 %v2137, %v2136
  %v2799 = vpack.c.b16 %v2139, %v2138
  %v2800 = vpack.c.b16 %v2141, %v2140
  %v2801 = vpack.c.b16 %v2143, %v2142
  %v2802 = vpack.c.b16 %v2145, %v2144
  %v2803 = vpack.c.b16 %v2147, %v2146
  %v2804 = vpack.c.b16 %v2149, %v2148
  %v2805 = vpack.c.b16 %v2151, %v2150
  %v2806 = vpack.c.b16 %v2153, %v2152
  %v2807 = vpack.c.b16 %v2155, %v2154
  %v2808 = vpack.c.b16 %v2157, %v2156
  %v2809 = vpack.c.b16 %v2159, %v2158
  %v2810 = vpack.c.b16 %v2161, %v2160
  %v2811 = vpack.c.b16 %v2163, %v2162
  %v2812 = vpack.c.b16 %v2165, %v2164
  %v2813 = vpack.c.b16 %v2167, %v2166
  %v2814 = vpack.c.b16 %v2169, %v2168
  %v2815 = vpack.c.b16 %v2171, %v2170
  %v2816 = vpack.c.b16 %v2173, %v2172
  %v2817 = vpack.c.b16 %v2175, %v2174
  %v2818 = vpack.c.b16 %v2177, %v2176
  %v2819 = vpack.c.b16 %v2179, %v2178
  %v2820 = vpack.c.b16 %v2181, %v2180
  %v2821 = vpack.c.b16 %v2183, %v2182
  %v2822 = vpack.c.b16 %v2185, %v2184
  %v2823 = vpack.c.b16 %v2187, %v2186
  %v2824 = vpack.c.b16 %v2189, %v2188
  %v2825 = vpack.c.b16 %v2191, %v2190
  %v2826 = vpack.c.b16 %v2193, %v2192
  %v2827 = vpack.c.b16 %v2195, %v2194
  %v2828 = vpack.c.b16 %v2197, %v2196
  %v2829 = vpack.c.b16 %v2199, %v2198
  %v2830 = vpack.c.b16 %v2201, %v2200
  %v2831 = vpack.c.b16 %v2203, %v2202
  %v2832 = vpack.c.b16 %v2205, %v2204
  %v2833 = vpack.c.b16 %v2207, %v2206
  %v2834 = vpack.c.b16 %v2209, %v2208
  %v2835 = vpack.c.b16 %v2211, %v2210
  %v2836 = vpack.c.b16 %v2213, %v2212
  %v2837 = vpack.c.b16 %v2215, %v2214
  %v2838 = vpack.c.b16 %v2217, %v2216
  %v2839 = vpack.c.b16 %v2219, %v2218
  %v2840 = vpack.c.b16 %v2221, %v2220
  %v2841 = vpack.c.b16 %v2223, %v2222
  %v2842 = vpack.c.b16 %v2225, %v2224
  %v2843 = vpack.c.b16 %v2227, %v2226
  %v2844 = vpack.c.b16 %v2229, %v2228
  %v2845 = vpack.c.b16 %v2231, %v2230
  %v2846 = vpack.c.b16 %v2233, %v2232
  %v2847 = vpack.c.b16 %v2235, %v2234
  %v2848 = vpack.c.b16 %v2237, %v2236
  %v2849 = vpack.c.b16 %v2239, %v2238
  %v2850 = vpack.c.b16 %v2241, %v2240
  %v2851 = vpack.c.b16 %v2243, %v2242
  %v2852 = vpack.c.b16 %v2245, %v2244
  %v2853 = vpack.c.b16 %v2247, %v2246
  %v2854 = vpack.c.b16 %v2249, %v2248
  %v2855 = vpack.c.b16 %v2251, %v2250
  %v2856 = vpack.c.b16 %v2253, %v2252
  %v2857 = vpack.c.b16 %v2255, %v2254
  %v2858 = vpack.c.b16 %v2257, %v2256
  %v2859 = vpack.c.b16 %v2259, %v2258
  %v2860 = vpack.c.b16 %v2261, %v2260
  %v2861 = vpack.c.b16 %v2263, %v2262
  %v2862 = vpack.c.b16 %v2265, %v2264
  %v2863 = vpack.c.b16 %v2267, %v2266
  %v2864 = vpack.c.b16 %v2269, %v2268
  %v2865 = vpack.c.b16 %v2271, %v2270
  %v2866 = vpack.c.b16 %v2273, %v2272
  %v2867 = vpack.c.b16 %v2275, %v2274
  %v2868 = vpack.c.b16 %v2277, %v2276
  %v2869 = vpack.c.b16 %v2279, %v2278
  %v2870 = vpack.c.b16 %v2281, %v2280
  %v2871 = vpack.c.b16 %v2283, %v2282
  %v2872 = vpack.c.b16 %v2285, %v2284
  %v2873 = vpack.c.b16 %v2287, %v2286
  %v2874 = vpack.c.b16 %v2289, %v2288
  %v2875 = vpack.c.b16 %v2291, %v2290
  %v2876 = vpack.c.b16 %v2293, %v2292
  %v2877 = vpack.c.b16 %v2295, %v2294
  %v2878 = vpack.c.b16 %v2297, %v2296
  %v2879 = vpack.c.b16 %v2299, %v2298
  %v2880 = vpack.c.b16 %v2301, %v2300
  %v2881 = vpack.c.b16 %v2303, %v2302
  %v2882 = vpack.c.b16 %v2305, %v2304
  %v2883 = vpack.c.b16 %v2307, %v2306
  %v2884 = vpack.c.b16 %v2309, %v2308
  %v2885 = vpack.c.b16 %v2311, %v2310
  %v2886 = vpack.c.b16 %v2313, %v2312
  %v2887 = vpack.c.b16 %v2315, %v2314
  %v2888 = vpack.c.b16 %v2317, %v2316
  %v2889 = vpack.c.b16 %v2319, %v2318
  %v2890 = vpack.c.b16 %v2321, %v2320
  %v2891 = vpack.c.b16 %v2323, %v2322
  %v2892 = vpack.c.b16 %v2325, %v2324
  %v2893 = vpack.c.b16 %v2327, %v2326
  %v2894 = vpack.c.b16 %v2329, %v2328
  %v2895 = vpack.c.b16 %v2331, %v2330
  %v2896 = vpack.c.b16 %v2333, %v2332
  %v2897 = vpack.c.b16 %v2335, %v2334
  %v2898 = vpack.c.b16 %v2337, %v2336
  %v2899 = vpack.c.b16 %v2339, %v2338
  %v2900 = vpack.c.b16 %v2341, %v2340
  %v2901 = vpack.c.b16 %v2343, %v2342
  %v2902 = vpack.c.b16 %v2345, %v2344
  %v2903 = vpack.c.b16 %v2347, %v2346
  %v2904 = vpack.c.b16 %v2349, %v2348
  %v2905 = vpack.c.b16 %v2351, %v2350
  %v2906 = vpack.c.b16 %v2353, %v2352
  %v2907 = vpack.c.b16 %v2355, %v2354
  %v2908 = vpack.c.b16 %v2357, %v2356
  %v2909 = vpack.c.b16 %v2359, %v2358
  %v2910 = vpack.c.b16 %v2361, %v2360
  %v2911 = vpack.c.b16 %v2363, %v2362
  %v2912 = vpack.c.b16 %v2365, %v2364
  %v2913 = vpack.c.b16 %v2367, %v2366
  %v2914 = vpack.c.b16 %v2369, %v2368
  %v2915 = vpack.c.b16 %v2371, %v2370
  %v2916 = vpack.c.b16 %v2373, %v2372
  %v2917 = vpack.c.b16 %v2375, %v2374
  %v2918 = vpack.c.b16 %v2377, %v2376
  %v2919 = vpack.c.b16 %v2379, %v2378
  %v2920 = vpack.c.b16 %v2381, %v2380
  %v2921 = vpack.c.b16 %v2383, %v2382
  %v2922 = vpack.c.b16 %v2385, %v2384
  %v2923 = vpack.c.b16 %v2387, %v2386
  %v2924 = vpack.c.b16 %v2389, %v2388
  %v2925 = vpack.c.b16 %v2391, %v2390
  %v2926 = vpack.c.b16 %v2393, %v2392
  %v2927 = vpack.c.b16 %v2395, %v2394
  %v2928 = vpack.c.b16 %v2397, %v2396
  %v2929 = vpack.c.b16 %v2399, %v2398
  %v2930 = vpack.c.b16 %v2401, %v2400
  %v2931 = vpack.c.b16 %v2403, %v2402
  %v2932 = vpack.c.b16 %v2405, %v2404
  %v2933 = vpack.c.b16 %v2407, %v2406
  %v2934 = vpack.c.b16 %v2409, %v2408
  %v2935 = vpack.c.b16 %v2411, %v2410
  %v2936 = vpack.c.b16 %v2413, %v2412
  %v2937 = vpack.c.b16 %v2415, %v2414
  %v2938 = vpack.c.b16 %v2417, %v2416
  %v2939 = vpack.c.b16 %v2419, %v2418
  %v2940 = vpack.c.b16 %v2421, %v2420
  %v2941 = vpack.c.b16 %v2423, %v2422
  %v2942 = vpack.c.b16 %v2425, %v2424
  %v2943 = vpack.c.b16 %v2427, %v2426
  %v2944 = vpack.c.b16 %v2429, %v2428
  %v2945 = vpack.c.b16 %v2431, %v2430
  %v2946 = vpack.c.b16 %v2433, %v2432
  %v2947 = vpack.c.b16 %v2435, %v2434
  %v2948 = vpack.c.b16 %v2437, %v2436
  %v2949 = vpack.c.b16 %v2439, %v2438
  %v2950 = vpack.c.b16 %v2441, %v2440
  %v2951 = vpack.c.b16 %v2443, %v2442
  %v2952 = vpack.c.b16 %v2445, %v2444
  %v2953 = vpack.c.b16 %v2447, %v2446
  %v2954 = vpack.c.b16 %v2449, %v2448
  %v2955 = vpack.c.b16 %v2451, %v2450
  %v2956 = vpack.c.b16 %v2453, %v2452
  %v2957 = vpack.c.b16 %v2455, %v2454
  %v2958 = vpack.c.b16 %v2457, %v2456
  %v2959 = vpack.c.b16 %v2459, %v2458
  %v2960 = vpack.c.b16 %v2461, %v2460
  %v2961 = vpack.c.b16 %v2463, %v2462
  %v2962 = vpack.c.b16 %v2465, %v2464
  %v2963 = vpack.c.b16 %v2467, %v2466
  %v2964 = vpack.c.b16 %v2469, %v2468
  %v2965 = vpack.c.b16 %v2471, %v2470
  %v2966 = vpack.c.b16 %v2473, %v2472
  %v2967 = vpack.c.b16 %v2475, %v2474
  %v2968 = vpack.c.b16 %v2477, %v2476
  %v2969 = vpack.c.b16 %v2479, %v2478
  %v2970 = vpack.c.b16 %v2481, %v2480
  %v2971 = vpack.c.b16 %v2483, %v2482
  %v2972 = vpack.c.b16 %v2485, %v2484
  %v2973 = vpack.c.b16 %v2487, %v2486
  %v2974 = vpack.c.b16 %v2489, %v2488
  %v2975 = vpack.c.b16 %v2491, %v2490
  %v2976 = vpack.c.b16 %v2493, %v2492
  %v2977 = vpack.c.b16 %v2495, %v2494
  %v2978 = vpack.c.b16 %v2497, %v2496
  %v2979 = vpack.c.b16 %v2499, %v2498
  %v2980 = vpack.c.b16 %v2501, %v2500
  %v2981 = vpack.c.b16 %v2503, %v2502
  %v2982 = vpack.c.b16 %v2505, %v2504
  %v2983 = vpack.c.b16 %v2507, %v2506
  %v2984 = vpack.c.b16 %v2509, %v2508
  %v2985 = vpack.c.b16 %v2511, %v2510
  %v2986 = vpack.c.b16 %v2513, %v2512
  %v2987 = vpack.c.b16 %v2515, %v2514
  %v2988 = vpack.c.b16 %v2517, %v2516
  %v2989 = vpack.c.b16 %v2519, %v2518
  %v2990 = vpack.c.b16 %v2521, %v2520
  %v2991 = vpack.c.b16 %v2523, %v2522
  %v2992 = vpack.c.b16 %v2525, %v2524
  %v2993 = vpack.c.b16 %v2527, %v2526
  %v2994 = vpack.c.b16 %v2529, %v2528
  %v2995 = vpack.c.b16 %v2531, %v2530
  %v2996 = vpack.c.b16 %v2533, %v2532
  %v2997 = vpack.c.b16 %v2535, %v2534
  %v2998 = vpack.c.b16 %v2537, %v2536
  %v2999 = vpack.c.b16 %v2539, %v2538
  %v3000 = vpack.c.b16 %v2541, %v2540
  %v3001 = vpack.c.b16 %v2543, %v2542
  %v3002 = vpack.c.b16 %v2545, %v2544
  %v3003 = vpack.c.b16 %v2547, %v2546
  %v3004 = vpack.c.b16 %v2549, %v2548
  %v3005 = vpack.c.b16 %v2551, %v2550
  %v3006 = vpack.c.b16 %v2553, %v2552
  %v3007 = vpack.c.b16 %v2555, %v2554
  %v3008 = vpack.c.b16 %v2557, %v2556
  %v3009 = vpack.c.b16 %v2559, %v2558
  %v3010 = vpack.c.b16 %v2561, %v2560
  %v3011 = vpack.c.b16 %v2563, %v2562
  %v3012 = vpack.c.b16 %v2565, %v2564
  %v3013 = vpack.c.b16 %v2567, %v2566
  %v3014 = vpack.c.b16 %v2569, %v2568
  %v3015 = vpack.c.b16 %v2571, %v2570
  %v3016 = vpack.c.b16 %v2573, %v2572
  %v3017 = vpack.c.b16 %v2575, %v2574
  %v3018 = vpack.c.b16 %v2577, %v2576
  %v3019 = vpack.c.b16 %v2579, %v2578
  %v3020 = vpack.c.b16 %v2581, %v2580
  %v3021 = vpack.c.b16 %v2583, %v2582
  %v3022 = vpack.c.b16 %v2585, %v2584
  %v3023 = vpack.c.b16 %v2587, %v2586
  %v3024 = vpack.c.b16 %v2589, %v2588
  %v3025 = vpack.c.b16 %v2591, %v2590
  %v3026 = vpack.c.b16 %v2593, %v2592
  %v3027 = vpack.c.b16 %v2595, %v2594
  %v3028 = vpack.c.b16 %v2597, %v2596
  %v3029 = vpack.c.b16 %v2599, %v2598
  %v3030 = vpack.c.b16 %v2601, %v2600
  %v3031 = vpack.c.b16 %v2603, %v2602
  %v3032 = vpack.c.b16 %v2605, %v2604
  %v3033 = vpack.c.b16 %v2607, %v2606
  %v3034 = vpack.c.b16 %v2609, %v2608
  %v3035 = vpack.c.b16 %v2611, %v2610
  %v3036 = vpack.c.b16 %v2613, %v2612
  %v3037 = vpack.c.b16 %v2615, %v2614
  %v3038 = vpack.c.b16 %v2617, %v2616
  %v3039 = vpack.c.b16 %v2619, %v2618
  %v3040 = vpack.c.b16 %v2621, %v2620
  %v3041 = vpack.c.b16 %v2623, %v2622
  %v3042 = vpack.c.b16 %v2625, %v2624
  %v3043 = vpack.c.b16 %v2627, %v2626
  %v3044 = vpack.c.b16 %v2629, %v2628
  %v3045 = vpack.c.b16 %v2631, %v2630
  %v3046 = vpack.c.b16 %v2633, %v2632
  %v3047 = vpack.c.b16 %v2635, %v2634
  %v3048 = vpack.c.b16 %v2637, %v2636
  %v3049 = vpack.c.b16 %v2639, %v2638
  %v3050 = vpack.c.b16 %v2641, %v2640
  %v3051 = vpack.c.b16 %v2643, %v2642
  %v3052 = vpack.c.b16 %v2645, %v2644
  %v3053 = vpack.c.b16 %v2647, %v2646
  %v3054 = vpack.c.b16 %v2649, %v2648
  %v3055 = vpack.c.b16 %v2651, %v2650
  %v3056 = vpack.c.b16 %v2653, %v2652
  %v3057 = vpack.c.b16 %v2655, %v2654
  %v3058 = vpack.c.b16 %v2657, %v2656
  %v3059 = vpack.c.b16 %v2659, %v2658
  %v3060 = vpack.c.b16 %v2661, %v2660
  %v3061 = vpack.c.b16 %v2663, %v2662
  %v3062 = vpack.c.b16 %v2665, %v2664
  %v3063 = vpack.c.b16 %v2667, %v2666
  %v3064 = vpack.c.b16 %v2669, %v2668
  %v3065 = vpack.c.b16 %v2671, %v2670
  %v3066 = vpack.c.b16 %v2673, %v2672
  %v3067 = vpack.c.b16 %v2675, %v2674
  %3460 = vmatprep.subr.bf16.mxu0 0
  %3461 = vmatpush1.bf16.msra.mxu0 %v2676
  %3462 = vmatprep.subr.bf16.mxu0 0
  %3463 = vmatpush1.bf16.msra.mxu0 %v2677
  %3464 = vmatprep.subr.bf16.mxu0 0
  %3465 = vmatpush1.bf16.msra.mxu0 %v2678
  %3466 = vmatprep.subr.bf16.mxu0 0
  %3467 = vmatpush1.bf16.msra.mxu0 %v2679
  %3468 = vmatprep.subr.bf16.mxu0 0
  %3469 = vmatpush1.bf16.msra.mxu0 %v2680
  %3470 = vmatprep.subr.bf16.mxu0 0
  %3471 = vmatpush1.bf16.msra.mxu0 %v2681
  %3472 = vmatprep.subr.bf16.mxu0 0
  %3473 = vmatpush1.bf16.msra.mxu0 %v2682
  %3474 = vmatprep.subr.bf16.mxu0 0
  %3475 = vmatpush1.bf16.msra.mxu0 %v2683
  %3476 = vmatprep.subr.bf16.mxu0 0
  %3477 = vmatpush1.bf16.msra.mxu0 %v2684
  %3478 = vmatprep.subr.bf16.mxu0 0
  %3479 = vmatpush1.bf16.msra.mxu0 %v2685
  %3480 = vmatprep.subr.bf16.mxu0 0
  %3481 = vmatpush1.bf16.msra.mxu0 %v2686
  %3482 = vmatprep.subr.bf16.mxu0 0
  %3483 = vmatpush1.bf16.msra.mxu0 %v2687
  %3484 = vmatprep.subr.bf16.mxu0 0
  %3485 = vmatpush1.bf16.msra.mxu0 %v2688
  %3486 = vmatprep.subr.bf16.mxu0 0
  %3487 = vmatpush1.bf16.msra.mxu0 %v2689
  %3488 = vmatprep.subr.bf16.mxu0 0
  %3489 = vmatpush1.bf16.msra.mxu0 %v2690
  %3490 = vmatprep.subr.bf16.mxu0 0
  %3491 = vmatpush1.bf16.msra.mxu0 %v2691
  %3492 = vmatprep.mubr.bf16.mxu0 %v1011
  %3493 = vmatmul.mubr.bf16.gmra.mrb[0].mxu0 %v1010
  %v3494 = vpop.f32.mrb[0].mxu0
  %v3495 = vadd.f32 %v860, %v3494
  %v3496 = vpop.f32.mrb[0].mxu0
  %v3497 = vpop.f32.mrb[0].mxu0
  %v3498 = vadd.f32 %v860, %v3497
  %v3499 = vpop.f32.mrb[0].mxu0
  %3500 = vdwg.mxu0
  %3501 = vmatprep.subr.bf16.mxu0 0
  %3502 = vmatpush1.bf16.msra.mxu0 %v2692
  %3503 = vmatprep.subr.bf16.mxu0 0
  %3504 = vmatpush1.bf16.msra.mxu0 %v2693
  %3505 = vmatprep.subr.bf16.mxu0 0
  %3506 = vmatpush1.bf16.msra.mxu0 %v2694
  %3507 = vmatprep.subr.bf16.mxu0 0
  %3508 = vmatpush1.bf16.msra.mxu0 %v2695
  %3509 = vmatprep.subr.bf16.mxu0 0
  %3510 = vmatpush1.bf16.msra.mxu0 %v2696
  %3511 = vmatprep.subr.bf16.mxu0 0
  %3512 = vmatpush1.bf16.msra.mxu0 %v2697
  %3513 = vmatprep.subr.bf16.mxu0 0
  %3514 = vmatpush1.bf16.msra.mxu0 %v2698
  %3515 = vmatprep.subr.bf16.mxu0 0
  %3516 = vmatpush1.bf16.msra.mxu0 %v2699
  %3517 = vmatprep.subr.bf16.mxu0 0
  %3518 = vmatpush1.bf16.msra.mxu0 %v2700
  %3519 = vmatprep.subr.bf16.mxu0 0
  %3520 = vmatpush1.bf16.msra.mxu0 %v2701
  %3521 = vmatprep.subr.bf16.mxu0 0
  %3522 = vmatpush1.bf16.msra.mxu0 %v2702
  %3523 = vmatprep.subr.bf16.mxu0 0
  %3524 = vmatpush1.bf16.msra.mxu0 %v2703
  %3525 = vmatprep.subr.bf16.mxu0 0
  %3526 = vmatpush1.bf16.msra.mxu0 %v2704
  %3527 = vmatprep.subr.bf16.mxu0 0
  %3528 = vmatpush1.bf16.msra.mxu0 %v2705
  %3529 = vmatprep.subr.bf16.mxu0 0
  %3530 = vmatpush1.bf16.msra.mxu0 %v2706
  %3531 = vmatprep.subr.bf16.mxu0 0
  %3532 = vmatpush1.bf16.msra.mxu0 %v2707
  %3533 = vmatprep.mubr.bf16.mxu0 %v1013
  %3534 = vmatmul.mubr.bf16.gmra.mrb[0].mxu0 %v1012
  %v3535 = vpop.f32.mrb[0].mxu0
  %v3536 = vadd.f32 %v3495, %v3535
  %v3537 = vpop.f32.mrb[0].mxu0
  %v3538 = vpop.f32.mrb[0].mxu0
  %v3539 = vadd.f32 %v3498, %v3538
  %v3540 = vpop.f32.mrb[0].mxu0
  %3541 = vdwg.mxu0
  %3542 = vmatprep.subr.bf16.mxu0 0
  %3543 = vmatpush1.bf16.msra.mxu0 %v2708
  %3544 = vmatprep.subr.bf16.mxu0 0
  %3545 = vmatpush1.bf16.msra.mxu0 %v2709
  %3546 = vmatprep.subr.bf16.mxu0 0
  %3547 = vmatpush1.bf16.msra.mxu0 %v2710
  %3548 = vmatprep.subr.bf16.mxu0 0
  %3549 = vmatpush1.bf16.msra.mxu0 %v2711
  %3550 = vmatprep.subr.bf16.mxu0 0
  %3551 = vmatpush1.bf16.msra.mxu0 %v2712
  %3552 = vmatprep.subr.bf16.mxu0 0
  %3553 = vmatpush1.bf16.msra.mxu0 %v2713
  %3554 = vmatprep.subr.bf16.mxu0 0
  %3555 = vmatpush1.bf16.msra.mxu0 %v2714
  %3556 = vmatprep.subr.bf16.mxu0 0
  %3557 = vmatpush1.bf16.msra.mxu0 %v2715
  %3558 = vmatprep.subr.bf16.mxu0 0
  %3559 = vmatpush1.bf16.msra.mxu0 %v2716
  %3560 = vmatprep.subr.bf16.mxu0 0
  %3561 = vmatpush1.bf16.msra.mxu0 %v2717
  %3562 = vmatprep.subr.bf16.mxu0 0
  %3563 = vmatpush1.bf16.msra.mxu0 %v2718
  %3564 = vmatprep.subr.bf16.mxu0 0
  %3565 = vmatpush1.bf16.msra.mxu0 %v2719
  %3566 = vmatprep.subr.bf16.mxu0 0
  %3567 = vmatpush1.bf16.msra.mxu0 %v2720
  %3568 = vmatprep.subr.bf16.mxu0 0
  %3569 = vmatpush1.bf16.msra.mxu0 %v2721
  %3570 = vmatprep.subr.bf16.mxu0 0
  %3571 = vmatpush1.bf16.msra.mxu0 %v2722
  %3572 = vmatprep.subr.bf16.mxu0 0
  %3573 = vmatpush1.bf16.msra.mxu0 %v2723
  %3574 = vmatprep.mubr.bf16.mxu0 %v1015
  %3575 = vmatmul.mubr.bf16.gmra.mrb[0].mxu0 %v1014
  %v3576 = vpop.f32.mrb[0].mxu0
  %v3577 = vadd.f32 %v3536, %v3576
  %v3578 = vpop.f32.mrb[0].mxu0
  %v3579 = vpop.f32.mrb[0].mxu0
  %v3580 = vadd.f32 %v3539, %v3579
  %v3581 = vpop.f32.mrb[0].mxu0
  %3582 = vdwg.mxu0
  %3583 = vmatprep.subr.bf16.mxu0 0
  %3584 = vmatpush1.bf16.msra.mxu0 %v2724
  %3585 = vmatprep.subr.bf16.mxu0 0
  %3586 = vmatpush1.bf16.msra.mxu0 %v2725
  %3587 = vmatprep.subr.bf16.mxu0 0
  %3588 = vmatpush1.bf16.msra.mxu0 %v2726
  %3589 = vmatprep.subr.bf16.mxu0 0
  %3590 = vmatpush1.bf16.msra.mxu0 %v2727
  %3591 = vmatprep.subr.bf16.mxu0 0
  %3592 = vmatpush1.bf16.msra.mxu0 %v2728
  %3593 = vmatprep.subr.bf16.mxu0 0
  %3594 = vmatpush1.bf16.msra.mxu0 %v2729
  %3595 = vmatprep.subr.bf16.mxu0 0
  %3596 = vmatpush1.bf16.msra.mxu0 %v2730
  %3597 = vmatprep.subr.bf16.mxu0 0
  %3598 = vmatpush1.bf16.msra.mxu0 %v2731
  %3599 = vmatprep.subr.bf16.mxu0 0
  %3600 = vmatpush1.bf16.msra.mxu0 %v2732
  %3601 = vmatprep.subr.bf16.mxu0 0
  %3602 = vmatpush1.bf16.msra.mxu0 %v2733
  %3603 = vmatprep.subr.bf16.mxu0 0
  %3604 = vmatpush1.bf16.msra.mxu0 %v2734
  %3605 = vmatprep.subr.bf16.mxu0 0
  %3606 = vmatpush1.bf16.msra.mxu0 %v2735
  %3607 = vmatprep.subr.bf16.mxu0 0
  %3608 = vmatpush1.bf16.msra.mxu0 %v2736
  %3609 = vmatprep.subr.bf16.mxu0 0
  %3610 = vmatpush1.bf16.msra.mxu0 %v2737
  %3611 = vmatprep.subr.bf16.mxu0 0
  %3612 = vmatpush1.bf16.msra.mxu0 %v2738
  %3613 = vmatprep.subr.bf16.mxu0 0
  %3614 = vmatpush1.bf16.msra.mxu0 %v2739
  %3615 = vmatprep.mubr.bf16.mxu0 %v1017
  %3616 = vmatmul.mubr.bf16.gmra.mrb[0].mxu0 %v1016
  %v3617 = vpop.f32.mrb[0].mxu0
  %v3618 = vadd.f32 %v3577, %v3617
  %v3619 = vpop.f32.mrb[0].mxu0
  %v3620 = vpop.f32.mrb[0].mxu0
  %v3621 = vadd.f32 %v3580, %v3620
  %v3622 = vpop.f32.mrb[0].mxu0
  %3623 = vdwg.mxu0
  %3624 = vmatprep.subr.bf16.mxu0 0
  %3625 = vmatpush1.bf16.msra.mxu0 %v2740
  %3626 = vmatprep.subr.bf16.mxu0 0
  %3627 = vmatpush1.bf16.msra.mxu0 %v2741
  %3628 = vmatprep.subr.bf16.mxu0 0
  %3629 = vmatpush1.bf16.msra.mxu0 %v2742
  %3630 = vmatprep.subr.bf16.mxu0 0
  %3631 = vmatpush1.bf16.msra.mxu0 %v2743
  %3632 = vmatprep.subr.bf16.mxu0 0
  %3633 = vmatpush1.bf16.msra.mxu0 %v2744
  %3634 = vmatprep.subr.bf16.mxu0 0
  %3635 = vmatpush1.bf16.msra.mxu0 %v2745
  %3636 = vmatprep.subr.bf16.mxu0 0
  %3637 = vmatpush1.bf16.msra.mxu0 %v2746
  %3638 = vmatprep.subr.bf16.mxu0 0
  %3639 = vmatpush1.bf16.msra.mxu0 %v2747
  %3640 = vmatprep.subr.bf16.mxu0 0
  %3641 = vmatpush1.bf16.msra.mxu0 %v2748
  %3642 = vmatprep.subr.bf16.mxu0 0
  %3643 = vmatpush1.bf16.msra.mxu0 %v2749
  %3644 = vmatprep.subr.bf16.mxu0 0
  %3645 = vmatpush1.bf16.msra.mxu0 %v2750
  %3646 = vmatprep.subr.bf16.mxu0 0
  %3647 = vmatpush1.bf16.msra.mxu0 %v2751
  %3648 = vmatprep.subr.bf16.mxu0 0
  %3649 = vmatpush1.bf16.msra.mxu0 %v2752
  %3650 = vmatprep.subr.bf16.mxu0 0
  %3651 = vmatpush1.bf16.msra.mxu0 %v2753
  %3652 = vmatprep.subr.bf16.mxu0 0
  %3653 = vmatpush1.bf16.msra.mxu0 %v2754
  %3654 = vmatprep.subr.bf16.mxu0 0
  %3655 = vmatpush1.bf16.msra.mxu0 %v2755
  %3656 = vmatprep.mubr.bf16.mxu0 %v1019
  %3657 = vmatmul.mubr.bf16.gmra.mrb[0].mxu0 %v1018
  %v3658 = vpop.f32.mrb[0].mxu0
  %v3659 = vadd.f32 %v3618, %v3658
  %v3660 = vpop.f32.mrb[0].mxu0
  %v3661 = vpop.f32.mrb[0].mxu0
  %v3662 = vadd.f32 %v3621, %v3661
  %v3663 = vpop.f32.mrb[0].mxu0
  %3664 = vdwg.mxu0
  %3665 = vmatprep.subr.bf16.mxu0 0
  %3666 = vmatpush1.bf16.msra.mxu0 %v2756
  %3667 = vmatprep.subr.bf16.mxu0 0
  %3668 = vmatpush1.bf16.msra.mxu0 %v2757
  %3669 = vmatprep.subr.bf16.mxu0 0
  %3670 = vmatpush1.bf16.msra.mxu0 %v2758
  %3671 = vmatprep.subr.bf16.mxu0 0
  %3672 = vmatpush1.bf16.msra.mxu0 %v2759
  %3673 = vmatprep.subr.bf16.mxu0 0
  %3674 = vmatpush1.bf16.msra.mxu0 %v2760
  %3675 = vmatprep.subr.bf16.mxu0 0
  %3676 = vmatpush1.bf16.msra.mxu0 %v2761
  %3677 = vmatprep.subr.bf16.mxu0 0
  %3678 = vmatpush1.bf16.msra.mxu0 %v2762
  %3679 = vmatprep.subr.bf16.mxu0 0
  %3680 = vmatpush1.bf16.msra.mxu0 %v2763
  %3681 = vmatprep.subr.bf16.mxu0 0
  %3682 = vmatpush1.bf16.msra.mxu0 %v2764
  %3683 = vmatprep.subr.bf16.mxu0 0
  %3684 = vmatpush1.bf16.msra.mxu0 %v2765
  %3685 = vmatprep.subr.bf16.mxu0 0
  %3686 = vmatpush1.bf16.msra.mxu0 %v2766
  %3687 = vmatprep.subr.bf16.mxu0 0
  %3688 = vmatpush1.bf16.msra.mxu0 %v2767
  %3689 = vmatprep.subr.bf16.mxu0 0
  %3690 = vmatpush1.bf16.msra.mxu0 %v2768
  %3691 = vmatprep.subr.bf16.mxu0 0
  %3692 = vmatpush1.bf16.msra.mxu0 %v2769
  %3693 = vmatprep.subr.bf16.mxu0 0
  %3694 = vmatpush1.bf16.msra.mxu0 %v2770
  %3695 = vmatprep.subr.bf16.mxu0 0
  %3696 = vmatpush1.bf16.msra.mxu0 %v2771
  %3697 = vmatprep.mubr.bf16.mxu0 %v1021
  %3698 = vmatmul.mubr.bf16.gmra.mrb[0].mxu0 %v1020
  %v3699 = vpop.f32.mrb[0].mxu0
  %v3700 = vadd.f32 %v3659, %v3699
  %v3701 = vpop.f32.mrb[0].mxu0
  %v3702 = vpop.f32.mrb[0].mxu0
  %v3703 = vadd.f32 %v3662, %v3702
  %v3704 = vpop.f32.mrb[0].mxu0
  %3705 = vdwg.mxu0
  %3706 = vmatprep.subr.bf16.mxu0 0
  %3707 = vmatpush1.bf16.msra.mxu0 %v2772
  %3708 = vmatprep.subr.bf16.mxu0 0
  %3709 = vmatpush1.bf16.msra.mxu0 %v2773
  %3710 = vmatprep.subr.bf16.mxu0 0
  %3711 = vmatpush1.bf16.msra.mxu0 %v2774
  %3712 = vmatprep.subr.bf16.mxu0 0
  %3713 = vmatpush1.bf16.msra.mxu0 %v2775
  %3714 = vmatprep.subr.bf16.mxu0 0
  %3715 = vmatpush1.bf16.msra.mxu0 %v2776
  %3716 = vmatprep.subr.bf16.mxu0 0
  %3717 = vmatpush1.bf16.msra.mxu0 %v2777
  %3718 = vmatprep.subr.bf16.mxu0 0
  %3719 = vmatpush1.bf16.msra.mxu0 %v2778
  %3720 = vmatprep.subr.bf16.mxu0 0
  %3721 = vmatpush1.bf16.msra.mxu0 %v2779
  %3722 = vmatprep.subr.bf16.mxu0 0
  %3723 = vmatpush1.bf16.msra.mxu0 %v2780
  %3724 = vmatprep.subr.bf16.mxu0 0
  %3725 = vmatpush1.bf16.msra.mxu0 %v2781
  %3726 = vmatprep.subr.bf16.mxu0 0
  %3727 = vmatpush1.bf16.msra.mxu0 %v2782
  %3728 = vmatprep.subr.bf16.mxu0 0
  %3729 = vmatpush1.bf16.msra.mxu0 %v2783
  %3730 = vmatprep.subr.bf16.mxu0 0
  %3731 = vmatpush1.bf16.msra.mxu0 %v2784
  %3732 = vmatprep.subr.bf16.mxu0 0
  %3733 = vmatpush1.bf16.msra.mxu0 %v2785
  %3734 = vmatprep.subr.bf16.mxu0 0
  %3735 = vmatpush1.bf16.msra.mxu0 %v2786
  %3736 = vmatprep.subr.bf16.mxu0 0
  %3737 = vmatpush1.bf16.msra.mxu0 %v2787
  %3738 = vmatprep.mubr.bf16.mxu0 %v1023
  %3739 = vmatmul.mubr.bf16.gmra.mrb[0].mxu0 %v1022
  %v3740 = vpop.f32.mrb[0].mxu0
  %v3741 = vadd.f32 %v3700, %v3740
  %v3742 = vpop.f32.mrb[0].mxu0
  %v3743 = vpop.f32.mrb[0].mxu0
  %v3744 = vadd.f32 %v3703, %v3743
  %v3745 = vpop.f32.mrb[0].mxu0
  %3746 = vdwg.mxu0
  %3747 = vmatprep.subr.bf16.mxu0 0
  %3748 = vmatpush1.bf16.msra.mxu0 %v2788
  %3749 = vmatprep.subr.bf16.mxu0 0
  %3750 = vmatpush1.bf16.msra.mxu0 %v2789
  %3751 = vmatprep.subr.bf16.mxu0 0
  %3752 = vmatpush1.bf16.msra.mxu0 %v2790
  %3753 = vmatprep.subr.bf16.mxu0 0
  %3754 = vmatpush1.bf16.msra.mxu0 %v2791
  %3755 = vmatprep.subr.bf16.mxu0 0
  %3756 = vmatpush1.bf16.msra.mxu0 %v2792
  %3757 = vmatprep.subr.bf16.mxu0 0
  %3758 = vmatpush1.bf16.msra.mxu0 %v2793
  %3759 = vmatprep.subr.bf16.mxu0 0
  %3760 = vmatpush1.bf16.msra.mxu0 %v2794
  %3761 = vmatprep.subr.bf16.mxu0 0
  %3762 = vmatpush1.bf16.msra.mxu0 %v2795
  %3763 = vmatprep.subr.bf16.mxu0 0
  %3764 = vmatpush1.bf16.msra.mxu0 %v2796
  %3765 = vmatprep.subr.bf16.mxu0 0
  %3766 = vmatpush1.bf16.msra.mxu0 %v2797
  %3767 = vmatprep.subr.bf16.mxu0 0
  %3768 = vmatpush1.bf16.msra.mxu0 %v2798
  %3769 = vmatprep.subr.bf16.mxu0 0
  %3770 = vmatpush1.bf16.msra.mxu0 %v2799
  %3771 = vmatprep.subr.bf16.mxu0 0
  %3772 = vmatpush1.bf16.msra.mxu0 %v2800
  %3773 = vmatprep.subr.bf16.mxu0 0
  %3774 = vmatpush1.bf16.msra.mxu0 %v2801
  %3775 = vmatprep.subr.bf16.mxu0 0
  %3776 = vmatpush1.bf16.msra.mxu0 %v2802
  %3777 = vmatprep.subr.bf16.mxu0 0
  %3778 = vmatpush1.bf16.msra.mxu0 %v2803
  %3779 = vmatprep.mubr.bf16.mxu0 %v1025
  %3780 = vmatmul.mubr.bf16.gmra.mrb[0].mxu0 %v1024
  %v3781 = vpop.f32.mrb[0].mxu0
  %v3782 = vadd.f32 %v3741, %v3781
  %v3783 = vpop.f32.mrb[0].mxu0
  %v3784 = vpop.f32.mrb[0].mxu0
  %v3785 = vadd.f32 %v3744, %v3784
  %v3786 = vpop.f32.mrb[0].mxu0
  %3787 = vdwg.mxu0
  %3788 = vmatprep.subr.bf16.mxu0 0
  %3789 = vmatpush1.bf16.msra.mxu0 %v2804
  %3790 = vmatprep.subr.bf16.mxu0 0
  %3791 = vmatpush1.bf16.msra.mxu0 %v2805
  %3792 = vmatprep.subr.bf16.mxu0 0
  %3793 = vmatpush1.bf16.msra.mxu0 %v2806
  %3794 = vmatprep.subr.bf16.mxu0 0
  %3795 = vmatpush1.bf16.msra.mxu0 %v2807
  %3796 = vmatprep.subr.bf16.mxu0 0
  %3797 = vmatpush1.bf16.msra.mxu0 %v2808
  %3798 = vmatprep.subr.bf16.mxu0 0
  %3799 = vmatpush1.bf16.msra.mxu0 %v2809
  %3800 = vmatprep.subr.bf16.mxu0 0
  %3801 = vmatpush1.bf16.msra.mxu0 %v2810
  %3802 = vmatprep.subr.bf16.mxu0 0
  %3803 = vmatpush1.bf16.msra.mxu0 %v2811
  %3804 = vmatprep.subr.bf16.mxu0 0
  %3805 = vmatpush1.bf16.msra.mxu0 %v2812
  %3806 = vmatprep.subr.bf16.mxu0 0
  %3807 = vmatpush1.bf16.msra.mxu0 %v2813
  %3808 = vmatprep.subr.bf16.mxu0 0
  %3809 = vmatpush1.bf16.msra.mxu0 %v2814
  %3810 = vmatprep.subr.bf16.mxu0 0
  %3811 = vmatpush1.bf16.msra.mxu0 %v2815
  %3812 = vmatprep.subr.bf16.mxu0 0
  %3813 = vmatpush1.bf16.msra.mxu0 %v2816
  %3814 = vmatprep.subr.bf16.mxu0 0
  %3815 = vmatpush1.bf16.msra.mxu0 %v2817
  %3816 = vmatprep.subr.bf16.mxu0 0
  %3817 = vmatpush1.bf16.msra.mxu0 %v2818
  %3818 = vmatprep.subr.bf16.mxu0 0
  %3819 = vmatpush1.bf16.msra.mxu0 %v2819
  %3820 = vmatprep.mubr.bf16.mxu0 %v1027
  %3821 = vmatmul.mubr.bf16.gmra.mrb[0].mxu0 %v1026
  %v3822 = vpop.f32.mrb[0].mxu0
  %v3823 = vadd.f32 %v3782, %v3822
  %v3824 = vpop.f32.mrb[0].mxu0
  %v3825 = vpop.f32.mrb[0].mxu0
  %v3826 = vadd.f32 %v3785, %v3825
  %v3827 = vpop.f32.mrb[0].mxu0
  %3828 = vdwg.mxu0
  %3829 = vmatprep.subr.bf16.mxu0 0
  %3830 = vmatpush1.bf16.msra.mxu0 %v2820
  %3831 = vmatprep.subr.bf16.mxu0 0
  %3832 = vmatpush1.bf16.msra.mxu0 %v2821
  %3833 = vmatprep.subr.bf16.mxu0 0
  %3834 = vmatpush1.bf16.msra.mxu0 %v2822
  %3835 = vmatprep.subr.bf16.mxu0 0
  %3836 = vmatpush1.bf16.msra.mxu0 %v2823
  %3837 = vmatprep.subr.bf16.mxu0 0
  %3838 = vmatpush1.bf16.msra.mxu0 %v2824
  %3839 = vmatprep.subr.bf16.mxu0 0
  %3840 = vmatpush1.bf16.msra.mxu0 %v2825
  %3841 = vmatprep.subr.bf16.mxu0 0
  %3842 = vmatpush1.bf16.msra.mxu0 %v2826
  %3843 = vmatprep.subr.bf16.mxu0 0
  %3844 = vmatpush1.bf16.msra.mxu0 %v2827
  %3845 = vmatprep.subr.bf16.mxu0 0
  %3846 = vmatpush1.bf16.msra.mxu0 %v2828
  %3847 = vmatprep.subr.bf16.mxu0 0
  %3848 = vmatpush1.bf16.msra.mxu0 %v2829
  %3849 = vmatprep.subr.bf16.mxu0 0
  %3850 = vmatpush1.bf16.msra.mxu0 %v2830
  %3851 = vmatprep.subr.bf16.mxu0 0
  %3852 = vmatpush1.bf16.msra.mxu0 %v2831
  %3853 = vmatprep.subr.bf16.mxu0 0
  %3854 = vmatpush1.bf16.msra.mxu0 %v2832
  %3855 = vmatprep.subr.bf16.mxu0 0
  %3856 = vmatpush1.bf16.msra.mxu0 %v2833
  %3857 = vmatprep.subr.bf16.mxu0 0
  %3858 = vmatpush1.bf16.msra.mxu0 %v2834
  %3859 = vmatprep.subr.bf16.mxu0 0
  %3860 = vmatpush1.bf16.msra.mxu0 %v2835
  %3861 = vmatprep.mubr.bf16.mxu0 %v1029
  %3862 = vmatmul.mubr.bf16.gmra.mrb[0].mxu0 %v1028
  %v3863 = vpop.f32.mrb[0].mxu0
  %v3864 = vadd.f32 %v3823, %v3863
  %v3865 = vpop.f32.mrb[0].mxu0
  %v3866 = vpop.f32.mrb[0].mxu0
  %v3867 = vadd.f32 %v3826, %v3866
  %v3868 = vpop.f32.mrb[0].mxu0
  %3869 = vdwg.mxu0
  %3870 = vmatprep.subr.bf16.mxu0 0
  %3871 = vmatpush1.bf16.msra.mxu0 %v2836
  %3872 = vmatprep.subr.bf16.mxu0 0
  %3873 = vmatpush1.bf16.msra.mxu0 %v2837
  %3874 = vmatprep.subr.bf16.mxu0 0
  %3875 = vmatpush1.bf16.msra.mxu0 %v2838
  %3876 = vmatprep.subr.bf16.mxu0 0
  %3877 = vmatpush1.bf16.msra.mxu0 %v2839
  %3878 = vmatprep.subr.bf16.mxu0 0
  %3879 = vmatpush1.bf16.msra.mxu0 %v2840
  %3880 = vmatprep.subr.bf16.mxu0 0
  %3881 = vmatpush1.bf16.msra.mxu0 %v2841
  %3882 = vmatprep.subr.bf16.mxu0 0
  %3883 = vmatpush1.bf16.msra.mxu0 %v2842
  %3884 = vmatprep.subr.bf16.mxu0 0
  %3885 = vmatpush1.bf16.msra.mxu0 %v2843
  %3886 = vmatprep.subr.bf16.mxu0 0
  %3887 = vmatpush1.bf16.msra.mxu0 %v2844
  %3888 = vmatprep.subr.bf16.mxu0 0
  %3889 = vmatpush1.bf16.msra.mxu0 %v2845
  %3890 = vmatprep.subr.bf16.mxu0 0
  %3891 = vmatpush1.bf16.msra.mxu0 %v2846
  %3892 = vmatprep.subr.bf16.mxu0 0
  %3893 = vmatpush1.bf16.msra.mxu0 %v2847
  %3894 = vmatprep.subr.bf16.mxu0 0
  %3895 = vmatpush1.bf16.msra.mxu0 %v2848
  %3896 = vmatprep.subr.bf16.mxu0 0
  %3897 = vmatpush1.bf16.msra.mxu0 %v2849
  %3898 = vmatprep.subr.bf16.mxu0 0
  %3899 = vmatpush1.bf16.msra.mxu0 %v2850
  %3900 = vmatprep.subr.bf16.mxu0 0
  %3901 = vmatpush1.bf16.msra.mxu0 %v2851
  %3902 = vmatprep.mubr.bf16.mxu0 %v1031
  %3903 = vmatmul.mubr.bf16.gmra.mrb[0].mxu0 %v1030
  %v3904 = vpop.f32.mrb[0].mxu0
  %v3905 = vadd.f32 %v3864, %v3904
  %v3906 = vpop.f32.mrb[0].mxu0
  %v3907 = vpop.f32.mrb[0].mxu0
  %v3908 = vadd.f32 %v3867, %v3907
  %v3909 = vpop.f32.mrb[0].mxu0
  %3910 = vdwg.mxu0
  %3911 = vmatprep.subr.bf16.mxu0 0
  %3912 = vmatpush1.bf16.msra.mxu0 %v2852
  %3913 = vmatprep.subr.bf16.mxu0 0
  %3914 = vmatpush1.bf16.msra.mxu0 %v2853
  %3915 = vmatprep.subr.bf16.mxu0 0
  %3916 = vmatpush1.bf16.msra.mxu0 %v2854
  %3917 = vmatprep.subr.bf16.mxu0 0
  %3918 = vmatpush1.bf16.msra.mxu0 %v2855
  %3919 = vmatprep.subr.bf16.mxu0 0
  %3920 = vmatpush1.bf16.msra.mxu0 %v2856
  %3921 = vmatprep.subr.bf16.mxu0 0
  %3922 = vmatpush1.bf16.msra.mxu0 %v2857
  %3923 = vmatprep.subr.bf16.mxu0 0
  %3924 = vmatpush1.bf16.msra.mxu0 %v2858
  %3925 = vmatprep.subr.bf16.mxu0 0
  %3926 = vmatpush1.bf16.msra.mxu0 %v2859
  %3927 = vmatprep.subr.bf16.mxu0 0
  %3928 = vmatpush1.bf16.msra.mxu0 %v2860
  %3929 = vmatprep.subr.bf16.mxu0 0
  %3930 = vmatpush1.bf16.msra.mxu0 %v2861
  %3931 = vmatprep.subr.bf16.mxu0 0
  %3932 = vmatpush1.bf16.msra.mxu0 %v2862
  %3933 = vmatprep.subr.bf16.mxu0 0
  %3934 = vmatpush1.bf16.msra.mxu0 %v2863
  %3935 = vmatprep.subr.bf16.mxu0 0
  %3936 = vmatpush1.bf16.msra.mxu0 %v2864
  %3937 = vmatprep.subr.bf16.mxu0 0
  %3938 = vmatpush1.bf16.msra.mxu0 %v2865
  %3939 = vmatprep.subr.bf16.mxu0 0
  %3940 = vmatpush1.bf16.msra.mxu0 %v2866
  %3941 = vmatprep.subr.bf16.mxu0 0
  %3942 = vmatpush1.bf16.msra.mxu0 %v2867
  %3943 = vmatprep.mubr.bf16.mxu0 %v1033
  %3944 = vmatmul.mubr.bf16.gmra.mrb[0].mxu0 %v1032
  %v3945 = vpop.f32.mrb[0].mxu0
  %v3946 = vadd.f32 %v3905, %v3945
  %v3947 = vpop.f32.mrb[0].mxu0
  %v3948 = vpop.f32.mrb[0].mxu0
  %v3949 = vadd.f32 %v3908, %v3948
  %v3950 = vpop.f32.mrb[0].mxu0
  %3951 = vdwg.mxu0
  %3952 = vmatprep.subr.bf16.mxu0 0
  %3953 = vmatpush1.bf16.msra.mxu0 %v2868
  %3954 = vmatprep.subr.bf16.mxu0 0
  %3955 = vmatpush1.bf16.msra.mxu0 %v2869
  %3956 = vmatprep.subr.bf16.mxu0 0
  %3957 = vmatpush1.bf16.msra.mxu0 %v2870
  %3958 = vmatprep.subr.bf16.mxu0 0
  %3959 = vmatpush1.bf16.msra.mxu0 %v2871
  %3960 = vmatprep.subr.bf16.mxu0 0
  %3961 = vmatpush1.bf16.msra.mxu0 %v2872
  %3962 = vmatprep.subr.bf16.mxu0 0
  %3963 = vmatpush1.bf16.msra.mxu0 %v2873
  %3964 = vmatprep.subr.bf16.mxu0 0
  %3965 = vmatpush1.bf16.msra.mxu0 %v2874
  %3966 = vmatprep.subr.bf16.mxu0 0
  %3967 = vmatpush1.bf16.msra.mxu0 %v2875
  %3968 = vmatprep.subr.bf16.mxu0 0
  %3969 = vmatpush1.bf16.msra.mxu0 %v2876
  %3970 = vmatprep.subr.bf16.mxu0 0
  %3971 = vmatpush1.bf16.msra.mxu0 %v2877
  %3972 = vmatprep.subr.bf16.mxu0 0
  %3973 = vmatpush1.bf16.msra.mxu0 %v2878
  %3974 = vmatprep.subr.bf16.mxu0 0
  %3975 = vmatpush1.bf16.msra.mxu0 %v2879
  %3976 = vmatprep.subr.bf16.mxu0 0
  %3977 = vmatpush1.bf16.msra.mxu0 %v2880
  %3978 = vmatprep.subr.bf16.mxu0 0
  %3979 = vmatpush1.bf16.msra.mxu0 %v2881
  %3980 = vmatprep.subr.bf16.mxu0 0
  %3981 = vmatpush1.bf16.msra.mxu0 %v2882
  %3982 = vmatprep.subr.bf16.mxu0 0
  %3983 = vmatpush1.bf16.msra.mxu0 %v2883
  %3984 = vmatprep.mubr.bf16.mxu0 %v1035
  %3985 = vmatmul.mubr.bf16.gmra.mrb[0].mxu0 %v1034
  %v3986 = vpop.f32.mrb[0].mxu0
  %v3987 = vadd.f32 %v3946, %v3986
  %v3988 = vpop.f32.mrb[0].mxu0
  %v3989 = vpop.f32.mrb[0].mxu0
  %v3990 = vadd.f32 %v3949, %v3989
  %v3991 = vpop.f32.mrb[0].mxu0
  %3992 = vdwg.mxu0
  %3993 = vmatprep.subr.bf16.mxu0 0
  %3994 = vmatpush1.bf16.msra.mxu0 %v2884
  %3995 = vmatprep.subr.bf16.mxu0 0
  %3996 = vmatpush1.bf16.msra.mxu0 %v2885
  %3997 = vmatprep.subr.bf16.mxu0 0
  %3998 = vmatpush1.bf16.msra.mxu0 %v2886
  %3999 = vmatprep.subr.bf16.mxu0 0
  %4000 = vmatpush1.bf16.msra.mxu0 %v2887
  %4001 = vmatprep.subr.bf16.mxu0 0
  %4002 = vmatpush1.bf16.msra.mxu0 %v2888
  %4003 = vmatprep.subr.bf16.mxu0 0
  %4004 = vmatpush1.bf16.msra.mxu0 %v2889
  %4005 = vmatprep.subr.bf16.mxu0 0
  %4006 = vmatpush1.bf16.msra.mxu0 %v2890
  %4007 = vmatprep.subr.bf16.mxu0 0
  %4008 = vmatpush1.bf16.msra.mxu0 %v2891
  %4009 = vmatprep.subr.bf16.mxu0 0
  %4010 = vmatpush1.bf16.msra.mxu0 %v2892
  %4011 = vmatprep.subr.bf16.mxu0 0
  %4012 = vmatpush1.bf16.msra.mxu0 %v2893
  %4013 = vmatprep.subr.bf16.mxu0 0
  %4014 = vmatpush1.bf16.msra.mxu0 %v2894
  %4015 = vmatprep.subr.bf16.mxu0 0
  %4016 = vmatpush1.bf16.msra.mxu0 %v2895
  %4017 = vmatprep.subr.bf16.mxu0 0
  %4018 = vmatpush1.bf16.msra.mxu0 %v2896
  %4019 = vmatprep.subr.bf16.mxu0 0
  %4020 = vmatpush1.bf16.msra.mxu0 %v2897
  %4021 = vmatprep.subr.bf16.mxu0 0
  %4022 = vmatpush1.bf16.msra.mxu0 %v2898
  %4023 = vmatprep.subr.bf16.mxu0 0
  %4024 = vmatpush1.bf16.msra.mxu0 %v2899
  %4025 = vmatprep.mubr.bf16.mxu0 %v1037
  %4026 = vmatmul.mubr.bf16.gmra.mrb[0].mxu0 %v1036
  %v4027 = vpop.f32.mrb[0].mxu0
  %v4028 = vadd.f32 %v3987, %v4027
  %v4029 = vpop.f32.mrb[0].mxu0
  %v4030 = vpop.f32.mrb[0].mxu0
  %v4031 = vadd.f32 %v3990, %v4030
  %v4032 = vpop.f32.mrb[0].mxu0
  %4033 = vdwg.mxu0
  %4034 = vmatprep.subr.bf16.mxu0 0
  %4035 = vmatpush1.bf16.msra.mxu0 %v2900
  %4036 = vmatprep.subr.bf16.mxu0 0
  %4037 = vmatpush1.bf16.msra.mxu0 %v2901
  %4038 = vmatprep.subr.bf16.mxu0 0
  %4039 = vmatpush1.bf16.msra.mxu0 %v2902
  %4040 = vmatprep.subr.bf16.mxu0 0
  %4041 = vmatpush1.bf16.msra.mxu0 %v2903
  %4042 = vmatprep.subr.bf16.mxu0 0
  %4043 = vmatpush1.bf16.msra.mxu0 %v2904
  %4044 = vmatprep.subr.bf16.mxu0 0
  %4045 = vmatpush1.bf16.msra.mxu0 %v2905
  %4046 = vmatprep.subr.bf16.mxu0 0
  %4047 = vmatpush1.bf16.msra.mxu0 %v2906
  %4048 = vmatprep.subr.bf16.mxu0 0
  %4049 = vmatpush1.bf16.msra.mxu0 %v2907
  %4050 = vmatprep.subr.bf16.mxu0 0
  %4051 = vmatpush1.bf16.msra.mxu0 %v2908
  %4052 = vmatprep.subr.bf16.mxu0 0
  %4053 = vmatpush1.bf16.msra.mxu0 %v2909
  %4054 = vmatprep.subr.bf16.mxu0 0
  %4055 = vmatpush1.bf16.msra.mxu0 %v2910
  %4056 = vmatprep.subr.bf16.mxu0 0
  %4057 = vmatpush1.bf16.msra.mxu0 %v2911
  %4058 = vmatprep.subr.bf16.mxu0 0
  %4059 = vmatpush1.bf16.msra.mxu0 %v2912
  %4060 = vmatprep.subr.bf16.mxu0 0
  %4061 = vmatpush1.bf16.msra.mxu0 %v2913
  %4062 = vmatprep.subr.bf16.mxu0 0
  %4063 = vmatpush1.bf16.msra.mxu0 %v2914
  %4064 = vmatprep.subr.bf16.mxu0 0
  %4065 = vmatpush1.bf16.msra.mxu0 %v2915
  %4066 = vmatprep.mubr.bf16.mxu0 %v1039
  %4067 = vmatmul.mubr.bf16.gmra.mrb[0].mxu0 %v1038
  %v4068 = vpop.f32.mrb[0].mxu0
  %v4069 = vadd.f32 %v4028, %v4068
  %v4070 = vpop.f32.mrb[0].mxu0
  %v4071 = vpop.f32.mrb[0].mxu0
  %v4072 = vadd.f32 %v4031, %v4071
  %v4073 = vpop.f32.mrb[0].mxu0
  %4074 = vdwg.mxu0
  %4075 = vmatprep.subr.bf16.mxu0 0
  %4076 = vmatpush1.bf16.msra.mxu0 %v2916
  %4077 = vmatprep.subr.bf16.mxu0 0
  %4078 = vmatpush1.bf16.msra.mxu0 %v2917
  %4079 = vmatprep.subr.bf16.mxu0 0
  %4080 = vmatpush1.bf16.msra.mxu0 %v2918
  %4081 = vmatprep.subr.bf16.mxu0 0
  %4082 = vmatpush1.bf16.msra.mxu0 %v2919
  %4083 = vmatprep.subr.bf16.mxu0 0
  %4084 = vmatpush1.bf16.msra.mxu0 %v2920
  %4085 = vmatprep.subr.bf16.mxu0 0
  %4086 = vmatpush1.bf16.msra.mxu0 %v2921
  %4087 = vmatprep.subr.bf16.mxu0 0
  %4088 = vmatpush1.bf16.msra.mxu0 %v2922
  %4089 = vmatprep.subr.bf16.mxu0 0
  %4090 = vmatpush1.bf16.msra.mxu0 %v2923
  %4091 = vmatprep.subr.bf16.mxu0 0
  %4092 = vmatpush1.bf16.msra.mxu0 %v2924
  %4093 = vmatprep.subr.bf16.mxu0 0
  %4094 = vmatpush1.bf16.msra.mxu0 %v2925
  %4095 = vmatprep.subr.bf16.mxu0 0
  %4096 = vmatpush1.bf16.msra.mxu0 %v2926
  %4097 = vmatprep.subr.bf16.mxu0 0
  %4098 = vmatpush1.bf16.msra.mxu0 %v2927
  %4099 = vmatprep.subr.bf16.mxu0 0
  %4100 = vmatpush1.bf16.msra.mxu0 %v2928
  %4101 = vmatprep.subr.bf16.mxu0 0
  %4102 = vmatpush1.bf16.msra.mxu0 %v2929
  %4103 = vmatprep.subr.bf16.mxu0 0
  %4104 = vmatpush1.bf16.msra.mxu0 %v2930
  %4105 = vmatprep.subr.bf16.mxu0 0
  %4106 = vmatpush1.bf16.msra.mxu0 %v2931
  %4107 = vmatprep.mubr.bf16.mxu0 %v1041
  %4108 = vmatmul.mubr.bf16.gmra.mrb[0].mxu0 %v1040
  %v4109 = vpop.f32.mrb[0].mxu0
  %v4110 = vadd.f32 %v4069, %v4109
  %v4111 = vpop.f32.mrb[0].mxu0
  %v4112 = vpop.f32.mrb[0].mxu0
  %v4113 = vadd.f32 %v4072, %v4112
  %v4114 = vpop.f32.mrb[0].mxu0
  %4115 = vdwg.mxu0
  %4116 = vmatprep.subr.bf16.mxu0 0
  %4117 = vmatpush1.bf16.msra.mxu0 %v2932
  %4118 = vmatprep.subr.bf16.mxu0 0
  %4119 = vmatpush1.bf16.msra.mxu0 %v2933
  %4120 = vmatprep.subr.bf16.mxu0 0
  %4121 = vmatpush1.bf16.msra.mxu0 %v2934
  %4122 = vmatprep.subr.bf16.mxu0 0
  %4123 = vmatpush1.bf16.msra.mxu0 %v2935
  %4124 = vmatprep.subr.bf16.mxu0 0
  %4125 = vmatpush1.bf16.msra.mxu0 %v2936
  %4126 = vmatprep.subr.bf16.mxu0 0
  %4127 = vmatpush1.bf16.msra.mxu0 %v2937
  %4128 = vmatprep.subr.bf16.mxu0 0
  %4129 = vmatpush1.bf16.msra.mxu0 %v2938
  %4130 = vmatprep.subr.bf16.mxu0 0
  %4131 = vmatpush1.bf16.msra.mxu0 %v2939
  %4132 = vmatprep.subr.bf16.mxu0 0
  %4133 = vmatpush1.bf16.msra.mxu0 %v2940
  %4134 = vmatprep.subr.bf16.mxu0 0
  %4135 = vmatpush1.bf16.msra.mxu0 %v2941
  %4136 = vmatprep.subr.bf16.mxu0 0
  %4137 = vmatpush1.bf16.msra.mxu0 %v2942
  %4138 = vmatprep.subr.bf16.mxu0 0
  %4139 = vmatpush1.bf16.msra.mxu0 %v2943
  %4140 = vmatprep.subr.bf16.mxu0 0
  %4141 = vmatpush1.bf16.msra.mxu0 %v2944
  %4142 = vmatprep.subr.bf16.mxu0 0
  %4143 = vmatpush1.bf16.msra.mxu0 %v2945
  %4144 = vmatprep.subr.bf16.mxu0 0
  %4145 = vmatpush1.bf16.msra.mxu0 %v2946
  %4146 = vmatprep.subr.bf16.mxu0 0
  %4147 = vmatpush1.bf16.msra.mxu0 %v2947
  %4148 = vmatprep.mubr.bf16.mxu0 %v1043
  %4149 = vmatmul.mubr.bf16.gmra.mrb[0].mxu0 %v1042
  %v4150 = vpop.f32.mrb[0].mxu0
  %v4151 = vadd.f32 %v4110, %v4150
  %v4152 = vpop.f32.mrb[0].mxu0
  %v4153 = vpop.f32.mrb[0].mxu0
  %v4154 = vadd.f32 %v4113, %v4153
  %v4155 = vpop.f32.mrb[0].mxu0
  %4156 = vdwg.mxu0
  %4157 = vmatprep.subr.bf16.mxu0 0
  %4158 = vmatpush1.bf16.msra.mxu0 %v2948
  %4159 = vmatprep.subr.bf16.mxu0 0
  %4160 = vmatpush1.bf16.msra.mxu0 %v2949
  %4161 = vmatprep.subr.bf16.mxu0 0
  %4162 = vmatpush1.bf16.msra.mxu0 %v2950
  %4163 = vmatprep.subr.bf16.mxu0 0
  %4164 = vmatpush1.bf16.msra.mxu0 %v2951
  %4165 = vmatprep.subr.bf16.mxu0 0
  %4166 = vmatpush1.bf16.msra.mxu0 %v2952
  %4167 = vmatprep.subr.bf16.mxu0 0
  %4168 = vmatpush1.bf16.msra.mxu0 %v2953
  %4169 = vmatprep.subr.bf16.mxu0 0
  %4170 = vmatpush1.bf16.msra.mxu0 %v2954
  %4171 = vmatprep.subr.bf16.mxu0 0
  %4172 = vmatpush1.bf16.msra.mxu0 %v2955
  %4173 = vmatprep.subr.bf16.mxu0 0
  %4174 = vmatpush1.bf16.msra.mxu0 %v2956
  %4175 = vmatprep.subr.bf16.mxu0 0
  %4176 = vmatpush1.bf16.msra.mxu0 %v2957
  %4177 = vmatprep.subr.bf16.mxu0 0
  %4178 = vmatpush1.bf16.msra.mxu0 %v2958
  %4179 = vmatprep.subr.bf16.mxu0 0
  %4180 = vmatpush1.bf16.msra.mxu0 %v2959
  %4181 = vmatprep.subr.bf16.mxu0 0
  %4182 = vmatpush1.bf16.msra.mxu0 %v2960
  %4183 = vmatprep.subr.bf16.mxu0 0
  %4184 = vmatpush1.bf16.msra.mxu0 %v2961
  %4185 = vmatprep.subr.bf16.mxu0 0
  %4186 = vmatpush1.bf16.msra.mxu0 %v2962
  %4187 = vmatprep.subr.bf16.mxu0 0
  %4188 = vmatpush1.bf16.msra.mxu0 %v2963
  %4189 = vmatprep.mubr.bf16.mxu0 %v1045
  %4190 = vmatmul.mubr.bf16.gmra.mrb[0].mxu0 %v1044
  %v4191 = vpop.f32.mrb[0].mxu0
  %v4192 = vadd.f32 %v4151, %v4191
  %v4193 = vpop.f32.mrb[0].mxu0
  %v4194 = vpop.f32.mrb[0].mxu0
  %v4195 = vadd.f32 %v4154, %v4194
  %v4196 = vpop.f32.mrb[0].mxu0
  %4197 = vdwg.mxu0
  %4198 = vmatprep.subr.bf16.mxu0 0
  %4199 = vmatpush1.bf16.msra.mxu0 %v2964
  %4200 = vmatprep.subr.bf16.mxu0 0
  %4201 = vmatpush1.bf16.msra.mxu0 %v2965
  %4202 = vmatprep.subr.bf16.mxu0 0
  %4203 = vmatpush1.bf16.msra.mxu0 %v2966
  %4204 = vmatprep.subr.bf16.mxu0 0
  %4205 = vmatpush1.bf16.msra.mxu0 %v2967
  %4206 = vmatprep.subr.bf16.mxu0 0
  %4207 = vmatpush1.bf16.msra.mxu0 %v2968
  %4208 = vmatprep.subr.bf16.mxu0 0
  %4209 = vmatpush1.bf16.msra.mxu0 %v2969
  %4210 = vmatprep.subr.bf16.mxu0 0
  %4211 = vmatpush1.bf16.msra.mxu0 %v2970
  %4212 = vmatprep.subr.bf16.mxu0 0
  %4213 = vmatpush1.bf16.msra.mxu0 %v2971
  %4214 = vmatprep.subr.bf16.mxu0 0
  %4215 = vmatpush1.bf16.msra.mxu0 %v2972
  %4216 = vmatprep.subr.bf16.mxu0 0
  %4217 = vmatpush1.bf16.msra.mxu0 %v2973
  %4218 = vmatprep.subr.bf16.mxu0 0
  %4219 = vmatpush1.bf16.msra.mxu0 %v2974
  %4220 = vmatprep.subr.bf16.mxu0 0
  %4221 = vmatpush1.bf16.msra.mxu0 %v2975
  %4222 = vmatprep.subr.bf16.mxu0 0
  %4223 = vmatpush1.bf16.msra.mxu0 %v2976
  %4224 = vmatprep.subr.bf16.mxu0 0
  %4225 = vmatpush1.bf16.msra.mxu0 %v2977
  %4226 = vmatprep.subr.bf16.mxu0 0
  %4227 = vmatpush1.bf16.msra.mxu0 %v2978
  %4228 = vmatprep.subr.bf16.mxu0 0
  %4229 = vmatpush1.bf16.msra.mxu0 %v2979
  %4230 = vmatprep.mubr.bf16.mxu0 %v1047
  %4231 = vmatmul.mubr.bf16.gmra.mrb[0].mxu0 %v1046
  %v4232 = vpop.f32.mrb[0].mxu0
  %v4233 = vadd.f32 %v4192, %v4232
  %v4234 = vpop.f32.mrb[0].mxu0
  %v4235 = vpop.f32.mrb[0].mxu0
  %v4236 = vadd.f32 %v4195, %v4235
  %v4237 = vpop.f32.mrb[0].mxu0
  %4238 = vdwg.mxu0
  %4239 = vmatprep.subr.bf16.mxu0 0
  %4240 = vmatpush1.bf16.msra.mxu0 %v2980
  %4241 = vmatprep.subr.bf16.mxu0 0
  %4242 = vmatpush1.bf16.msra.mxu0 %v2981
  %4243 = vmatprep.subr.bf16.mxu0 0
  %4244 = vmatpush1.bf16.msra.mxu0 %v2982
  %4245 = vmatprep.subr.bf16.mxu0 0
  %4246 = vmatpush1.bf16.msra.mxu0 %v2983
  %4247 = vmatprep.subr.bf16.mxu0 0
  %4248 = vmatpush1.bf16.msra.mxu0 %v2984
  %4249 = vmatprep.subr.bf16.mxu0 0
  %4250 = vmatpush1.bf16.msra.mxu0 %v2985
  %4251 = vmatprep.subr.bf16.mxu0 0
  %4252 = vmatpush1.bf16.msra.mxu0 %v2986
  %4253 = vmatprep.subr.bf16.mxu0 0
  %4254 = vmatpush1.bf16.msra.mxu0 %v2987
  %4255 = vmatprep.subr.bf16.mxu0 0
  %4256 = vmatpush1.bf16.msra.mxu0 %v2988
  %4257 = vmatprep.subr.bf16.mxu0 0
  %4258 = vmatpush1.bf16.msra.mxu0 %v2989
  %4259 = vmatprep.subr.bf16.mxu0 0
  %4260 = vmatpush1.bf16.msra.mxu0 %v2990
  %4261 = vmatprep.subr.bf16.mxu0 0
  %4262 = vmatpush1.bf16.msra.mxu0 %v2991
  %4263 = vmatprep.subr.bf16.mxu0 0
  %4264 = vmatpush1.bf16.msra.mxu0 %v2992
  %4265 = vmatprep.subr.bf16.mxu0 0
  %4266 = vmatpush1.bf16.msra.mxu0 %v2993
  %4267 = vmatprep.subr.bf16.mxu0 0
  %4268 = vmatpush1.bf16.msra.mxu0 %v2994
  %4269 = vmatprep.subr.bf16.mxu0 0
  %4270 = vmatpush1.bf16.msra.mxu0 %v2995
  %4271 = vmatprep.mubr.bf16.mxu0 %v1049
  %4272 = vmatmul.mubr.bf16.gmra.mrb[0].mxu0 %v1048
  %v4273 = vpop.f32.mrb[0].mxu0
  %v4274 = vadd.f32 %v4233, %v4273
  %v4275 = vpop.f32.mrb[0].mxu0
  %v4276 = vpop.f32.mrb[0].mxu0
  %v4277 = vadd.f32 %v4236, %v4276
  %v4278 = vpop.f32.mrb[0].mxu0
  %4279 = vdwg.mxu0
  %4280 = vmatprep.subr.bf16.mxu0 0
  %4281 = vmatpush1.bf16.msra.mxu0 %v2996
  %4282 = vmatprep.subr.bf16.mxu0 0
  %4283 = vmatpush1.bf16.msra.mxu0 %v2997
  %4284 = vmatprep.subr.bf16.mxu0 0
  %4285 = vmatpush1.bf16.msra.mxu0 %v2998
  %4286 = vmatprep.subr.bf16.mxu0 0
  %4287 = vmatpush1.bf16.msra.mxu0 %v2999
  %4288 = vmatprep.subr.bf16.mxu0 0
  %4289 = vmatpush1.bf16.msra.mxu0 %v3000
  %4290 = vmatprep.subr.bf16.mxu0 0
  %4291 = vmatpush1.bf16.msra.mxu0 %v3001
  %4292 = vmatprep.subr.bf16.mxu0 0
  %4293 = vmatpush1.bf16.msra.mxu0 %v3002
  %4294 = vmatprep.subr.bf16.mxu0 0
  %4295 = vmatpush1.bf16.msra.mxu0 %v3003
  %4296 = vmatprep.subr.bf16.mxu0 0
  %4297 = vmatpush1.bf16.msra.mxu0 %v3004
  %4298 = vmatprep.subr.bf16.mxu0 0
  %4299 = vmatpush1.bf16.msra.mxu0 %v3005
  %4300 = vmatprep.subr.bf16.mxu0 0
  %4301 = vmatpush1.bf16.msra.mxu0 %v3006
  %4302 = vmatprep.subr.bf16.mxu0 0
  %4303 = vmatpush1.bf16.msra.mxu0 %v3007
  %4304 = vmatprep.subr.bf16.mxu0 0
  %4305 = vmatpush1.bf16.msra.mxu0 %v3008
  %4306 = vmatprep.subr.bf16.mxu0 0
  %4307 = vmatpush1.bf16.msra.mxu0 %v3009
  %4308 = vmatprep.subr.bf16.mxu0 0
  %4309 = vmatpush1.bf16.msra.mxu0 %v3010
  %4310 = vmatprep.subr.bf16.mxu0 0
  %4311 = vmatpush1.bf16.msra.mxu0 %v3011
  %4312 = vmatprep.mubr.bf16.mxu0 %v1051
  %4313 = vmatmul.mubr.bf16.gmra.mrb[0].mxu0 %v1050
  %v4314 = vpop.f32.mrb[0].mxu0
  %v4315 = vadd.f32 %v4274, %v4314
  %v4316 = vpop.f32.mrb[0].mxu0
  %v4317 = vpop.f32.mrb[0].mxu0
  %v4318 = vadd.f32 %v4277, %v4317
  %v4319 = vpop.f32.mrb[0].mxu0
  %4320 = vdwg.mxu0
  %4321 = vmatprep.subr.bf16.mxu0 0
  %4322 = vmatpush1.bf16.msra.mxu0 %v3012
  %4323 = vmatprep.subr.bf16.mxu0 0
  %4324 = vmatpush1.bf16.msra.mxu0 %v3013
  %4325 = vmatprep.subr.bf16.mxu0 0
  %4326 = vmatpush1.bf16.msra.mxu0 %v3014
  %4327 = vmatprep.subr.bf16.mxu0 0
  %4328 = vmatpush1.bf16.msra.mxu0 %v3015
  %4329 = vmatprep.subr.bf16.mxu0 0
  %4330 = vmatpush1.bf16.msra.mxu0 %v3016
  %4331 = vmatprep.subr.bf16.mxu0 0
  %4332 = vmatpush1.bf16.msra.mxu0 %v3017
  %4333 = vmatprep.subr.bf16.mxu0 0
  %4334 = vmatpush1.bf16.msra.mxu0 %v3018
  %4335 = vmatprep.subr.bf16.mxu0 0
  %4336 = vmatpush1.bf16.msra.mxu0 %v3019
  %4337 = vmatprep.subr.bf16.mxu0 0
  %4338 = vmatpush1.bf16.msra.mxu0 %v3020
  %4339 = vmatprep.subr.bf16.mxu0 0
  %4340 = vmatpush1.bf16.msra.mxu0 %v3021
  %4341 = vmatprep.subr.bf16.mxu0 0
  %4342 = vmatpush1.bf16.msra.mxu0 %v3022
  %4343 = vmatprep.subr.bf16.mxu0 0
  %4344 = vmatpush1.bf16.msra.mxu0 %v3023
  %4345 = vmatprep.subr.bf16.mxu0 0
  %4346 = vmatpush1.bf16.msra.mxu0 %v3024
  %4347 = vmatprep.subr.bf16.mxu0 0
  %4348 = vmatpush1.bf16.msra.mxu0 %v3025
  %4349 = vmatprep.subr.bf16.mxu0 0
  %4350 = vmatpush1.bf16.msra.mxu0 %v3026
  %4351 = vmatprep.subr.bf16.mxu0 0
  %4352 = vmatpush1.bf16.msra.mxu0 %v3027
  %4353 = vmatprep.mubr.bf16.mxu0 %v1053
  %4354 = vmatmul.mubr.bf16.gmra.mrb[0].mxu0 %v1052
  %v4355 = vpop.f32.mrb[0].mxu0
  %v4356 = vadd.f32 %v4315, %v4355
  %v4357 = vpop.f32.mrb[0].mxu0
  %v4358 = vpop.f32.mrb[0].mxu0
  %v4359 = vadd.f32 %v4318, %v4358
  %v4360 = vpop.f32.mrb[0].mxu0
  %4361 = vdwg.mxu0
  %4362 = vmatprep.subr.bf16.mxu0 0
  %4363 = vmatpush1.bf16.msra.mxu0 %v3028
  %4364 = vmatprep.subr.bf16.mxu0 0
  %4365 = vmatpush1.bf16.msra.mxu0 %v3029
  %4366 = vmatprep.subr.bf16.mxu0 0
  %4367 = vmatpush1.bf16.msra.mxu0 %v3030
  %4368 = vmatprep.subr.bf16.mxu0 0
  %4369 = vmatpush1.bf16.msra.mxu0 %v3031
  %4370 = vmatprep.subr.bf16.mxu0 0
  %4371 = vmatpush1.bf16.msra.mxu0 %v3032
  %4372 = vmatprep.subr.bf16.mxu0 0
  %4373 = vmatpush1.bf16.msra.mxu0 %v3033
  %4374 = vmatprep.subr.bf16.mxu0 0
  %4375 = vmatpush1.bf16.msra.mxu0 %v3034
  %4376 = vmatprep.subr.bf16.mxu0 0
  %4377 = vmatpush1.bf16.msra.mxu0 %v3035
  %4378 = vmatprep.subr.bf16.mxu0 0
  %4379 = vmatpush1.bf16.msra.mxu0 %v3036
  %4380 = vmatprep.subr.bf16.mxu0 0
  %4381 = vmatpush1.bf16.msra.mxu0 %v3037
  %4382 = vmatprep.subr.bf16.mxu0 0
  %4383 = vmatpush1.bf16.msra.mxu0 %v3038
  %4384 = vmatprep.subr.bf16.mxu0 0
  %4385 = vmatpush1.bf16.msra.mxu0 %v3039
  %4386 = vmatprep.subr.bf16.mxu0 0
  %4387 = vmatpush1.bf16.msra.mxu0 %v3040
  %4388 = vmatprep.subr.bf16.mxu0 0
  %4389 = vmatpush1.bf16.msra.mxu0 %v3041
  %4390 = vmatprep.subr.bf16.mxu0 0
  %4391 = vmatpush1.bf16.msra.mxu0 %v3042
  %4392 = vmatprep.subr.bf16.mxu0 0
  %4393 = vmatpush1.bf16.msra.mxu0 %v3043
  %4394 = vmatprep.mubr.bf16.mxu0 %v1055
  %4395 = vmatmul.mubr.bf16.gmra.mrb[0].mxu0 %v1054
  %v4396 = vpop.f32.mrb[0].mxu0
  %v4397 = vadd.f32 %v4356, %v4396
  %v4398 = vpop.f32.mrb[0].mxu0
  %v4399 = vpop.f32.mrb[0].mxu0
  %v4400 = vadd.f32 %v4359, %v4399
  %v4401 = vpop.f32.mrb[0].mxu0
  %4402 = vdwg.mxu0
  %4403 = vmatprep.subr.bf16.mxu0 0
  %4404 = vmatpush1.bf16.msra.mxu0 %v3044
  %4405 = vmatprep.subr.bf16.mxu0 0
  %4406 = vmatpush1.bf16.msra.mxu0 %v3045
  %4407 = vmatprep.subr.bf16.mxu0 0
  %4408 = vmatpush1.bf16.msra.mxu0 %v3046
  %4409 = vmatprep.subr.bf16.mxu0 0
  %4410 = vmatpush1.bf16.msra.mxu0 %v3047
  %4411 = vmatprep.subr.bf16.mxu0 0
  %4412 = vmatpush1.bf16.msra.mxu0 %v3048
  %4413 = vmatprep.subr.bf16.mxu0 0
  %4414 = vmatpush1.bf16.msra.mxu0 %v3049
  %4415 = vmatprep.subr.bf16.mxu0 0
  %4416 = vmatpush1.bf16.msra.mxu0 %v3050
  %4417 = vmatprep.subr.bf16.mxu0 0
  %4418 = vmatpush1.bf16.msra.mxu0 %v3051
  %4419 = vmatprep.subr.bf16.mxu0 0
  %4420 = vmatpush1.bf16.msra.mxu0 %v3052
  %4421 = vmatprep.subr.bf16.mxu0 0
  %4422 = vmatpush1.bf16.msra.mxu0 %v3053
  %4423 = vmatprep.subr.bf16.mxu0 0
  %4424 = vmatpush1.bf16.msra.mxu0 %v3054
  %4425 = vmatprep.subr.bf16.mxu0 0
  %4426 = vmatpush1.bf16.msra.mxu0 %v3055
  %4427 = vmatprep.subr.bf16.mxu0 0
  %4428 = vmatpush1.bf16.msra.mxu0 %v3056
  %4429 = vmatprep.subr.bf16.mxu0 0
  %4430 = vmatpush1.bf16.msra.mxu0 %v3057
  %4431 = vmatprep.subr.bf16.mxu0 0
  %4432 = vmatpush1.bf16.msra.mxu0 %v3058
  %4433 = vmatprep.subr.bf16.mxu0 0
  %4434 = vmatpush1.bf16.msra.mxu0 %v3059
  %4435 = vmatprep.mubr.bf16.mxu0 %v1057
  %4436 = vmatmul.mubr.bf16.gmra.mrb[0].mxu0 %v1056
  %v4437 = vpop.f32.mrb[0].mxu0
  %v4438 = vadd.f32 %v4397, %v4437
  %v4439 = vpop.f32.mrb[0].mxu0
  %v4440 = vpop.f32.mrb[0].mxu0
  %v4441 = vadd.f32 %v4400, %v4440
  %v4442 = vpop.f32.mrb[0].mxu0
  %4443 = vdwg.mxu0
  %4444 = vmatprep.subr.bf16.mxu0 0
  %4445 = vmatpush1.bf16.msra.mxu0 %v3060
  %4446 = vmatprep.subr.bf16.mxu0 0
  %4447 = vmatpush1.bf16.msra.mxu0 %v3061
  %4448 = vmatprep.subr.bf16.mxu0 0
  %4449 = vmatpush1.bf16.msra.mxu0 %v3062
  %4450 = vmatprep.subr.bf16.mxu0 0
  %4451 = vmatpush1.bf16.msra.mxu0 %v3063
  %4452 = vmatprep.subr.bf16.mxu0 0
  %4453 = vmatpush1.bf16.msra.mxu0 %v3064
  %4454 = vmatprep.subr.bf16.mxu0 0
  %4455 = vmatpush1.bf16.msra.mxu0 %v3065
  %4456 = vmatprep.subr.bf16.mxu0 0
  %4457 = vmatpush1.bf16.msra.mxu0 %v3066
  %4458 = vmatprep.subr.bf16.mxu0 0
  %4459 = vmatpush1.bf16.msra.mxu0 %v3067
  %4460 = vmatprep.subr.bf16.mxu0 0
  %4461 = vmatpush1.bf16.msra.mxu0 0
  %4462 = vmatprep.subr.bf16.mxu0 0
  %4463 = vmatpush1.bf16.msra.mxu0 0
  %4464 = vmatprep.subr.bf16.mxu0 0
  %4465 = vmatpush1.bf16.msra.mxu0 0
  %4466 = vmatprep.subr.bf16.mxu0 0
  %4467 = vmatpush1.bf16.msra.mxu0 0
  %4468 = vmatprep.subr.bf16.mxu0 0
  %4469 = vmatpush1.bf16.msra.mxu0 0
  %4470 = vmatprep.subr.bf16.mxu0 0
  %4471 = vmatpush1.bf16.msra.mxu0 0
  %4472 = vmatprep.subr.bf16.mxu0 0
  %4473 = vmatpush1.bf16.msra.mxu0 0
  %4474 = vmatprep.subr.bf16.mxu0 0
  %4475 = vmatpush1.bf16.msra.mxu0 0
  %4476 = vmatprep.mubr.bf16.mxu0 0
  %4477 = vmatmul.mubr.bf16.gmra.mrb[0].mxu0 %v1058
  %v4478 = vpop.f32.mrb[0].mxu0
  %v4479 = vadd.f32 %v4438, %v4478
  %v4480 = vpop.f32.mrb[0].mxu0
  %v4481 = vpop.f32.mrb[0].mxu0
  %v4482 = vadd.f32 %v4441, %v4481
  %v4483 = vpop.f32.mrb[0].mxu0
  %4484 = vdwg.mxu0
  %v4485 = vmax.f32 %v4479, 0.0
  %v4486 = vmax.f32 %v4482, 0.0
  %v4487 = vpack.c.bf16 %v4486, %v4485
  %v4488 = vld [vmem:[%s3] sm:$0xf]
  %v4489 = vld [vmem:[%s3 + $0x4] sm:$0xf]
  %v4490 = vld [vmem:[%s3 + $0x8] sm:$0xf]
  %v4491 = vld [vmem:[%s3 + $0xc] sm:$0xf]
  %v4492 = vld [vmem:[%s3 + $0x10] sm:$0xf]
  %v4493 = vld [vmem:[%s3 + $0x14] sm:$0xf]
  %v4494 = vld [vmem:[%s3 + $0x18] sm:$0xf]
  %v4495 = vld [vmem:[%s3 + $0x1c] sm:$0xf]
  %v4496 = vld [vmem:[%s4] sm:$0x1]
  %v4498 = vlaneseq
  %v4499 = vshrl.u32 %v4498, 7
  %v4500 = vsub.s32 0, %v4499
  %v4501 = vrot.slane %v4496, %v4500
  %v4511 = vunpack.c.l.b16 %v4488
  %v4512 = vunpack.c.l.b16 %v4489
  %v4513 = vunpack.c.l.b16 %v4490
  %v4514 = vunpack.c.l.b16 %v4491
  %v4515 = vunpack.c.l.b16 %v4492
  %v4516 = vunpack.c.l.b16 %v4493
  %v4517 = vunpack.c.l.b16 %v4494
  %v4518 = vunpack.c.l.b16 %v4495
  %v4519 = vpack.c.b16 %v4512, %v4511
  %v4520 = vpack.c.b16 %v4514, %v4513
  %v4521 = vpack.c.b16 %v4516, %v4515
  %v4522 = vpack.c.b16 %v4518, %v4517
  %vm4527 = vcmask 523264
  %v4529 = vsel %vm4527, %v4487, 0
  %4531 = vmatprep.subr.bf16.mxu0 0
  %4532 = vmatpush1.bf16.msra.mxu0 %v4519
  %4533 = vmatprep.subr.bf16.mxu0 0
  %4534 = vmatpush1.bf16.msra.mxu0 %v4520
  %4535 = vmatprep.subr.bf16.mxu0 0
  %4536 = vmatpush1.bf16.msra.mxu0 %v4521
  %4537 = vmatprep.subr.bf16.mxu0 0
  %4538 = vmatpush1.bf16.msra.mxu0 %v4522
  %4539 = vmatprep.subr.bf16.mxu0 0
  %4540 = vmatpush1.bf16.msra.mxu0 0
  %4541 = vmatprep.subr.bf16.mxu0 0
  %4542 = vmatpush1.bf16.msra.mxu0 0
  %4543 = vmatprep.subr.bf16.mxu0 0
  %4544 = vmatpush1.bf16.msra.mxu0 0
  %4545 = vmatprep.subr.bf16.mxu0 0
  %4546 = vmatpush1.bf16.msra.mxu0 0
  %4547 = vmatprep.subr.bf16.mxu0 0
  %4548 = vmatpush1.bf16.msra.mxu0 0
  %4549 = vmatprep.subr.bf16.mxu0 0
  %4550 = vmatpush1.bf16.msra.mxu0 0
  %4551 = vmatprep.subr.bf16.mxu0 0
  %4552 = vmatpush1.bf16.msra.mxu0 0
  %4553 = vmatprep.subr.bf16.mxu0 0
  %4554 = vmatpush1.bf16.msra.mxu0 0
  %4555 = vmatprep.subr.bf16.mxu0 0
  %4556 = vmatpush1.bf16.msra.mxu0 0
  %4557 = vmatprep.subr.bf16.mxu0 0
  %4558 = vmatpush1.bf16.msra.mxu0 0
  %4559 = vmatprep.subr.bf16.mxu0 0
  %4560 = vmatpush1.bf16.msra.mxu0 0
  %4561 = vmatprep.subr.bf16.mxu0 0
  %4562 = vmatpush1.bf16.msra.mxu0 0
  %4563 = vmatprep.mubr.bf16.mxu0 0
  %4564 = vmatmul.mubr.bf16.gmra.mrb[0].mxu0 %v4529
  %v4565 = vpop.f32.mrb[0].mxu0
  %v4566 = vadd.f32 %v4501, %v4565
  %v4567 = vpop.f32.mrb[0].mxu0
  %v4568 = vpop.f32.mrb[0].mxu0
  %v4569 = vadd.f32 %v4501, %v4568
  %v4570 = vpop.f32.mrb[0].mxu0
  %4571 = vdwg.mxu0
  %4572 = vst [vmem:[%s5] sm:$0xff] %v4566
  %4573 = vst [vmem:[%s5 + $0x8] sm:$0xff] %v4569
  // Predicated region
  $region22: #{_lambda_.3} parent=0 // pred_check
    _
  $region23: #{_lambda_.3} parent=0 // pred_check_branch
    %4575 = sbr.rel (0) target = $region25
  $region24: #{_lambda_.3} parent=0 // pred_region
    _
  $region25: #{_lambda_.3} parent=0 // pred_fallthru
    _
  // Predicated region
  $region26: #{_lambda_.3} parent=0 // pred_check
    _
  $region27: #{_lambda_.3} parent=0 // pred_check_branch
    %4577 = sbr.rel (0) target = $region29
  $region28: #{_lambda_.3} parent=0 // pred_region
    _
  $region29: #{_lambda_.3} parent=0 // pred_fallthru
    _

</llo_original>
